<compile_context>
chip_gen: v7x
topology: tpu7x:2x2x1
jax: 0.10.0
libtpu: 0.0.40
codegen_flags: <defaults>
</compile_context>

<pallas_src>
import functools

import jax
import jax.numpy as jnp
from jax import lax
from jax.experimental import pallas as pl
from jax.experimental.pallas import tpu as pltpu

_BF16 = jnp.bfloat16
_F32 = jnp.float32
_EPS = 1e-3  # nn.BatchNorm3d(eps=0.001) in the module.


# ----------------------------- Pallas kernels ------------------------------ #

def _gemm_stats_kernel(a_ref, b_ref, o_ref, st_ref):
    """(tm, K)bf16 @ (K, Co)bf16 -> (tm, Co)bf16 plus per-tile (sum, sumsq)."""
    acc = jnp.dot(a_ref[...], b_ref[...], preferred_element_type=jnp.float32)
    o_ref[...] = acc.astype(o_ref.dtype)
    s = jnp.sum(acc, axis=0, keepdims=True)          # (1, Co)
    ss = jnp.sum(acc * acc, axis=0, keepdims=True)   # (1, Co)
    st_ref[...] = jnp.concatenate([s, ss], axis=0)   # (2, Co)


def _stem_epilogue_kernel(y_ref, sc_ref, bi_ref, y0_ref, y12_ref, *, split):
    """Fused BN (folded scale/bias) + ReLU, split into branch0 / branch1+2."""
    y = jnp.maximum(y_ref[...].astype(jnp.float32) * sc_ref[...] + bi_ref[...],
                    0.0)
    y0_ref[...] = y[:, :split].astype(y0_ref.dtype)
    y12_ref[...] = y[:, split:].astype(y12_ref.dtype)


def _spatial_conv_kernel(xw_ref, w_ref, o_ref, st_ref, *, W, HW):
    """(1,3,3) conv: 3 W-taps are pre-packed into the lane dim of the input,
    the 3 H-taps are accumulated in-kernel with static row slices."""
    co = o_ref.shape[-1]
    acc = jnp.zeros((HW, co), jnp.float32)
    for a in range(3):                                   # H taps (unrolled)
        xs = xw_ref[a * W:a * W + HW, :]                 # ((H*W), 3*Cin)
        acc = acc + jnp.dot(xs, w_ref[a],
                            preferred_element_type=jnp.float32)
    o_ref[...] = acc.astype(o_ref.dtype)
    s = jnp.sum(acc, axis=0, keepdims=True)
    ss = jnp.sum(acc * acc, axis=0, keepdims=True)
    st_ref[...] = jnp.concatenate([s, ss], axis=0)


def _temporal_conv_kernel(z_ref, sc_ref, bi_ref, w_ref, o_ref, st_ref,
                          acc_ref, *, D):
    """(3,1,1) conv accumulated over the innermost ("arbitrary") tap axis.
    The BN+ReLU of the producing spatial conv is fused into the input load.
    The D-padding slabs of the raw input are masked out (equivalent to zero
    padding of the *normalized* input)."""
    d = pl.program_id(1)
    t = pl.program_id(2)

    @pl.when(t == 0)
    def _():
        acc_ref[...] = jnp.zeros_like(acc_ref)

    d_in = d + t                                   # index into D-padded input
    valid = jnp.logical_and(d_in >= 1, d_in <= D)  # slabs 0 and D+1 are pads

    @pl.when(valid)
    def _():
        zn = jnp.maximum(
            z_ref[...].astype(jnp.float32) * sc_ref[...] + bi_ref[...], 0.0)
        acc_ref[...] += jnp.dot(zn.astype(jnp.bfloat16), w_ref[...],
                                preferred_element_type=jnp.float32)

    @pl.when(t == 2)
    def _():
        acc = acc_ref[...]
        o_ref[...] = acc.astype(o_ref.dtype)
        s = jnp.sum(acc, axis=0, keepdims=True)
        ss = jnp.sum(acc * acc, axis=0, keepdims=True)
        st_ref[...] = jnp.concatenate([s, ss], axis=0)


def _final_epilogue_kernel(y0_ref, zt_ref, y3_ref, sct_ref, bit_ref,
                           sc3_ref, bi3_ref, o_ref):
    """Final BN+ReLU of branch1/2 (fused) and branch3, plus channel concat
    into a lane-dense 256-wide f32 output."""
    b12 = jnp.maximum(
        zt_ref[...].astype(jnp.float32) * sct_ref[...] + bit_ref[...], 0.0)
    b3 = jnp.maximum(
        y3_ref[...].astype(jnp.float32) * sc3_ref[...] + bi3_ref[...], 0.0)
    o_ref[...] = jnp.concatenate(
        [y0_ref[...].astype(jnp.float32), b12, b3], axis=-1)


# ------------------------------ pallas_call wrappers ------------------------ #

def _pick_tm(m):
    # Prefer 256 rows: >=2 grid tiles when M>=512 (keeps both v7x TCs busy)
    # while staying well inside VMEM on every generation.
    for tm in (256, 512, 128, 64, 32, 16, 8):
        if m % tm == 0:
            return tm
    return 256


def _pad_rows(a, rows):
    if a.shape[0] == rows:
        return a
    return jnp.pad(a, ((0, rows - a.shape[0]),) + ((0, 0),) * (a.ndim - 1))


def _gemm_with_stats(a2d, w2d, tm):
    Mp, K = a2d.shape
    Co = w2d.shape[1]
    g = Mp // tm
    return pl.pallas_call(
        _gemm_stats_kernel,
        out_shape=(jax.ShapeDtypeStruct((Mp, Co), _BF16),
                   jax.ShapeDtypeStruct((g, 2, Co), _F32)),
        grid=(g,),
        in_specs=[pl.BlockSpec((tm, K), lambda i: (i, 0)),
                  pl.BlockSpec((K, Co), lambda i: (0, 0))],
        out_specs=(pl.BlockSpec((tm, Co), lambda i: (i, 0)),
                   pl.BlockSpec((None, 2, Co), lambda i: (i, 0, 0))),
        compiler_params=pltpu.CompilerParams(
            dimension_semantics=("parallel",)),
    )(a2d, w2d)


def _stem_epilogue(y_raw, scale, bias, split, tm):
    Mp, C = y_raw.shape
    g = Mp // tm
    return pl.pallas_call(
        functools.partial(_stem_epilogue_kernel, split=split),
        out_shape=(jax.ShapeDtypeStruct((Mp, split), _BF16),
                   jax.ShapeDtypeStruct((Mp, C - split), _BF16)),
        grid=(g,),
        in_specs=[pl.BlockSpec((tm, C), lambda i: (i, 0)),
                  pl.BlockSpec((1, C), lambda i: (0, 0)),
                  pl.BlockSpec((1, C), lambda i: (0, 0))],
        out_specs=(pl.BlockSpec((tm, split), lambda i: (i, 0)),
                   pl.BlockSpec((tm, C - split), lambda i: (i, 0))),
        compiler_params=pltpu.CompilerParams(
            dimension_semantics=("parallel",)),
    )(y_raw, scale, bias)


def _spatial_conv(xw, w_sp, H, W):
    N, D, HP2W, C3 = xw.shape
    Co = w_sp.shape[-1]
    HW = H * W
    return pl.pallas_call(
        functools.partial(_spatial_conv_kernel, W=W, HW=HW),
        out_shape=(jax.ShapeDtypeStruct((N, D, HW, Co), _BF16),
                   jax.ShapeDtypeStruct((N, D, 2, Co), _F32)),
        grid=(N, D),
        in_specs=[pl.BlockSpec((None, None, HP2W, C3),
                               lambda n, d: (n, d, 0, 0)),
                  pl.BlockSpec((3, C3, Co), lambda n, d: (0, 0, 0))],
        out_specs=(pl.BlockSpec((None, None, HW, Co),
                                lambda n, d: (n, d, 0, 0)),
                   pl.BlockSpec((None, None, 2, Co),
                                lambda n, d: (n, d, 0, 0))),
        compiler_params=pltpu.CompilerParams(
            dimension_semantics=("parallel", "parallel")),
    )(xw, w_sp)


def _temporal_conv(zpad, scale_s, bias_s, w_t):
    N, Dp2, HW, C = zpad.shape
    D = Dp2 - 2
    Co = w_t.shape[-1]
    return pl.pallas_call(
        functools.partial(_temporal_conv_kernel, D=D),
        out_shape=(jax.ShapeDtypeStruct((N, D, HW, Co), _BF16),
                   jax.ShapeDtypeStruct((N, D, 2, Co), _F32)),
        grid=(N, D, 3),
        in_specs=[pl.BlockSpec((None, None, HW, C),
                               lambda n, d, t: (n, d + t, 0, 0)),
                  pl.BlockSpec((1, C), lambda n, d, t: (0, 0)),
                  pl.BlockSpec((1, C), lambda n, d, t: (0, 0)),
                  pl.BlockSpec((None, C, Co), lambda n, d, t: (t, 0, 0))],
        out_specs=(pl.BlockSpec((None, None, HW, Co),
                                lambda n, d, t: (n, d, 0, 0)),
                   pl.BlockSpec((None, None, 2, Co),
                                lambda n, d, t: (n, d, 0, 0))),
        scratch_shapes=[pltpu.VMEM((HW, Co), _F32)],
        compiler_params=pltpu.CompilerParams(
            dimension_semantics=("parallel", "parallel", "arbitrary")),
    )(zpad, scale_s, bias_s, w_t)


def _final_epilogue(y0, zt, y3, sc_t, bi_t, sc3, bi3, tm):
    Mp = y0.shape[0]
    c0, ct, c3 = y0.shape[1], zt.shape[1], y3.shape[1]
    g = Mp // tm
    return pl.pallas_call(
        _final_epilogue_kernel,
        out_shape=jax.ShapeDtypeStruct((Mp, c0 + ct + c3), _F32),
        grid=(g,),
        in_specs=[pl.BlockSpec((tm, c0), lambda i: (i, 0)),
                  pl.BlockSpec((tm, ct), lambda i: (i, 0)),
                  pl.BlockSpec((tm, c3), lambda i: (i, 0)),
                  pl.BlockSpec((1, ct), lambda i: (0, 0)),
                  pl.BlockSpec((1, ct), lambda i: (0, 0)),
                  pl.BlockSpec((1, c3), lambda i: (0, 0)),
                  pl.BlockSpec((1, c3), lambda i: (0, 0))],
        out_specs=pl.BlockSpec((tm, c0 + ct + c3), lambda i: (i, 0)),
        compiler_params=pltpu.CompilerParams(
            dimension_semantics=("parallel",)),
    )(y0, zt, y3, sc_t, bi_t, sc3, bi3)


# ------------------------------ JAX-side helpers ---------------------------- #

def _fold_bn(stats, gamma, beta, count):
    """Reduce per-tile (sum, sumsq) partials and fold BN into scale/bias."""
    red = jnp.sum(stats.reshape(-1, 2, stats.shape[-1]).astype(_F32), axis=0)
    mean = red[0] / count
    var = jnp.maximum(red[1] / count - mean * mean, 0.0)  # biased variance
    inv = lax.rsqrt(var + _EPS)
    scale = gamma.astype(_F32) * inv
    bias = beta.astype(_F32) - mean * scale
    return scale[None, :], bias[None, :]


def _build_w_im2col(y5):
    """(N,D,H,W,C) -> (N,D,(H+2)*W, 3*C): pack the 3 W-taps into the channel
    (lane) dim, zero-pad H by 1 on both sides and flatten (H+2, W)."""
    N, D, H, W, C = y5.shape
    yw = jnp.pad(y5, ((0, 0), (0, 0), (0, 0), (1, 1), (0, 0)))
    xw = jnp.concatenate([yw[:, :, :, 0:W, :],
                          yw[:, :, :, 1:W + 1, :],
                          yw[:, :, :, 2:W + 2, :]], axis=-1)
    xw = jnp.pad(xw, ((0, 0), (0, 0), (1, 1), (0, 0), (0, 0)))
    return xw.reshape(N, D, (H + 2) * W, 3 * C)


def _prep_spatial_weight(w1, w2):
    """Block-diagonal fused (1,3,3) weight: (3, 3*(Ci1+Ci2), Co1+Co2) bf16."""
    co1, ci1 = w1.shape[0], w1.shape[1]
    co2, ci2 = w2.shape[0], w2.shape[1]
    k = jnp.zeros((3, 3, ci1 + ci2, co1 + co2), _F32)
    k = k.at[:, :, :ci1, :co1].set(jnp.transpose(w1[:, :, 0], (2, 3, 1, 0)))
    k = k.at[:, :, ci1:, co1:].set(jnp.transpose(w2[:, :, 0], (2, 3, 1, 0)))
    return k.reshape(3, 3 * (ci1 + ci2), co1 + co2).astype(_BF16)


def _prep_temporal_weight(w1, w2):
    """Block-diagonal fused (3,1,1) weight: (3, Ci1+Ci2, Co1+Co2) bf16."""
    co1, ci1 = w1.shape[0], w1.shape[1]
    co2, ci2 = w2.shape[0], w2.shape[1]
    k = jnp.zeros((3, ci1 + ci2, co1 + co2), _F32)
    k = k.at[:, :ci1, :co1].set(jnp.transpose(w1[:, :, :, 0, 0], (2, 1, 0)))
    k = k.at[:, ci1:, co1:].set(jnp.transpose(w2[:, :, :, 0, 0], (2, 1, 0)))
    return k.astype(_BF16)


def _maxpool3(x5):
    """3x3x3 / stride 1 / pad 1 max pool over (D,H,W), channel-last input."""
    def pool(v, axis):
        n = v.shape[axis]
        pw = [(0, 0)] * v.ndim
        pw[axis] = (1, 1)
        vp = jnp.pad(v, pw, constant_values=-jnp.inf)
        return jnp.maximum(
            jnp.maximum(lax.slice_in_dim(vp, 0, n, axis=axis),
                        lax.slice_in_dim(vp, 1, n + 1, axis=axis)),
            lax.slice_in_dim(vp, 2, n + 2, axis=axis))
    x5 = pool(x5, 1)
    x5 = pool(x5, 2)
    x5 = pool(x5, 3)
    return x5


# --------------------------------- forward ---------------------------------- #

@jax.jit
def mixed_3b(x, params):
    """Mixed_3b forward. x: (N, 192, D, H, W) f32 -> (N, 256, D, H, W) f32."""
    p = params
    N, Ci, D, H, W = x.shape
    M = N * D * H * W
    tm = _pick_tm(M)
    Mp = ((M + tm - 1) // tm) * tm

    # Channel-last bf16 view (reused by the fused stem GEMM and the maxpool).
    x_cl = jnp.transpose(x, (0, 2, 3, 4, 1)).astype(_BF16)     # (N,D,H,W,192)
    x2d = x_cl.reshape(M, Ci)

    # ---- fused 1x1x1 stem: branch0 + branch1-stem + branch2-stem (192->176) --
    c0 = p["b0_w"].shape[0]
    c1 = p["b1_w0"].shape[0]
    c2 = p["b2_w0"].shape[0]
    w_stem = jnp.concatenate([p["b0_w"].reshape(c0, Ci),
                              p["b1_w0"].reshape(c1, Ci),
                              p["b2_w0"].reshape(c2, Ci)],
                             axis=0).T.astype(_BF16)           # (192, 176)
    g_stem = jnp.concatenate([p["b0_g"], p["b1_g0"], p["b2_g0"]])
    b_stem = jnp.concatenate([p["b0_b"], p["b1_b0"], p["b2_b0"]])

    y_raw, st_stem = _gemm_with_stats(_pad_rows(x2d, Mp), w_stem, tm)
    sc_stem, bi_stem = _fold_bn(st_stem, g_stem, b_stem, M)
    y0, y12 = _stem_epilogue(y_raw, sc_stem, bi_stem, c0, tm)  # (Mp,64),(Mp,112)

    # ---- fused SepConv3d spatial (1,3,3): branch1+branch2 (112 -> 160) -------
    c12 = c1 + c2
    y12_5 = y12[:M].reshape(N, D, H, W, c12)
    xw = _build_w_im2col(y12_5)
    w_sp = _prep_spatial_weight(p["b1_ws"], p["b2_ws"])
    g_s = jnp.concatenate([p["b1_gs"], p["b2_gs"]])
    b_s = jnp.concatenate([p["b1_bs"], p["b2_bs"]])
    z_s_raw, st_s = _spatial_conv(xw, w_sp, H, W)              # (N,D,HW,160)
    sc_s, bi_s = _fold_bn(st_s, g_s, b_s, M)

    # ---- fused SepConv3d temporal (3,1,1): branch1+branch2 (160 -> 160) ------
    zpad = jnp.pad(z_s_raw, ((0, 0), (1, 1), (0, 0), (0, 0)))  # zero D pads
    w_t = _prep_temporal_weight(p["b1_wt"], p["b2_wt"])
    g_t = jnp.concatenate([p["b1_gt"], p["b2_gt"]])
    b_t = jnp.concatenate([p["b1_bt"], p["b2_bt"]])
    z_t_raw, st_t = _temporal_conv(zpad, sc_s, bi_s, w_t)      # (N,D,HW,160)
    sc_t, bi_t = _fold_bn(st_t, g_t, b_t, M)

    # ---- branch3: MaxPool3d (JAX-level, separable) + 1x1x1 conv (192 -> 32) --
    x_pool = _maxpool3(x_cl).reshape(M, Ci)
    c3 = p["b3_w"].shape[0]
    w3 = p["b3_w"].reshape(c3, Ci).T.astype(_BF16)
    y3_raw, st_3 = _gemm_with_stats(_pad_rows(x_pool, Mp), w3, tm)
    sc_3, bi_3 = _fold_bn(st_3, p["b3_g"], p["b3_b"], M)

    # ---- final fused BN+ReLU + channel concat (lane-dense 256-wide output) ---
    zt2d = _pad_rows(z_t_raw.reshape(M, z_t_raw.shape[-1]), Mp)
    out2d = _final_epilogue(y0, zt2d, y3_raw, sc_t, bi_t, sc_3, bi_3, tm)
    out = out2d[:M].reshape(N, D, H, W, -1)
    return jnp.transpose(out, (0, 4, 1, 2, 3))                 # back to NCDHW


# --------------------------------- reference -------------------------------- #

def _ref_bn_relu(y, g, b):
    mean = jnp.mean(y, axis=(0, 2, 3, 4), keepdims=True)
    var = jnp.mean(jnp.square(y - mean), axis=(0, 2, 3, 4), keepdims=True)
    yn = (y - mean) * lax.rsqrt(var + _EPS)
    yn = yn * g.reshape(1, -1, 1, 1, 1) + b.reshape(1, -1, 1, 1, 1)
    return jnp.maximum(yn, 0.0)


def _ref_conv(x, w, padding):
    return lax.conv_general_dilated(
        x, w, window_strides=(1, 1, 1), padding=padding,
        dimension_numbers=("NCDHW", "OIDHW", "NCDHW"))


def _ref_mixed_3b(x, p):
    pad0 = [(0, 0)] * 3
    pad_s = [(0, 0), (1, 1), (1, 1)]
    pad_t = [(1, 1), (0, 0), (0, 0)]
    x0 = _ref_bn_relu(_ref_conv(x, p["b0_w"], pad0), p["b0_g"], p["b0_b"])
    t1 = _ref_bn_relu(_ref_conv(x, p["b1_w0"], pad0), p["b1_g0"], p["b1_b0"])
    t1 = _ref_bn_relu(_ref_conv(t1, p["b1_ws"], pad_s), p["b1_gs"], p["b1_bs"])
    x1 = _ref_bn_relu(_ref_conv(t1, p["b1_wt"], pad_t), p["b1_gt"], p["b1_bt"])
    t2 = _ref_bn_relu(_ref_conv(x, p["b2_w0"], pad0), p["b2_g0"], p["b2_b0"])
    t2 = _ref_bn_relu(_ref_conv(t2, p["b2_ws"], pad_s), p["b2_gs"], p["b2_bs"])
    x2 = _ref_bn_relu(_ref_conv(t2, p["b2_wt"], pad_t), p["b2_gt"], p["b2_bt"])
    xp = lax.reduce_window(x, -jnp.inf, lax.max, (1, 1, 3, 3, 3),
                           (1, 1, 1, 1, 1),
                           [(0, 0), (0, 0), (1, 1), (1, 1), (1, 1)])
    x3 = _ref_bn_relu(_ref_conv(xp, p["b3_w"], pad0), p["b3_g"], p["b3_b"])
    return jnp.concatenate([x0, x1, x2, x3], axis=1)


# ----------------------------------- main ------------------------------------ #

if __name__ == "__main__":
    N, Ci, D, H, W = 2, 192, 4, 8, 8          # Cin=192 fixed by the module

    key = jax.random.PRNGKey(0)
    keys = iter(jax.random.split(key, 32))

    def conv_w(k, co, ci, kd, kh, kw):
        fan = ci * kd * kh * kw
        return jax.random.normal(k, (co, ci, kd, kh, kw), jnp.float32) / jnp.sqrt(fan)

    def bn(kg, kb, c):
        return (1.0 + 0.1 * jax.random.normal(kg, (c,), jnp.float32),
                0.1 * jax.random.normal(kb, (c,), jnp.float32))

    params = {}
    params["b0_w"] = conv_w(next(keys), 64, 192, 1, 1, 1)
    params["b0_g"], params["b0_b"] = bn(next(keys), next(keys), 64)
    params["b1_w0"] = conv_w(next(keys), 96, 192, 1, 1, 1)
    params["b1_g0"], params["b1_b0"] = bn(next(keys), next(keys), 96)
    params["b1_ws"] = conv_w(next(keys), 128, 96, 1, 3, 3)
    params["b1_gs"], params["b1_bs"] = bn(next(keys), next(keys), 128)
    params["b1_wt"] = conv_w(next(keys), 128, 128, 3, 1, 1)
    params["b1_gt"], params["b1_bt"] = bn(next(keys), next(keys), 128)
    params["b2_w0"] = conv_w(next(keys), 16, 192, 1, 1, 1)
    params["b2_g0"], params["b2_b0"] = bn(next(keys), next(keys), 16)
    params["b2_ws"] = conv_w(next(keys), 32, 16, 1, 3, 3)
    params["b2_gs"], params["b2_bs"] = bn(next(keys), next(keys), 32)
    params["b2_wt"] = conv_w(next(keys), 32, 32, 3, 1, 1)
    params["b2_gt"], params["b2_bt"] = bn(next(keys), next(keys), 32)
    params["b3_w"] = conv_w(next(keys), 32, 192, 1, 1, 1)
    params["b3_g"], params["b3_b"] = bn(next(keys), next(keys), 32)

    x = jax.random.normal(next(keys), (N, Ci, D, H, W), jnp.float32)

    out = jax.block_until_ready(mixed_3b(x, params))
    ref = _ref_mixed_3b(x, params)

    assert out.shape == (N, 256, D, H, W), out.shape
    # bf16 MXU operands + bf16 intermediates vs an f32 reference: outputs are
    # post-BN (O(1) scale), so a 1e-1 abs/rel envelope comfortably covers the
    # numeric noise while still catching any structural bug.
    assert bool(jnp.allclose(out, ref, atol=1e-1, rtol=1e-1)), float(
        jnp.max(jnp.abs(out - ref)))

    print("KERNEL_OK")
</pallas_src>

<mosaic_0001>
module attributes {stable_mosaic.version = 11 : i64} {
  func.func @_gemm_stats_kernel(%arg0: i32, %arg1: memref<256x192xbf16, #tpu.memory_space<vmem>>, %arg2: memref<192x176xbf16, #tpu.memory_space<vmem>>, %arg3: memref<256x176xbf16, #tpu.memory_space<vmem>>, %arg4: memref<1x2x176xf32, #tpu.memory_space<vmem>>) attributes {dimension_semantics = [#tpu.dimension_semantics<parallel>], iteration_bounds = array<i64: 2>, scalar_prefetch = 0 : i64, scratch_operands = 0 : i64, tpu.core_type = #tpu.core_type<tc>, window_params = [{transform_indices = @transform_0, window_bounds = array<i64: 256, 192>}, {pipeline_mode = #tpu.pipeline_mode<synchronous>, transform_indices = @transform_1, window_bounds = array<i64: 192, 176>}, {transform_indices = @transform_2, window_bounds = array<i64: 256, 176>}, {transform_indices = @transform_3, window_bounds = array<i64: 1, 2, 176>}]} {
    %c0 = arith.constant 0 : index
    %c0_0 = arith.constant 0 : index
    %0 = vector.load %arg1[%c0, %c0_0] : memref<256x192xbf16, #tpu.memory_space<vmem>>, vector<256x192xbf16>
    %c0_1 = arith.constant 0 : index
    %c0_2 = arith.constant 0 : index
    %1 = vector.load %arg2[%c0_1, %c0_2] : memref<192x176xbf16, #tpu.memory_space<vmem>>, vector<192x176xbf16>
    %cst = arith.constant dense<0.000000e+00> : vector<256x176xf32>
    %2 = tpu.matmul %0, %1, %cst {dimension_numbers = #tpu.dot_dimension_numbers<[1], [0], [0], [1], [0, 0, 1, 1], [], []>} : vector<256x192xbf16>, vector<192x176xbf16>, vector<256x176xf32> -> vector<256x176xf32>
    %3 = arith.truncf %2 : vector<256x176xf32> to vector<256x176xbf16>
    %c0_3 = arith.constant 0 : index
    %c0_4 = arith.constant 0 : index
    %4 = vector.load %arg3[%c0_3, %c0_4] : memref<256x176xbf16, #tpu.memory_space<vmem>>, vector<256x176xbf16>
    tpu.vector_store %arg3[%c0_3, %c0_4], %3 {strides = array<i32>} : memref<256x176xbf16, #tpu.memory_space<vmem>>, vector<256x176xbf16>,
    %cst_5 = arith.constant dense<0.000000e+00> : vector<176xf32>
    %5 = vector.multi_reduction <add>, %2, %cst_5 [0] : vector<256x176xf32> to vector<176xf32>
    %6 = vector.shape_cast %5 : vector<176xf32> to vector<1x176xf32>
    %7 = arith.mulf %2, %2 : vector<256x176xf32>
    %cst_6 = arith.constant dense<0.000000e+00> : vector<176xf32>
    %8 = vector.multi_reduction <add>, %7, %cst_6 [0] : vector<256x176xf32> to vector<176xf32>
    %9 = vector.shape_cast %8 : vector<176xf32> to vector<1x176xf32>
    %10 = tpu.concatenate %6, %9 in 0 : vector<1x176xf32>, vector<1x176xf32> -> vector<2x176xf32>
    %c0_7 = arith.constant 0 : index
    %c0_8 = arith.constant 0 : index
    %c0_9 = arith.constant 0 : index
    %11 = vector.load %arg4[%c0_7, %c0_8, %c0_9] : memref<1x2x176xf32, #tpu.memory_space<vmem>>, vector<1x2x176xf32>
    %12 = vector.shape_cast %11 : vector<1x2x176xf32> to vector<2x176xf32>
    %13 = vector.shape_cast %10 : vector<2x176xf32> to vector<1x2x176xf32>
    tpu.vector_store %arg4[%c0_7, %c0_8, %c0_9], %13 {strides = array<i32>} : memref<1x2x176xf32, #tpu.memory_space<vmem>>, vector<1x2x176xf32>,
    return
  }
  func.func @transform_0(%arg0: i32) -> (i32, i32) {
    %c0_i32 = arith.constant 0 : i32
    %c0_i32_0 = arith.constant 0 : i32
    return %arg0, %c0_i32 : i32, i32
  }
  func.func @transform_1(%arg0: i32) -> (i32, i32) {
    %c0_i32 = arith.constant 0 : i32
    %c0_i32_0 = arith.constant 0 : i32
    %c0_i32_1 = arith.constant 0 : i32
    return %c0_i32, %c0_i32_0 : i32, i32
  }
  func.func @transform_2(%arg0: i32) -> (i32, i32) {
    %c0_i32 = arith.constant 0 : i32
    %c0_i32_0 = arith.constant 0 : i32
    return %arg0, %c0_i32 : i32, i32
  }
  func.func @transform_3(%arg0: i32) -> (i32, i32, i32) {
    %c0_i32 = arith.constant 0 : i32
    %c0_i32_0 = arith.constant 0 : i32
    %c0_i32_1 = arith.constant 0 : i32
    return %arg0, %c0_i32, %c0_i32_0 : i32, i32, i32
  }
}

module attributes {stable_mosaic.version = 11 : i64} {
  func.func @_stem_epilogue_kernel(%arg0: i32, %arg1: memref<256x176xbf16, #tpu.memory_space<vmem>>, %arg2: memref<1x176xf32, #tpu.memory_space<vmem>>, %arg3: memref<1x176xf32, #tpu.memory_space<vmem>>, %arg4: memref<256x64xbf16, #tpu.memory_space<vmem>>, %arg5: memref<256x112xbf16, #tpu.memory_space<vmem>>) attributes {dimension_semantics = [#tpu.dimension_semantics<parallel>], iteration_bounds = array<i64: 2>, scalar_prefetch = 0 : i64, scratch_operands = 0 : i64, tpu.core_type = #tpu.core_type<tc>, window_params = [{transform_indices = @transform_0, window_bounds = array<i64: 256, 176>}, {pipeline_mode = #tpu.pipeline_mode<synchronous>, transform_indices = @transform_1, window_bounds = array<i64: 1, 176>}, {pipeline_mode = #tpu.pipeline_mode<synchronous>, transform_indices = @transform_2, window_bounds = array<i64: 1, 176>}, {transform_indices = @transform_3, window_bounds = array<i64: 256, 64>}, {transform_indices = @transform_4, window_bounds = array<i64: 256, 112>}]} {
    %c0 = arith.constant 0 : index
    %c0_0 = arith.constant 0 : index
    %0 = vector.load %arg1[%c0, %c0_0] : memref<256x176xbf16, #tpu.memory_space<vmem>>, vector<256x176xbf16>
    %1 = arith.extf %0 : vector<256x176xbf16> to vector<256x176xf32>
    %c0_1 = arith.constant 0 : index
    %c0_2 = arith.constant 0 : index
    %2 = vector.load %arg2[%c0_1, %c0_2] : memref<1x176xf32, #tpu.memory_space<vmem>>, vector<1x176xf32>
    %3 = vector.broadcast %2 : vector<1x176xf32> to vector<256x176xf32>
    %4 = arith.mulf %1, %3 : vector<256x176xf32>
    %c0_3 = arith.constant 0 : index
    %c0_4 = arith.constant 0 : index
    %5 = vector.load %arg3[%c0_3, %c0_4] : memref<1x176xf32, #tpu.memory_space<vmem>>, vector<1x176xf32>
    %6 = vector.broadcast %5 : vector<1x176xf32> to vector<256x176xf32>
    %7 = arith.addf %4, %6 : vector<256x176xf32>
    %cst = arith.constant 0.000000e+00 : f32
    %8 = vector.broadcast %cst : f32 to vector<256x176xf32>
    %9 = arith.maximumf %7, %8 : vector<256x176xf32>
    %10 = vector.extract_strided_slice %9 {offsets = [0, 0], sizes = [256, 64], strides = [1, 1]} : vector<256x176xf32> to vector<256x64xf32>
    %11 = arith.truncf %10 : vector<256x64xf32> to vector<256x64xbf16>
    %c0_5 = arith.constant 0 : index
    %c0_6 = arith.constant 0 : index
    %12 = vector.load %arg4[%c0_5, %c0_6] : memref<256x64xbf16, #tpu.memory_space<vmem>>, vector<256x64xbf16>
    tpu.vector_store %arg4[%c0_5, %c0_6], %11 {strides = array<i32>} : memref<256x64xbf16, #tpu.memory_space<vmem>>, vector<256x64xbf16>,
    %13 = vector.extract_strided_slice %9 {offsets = [0, 64], sizes = [256, 112], strides = [1, 1]} : vector<256x176xf32> to vector<256x112xf32>
    %14 = arith.truncf %13 : vector<256x112xf32> to vector<256x112xbf16>
    %c0_7 = arith.constant 0 : index
    %c0_8 = arith.constant 0 : index
    %15 = vector.load %arg5[%c0_7, %c0_8] : memref<256x112xbf16, #tpu.memory_space<vmem>>, vector<256x112xbf16>
    tpu.vector_store %arg5[%c0_7, %c0_8], %14 {strides = array<i32>} : memref<256x112xbf16, #tpu.memory_space<vmem>>, vector<256x112xbf16>,
    return
  }
  func.func @transform_0(%arg0: i32) -> (i32, i32) {
    %c0_i32 = arith.constant 0 : i32
    %c0_i32_0 = arith.constant 0 : i32
    return %arg0, %c0_i32 : i32, i32
  }
  func.func @transform_1(%arg0: i32) -> (i32, i32) {
    %c0_i32 = arith.constant 0 : i32
    %c0_i32_0 = arith.constant 0 : i32
    %c0_i32_1 = arith.constant 0 : i32
    return %c0_i32, %c0_i32_0 : i32, i32
  }
  func.func @transform_2(%arg0: i32) -> (i32, i32) {
    %c0_i32 = arith.constant 0 : i32
    %c0_i32_0 = arith.constant 0 : i32
    %c0_i32_1 = arith.constant 0 : i32
    return %c0_i32, %c0_i32_0 : i32, i32
  }
  func.func @transform_3(%arg0: i32) -> (i32, i32) {
    %c0_i32 = arith.constant 0 : i32
    %c0_i32_0 = arith.constant 0 : i32
    return %arg0, %c0_i32 : i32, i32
  }
  func.func @transform_4(%arg0: i32) -> (i32, i32) {
    %c0_i32 = arith.constant 0 : i32
    %c0_i32_0 = arith.constant 0 : i32
    return %arg0, %c0_i32 : i32, i32
  }
}

module attributes {stable_mosaic.version = 11 : i64} {
  func.func @_spatial_conv_kernel(%arg0: i32, %arg1: i32, %arg2: memref<1x1x80x336xbf16, #tpu.memory_space<vmem>>, %arg3: memref<3x336x160xbf16, #tpu.memory_space<vmem>>, %arg4: memref<1x1x64x160xbf16, #tpu.memory_space<vmem>>, %arg5: memref<1x1x2x160xf32, #tpu.memory_space<vmem>>) attributes {dimension_semantics = [#tpu.dimension_semantics<parallel>, #tpu.dimension_semantics<parallel>], iteration_bounds = array<i64: 2, 4>, scalar_prefetch = 0 : i64, scratch_operands = 0 : i64, tpu.core_type = #tpu.core_type<tc>, window_params = [{transform_indices = @transform_0, window_bounds = array<i64: 1, 1, 80, 336>}, {pipeline_mode = #tpu.pipeline_mode<synchronous>, transform_indices = @transform_1, window_bounds = array<i64: 3, 336, 160>}, {transform_indices = @transform_2, window_bounds = array<i64: 1, 1, 64, 160>}, {transform_indices = @transform_3, window_bounds = array<i64: 1, 1, 2, 160>}]} {
    %cst = arith.constant 0.000000e+00 : f32
    %0 = vector.broadcast %cst : f32 to vector<64x160xf32>
    %c0 = arith.constant 0 : index
    %c0_0 = arith.constant 0 : index
    %c0_1 = arith.constant 0 : index
    %c0_2 = arith.constant 0 : index
    %1 = vector.load %arg2[%c0, %c0_0, %c0_1, %c0_2] : memref<1x1x80x336xbf16, #tpu.memory_space<vmem>>, vector<1x1x64x336xbf16>
    %2 = vector.shape_cast %1 : vector<1x1x64x336xbf16> to vector<64x336xbf16>
    %c0_3 = arith.constant 0 : index
    %c0_4 = arith.constant 0 : index
    %c0_5 = arith.constant 0 : index
    %3 = vector.load %arg3[%c0_3, %c0_4, %c0_5] : memref<3x336x160xbf16, #tpu.memory_space<vmem>>, vector<1x336x160xbf16>
    %4 = vector.shape_cast %3 : vector<1x336x160xbf16> to vector<336x160xbf16>
    %cst_6 = arith.constant dense<0.000000e+00> : vector<64x160xf32>
    %5 = tpu.matmul %2, %4, %cst_6 {dimension_numbers = #tpu.dot_dimension_numbers<[1], [0], [0], [1], [0, 0, 1, 1], [], []>} : vector<64x336xbf16>, vector<336x160xbf16>, vector<64x160xf32> -> vector<64x160xf32>
    %6 = arith.addf %0, %5 : vector<64x160xf32>
    %c0_7 = arith.constant 0 : index
    %c0_8 = arith.constant 0 : index
    %c8 = arith.constant 8 : index
    %c0_9 = arith.constant 0 : index
    %7 = vector.load %arg2[%c0_7, %c0_8, %c8, %c0_9] : memref<1x1x80x336xbf16, #tpu.memory_space<vmem>>, vector<1x1x64x336xbf16>
    %8 = vector.shape_cast %7 : vector<1x1x64x336xbf16> to vector<64x336xbf16>
    %c1 = arith.constant 1 : index
    %c0_10 = arith.constant 0 : index
    %c0_11 = arith.constant 0 : index
    %9 = vector.load %arg3[%c1, %c0_10, %c0_11] : memref<3x336x160xbf16, #tpu.memory_space<vmem>>, vector<1x336x160xbf16>
    %10 = vector.shape_cast %9 : vector<1x336x160xbf16> to vector<336x160xbf16>
    %cst_12 = arith.constant dense<0.000000e+00> : vector<64x160xf32>
    %11 = tpu.matmul %8, %10, %cst_12 {dimension_numbers = #tpu.dot_dimension_numbers<[1], [0], [0], [1], [0, 0, 1, 1], [], []>} : vector<64x336xbf16>, vector<336x160xbf16>, vector<64x160xf32> -> vector<64x160xf32>
    %12 = arith.addf %6, %11 : vector<64x160xf32>
    %c0_13 = arith.constant 0 : index
    %c0_14 = arith.constant 0 : index
    %c16 = arith.constant 16 : index
    %c0_15 = arith.constant 0 : index
    %13 = vector.load %arg2[%c0_13, %c0_14, %c16, %c0_15] : memref<1x1x80x336xbf16, #tpu.memory_space<vmem>>, vector<1x1x64x336xbf16>
    %14 = vector.shape_cast %13 : vector<1x1x64x336xbf16> to vector<64x336xbf16>
    %c2 = arith.constant 2 : index
    %c0_16 = arith.constant 0 : index
    %c0_17 = arith.constant 0 : index
    %15 = vector.load %arg3[%c2, %c0_16, %c0_17] : memref<3x336x160xbf16, #tpu.memory_space<vmem>>, vector<1x336x160xbf16>
    %16 = vector.shape_cast %15 : vector<1x336x160xbf16> to vector<336x160xbf16>
    %cst_18 = arith.constant dense<0.000000e+00> : vector<64x160xf32>
    %17 = tpu.matmul %14, %16, %cst_18 {dimension_numbers = #tpu.dot_dimension_numbers<[1], [0], [0], [1], [0, 0, 1, 1], [], []>} : vector<64x336xbf16>, vector<336x160xbf16>, vector<64x160xf32> -> vector<64x160xf32>
    %18 = arith.addf %12, %17 : vector<64x160xf32>
    %19 = arith.truncf %18 : vector<64x160xf32> to vector<64x160xbf16>
    %c0_19 = arith.constant 0 : index
    %c0_20 = arith.constant 0 : index
    %c0_21 = arith.constant 0 : index
    %c0_22 = arith.constant 0 : index
    %20 = vector.load %arg4[%c0_19, %c0_20, %c0_21, %c0_22] : memref<1x1x64x160xbf16, #tpu.memory_space<vmem>>, vector<1x1x64x160xbf16>
    %21 = vector.shape_cast %20 : vector<1x1x64x160xbf16> to vector<64x160xbf16>
    %22 = vector.shape_cast %19 : vector<64x160xbf16> to vector<1x1x64x160xbf16>
    tpu.vector_store %arg4[%c0_19, %c0_20, %c0_21, %c0_22], %22 {strides = array<i32>} : memref<1x1x64x160xbf16, #tpu.memory_space<vmem>>, vector<1x1x64x160xbf16>,
    %cst_23 = arith.constant dense<0.000000e+00> : vector<160xf32>
    %23 = vector.multi_reduction <add>, %18, %cst_23 [0] : vector<64x160xf32> to vector<160xf32>
    %24 = vector.shape_cast %23 : vector<160xf32> to vector<1x160xf32>
    %25 = arith.mulf %18, %18 : vector<64x160xf32>
    %cst_24 = arith.constant dense<0.000000e+00> : vector<160xf32>
    %26 = vector.multi_reduction <add>, %25, %cst_24 [0] : vector<64x160xf32> to vector<160xf32>
    %27 = vector.shape_cast %26 : vector<160xf32> to vector<1x160xf32>
    %28 = tpu.concatenate %24, %27 in 0 : vector<1x160xf32>, vector<1x160xf32> -> vector<2x160xf32>
    %c0_25 = arith.constant 0 : index
    %c0_26 = arith.constant 0 : index
    %c0_27 = arith.constant 0 : index
    %c0_28 = arith.constant 0 : index
    %29 = vector.load %arg5[%c0_25, %c0_26, %c0_27, %c0_28] : memref<1x1x2x160xf32, #tpu.memory_space<vmem>>, vector<1x1x2x160xf32>
    %30 = vector.shape_cast %29 : vector<1x1x2x160xf32> to vector<2x160xf32>
    %31 = vector.shape_cast %28 : vector<2x160xf32> to vector<1x1x2x160xf32>
    tpu.vector_store %arg5[%c0_25, %c0_26, %c0_27, %c0_28], %31 {strides = array<i32>} : memref<1x1x2x160xf32, #tpu.memory_space<vmem>>, vector<1x1x2x160xf32>,
    return
  }
  func.func @transform_0(%arg0: i32, %arg1: i32) -> (i32, i32, i32, i32) {
    %c0_i32 = arith.constant 0 : i32
    %c0_i32_0 = arith.constant 0 : i32
    %c0_i32_1 = arith.constant 0 : i32
    return %arg0, %arg1, %c0_i32, %c0_i32_0 : i32, i32, i32, i32
  }
  func.func @transform_1(%arg0: i32, %arg1: i32) -> (i32, i32, i32) {
    %c0_i32 = arith.constant 0 : i32
    %c0_i32_0 = arith.constant 0 : i32
    %c0_i32_1 = arith.constant 0 : i32
    %c0_i32_2 = arith.constant 0 : i32
    return %c0_i32, %c0_i32_0, %c0_i32_1 : i32, i32, i32
  }
  func.func @transform_2(%arg0: i32, %arg1: i32) -> (i32, i32, i32, i32) {
    %c0_i32 = arith.constant 0 : i32
    %c0_i32_0 = arith.constant 0 : i32
    %c0_i32_1 = arith.constant 0 : i32
    return %arg0, %arg1, %c0_i32, %c0_i32_0 : i32, i32, i32, i32
  }
  func.func @transform_3(%arg0: i32, %arg1: i32) -> (i32, i32, i32, i32) {
    %c0_i32 = arith.constant 0 : i32
    %c0_i32_0 = arith.constant 0 : i32
    %c0_i32_1 = arith.constant 0 : i32
    return %arg0, %arg1, %c0_i32, %c0_i32_0 : i32, i32, i32, i32
  }
}

module attributes {stable_mosaic.version = 11 : i64} {
  func.func @_temporal_conv_kernel(%arg0: i32, %arg1: i32, %arg2: i32, %arg3: memref<1x1x64x160xbf16, #tpu.memory_space<vmem>>, %arg4: memref<1x160xf32, #tpu.memory_space<vmem>>, %arg5: memref<1x160xf32, #tpu.memory_space<vmem>>, %arg6: memref<1x160x160xbf16, #tpu.memory_space<vmem>>, %arg7: memref<1x1x64x160xbf16, #tpu.memory_space<vmem>>, %arg8: memref<1x1x2x160xf32, #tpu.memory_space<vmem>>, %arg9: memref<64x160xf32, #tpu.memory_space<vmem>>) attributes {dimension_semantics = [#tpu.dimension_semantics<parallel>, #tpu.dimension_semantics<parallel>, #tpu.dimension_semantics<arbitrary>], iteration_bounds = array<i64: 2, 4, 3>, scalar_prefetch = 0 : i64, scratch_operands = 1 : i64, tpu.core_type = #tpu.core_type<tc>, window_params = [{transform_indices = @transform_0, window_bounds = array<i64: 1, 1, 64, 160>}, {pipeline_mode = #tpu.pipeline_mode<synchronous>, transform_indices = @transform_1, window_bounds = array<i64: 1, 160>}, {pipeline_mode = #tpu.pipeline_mode<synchronous>, transform_indices = @transform_2, window_bounds = array<i64: 1, 160>}, {transform_indices = @transform_3, window_bounds = array<i64: 1, 160, 160>}, {transform_indices = @transform_4, window_bounds = array<i64: 1, 1, 64, 160>}, {transform_indices = @transform_5, window_bounds = array<i64: 1, 1, 2, 160>}]} {
    %c0_i32 = arith.constant 0 : i32
    %0 = arith.cmpi eq, %arg2, %c0_i32 : i32
    %1 = arith.extui %0 : i1 to i32
    %c0_i32_0 = arith.constant 0 : i32
    %2 = arith.cmpi ne, %1, %c0_i32_0 : i32
    scf.if %2 {
      %cst = arith.constant 0.000000e+00 : f32
      %12 = vector.broadcast %cst : f32 to vector<64x160xf32>
      %c0 = arith.constant 0 : index
      %c0_3 = arith.constant 0 : index
      %13 = vector.load %arg9[%c0, %c0_3] : memref<64x160xf32, #tpu.memory_space<vmem>>, vector<64x160xf32>
      tpu.vector_store %arg9[%c0, %c0_3], %12 {strides = array<i32>} : memref<64x160xf32, #tpu.memory_space<vmem>>, vector<64x160xf32>,
    } else {
    }
    %3 = arith.addi %arg1, %arg2 : i32
    %c1_i32 = arith.constant 1 : i32
    %4 = arith.cmpi sge, %3, %c1_i32 : i32
    %c4_i32 = arith.constant 4 : i32
    %5 = arith.cmpi sle, %3, %c4_i32 : i32
    %6 = arith.andi %4, %5 : i1
    %7 = arith.extui %6 : i1 to i32
    %c0_i32_1 = arith.constant 0 : i32
    %8 = arith.cmpi ne, %7, %c0_i32_1 : i32
    scf.if %8 {
      %c0 = arith.constant 0 : index
      %c0_3 = arith.constant 0 : index
      %c0_4 = arith.constant 0 : index
      %c0_5 = arith.constant 0 : index
      %12 = vector.load %arg3[%c0, %c0_3, %c0_4, %c0_5] : memref<1x1x64x160xbf16, #tpu.memory_space<vmem>>, vector<1x1x64x160xbf16>
      %13 = vector.shape_cast %12 : vector<1x1x64x160xbf16> to vector<64x160xbf16>
      %14 = arith.extf %13 : vector<64x160xbf16> to vector<64x160xf32>
      %c0_6 = arith.constant 0 : index
      %c0_7 = arith.constant 0 : index
      %15 = vector.load %arg4[%c0_6, %c0_7] : memref<1x160xf32, #tpu.memory_space<vmem>>, vector<1x160xf32>
      %16 = vector.broadcast %15 : vector<1x160xf32> to vector<64x160xf32>
      %17 = arith.mulf %14, %16 : vector<64x160xf32>
      %c0_8 = arith.constant 0 : index
      %c0_9 = arith.constant 0 : index
      %18 = vector.load %arg5[%c0_8, %c0_9] : memref<1x160xf32, #tpu.memory_space<vmem>>, vector<1x160xf32>
      %19 = vector.broadcast %18 : vector<1x160xf32> to vector<64x160xf32>
      %20 = arith.addf %17, %19 : vector<64x160xf32>
      %cst = arith.constant 0.000000e+00 : f32
      %21 = vector.broadcast %cst : f32 to vector<64x160xf32>
      %22 = arith.maximumf %20, %21 : vector<64x160xf32>
      %c0_10 = arith.constant 0 : index
      %c0_11 = arith.constant 0 : index
      %23 = vector.load %arg9[%c0_10, %c0_11] : memref<64x160xf32, #tpu.memory_space<vmem>>, vector<64x160xf32>
      %24 = arith.truncf %22 : vector<64x160xf32> to vector<64x160xbf16>
      %c0_12 = arith.constant 0 : index
      %c0_13 = arith.constant 0 : index
      %c0_14 = arith.constant 0 : index
      %25 = vector.load %arg6[%c0_12, %c0_13, %c0_14] : memref<1x160x160xbf16, #tpu.memory_space<vmem>>, vector<1x160x160xbf16>
      %26 = vector.shape_cast %25 : vector<1x160x160xbf16> to vector<160x160xbf16>
      %cst_15 = arith.constant dense<0.000000e+00> : vector<64x160xf32>
      %27 = tpu.matmul %24, %26, %cst_15 {dimension_numbers = #tpu.dot_dimension_numbers<[1], [0], [0], [1], [0, 0, 1, 1], [], []>} : vector<64x160xbf16>, vector<160x160xbf16>, vector<64x160xf32> -> vector<64x160xf32>
      %28 = arith.addf %23, %27 : vector<64x160xf32>
      %c0_16 = arith.constant 0 : index
      %c0_17 = arith.constant 0 : index
      %29 = vector.load %arg9[%c0_16, %c0_17] : memref<64x160xf32, #tpu.memory_space<vmem>>, vector<64x160xf32>
      tpu.vector_store %arg9[%c0_16, %c0_17], %28 {strides = array<i32>} : memref<64x160xf32, #tpu.memory_space<vmem>>, vector<64x160xf32>,
    } else {
    }
    %c2_i32 = arith.constant 2 : i32
    %9 = arith.cmpi eq, %arg2, %c2_i32 : i32
    %10 = arith.extui %9 : i1 to i32
    %c0_i32_2 = arith.constant 0 : i32
    %11 = arith.cmpi ne, %10, %c0_i32_2 : i32
    scf.if %11 {
      %c0 = arith.constant 0 : index
      %c0_3 = arith.constant 0 : index
      %12 = vector.load %arg9[%c0, %c0_3] : memref<64x160xf32, #tpu.memory_space<vmem>>, vector<64x160xf32>
      %13 = arith.truncf %12 : vector<64x160xf32> to vector<64x160xbf16>
      %c0_4 = arith.constant 0 : index
      %c0_5 = arith.constant 0 : index
      %c0_6 = arith.constant 0 : index
      %c0_7 = arith.constant 0 : index
      %14 = vector.load %arg7[%c0_4, %c0_5, %c0_6, %c0_7] : memref<1x1x64x160xbf16, #tpu.memory_space<vmem>>, vector<1x1x64x160xbf16>
      %15 = vector.shape_cast %14 : vector<1x1x64x160xbf16> to vector<64x160xbf16>
      %16 = vector.shape_cast %13 : vector<64x160xbf16> to vector<1x1x64x160xbf16>
      tpu.vector_store %arg7[%c0_4, %c0_5, %c0_6, %c0_7], %16 {strides = array<i32>} : memref<1x1x64x160xbf16, #tpu.memory_space<vmem>>, vector<1x1x64x160xbf16>,
      %cst = arith.constant dense<0.000000e+00> : vector<160xf32>
      %17 = vector.multi_reduction <add>, %12, %cst [0] : vector<64x160xf32> to vector<160xf32>
      %18 = vector.shape_cast %17 : vector<160xf32> to vector<1x160xf32>
      %19 = arith.mulf %12, %12 : vector<64x160xf32>
      %cst_8 = arith.constant dense<0.000000e+00> : vector<160xf32>
      %20 = vector.multi_reduction <add>, %19, %cst_8 [0] : vector<64x160xf32> to vector<160xf32>
      %21 = vector.shape_cast %20 : vector<160xf32> to vector<1x160xf32>
      %22 = tpu.concatenate %18, %21 in 0 : vector<1x160xf32>, vector<1x160xf32> -> vector<2x160xf32>
      %c0_9 = arith.constant 0 : index
      %c0_10 = arith.constant 0 : index
      %c0_11 = arith.constant 0 : index
      %c0_12 = arith.constant 0 : index
      %23 = vector.load %arg8[%c0_9, %c0_10, %c0_11, %c0_12] : memref<1x1x2x160xf32, #tpu.memory_space<vmem>>, vector<1x1x2x160xf32>
      %24 = vector.shape_cast %23 : vector<1x1x2x160xf32> to vector<2x160xf32>
      %25 = vector.shape_cast %22 : vector<2x160xf32> to vector<1x1x2x160xf32>
      tpu.vector_store %arg8[%c0_9, %c0_10, %c0_11, %c0_12], %25 {strides = array<i32>} : memref<1x1x2x160xf32, #tpu.memory_space<vmem>>, vector<1x1x2x160xf32>,
    } else {
    }
    return
  }
  func.func @transform_0(%arg0: i32, %arg1: i32, %arg2: i32) -> (i32, i32, i32, i32) {
    %0 = arith.addi %arg1, %arg2 : i32
    %c0_i32 = arith.constant 0 : i32
    %c0_i32_0 = arith.constant 0 : i32
    %c0_i32_1 = arith.constant 0 : i32
    return %arg0, %0, %c0_i32, %c0_i32_0 : i32, i32, i32, i32
  }
  func.func @transform_1(%arg0: i32, %arg1: i32, %arg2: i32) -> (i32, i32) {
    %c0_i32 = arith.constant 0 : i32
    %c0_i32_0 = arith.constant 0 : i32
    %c0_i32_1 = arith.constant 0 : i32
    return %c0_i32, %c0_i32_0 : i32, i32
  }
  func.func @transform_2(%arg0: i32, %arg1: i32, %arg2: i32) -> (i32, i32) {
    %c0_i32 = arith.constant 0 : i32
    %c0_i32_0 = arith.constant 0 : i32
    %c0_i32_1 = arith.constant 0 : i32
    return %c0_i32, %c0_i32_0 : i32, i32
  }
  func.func @transform_3(%arg0: i32, %arg1: i32, %arg2: i32) -> (i32, i32, i32) {
    %c0_i32 = arith.constant 0 : i32
    %c0_i32_0 = arith.constant 0 : i32
    %c0_i32_1 = arith.constant 0 : i32
    return %arg2, %c0_i32, %c0_i32_0 : i32, i32, i32
  }
  func.func @transform_4(%arg0: i32, %arg1: i32, %arg2: i32) -> (i32, i32, i32, i32) {
    %c0_i32 = arith.constant 0 : i32
    %c0_i32_0 = arith.constant 0 : i32
    %c0_i32_1 = arith.constant 0 : i32
    return %arg0, %arg1, %c0_i32, %c0_i32_0 : i32, i32, i32, i32
  }
  func.func @transform_5(%arg0: i32, %arg1: i32, %arg2: i32) -> (i32, i32, i32, i32) {
    %c0_i32 = arith.constant 0 : i32
    %c0_i32_0 = arith.constant 0 : i32
    %c0_i32_1 = arith.constant 0 : i32
    return %arg0, %arg1, %c0_i32, %c0_i32_0 : i32, i32, i32, i32
  }
}

module attributes {stable_mosaic.version = 11 : i64} {
  func.func @_gemm_stats_kernel(%arg0: i32, %arg1: memref<256x192xbf16, #tpu.memory_space<vmem>>, %arg2: memref<192x32xbf16, #tpu.memory_space<vmem>>, %arg3: memref<256x32xbf16, #tpu.memory_space<vmem>>, %arg4: memref<1x2x32xf32, #tpu.memory_space<vmem>>) attributes {dimension_semantics = [#tpu.dimension_semantics<parallel>], iteration_bounds = array<i64: 2>, scalar_prefetch = 0 : i64, scratch_operands = 0 : i64, tpu.core_type = #tpu.core_type<tc>, window_params = [{transform_indices = @transform_0, window_bounds = array<i64: 256, 192>}, {pipeline_mode = #tpu.pipeline_mode<synchronous>, transform_indices = @transform_1, window_bounds = array<i64: 192, 32>}, {transform_indices = @transform_2, window_bounds = array<i64: 256, 32>}, {transform_indices = @transform_3, window_bounds = array<i64: 1, 2, 32>}]} {
    %c0 = arith.constant 0 : index
    %c0_0 = arith.constant 0 : index
    %0 = vector.load %arg1[%c0, %c0_0] : memref<256x192xbf16, #tpu.memory_space<vmem>>, vector<256x192xbf16>
    %c0_1 = arith.constant 0 : index
    %c0_2 = arith.constant 0 : index
    %1 = vector.load %arg2[%c0_1, %c0_2] : memref<192x32xbf16, #tpu.memory_space<vmem>>, vector<192x32xbf16>
    %cst = arith.constant dense<0.000000e+00> : vector<256x32xf32>
    %2 = tpu.matmul %0, %1, %cst {dimension_numbers = #tpu.dot_dimension_numbers<[1], [0], [0], [1], [0, 0, 1, 1], [], []>} : vector<256x192xbf16>, vector<192x32xbf16>, vector<256x32xf32> -> vector<256x32xf32>
    %3 = arith.truncf %2 : vector<256x32xf32> to vector<256x32xbf16>
    %c0_3 = arith.constant 0 : index
    %c0_4 = arith.constant 0 : index
    %4 = vector.load %arg3[%c0_3, %c0_4] : memref<256x32xbf16, #tpu.memory_space<vmem>>, vector<256x32xbf16>
    tpu.vector_store %arg3[%c0_3, %c0_4], %3 {strides = array<i32>} : memref<256x32xbf16, #tpu.memory_space<vmem>>, vector<256x32xbf16>,
    %cst_5 = arith.constant dense<0.000000e+00> : vector<32xf32>
    %5 = vector.multi_reduction <add>, %2, %cst_5 [0] : vector<256x32xf32> to vector<32xf32>
    %6 = vector.shape_cast %5 : vector<32xf32> to vector<1x32xf32>
    %7 = arith.mulf %2, %2 : vector<256x32xf32>
    %cst_6 = arith.constant dense<0.000000e+00> : vector<32xf32>
    %8 = vector.multi_reduction <add>, %7, %cst_6 [0] : vector<256x32xf32> to vector<32xf32>
    %9 = vector.shape_cast %8 : vector<32xf32> to vector<1x32xf32>
    %10 = tpu.concatenate %6, %9 in 0 : vector<1x32xf32>, vector<1x32xf32> -> vector<2x32xf32>
    %c0_7 = arith.constant 0 : index
    %c0_8 = arith.constant 0 : index
    %c0_9 = arith.constant 0 : index
    %11 = vector.load %arg4[%c0_7, %c0_8, %c0_9] : memref<1x2x32xf32, #tpu.memory_space<vmem>>, vector<1x2x32xf32>
    %12 = vector.shape_cast %11 : vector<1x2x32xf32> to vector<2x32xf32>
    %13 = vector.shape_cast %10 : vector<2x32xf32> to vector<1x2x32xf32>
    tpu.vector_store %arg4[%c0_7, %c0_8, %c0_9], %13 {strides = array<i32>} : memref<1x2x32xf32, #tpu.memory_space<vmem>>, vector<1x2x32xf32>,
    return
  }
  func.func @transform_0(%arg0: i32) -> (i32, i32) {
    %c0_i32 = arith.constant 0 : i32
    %c0_i32_0 = arith.constant 0 : i32
    return %arg0, %c0_i32 : i32, i32
  }
  func.func @transform_1(%arg0: i32) -> (i32, i32) {
    %c0_i32 = arith.constant 0 : i32
    %c0_i32_0 = arith.constant 0 : i32
    %c0_i32_1 = arith.constant 0 : i32
    return %c0_i32, %c0_i32_0 : i32, i32
  }
  func.func @transform_2(%arg0: i32) -> (i32, i32) {
    %c0_i32 = arith.constant 0 : i32
    %c0_i32_0 = arith.constant 0 : i32
    return %arg0, %c0_i32 : i32, i32
  }
  func.func @transform_3(%arg0: i32) -> (i32, i32, i32) {
    %c0_i32 = arith.constant 0 : i32
    %c0_i32_0 = arith.constant 0 : i32
    %c0_i32_1 = arith.constant 0 : i32
    return %arg0, %c0_i32, %c0_i32_0 : i32, i32, i32
  }
}

module attributes {stable_mosaic.version = 11 : i64} {
  func.func @_final_epilogue_kernel(%arg0: i32, %arg1: memref<256x64xbf16, #tpu.memory_space<vmem>>, %arg2: memref<256x160xbf16, #tpu.memory_space<vmem>>, %arg3: memref<256x32xbf16, #tpu.memory_space<vmem>>, %arg4: memref<1x160xf32, #tpu.memory_space<vmem>>, %arg5: memref<1x160xf32, #tpu.memory_space<vmem>>, %arg6: memref<1x32xf32, #tpu.memory_space<vmem>>, %arg7: memref<1x32xf32, #tpu.memory_space<vmem>>, %arg8: memref<256x256xf32, #tpu.memory_space<vmem>>) attributes {dimension_semantics = [#tpu.dimension_semantics<parallel>], iteration_bounds = array<i64: 2>, scalar_prefetch = 0 : i64, scratch_operands = 0 : i64, tpu.core_type = #tpu.core_type<tc>, window_params = [{transform_indices = @transform_0, window_bounds = array<i64: 256, 64>}, {transform_indices = @transform_1, window_bounds = array<i64: 256, 160>}, {transform_indices = @transform_2, window_bounds = array<i64: 256, 32>}, {pipeline_mode = #tpu.pipeline_mode<synchronous>, transform_indices = @transform_3, window_bounds = array<i64: 1, 160>}, {pipeline_mode = #tpu.pipeline_mode<synchronous>, transform_indices = @transform_4, window_bounds = array<i64: 1, 160>}, {pipeline_mode = #tpu.pipeline_mode<synchronous>, transform_indices = @transform_5, window_bounds = array<i64: 1, 32>}, {pipeline_mode = #tpu.pipeline_mode<synchronous>, transform_indices = @transform_6, window_bounds = array<i64: 1, 32>}, {transform_indices = @transform_7, window_bounds = array<i64: 256, 256>}]} {
    %c0 = arith.constant 0 : index
    %c0_0 = arith.constant 0 : index
    %0 = vector.load %arg2[%c0, %c0_0] : memref<256x160xbf16, #tpu.memory_space<vmem>>, vector<256x160xbf16>
    %1 = arith.extf %0 : vector<256x160xbf16> to vector<256x160xf32>
    %c0_1 = arith.constant 0 : index
    %c0_2 = arith.constant 0 : index
    %2 = vector.load %arg4[%c0_1, %c0_2] : memref<1x160xf32, #tpu.memory_space<vmem>>, vector<1x160xf32>
    %3 = vector.broadcast %2 : vector<1x160xf32> to vector<256x160xf32>
    %4 = arith.mulf %1, %3 : vector<256x160xf32>
    %c0_3 = arith.constant 0 : index
    %c0_4 = arith.constant 0 : index
    %5 = vector.load %arg5[%c0_3, %c0_4] : memref<1x160xf32, #tpu.memory_space<vmem>>, vector<1x160xf32>
    %6 = vector.broadcast %5 : vector<1x160xf32> to vector<256x160xf32>
    %7 = arith.addf %4, %6 : vector<256x160xf32>
    %cst = arith.constant 0.000000e+00 : f32
    %8 = vector.broadcast %cst : f32 to vector<256x160xf32>
    %9 = arith.maximumf %7, %8 : vector<256x160xf32>
    %c0_5 = arith.constant 0 : index
    %c0_6 = arith.constant 0 : index
    %10 = vector.load %arg3[%c0_5, %c0_6] : memref<256x32xbf16, #tpu.memory_space<vmem>>, vector<256x32xbf16>
    %11 = arith.extf %10 : vector<256x32xbf16> to vector<256x32xf32>
    %c0_7 = arith.constant 0 : index
    %c0_8 = arith.constant 0 : index
    %12 = vector.load %arg6[%c0_7, %c0_8] : memref<1x32xf32, #tpu.memory_space<vmem>>, vector<1x32xf32>
    %13 = vector.broadcast %12 : vector<1x32xf32> to vector<256x32xf32>
    %14 = arith.mulf %11, %13 : vector<256x32xf32>
    %c0_9 = arith.constant 0 : index
    %c0_10 = arith.constant 0 : index
    %15 = vector.load %arg7[%c0_9, %c0_10] : memref<1x32xf32, #tpu.memory_space<vmem>>, vector<1x32xf32>
    %16 = vector.broadcast %15 : vector<1x32xf32> to vector<256x32xf32>
    %17 = arith.addf %14, %16 : vector<256x32xf32>
    %cst_11 = arith.constant 0.000000e+00 : f32
    %18 = vector.broadcast %cst_11 : f32 to vector<256x32xf32>
    %19 = arith.maximumf %17, %18 : vector<256x32xf32>
    %c0_12 = arith.constant 0 : index
    %c0_13 = arith.constant 0 : index
    %20 = vector.load %arg1[%c0_12, %c0_13] : memref<256x64xbf16, #tpu.memory_space<vmem>>, vector<256x64xbf16>
    %21 = arith.extf %20 : vector<256x64xbf16> to vector<256x64xf32>
    %22 = tpu.concatenate %21, %9, %19 in 1 : vector<256x64xf32>, vector<256x160xf32>, vector<256x32xf32> -> vector<256x256xf32>
    %c0_14 = arith.constant 0 : index
    %c0_15 = arith.constant 0 : index
    %23 = vector.load %arg8[%c0_14, %c0_15] : memref<256x256xf32, #tpu.memory_space<vmem>>, vector<256x256xf32>
    tpu.vector_store %arg8[%c0_14, %c0_15], %22 {strides = array<i32>} : memref<256x256xf32, #tpu.memory_space<vmem>>, vector<256x256xf32>,
    return
  }
  func.func @transform_0(%arg0: i32) -> (i32, i32) {
    %c0_i32 = arith.constant 0 : i32
    %c0_i32_0 = arith.constant 0 : i32
    return %arg0, %c0_i32 : i32, i32
  }
  func.func @transform_1(%arg0: i32) -> (i32, i32) {
    %c0_i32 = arith.constant 0 : i32
    %c0_i32_0 = arith.constant 0 : i32
    return %arg0, %c0_i32 : i32, i32
  }
  func.func @transform_2(%arg0: i32) -> (i32, i32) {
    %c0_i32 = arith.constant 0 : i32
    %c0_i32_0 = arith.constant 0 : i32
    return %arg0, %c0_i32 : i32, i32
  }
  func.func @transform_3(%arg0: i32) -> (i32, i32) {
    %c0_i32 = arith.constant 0 : i32
    %c0_i32_0 = arith.constant 0 : i32
    %c0_i32_1 = arith.constant 0 : i32
    return %c0_i32, %c0_i32_0 : i32, i32
  }
  func.func @transform_4(%arg0: i32) -> (i32, i32) {
    %c0_i32 = arith.constant 0 : i32
    %c0_i32_0 = arith.constant 0 : i32
    %c0_i32_1 = arith.constant 0 : i32
    return %c0_i32, %c0_i32_0 : i32, i32
  }
  func.func @transform_5(%arg0: i32) -> (i32, i32) {
    %c0_i32 = arith.constant 0 : i32
    %c0_i32_0 = arith.constant 0 : i32
    %c0_i32_1 = arith.constant 0 : i32
    return %c0_i32, %c0_i32_0 : i32, i32
  }
  func.func @transform_6(%arg0: i32) -> (i32, i32) {
    %c0_i32 = arith.constant 0 : i32
    %c0_i32_0 = arith.constant 0 : i32
    %c0_i32_1 = arith.constant 0 : i32
    return %c0_i32, %c0_i32_0 : i32, i32
  }
  func.func @transform_7(%arg0: i32) -> (i32, i32) {
    %c0_i32 = arith.constant 0 : i32
    %c0_i32_0 = arith.constant 0 : i32
    return %arg0, %c0_i32 : i32, i32
  }
}

</mosaic_0001>

<llo_original>
// kernel: mixed_3b.6
$region0: #{mixed_3b.6}
  #allocation0 [shape = 'u32[]', space=smem, size = 0x4, offset = 0x4, fixed_abs, tag = 'smem constant byte address 0x4 - core index']
  #allocation1 [shape = 'u32[144,128]{1,0:T(1,128)}', space=vmem, size = 0x12000, scoped, tag = 'internal scratch']
  %s0 = inlined_call_operand.vmem [shape: bf16[512,192], index: 0, kind: input, shape index: {}]
  %s1 = inlined_call_operand.vmem [shape: bf16[192,176], index: 1, kind: input, shape index: {}]
  %s2 = inlined_call_operand.vmem [shape: bf16[512,176], index: 2, kind: output, shape index: {0}]
  %s3 = inlined_call_operand.vmem [shape: f32[2,2,176], index: 3, kind: output, shape index: {1}]
  %4 = xla_tuple %s2, %s3
  %s5 = sld [smem:[#allocation0]]
  $region49: #{mixed_3b.6} parent=0
    _
  %s7 = ssub.s32 1, %s5
  %s8 = scalar_select 0, %s7, %s5
  loop: start=0, step=1, limit=4
  $region2: #{mixed_3b.6} parent=0 // loop_pre_header
    _
  $region3: #{mixed_3b.6} parent=0 // loop_header
    %s10 = sphi 0, %s14
    %p11 = scmp.ge.s32.totalorder %s10, 4
    %s20 = sphi 0, %s22
    %s23 = sphi 0, %s20
    %s24 = sphi 0, %s23
    %s40 = sphi 0, %s24
    %s44 = sphi 0, %s44
    %s46 = sphi 0, %s44
    %s47 = sphi 0, %s46
    %s61 = sphi 0, %s47
    %s67 = sphi 0, %s69
    %s70 = sphi 0, %s67
    %s71 = sphi 0, %s70
    %s87 = sphi 0, %s71
    %s93 = sphi 0, %s95
    %s96 = sphi 0, %s93
    %s97 = sphi 0, %s96
    %s113 = sphi 0, %s97
  $region4: #{mixed_3b.6} parent=0 // loop_header_branch
    %13 = sbr.rel (%p11) target = $region8
  $region5: #{mixed_3b.6} parent=0 // loop_body
    %s15 = ssub.s32 %s10, 1
    %s16 = ssub.s32 %s10, 2
    %s17 = sadd.s32 %s10, 1
    %s18 = ssub.s32 %s10, %s17
    %p19 = scmp.eq.s32.totalorder %s18, 0
    %s21 = sadd.s32 %s20, 1
    %s22 = scalar_select %p19, %s20, %s21
    %p25 = pneg %p19
    %p26 = scmp.eq.s32.totalorder %s10, 1
    %p27 = por %p25, %p26
    %p28 = scmp.ne.s32.totalorder %s20, %s23
    %p29 = scmp.eq.s32.totalorder %s10, 0
    %p30 = por %p28, %p29
    %p31 = scmp.ne.s32.totalorder %s20, %s23
    %p32 = scmp.eq.s32.totalorder %s15, 1
    %p33 = por %p31, %p32
    %p34 = scmp.ne.s32.totalorder %s23, %s24
    %p35 = scmp.eq.s32.totalorder %s15, 0
    %p36 = por %p34, %p35
    %p37 = scmp.ne.s32.totalorder %s23, %s24
    %p38 = scmp.eq.s32.totalorder %s16, 1
    %p39 = por %p37, %p38
    %p41 = scmp.ne.s32.totalorder %s24, %s40
    %p42 = scmp.eq.s32.totalorder %s16, 0
    %p43 = por %p41, %p42
    %s45 = sadd.s32 %s44, 1
    %p48 = scmp.eq.s32.totalorder %s10, 1
    %p49 = scmp.ne.s32.totalorder %s44, %s46
    %p50 = scmp.eq.s32.totalorder %s10, 0
    %p51 = por %p49, %p50
    %p52 = scmp.ne.s32.totalorder %s44, %s46
    %p53 = scmp.eq.s32.totalorder %s15, 1
    %p54 = por %p52, %p53
    %p55 = scmp.ne.s32.totalorder %s46, %s47
    %p56 = scmp.eq.s32.totalorder %s15, 0
    %p57 = por %p55, %p56
    %p58 = scmp.ne.s32.totalorder %s46, %s47
    %p59 = scmp.eq.s32.totalorder %s16, 1
    %p60 = por %p58, %p59
    %p62 = scmp.ne.s32.totalorder %s47, %s61
    %p63 = scmp.eq.s32.totalorder %s16, 0
    %p64 = por %p62, %p63
    %s65 = ssub.s32 %s10, %s17
    %p66 = scmp.eq.s32.totalorder %s65, 0
    %s68 = sadd.s32 %s67, 1
    %s69 = scalar_select %p66, %s67, %s68
    %p72 = pneg %p66
    %p73 = scmp.eq.s32.totalorder %s10, 1
    %p74 = por %p72, %p73
    %p75 = scmp.ne.s32.totalorder %s67, %s70
    %p76 = scmp.eq.s32.totalorder %s10, 0
    %p77 = por %p75, %p76
    %p78 = scmp.ne.s32.totalorder %s67, %s70
    %p79 = scmp.eq.s32.totalorder %s15, 1
    %p80 = por %p78, %p79
    %p81 = scmp.ne.s32.totalorder %s70, %s71
    %p82 = scmp.eq.s32.totalorder %s15, 0
    %p83 = por %p81, %p82
    %p84 = scmp.ne.s32.totalorder %s70, %s71
    %p85 = scmp.eq.s32.totalorder %s16, 1
    %p86 = por %p84, %p85
    %p88 = scmp.ne.s32.totalorder %s71, %s87
    %p89 = scmp.eq.s32.totalorder %s16, 0
    %p90 = por %p88, %p89
    %s91 = ssub.s32 %s10, %s17
    %p92 = scmp.eq.s32.totalorder %s91, 0
    %s94 = sadd.s32 %s93, 1
    %s95 = scalar_select %p92, %s93, %s94
    %p98 = pneg %p92
    %p99 = scmp.eq.s32.totalorder %s10, 1
    %p100 = por %p98, %p99
    %p101 = scmp.ne.s32.totalorder %s93, %s96
    %p102 = scmp.eq.s32.totalorder %s10, 0
    %p103 = por %p101, %p102
    %p104 = scmp.ne.s32.totalorder %s93, %s96
    %p105 = scmp.eq.s32.totalorder %s15, 1
    %p106 = por %p104, %p105
    %p107 = scmp.ne.s32.totalorder %s96, %s97
    %p108 = scmp.eq.s32.totalorder %s15, 0
    %p109 = por %p107, %p108
    %p110 = scmp.ne.s32.totalorder %s96, %s97
    %p111 = scmp.eq.s32.totalorder %s16, 1
    %p112 = por %p110, %p111
    %p114 = scmp.ne.s32.totalorder %s97, %s113
    %p115 = scmp.eq.s32.totalorder %s16, 0
    %p116 = por %p114, %p115
    %p117 = scmp.le.s32.totalorder 1, %s10
    %p118 = scmp.lt.s32.totalorder %s10, 3
    %p119 = pnand %p117, %p118
    %p120 = pneg %p119
    // Predicated region
    $region9: #{mixed_3b.6} parent=5 // pred_check
      _
    $region10: #{mixed_3b.6} parent=5 // pred_check_branch
      %122 = sbr.rel (%p119) target = $region12
    $region11: #{mixed_3b.6} parent=5 // pred_region
      %s123 = ssub.s32 %s10, 1
      // Predicated region
      $region13: #{mixed_3b.6} parent=11 // pred_check
        %p124 = pneg %p57
      $region14: #{mixed_3b.6} parent=11 // pred_check_branch
        %126 = sbr.rel (%p124) target = $region16
      $region15: #{mixed_3b.6} parent=11 // pred_region
        _
      $region16: #{mixed_3b.6} parent=11 // pred_fallthru
        _
    $region12: #{mixed_3b.6} parent=5 // pred_fallthru
      _
    %p127 = scmp.lt.s32.totalorder %s10, 2
    // Predicated region
    $region17: #{mixed_3b.6} parent=5 // pred_check
      %p128 = pneg %p127
    $region18: #{mixed_3b.6} parent=5 // pred_check_branch
      %130 = sbr.rel (%p128) target = $region20
    $region19: #{mixed_3b.6} parent=5 // pred_region
      // Predicated region
      $region21: #{mixed_3b.6} parent=19 // pred_check
        %p131 = pneg %p30
      $region22: #{mixed_3b.6} parent=19 // pred_check_branch
        %133 = sbr.rel (%p131) target = $region24
      $region23: #{mixed_3b.6} parent=19 // pred_region
        %s134 = smul.u32 32, %s10
        %p135 = scmp.lt.s32.totalorder %s134, 63
        %s136 = scalar_select %p135, %s134, 63
        %s137 = smul.addr %s136, 2
        %s138 = smul.addr %s137, 4
        %s139 = scalar_lea.vmem %s0, %s138
        %s140 = smul.u32 32, %s10
      $region24: #{mixed_3b.6} parent=19 // pred_fallthru
        _
    $region20: #{mixed_3b.6} parent=5 // pred_fallthru
      _
    %p141 = scmp.le.s32.totalorder 1, %s10
    %p142 = scmp.lt.s32.totalorder %s10, 3
    %p143 = pnand %p141, %p142
    %p144 = pneg %p143
    // Predicated region
    $region25: #{mixed_3b.6} parent=5 // pred_check
      _
    $region26: #{mixed_3b.6} parent=5 // pred_check_branch
      %146 = sbr.rel (%p143) target = $region28
    $region27: #{mixed_3b.6} parent=5 // pred_region
      %s147 = ssub.s32 %s10, 1
      %s148 = smul.u32 32, %s15
      %p149 = scmp.lt.s32.totalorder %s148, 63
      %s150 = scalar_select %p149, %s148, 63
      %s151 = smul.addr %s150, 2
      %s152 = smul.addr %s151, 4
      %s153 = scalar_lea.vmem %s0, %s152
      %p154 = pneg %p36
      %p155 = pneg %p33
      %p156 = pneg %p57
      %p157 = pneg %p54
      %p158 = pneg %p83
      %p159 = pneg %p80
      %s160 = smul.u32 32, %s15
      %p161 = scmp.lt.s32.totalorder %s160, 63
      %s162 = scalar_select %p161, %s160, 63
      %s163 = smul.addr %s162, 2
      %s164 = smul.addr %s163, 4
      %s165 = scalar_lea.vmem %s2, %s164
      %p166 = pneg %p109
      %p167 = pneg %p106
      %p168 = scmp.lt.s32.totalorder %s15, 1
      %s169 = scalar_select %p168, %s15, 1
      %s170 = smul.addr %s169, 2
      %s171 = smul.addr %s170, 2
      %s172 = scalar_lea.vmem %s3, %s171
      %s173 = smul.u32 32, %s15
      %p174 = scmp.lt.s32.totalorder %s173, 63
      %s175 = scalar_select %p174, %s173, 63
      %s176 = smul.addr %s175, 2
      %s177 = smul.addr %s176, 4
      %s178 = scalar_lea.vmem %s0, %s177
      %s179 = smul.u32 32, %s15
      %s180 = smul.u32 32, %s15
      %p181 = scmp.lt.s32.totalorder %s180, 63
      %s182 = scalar_select %p181, %s180, 63
      %s183 = smul.addr %s182, 2
      %s184 = smul.addr %s183, 4
      %s185 = scalar_lea.vmem %s2, %s184
      %s186 = smul.u32 32, %s15
      %p187 = scmp.lt.s32.totalorder %s15, 1
      %s188 = scalar_select %p187, %s15, 1
      %s189 = smul.addr %s188, 2
      %s190 = smul.addr %s189, 2
      %s191 = scalar_lea.vmem %s3, %s190
      %v193 = vld [vmem:[%s178] sm:$0xff]
      %v194 = vld [vmem:[%s178 + $0x8] sm:$0xff]
      %v195 = vld [vmem:[%s178 + $0x10] sm:$0xff]
      %v196 = vld [vmem:[%s178 + $0x18] sm:$0xff]
      %v197 = vld [vmem:[%s178 + $0x20] sm:$0xff]
      %v198 = vld [vmem:[%s178 + $0x28] sm:$0xff]
      %v199 = vld [vmem:[%s178 + $0x30] sm:$0xff]
      %v200 = vld [vmem:[%s178 + $0x38] sm:$0xff]
      %v201 = vld [vmem:[%s178 + $0x40] sm:$0xff]
      %v202 = vld [vmem:[%s178 + $0x48] sm:$0xff]
      %v203 = vld [vmem:[%s178 + $0x50] sm:$0xff]
      %v204 = vld [vmem:[%s178 + $0x58] sm:$0xff]
      %v205 = vld [vmem:[%s178 + $0x60] sm:$0xff]
      %v206 = vld [vmem:[%s178 + $0x68] sm:$0xff]
      %v207 = vld [vmem:[%s178 + $0x70] sm:$0xff]
      %v208 = vld [vmem:[%s178 + $0x78] sm:$0xff]
      %v209 = vld [vmem:[%s178 + $0x80] sm:$0xff]
      %v210 = vld [vmem:[%s178 + $0x88] sm:$0xff]
      %v211 = vld [vmem:[%s178 + $0x90] sm:$0xff]
      %v212 = vld [vmem:[%s178 + $0x98] sm:$0xff]
      %v213 = vld [vmem:[%s178 + $0xa0] sm:$0xff]
      %v214 = vld [vmem:[%s178 + $0xa8] sm:$0xff]
      %v215 = vld [vmem:[%s178 + $0xb0] sm:$0xff]
      %v216 = vld [vmem:[%s178 + $0xb8] sm:$0xff]
      %v217 = vld [vmem:[%s178 + $0xc0] sm:$0xff]
      %v218 = vld [vmem:[%s178 + $0xc8] sm:$0xff]
      %v219 = vld [vmem:[%s178 + $0xd0] sm:$0xff]
      %v220 = vld [vmem:[%s178 + $0xd8] sm:$0xff]
      %v221 = vld [vmem:[%s178 + $0xe0] sm:$0xff]
      %v222 = vld [vmem:[%s178 + $0xe8] sm:$0xff]
      %v223 = vld [vmem:[%s178 + $0xf0] sm:$0xff]
      %v224 = vld [vmem:[%s178 + $0xf8] sm:$0xff]
      %v225 = vld [vmem:[%s1] sm:$0xff]
      %v226 = vld [vmem:[%s1 + $0x8] sm:$0xff]
      %v227 = vld [vmem:[%s1 + $0x10] sm:$0xff]
      %v228 = vld [vmem:[%s1 + $0x18] sm:$0xff]
      %v229 = vld [vmem:[%s1 + $0x20] sm:$0xff]
      %v230 = vld [vmem:[%s1 + $0x28] sm:$0xff]
      %v231 = vld [vmem:[%s1 + $0x30] sm:$0xff]
      %v232 = vld [vmem:[%s1 + $0x38] sm:$0xff]
      %v233 = vld [vmem:[%s1 + $0x40] sm:$0xff]
      %v234 = vld [vmem:[%s1 + $0x48] sm:$0xff]
      %v235 = vld [vmem:[%s1 + $0x50] sm:$0xff]
      %v236 = vld [vmem:[%s1 + $0x58] sm:$0xff]
      %v237 = vld [vmem:[%s1 + $0x60] sm:$0xff]
      %v238 = vld [vmem:[%s1 + $0x68] sm:$0xff]
      %v239 = vld [vmem:[%s1 + $0x70] sm:$0xff]
      %v240 = vld [vmem:[%s1 + $0x78] sm:$0xff]
      %v241 = vld [vmem:[%s1 + $0x80] sm:$0xff]
      %v242 = vld [vmem:[%s1 + $0x88] sm:$0xff]
      %v243 = vld [vmem:[%s1 + $0x90] sm:$0xff]
      %v244 = vld [vmem:[%s1 + $0x98] sm:$0xff]
      %v245 = vld [vmem:[%s1 + $0xa0] sm:$0xff]
      %v246 = vld [vmem:[%s1 + $0xa8] sm:$0xff]
      %v247 = vld [vmem:[%s1 + $0xb0] sm:$0xff]
      %v248 = vld [vmem:[%s1 + $0xb8] sm:$0xff]
      %v281 = vunpack.c.l.b16 %v193
      %v282 = vunpack.c.h.b16 %v193
      %v283 = vunpack.c.l.b16 %v194
      %v284 = vunpack.c.h.b16 %v194
      %v285 = vunpack.c.l.b16 %v195
      %v286 = vunpack.c.h.b16 %v195
      %v287 = vunpack.c.l.b16 %v196
      %v288 = vunpack.c.h.b16 %v196
      %v289 = vunpack.c.l.b16 %v197
      %v290 = vunpack.c.h.b16 %v197
      %v291 = vunpack.c.l.b16 %v198
      %v292 = vunpack.c.h.b16 %v198
      %v293 = vunpack.c.l.b16 %v199
      %v294 = vunpack.c.h.b16 %v199
      %v295 = vunpack.c.l.b16 %v200
      %v296 = vunpack.c.h.b16 %v200
      %v297 = vunpack.c.l.b16 %v201
      %v298 = vunpack.c.h.b16 %v201
      %v299 = vunpack.c.l.b16 %v202
      %v300 = vunpack.c.h.b16 %v202
      %v301 = vunpack.c.l.b16 %v203
      %v302 = vunpack.c.h.b16 %v203
      %v303 = vunpack.c.l.b16 %v204
      %v304 = vunpack.c.h.b16 %v204
      %v305 = vunpack.c.l.b16 %v205
      %v306 = vunpack.c.h.b16 %v205
      %v307 = vunpack.c.l.b16 %v206
      %v308 = vunpack.c.h.b16 %v206
      %v309 = vunpack.c.l.b16 %v207
      %v310 = vunpack.c.h.b16 %v207
      %v311 = vunpack.c.l.b16 %v208
      %v312 = vunpack.c.h.b16 %v208
      %v313 = vunpack.c.l.b16 %v209
      %v314 = vunpack.c.h.b16 %v209
      %v315 = vunpack.c.l.b16 %v210
      %v316 = vunpack.c.h.b16 %v210
      %v317 = vunpack.c.l.b16 %v211
      %v318 = vunpack.c.h.b16 %v211
      %v319 = vunpack.c.l.b16 %v212
      %v320 = vunpack.c.h.b16 %v212
      %v321 = vunpack.c.l.b16 %v213
      %v322 = vunpack.c.h.b16 %v213
      %v323 = vunpack.c.l.b16 %v214
      %v324 = vunpack.c.h.b16 %v214
      %v325 = vunpack.c.l.b16 %v215
      %v326 = vunpack.c.h.b16 %v215
      %v327 = vunpack.c.l.b16 %v216
      %v328 = vunpack.c.h.b16 %v216
      %v329 = vunpack.c.l.b16 %v217
      %v330 = vunpack.c.h.b16 %v217
      %v331 = vunpack.c.l.b16 %v218
      %v332 = vunpack.c.h.b16 %v218
      %v333 = vunpack.c.l.b16 %v219
      %v334 = vunpack.c.h.b16 %v219
      %v335 = vunpack.c.l.b16 %v220
      %v336 = vunpack.c.h.b16 %v220
      %v337 = vunpack.c.l.b16 %v221
      %v338 = vunpack.c.h.b16 %v221
      %v339 = vunpack.c.l.b16 %v222
      %v340 = vunpack.c.h.b16 %v222
      %v341 = vunpack.c.l.b16 %v223
      %v342 = vunpack.c.h.b16 %v223
      %v343 = vunpack.c.l.b16 %v224
      %v344 = vunpack.c.h.b16 %v224
      %v345 = vpack.c.b16 %v283, %v281
      %v346 = vpack.c.b16 %v284, %v282
      %v347 = vpack.c.b16 %v287, %v285
      %v348 = vpack.c.b16 %v288, %v286
      %v349 = vpack.c.b16 %v291, %v289
      %v350 = vpack.c.b16 %v292, %v290
      %v351 = vpack.c.b16 %v295, %v293
      %v352 = vpack.c.b16 %v296, %v294
      %v353 = vpack.c.b16 %v299, %v297
      %v354 = vpack.c.b16 %v300, %v298
      %v355 = vpack.c.b16 %v303, %v301
      %v356 = vpack.c.b16 %v304, %v302
      %v357 = vpack.c.b16 %v307, %v305
      %v358 = vpack.c.b16 %v308, %v306
      %v359 = vpack.c.b16 %v311, %v309
      %v360 = vpack.c.b16 %v312, %v310
      %v361 = vpack.c.b16 %v315, %v313
      %v362 = vpack.c.b16 %v316, %v314
      %v363 = vpack.c.b16 %v319, %v317
      %v364 = vpack.c.b16 %v320, %v318
      %v365 = vpack.c.b16 %v323, %v321
      %v366 = vpack.c.b16 %v324, %v322
      %v367 = vpack.c.b16 %v327, %v325
      %v368 = vpack.c.b16 %v328, %v326
      %v369 = vpack.c.b16 %v331, %v329
      %v370 = vpack.c.b16 %v332, %v330
      %v371 = vpack.c.b16 %v335, %v333
      %v372 = vpack.c.b16 %v336, %v334
      %v373 = vpack.c.b16 %v339, %v337
      %v374 = vpack.c.b16 %v340, %v338
      %v375 = vpack.c.b16 %v343, %v341
      %v376 = vpack.c.b16 %v344, %v342
      %v417 = vunpack.c.l.b16 %v225
      %v418 = vunpack.c.h.b16 %v225
      %v419 = vunpack.c.l.b16 %v226
      %v420 = vunpack.c.h.b16 %v226
      %v421 = vunpack.c.l.b16 %v227
      %v422 = vunpack.c.h.b16 %v227
      %v423 = vunpack.c.l.b16 %v228
      %v424 = vunpack.c.h.b16 %v228
      %v425 = vunpack.c.l.b16 %v229
      %v426 = vunpack.c.h.b16 %v229
      %v427 = vunpack.c.l.b16 %v230
      %v428 = vunpack.c.h.b16 %v230
      %v429 = vunpack.c.l.b16 %v231
      %v430 = vunpack.c.h.b16 %v231
      %v431 = vunpack.c.l.b16 %v232
      %v432 = vunpack.c.h.b16 %v232
      %v433 = vunpack.c.l.b16 %v233
      %v434 = vunpack.c.h.b16 %v233
      %v435 = vunpack.c.l.b16 %v234
      %v436 = vunpack.c.h.b16 %v234
      %v437 = vunpack.c.l.b16 %v235
      %v438 = vunpack.c.h.b16 %v235
      %v439 = vunpack.c.l.b16 %v236
      %v440 = vunpack.c.h.b16 %v236
      %v441 = vunpack.c.l.b16 %v237
      %v442 = vunpack.c.h.b16 %v237
      %v443 = vunpack.c.l.b16 %v238
      %v444 = vunpack.c.h.b16 %v238
      %v445 = vunpack.c.l.b16 %v239
      %v446 = vunpack.c.h.b16 %v239
      %v447 = vunpack.c.l.b16 %v240
      %v448 = vunpack.c.h.b16 %v240
      %v449 = vunpack.c.l.b16 %v241
      %v450 = vunpack.c.h.b16 %v241
      %v451 = vunpack.c.l.b16 %v242
      %v452 = vunpack.c.h.b16 %v242
      %v453 = vunpack.c.l.b16 %v243
      %v454 = vunpack.c.h.b16 %v243
      %v455 = vunpack.c.l.b16 %v244
      %v456 = vunpack.c.h.b16 %v244
      %v457 = vunpack.c.l.b16 %v245
      %v458 = vunpack.c.h.b16 %v245
      %v459 = vunpack.c.l.b16 %v246
      %v460 = vunpack.c.h.b16 %v246
      %v461 = vunpack.c.l.b16 %v247
      %v462 = vunpack.c.h.b16 %v247
      %v463 = vunpack.c.l.b16 %v248
      %v464 = vunpack.c.h.b16 %v248
      %v465 = vpack.c.b16 %v419, %v417
      %v466 = vpack.c.b16 %v420, %v418
      %v467 = vpack.c.b16 %v423, %v421
      %v468 = vpack.c.b16 %v424, %v422
      %v469 = vpack.c.b16 %v427, %v425
      %v470 = vpack.c.b16 %v428, %v426
      %v471 = vpack.c.b16 %v431, %v429
      %v472 = vpack.c.b16 %v432, %v430
      %v473 = vpack.c.b16 %v435, %v433
      %v474 = vpack.c.b16 %v436, %v434
      %v475 = vpack.c.b16 %v439, %v437
      %v476 = vpack.c.b16 %v440, %v438
      %v477 = vpack.c.b16 %v443, %v441
      %v478 = vpack.c.b16 %v444, %v442
      %v479 = vpack.c.b16 %v447, %v445
      %v480 = vpack.c.b16 %v448, %v446
      %v481 = vpack.c.b16 %v451, %v449
      %v482 = vpack.c.b16 %v452, %v450
      %v483 = vpack.c.b16 %v455, %v453
      %v484 = vpack.c.b16 %v456, %v454
      %v485 = vpack.c.b16 %v459, %v457
      %v486 = vpack.c.b16 %v460, %v458
      %v487 = vpack.c.b16 %v463, %v461
      %v488 = vpack.c.b16 %v464, %v462
      %vm513 = vcmask 523264
      %v515 = vsel %vm513, %v346, 0
      %v518 = vsel %vm513, %v348, 0
      %v521 = vsel %vm513, %v350, 0
      %v524 = vsel %vm513, %v352, 0
      %v527 = vsel %vm513, %v354, 0
      %v530 = vsel %vm513, %v356, 0
      %v533 = vsel %vm513, %v358, 0
      %v536 = vsel %vm513, %v360, 0
      %v539 = vsel %vm513, %v362, 0
      %v542 = vsel %vm513, %v364, 0
      %v545 = vsel %vm513, %v366, 0
      %v548 = vsel %vm513, %v368, 0
      %v551 = vsel %vm513, %v370, 0
      %v554 = vsel %vm513, %v372, 0
      %v557 = vsel %vm513, %v374, 0
      %v560 = vsel %vm513, %v376, 0
      %562 = vmatprep.subr.bf16.mxu0 %v466
      %563 = vmatpush1.bf16.msra.mxu0 %v465
      %564 = vmatprep.subr.bf16.mxu0 %v468
      %565 = vmatpush1.bf16.msra.mxu0 %v467
      %566 = vmatprep.subr.bf16.mxu0 %v470
      %567 = vmatpush1.bf16.msra.mxu0 %v469
      %568 = vmatprep.subr.bf16.mxu0 %v472
      %569 = vmatpush1.bf16.msra.mxu0 %v471
      %570 = vmatprep.subr.bf16.mxu0 %v474
      %571 = vmatpush1.bf16.msra.mxu0 %v473
      %572 = vmatprep.subr.bf16.mxu0 %v476
      %573 = vmatpush1.bf16.msra.mxu0 %v475
      %574 = vmatprep.subr.bf16.mxu0 %v478
      %575 = vmatpush1.bf16.msra.mxu0 %v477
      %576 = vmatprep.subr.bf16.mxu0 %v480
      %577 = vmatpush1.bf16.msra.mxu0 %v479
      %578 = vmatprep.subr.bf16.mxu0 %v482
      %579 = vmatpush1.bf16.msra.mxu0 %v481
      %580 = vmatprep.subr.bf16.mxu0 %v484
      %581 = vmatpush1.bf16.msra.mxu0 %v483
      %582 = vmatprep.subr.bf16.mxu0 %v486
      %583 = vmatpush1.bf16.msra.mxu0 %v485
      %584 = vmatprep.subr.bf16.mxu0 %v488
      %585 = vmatpush1.bf16.msra.mxu0 %v487
      %586 = vmatprep.subr.bf16.mxu0 0
      %587 = vmatpush1.bf16.msra.mxu0 0
      %588 = vmatprep.subr.bf16.mxu0 0
      %589 = vmatpush1.bf16.msra.mxu0 0
      %590 = vmatprep.subr.bf16.mxu0 0
      %591 = vmatpush1.bf16.msra.mxu0 0
      %592 = vmatprep.subr.bf16.mxu0 0
      %593 = vmatpush1.bf16.msra.mxu0 0
      %594 = vmatprep.mubr.bf16.mxu0 %v515
      %595 = vmatmul.mubr.bf16.gmra.mrb[0].mxu0 %v345
      %v596 = vpop.f32.mrb[0].mxu0
      %v597 = vadd.f32 0.0, %v596
      %v598 = vpop.f32.mrb[0].mxu0
      %v599 = vadd.f32 0.0, %v598
      %v600 = vpop.f32.mrb[0].mxu0
      %v601 = vadd.f32 0.0, %v600
      %v602 = vpop.f32.mrb[0].mxu0
      %v603 = vadd.f32 0.0, %v602
      %604 = vmatprep.mubr.bf16.mxu0 %v518
      %605 = vmatmul.mubr.bf16.gmra.mrb[0].mxu0 %v347
      %v606 = vpop.f32.mrb[0].mxu0
      %v607 = vadd.f32 0.0, %v606
      %v608 = vpop.f32.mrb[0].mxu0
      %v609 = vadd.f32 0.0, %v608
      %v610 = vpop.f32.mrb[0].mxu0
      %v611 = vadd.f32 0.0, %v610
      %v612 = vpop.f32.mrb[0].mxu0
      %v613 = vadd.f32 0.0, %v612
      %614 = vmatprep.mubr.bf16.mxu0 %v521
      %615 = vmatmul.mubr.bf16.gmra.mrb[0].mxu0 %v349
      %v616 = vpop.f32.mrb[0].mxu0
      %v617 = vadd.f32 0.0, %v616
      %v618 = vpop.f32.mrb[0].mxu0
      %v619 = vadd.f32 0.0, %v618
      %v620 = vpop.f32.mrb[0].mxu0
      %v621 = vadd.f32 0.0, %v620
      %v622 = vpop.f32.mrb[0].mxu0
      %v623 = vadd.f32 0.0, %v622
      %624 = vmatprep.mubr.bf16.mxu0 %v524
      %625 = vmatmul.mubr.bf16.gmra.mrb[0].mxu0 %v351
      %v626 = vpop.f32.mrb[0].mxu0
      %v627 = vadd.f32 0.0, %v626
      %v628 = vpop.f32.mrb[0].mxu0
      %v629 = vadd.f32 0.0, %v628
      %v630 = vpop.f32.mrb[0].mxu0
      %v631 = vadd.f32 0.0, %v630
      %v632 = vpop.f32.mrb[0].mxu0
      %v633 = vadd.f32 0.0, %v632
      %634 = vmatprep.mubr.bf16.mxu0 %v527
      %635 = vmatmul.mubr.bf16.gmra.mrb[0].mxu0 %v353
      %v636 = vpop.f32.mrb[0].mxu0
      %v637 = vadd.f32 0.0, %v636
      %v638 = vpop.f32.mrb[0].mxu0
      %v639 = vadd.f32 0.0, %v638
      %v640 = vpop.f32.mrb[0].mxu0
      %v641 = vadd.f32 0.0, %v640
      %v642 = vpop.f32.mrb[0].mxu0
      %v643 = vadd.f32 0.0, %v642
      %644 = vmatprep.mubr.bf16.mxu0 %v530
      %645 = vmatmul.mubr.bf16.gmra.mrb[0].mxu0 %v355
      %v646 = vpop.f32.mrb[0].mxu0
      %v647 = vadd.f32 0.0, %v646
      %v648 = vpop.f32.mrb[0].mxu0
      %v649 = vadd.f32 0.0, %v648
      %v650 = vpop.f32.mrb[0].mxu0
      %v651 = vadd.f32 0.0, %v650
      %v652 = vpop.f32.mrb[0].mxu0
      %v653 = vadd.f32 0.0, %v652
      %654 = vmatprep.mubr.bf16.mxu0 %v533
      %655 = vmatmul.mubr.bf16.gmra.mrb[0].mxu0 %v357
      %v656 = vpop.f32.mrb[0].mxu0
      %v657 = vadd.f32 0.0, %v656
      %v658 = vpop.f32.mrb[0].mxu0
      %v659 = vadd.f32 0.0, %v658
      %v660 = vpop.f32.mrb[0].mxu0
      %v661 = vadd.f32 0.0, %v660
      %v662 = vpop.f32.mrb[0].mxu0
      %v663 = vadd.f32 0.0, %v662
      %664 = vmatprep.mubr.bf16.mxu0 %v536
      %665 = vmatmul.mubr.bf16.gmra.mrb[0].mxu0 %v359
      %v666 = vpop.f32.mrb[0].mxu0
      %v667 = vadd.f32 0.0, %v666
      %v668 = vpop.f32.mrb[0].mxu0
      %v669 = vadd.f32 0.0, %v668
      %v670 = vpop.f32.mrb[0].mxu0
      %v671 = vadd.f32 0.0, %v670
      %v672 = vpop.f32.mrb[0].mxu0
      %v673 = vadd.f32 0.0, %v672
      %674 = vmatprep.mubr.bf16.mxu0 %v539
      %675 = vmatmul.mubr.bf16.gmra.mrb[0].mxu0 %v361
      %v676 = vpop.f32.mrb[0].mxu0
      %v677 = vadd.f32 0.0, %v676
      %v678 = vpop.f32.mrb[0].mxu0
      %v679 = vadd.f32 0.0, %v678
      %v680 = vpop.f32.mrb[0].mxu0
      %v681 = vadd.f32 0.0, %v680
      %v682 = vpop.f32.mrb[0].mxu0
      %v683 = vadd.f32 0.0, %v682
      %684 = vmatprep.mubr.bf16.mxu0 %v542
      %685 = vmatmul.mubr.bf16.gmra.mrb[0].mxu0 %v363
      %v686 = vpop.f32.mrb[0].mxu0
      %v687 = vadd.f32 0.0, %v686
      %v688 = vpop.f32.mrb[0].mxu0
      %v689 = vadd.f32 0.0, %v688
      %v690 = vpop.f32.mrb[0].mxu0
      %v691 = vadd.f32 0.0, %v690
      %v692 = vpop.f32.mrb[0].mxu0
      %v693 = vadd.f32 0.0, %v692
      %694 = vmatprep.mubr.bf16.mxu0 %v545
      %695 = vmatmul.mubr.bf16.gmra.mrb[0].mxu0 %v365
      %v696 = vpop.f32.mrb[0].mxu0
      %v697 = vadd.f32 0.0, %v696
      %v698 = vpop.f32.mrb[0].mxu0
      %v699 = vadd.f32 0.0, %v698
      %v700 = vpop.f32.mrb[0].mxu0
      %v701 = vadd.f32 0.0, %v700
      %v702 = vpop.f32.mrb[0].mxu0
      %v703 = vadd.f32 0.0, %v702
      %704 = vmatprep.mubr.bf16.mxu0 %v548
      %705 = vmatmul.mubr.bf16.gmra.mrb[0].mxu0 %v367
      %v706 = vpop.f32.mrb[0].mxu0
      %v707 = vadd.f32 0.0, %v706
      %v708 = vpop.f32.mrb[0].mxu0
      %v709 = vadd.f32 0.0, %v708
      %v710 = vpop.f32.mrb[0].mxu0
      %v711 = vadd.f32 0.0, %v710
      %v712 = vpop.f32.mrb[0].mxu0
      %v713 = vadd.f32 0.0, %v712
      %714 = vmatprep.mubr.bf16.mxu0 %v551
      %715 = vmatmul.mubr.bf16.gmra.mrb[0].mxu0 %v369
      %v716 = vpop.f32.mrb[0].mxu0
      %v717 = vadd.f32 0.0, %v716
      %v718 = vpop.f32.mrb[0].mxu0
      %v719 = vadd.f32 0.0, %v718
      %v720 = vpop.f32.mrb[0].mxu0
      %v721 = vadd.f32 0.0, %v720
      %v722 = vpop.f32.mrb[0].mxu0
      %v723 = vadd.f32 0.0, %v722
      %724 = vmatprep.mubr.bf16.mxu0 %v554
      %725 = vmatmul.mubr.bf16.gmra.mrb[0].mxu0 %v371
      %v726 = vpop.f32.mrb[0].mxu0
      %v727 = vadd.f32 0.0, %v726
      %v728 = vpop.f32.mrb[0].mxu0
      %v729 = vadd.f32 0.0, %v728
      %v730 = vpop.f32.mrb[0].mxu0
      %v731 = vadd.f32 0.0, %v730
      %v732 = vpop.f32.mrb[0].mxu0
      %v733 = vadd.f32 0.0, %v732
      %734 = vmatprep.mubr.bf16.mxu0 %v557
      %735 = vmatmul.mubr.bf16.gmra.mrb[0].mxu0 %v373
      %v736 = vpop.f32.mrb[0].mxu0
      %v737 = vadd.f32 0.0, %v736
      %v738 = vpop.f32.mrb[0].mxu0
      %v739 = vadd.f32 0.0, %v738
      %v740 = vpop.f32.mrb[0].mxu0
      %v741 = vadd.f32 0.0, %v740
      %v742 = vpop.f32.mrb[0].mxu0
      %v743 = vadd.f32 0.0, %v742
      %744 = vmatprep.mubr.bf16.mxu0 %v560
      %745 = vmatmul.mubr.bf16.gmra.mrb[0].mxu0 %v375
      %v746 = vpop.f32.mrb[0].mxu0
      %v747 = vadd.f32 0.0, %v746
      %v748 = vpop.f32.mrb[0].mxu0
      %v749 = vadd.f32 0.0, %v748
      %v750 = vpop.f32.mrb[0].mxu0
      %v751 = vadd.f32 0.0, %v750
      %v752 = vpop.f32.mrb[0].mxu0
      %v753 = vadd.f32 0.0, %v752
      %754 = vdwg.mxu0
      %v755 = vpack.c.bf16 %v601, %v597
      %v756 = vpack.c.bf16 %v603, %v599
      %v757 = vpack.c.bf16 %v611, %v607
      %v758 = vpack.c.bf16 %v613, %v609
      %v759 = vpack.c.bf16 %v621, %v617
      %v760 = vpack.c.bf16 %v623, %v619
      %v761 = vpack.c.bf16 %v631, %v627
      %v762 = vpack.c.bf16 %v633, %v629
      %v763 = vpack.c.bf16 %v641, %v637
      %v764 = vpack.c.bf16 %v643, %v639
      %v765 = vpack.c.bf16 %v651, %v647
      %v766 = vpack.c.bf16 %v653, %v649
      %v767 = vpack.c.bf16 %v661, %v657
      %v768 = vpack.c.bf16 %v663, %v659
      %v769 = vpack.c.bf16 %v671, %v667
      %v770 = vpack.c.bf16 %v673, %v669
      %v771 = vpack.c.bf16 %v681, %v677
      %v772 = vpack.c.bf16 %v683, %v679
      %v773 = vpack.c.bf16 %v691, %v687
      %v774 = vpack.c.bf16 %v693, %v689
      %v775 = vpack.c.bf16 %v701, %v697
      %v776 = vpack.c.bf16 %v703, %v699
      %v777 = vpack.c.bf16 %v711, %v707
      %v778 = vpack.c.bf16 %v713, %v709
      %v779 = vpack.c.bf16 %v721, %v717
      %v780 = vpack.c.bf16 %v723, %v719
      %v781 = vpack.c.bf16 %v731, %v727
      %v782 = vpack.c.bf16 %v733, %v729
      %v783 = vpack.c.bf16 %v741, %v737
      %v784 = vpack.c.bf16 %v743, %v739
      %v785 = vpack.c.bf16 %v751, %v747
      %v786 = vpack.c.bf16 %v753, %v749
      %v819 = vunpack.c.l.b16 %v755
      %v820 = vunpack.c.l.b16 %v756
      %v821 = vunpack.c.h.b16 %v755
      %v822 = vunpack.c.h.b16 %v756
      %v823 = vunpack.c.l.b16 %v757
      %v824 = vunpack.c.l.b16 %v758
      %v825 = vunpack.c.h.b16 %v757
      %v826 = vunpack.c.h.b16 %v758
      %v827 = vunpack.c.l.b16 %v759
      %v828 = vunpack.c.l.b16 %v760
      %v829 = vunpack.c.h.b16 %v759
      %v830 = vunpack.c.h.b16 %v760
      %v831 = vunpack.c.l.b16 %v761
      %v832 = vunpack.c.l.b16 %v762
      %v833 = vunpack.c.h.b16 %v761
      %v834 = vunpack.c.h.b16 %v762
      %v835 = vunpack.c.l.b16 %v763
      %v836 = vunpack.c.l.b16 %v764
      %v837 = vunpack.c.h.b16 %v763
      %v838 = vunpack.c.h.b16 %v764
      %v839 = vunpack.c.l.b16 %v765
      %v840 = vunpack.c.l.b16 %v766
      %v841 = vunpack.c.h.b16 %v765
      %v842 = vunpack.c.h.b16 %v766
      %v843 = vunpack.c.l.b16 %v767
      %v844 = vunpack.c.l.b16 %v768
      %v845 = vunpack.c.h.b16 %v767
      %v846 = vunpack.c.h.b16 %v768
      %v847 = vunpack.c.l.b16 %v769
      %v848 = vunpack.c.l.b16 %v770
      %v849 = vunpack.c.h.b16 %v769
      %v850 = vunpack.c.h.b16 %v770
      %v851 = vunpack.c.l.b16 %v771
      %v852 = vunpack.c.l.b16 %v772
      %v853 = vunpack.c.h.b16 %v771
      %v854 = vunpack.c.h.b16 %v772
      %v855 = vunpack.c.l.b16 %v773
      %v856 = vunpack.c.l.b16 %v774
      %v857 = vunpack.c.h.b16 %v773
      %v858 = vunpack.c.h.b16 %v774
      %v859 = vunpack.c.l.b16 %v775
      %v860 = vunpack.c.l.b16 %v776
      %v861 = vunpack.c.h.b16 %v775
      %v862 = vunpack.c.h.b16 %v776
      %v863 = vunpack.c.l.b16 %v777
      %v864 = vunpack.c.l.b16 %v778
      %v865 = vunpack.c.h.b16 %v777
      %v866 = vunpack.c.h.b16 %v778
      %v867 = vunpack.c.l.b16 %v779
      %v868 = vunpack.c.l.b16 %v780
      %v869 = vunpack.c.h.b16 %v779
      %v870 = vunpack.c.h.b16 %v780
      %v871 = vunpack.c.l.b16 %v781
      %v872 = vunpack.c.l.b16 %v782
      %v873 = vunpack.c.h.b16 %v781
      %v874 = vunpack.c.h.b16 %v782
      %v875 = vunpack.c.l.b16 %v783
      %v876 = vunpack.c.l.b16 %v784
      %v877 = vunpack.c.h.b16 %v783
      %v878 = vunpack.c.h.b16 %v784
      %v879 = vunpack.c.l.b16 %v785
      %v880 = vunpack.c.l.b16 %v786
      %v881 = vunpack.c.h.b16 %v785
      %v882 = vunpack.c.h.b16 %v786
      %v883 = vpack.c.b16 %v820, %v819
      %v884 = vpack.c.b16 %v822, %v821
      %v885 = vpack.c.b16 %v824, %v823
      %v886 = vpack.c.b16 %v826, %v825
      %v887 = vpack.c.b16 %v828, %v827
      %v888 = vpack.c.b16 %v830, %v829
      %v889 = vpack.c.b16 %v832, %v831
      %v890 = vpack.c.b16 %v834, %v833
      %v891 = vpack.c.b16 %v836, %v835
      %v892 = vpack.c.b16 %v838, %v837
      %v893 = vpack.c.b16 %v840, %v839
      %v894 = vpack.c.b16 %v842, %v841
      %v895 = vpack.c.b16 %v844, %v843
      %v896 = vpack.c.b16 %v846, %v845
      %v897 = vpack.c.b16 %v848, %v847
      %v898 = vpack.c.b16 %v850, %v849
      %v899 = vpack.c.b16 %v852, %v851
      %v900 = vpack.c.b16 %v854, %v853
      %v901 = vpack.c.b16 %v856, %v855
      %v902 = vpack.c.b16 %v858, %v857
      %v903 = vpack.c.b16 %v860, %v859
      %v904 = vpack.c.b16 %v862, %v861
      %v905 = vpack.c.b16 %v864, %v863
      %v906 = vpack.c.b16 %v866, %v865
      %v907 = vpack.c.b16 %v868, %v867
      %v908 = vpack.c.b16 %v870, %v869
      %v909 = vpack.c.b16 %v872, %v871
      %v910 = vpack.c.b16 %v874, %v873
      %v911 = vpack.c.b16 %v876, %v875
      %v912 = vpack.c.b16 %v878, %v877
      %v913 = vpack.c.b16 %v880, %v879
      %v914 = vpack.c.b16 %v882, %v881
      %vm947 = vcmask 1043456
      %vm948 = vcmask 392196
      %vm949 = vmor %vm948, %vm947
      %950 = vst.msk [vmem:[%s185] sm:$0xff] %vm949, %v883
      %951 = vst.msk [vmem:[%s185 + $0x8] sm:$0xff] %vm949, %v884
      %952 = vst.msk [vmem:[%s185 + $0x10] sm:$0xff] %vm949, %v885
      %953 = vst.msk [vmem:[%s185 + $0x18] sm:$0xff] %vm949, %v886
      %954 = vst.msk [vmem:[%s185 + $0x20] sm:$0xff] %vm949, %v887
      %955 = vst.msk [vmem:[%s185 + $0x28] sm:$0xff] %vm949, %v888
      %956 = vst.msk [vmem:[%s185 + $0x30] sm:$0xff] %vm949, %v889
      %957 = vst.msk [vmem:[%s185 + $0x38] sm:$0xff] %vm949, %v890
      %958 = vst.msk [vmem:[%s185 + $0x40] sm:$0xff] %vm949, %v891
      %959 = vst.msk [vmem:[%s185 + $0x48] sm:$0xff] %vm949, %v892
      %960 = vst.msk [vmem:[%s185 + $0x50] sm:$0xff] %vm949, %v893
      %961 = vst.msk [vmem:[%s185 + $0x58] sm:$0xff] %vm949, %v894
      %962 = vst.msk [vmem:[%s185 + $0x60] sm:$0xff] %vm949, %v895
      %963 = vst.msk [vmem:[%s185 + $0x68] sm:$0xff] %vm949, %v896
      %964 = vst.msk [vmem:[%s185 + $0x70] sm:$0xff] %vm949, %v897
      %965 = vst.msk [vmem:[%s185 + $0x78] sm:$0xff] %vm949, %v898
      %966 = vst.msk [vmem:[%s185 + $0x80] sm:$0xff] %vm949, %v899
      %967 = vst.msk [vmem:[%s185 + $0x88] sm:$0xff] %vm949, %v900
      %968 = vst.msk [vmem:[%s185 + $0x90] sm:$0xff] %vm949, %v901
      %969 = vst.msk [vmem:[%s185 + $0x98] sm:$0xff] %vm949, %v902
      %970 = vst.msk [vmem:[%s185 + $0xa0] sm:$0xff] %vm949, %v903
      %971 = vst.msk [vmem:[%s185 + $0xa8] sm:$0xff] %vm949, %v904
      %972 = vst.msk [vmem:[%s185 + $0xb0] sm:$0xff] %vm949, %v905
      %973 = vst.msk [vmem:[%s185 + $0xb8] sm:$0xff] %vm949, %v906
      %974 = vst.msk [vmem:[%s185 + $0xc0] sm:$0xff] %vm949, %v907
      %975 = vst.msk [vmem:[%s185 + $0xc8] sm:$0xff] %vm949, %v908
      %976 = vst.msk [vmem:[%s185 + $0xd0] sm:$0xff] %vm949, %v909
      %977 = vst.msk [vmem:[%s185 + $0xd8] sm:$0xff] %vm949, %v910
      %978 = vst.msk [vmem:[%s185 + $0xe0] sm:$0xff] %vm949, %v911
      %979 = vst.msk [vmem:[%s185 + $0xe8] sm:$0xff] %vm949, %v912
      %980 = vst.msk [vmem:[%s185 + $0xf0] sm:$0xff] %vm949, %v913
      %981 = vst.msk [vmem:[%s185 + $0xf8] sm:$0xff] %vm949, %v914
      %v982 = vadd.f32 %v597, %v601
      %v983 = vadd.f32 %v982, %v607
      %v984 = vadd.f32 %v983, %v611
      %v985 = vadd.f32 %v984, %v617
      %v986 = vadd.f32 %v985, %v621
      %v987 = vadd.f32 %v986, %v627
      %v988 = vadd.f32 %v987, %v631
      %v989 = vadd.f32 %v988, %v637
      %v990 = vadd.f32 %v989, %v641
      %v991 = vadd.f32 %v990, %v647
      %v992 = vadd.f32 %v991, %v651
      %v993 = vadd.f32 %v992, %v657
      %v994 = vadd.f32 %v993, %v661
      %v995 = vadd.f32 %v994, %v667
      %v996 = vadd.f32 %v995, %v671
      %v997 = vadd.f32 %v996, %v677
      %v998 = vadd.f32 %v997, %v681
      %v999 = vadd.f32 %v998, %v687
      %v1000 = vadd.f32 %v999, %v691
      %v1001 = vadd.f32 %v1000, %v697
      %v1002 = vadd.f32 %v1001, %v701
      %v1003 = vadd.f32 %v1002, %v707
      %v1004 = vadd.f32 %v1003, %v711
      %v1005 = vadd.f32 %v1004, %v717
      %v1006 = vadd.f32 %v1005, %v721
      %v1007 = vadd.f32 %v1006, %v727
      %v1008 = vadd.f32 %v1007, %v731
      %v1009 = vadd.f32 %v1008, %v737
      %v1010 = vadd.f32 %v1009, %v741
      %v1011 = vadd.f32 %v1010, %v747
      %v1012 = vadd.f32 %v1011, %v751
      %v1013 = vrot.slane %v1012, 4
      %v1014 = vadd.f32 %v1012, %v1013
      %v1015 = vrot.slane %v1014, 2
      %v1016 = vadd.f32 %v1014, %v1015
      %v1017 = vrot.slane %v1016, 1
      %v1018 = vadd.f32 %v1016, %v1017
      %vm1019 = vcmask 392192
      %v1020 = vsel %vm1019, %v599, 0.0
      %v1021 = vsel %vm1019, %v603, 0.0
      %v1022 = vadd.f32 %v1020, %v1021
      %v1023 = vsel %vm1019, %v609, 0.0
      %v1024 = vadd.f32 %v1022, %v1023
      %v1025 = vsel %vm1019, %v613, 0.0
      %v1026 = vadd.f32 %v1024, %v1025
      %v1027 = vsel %vm1019, %v619, 0.0
      %v1028 = vadd.f32 %v1026, %v1027
      %v1029 = vsel %vm1019, %v623, 0.0
      %v1030 = vadd.f32 %v1028, %v1029
      %v1031 = vsel %vm1019, %v629, 0.0
      %v1032 = vadd.f32 %v1030, %v1031
      %v1033 = vsel %vm1019, %v633, 0.0
      %v1034 = vadd.f32 %v1032, %v1033
      %v1035 = vsel %vm1019, %v639, 0.0
      %v1036 = vadd.f32 %v1034, %v1035
      %v1037 = vsel %vm1019, %v643, 0.0
      %v1038 = vadd.f32 %v1036, %v1037
      %v1039 = vsel %vm1019, %v649, 0.0
      %v1040 = vadd.f32 %v1038, %v1039
      %v1041 = vsel %vm1019, %v653, 0.0
      %v1042 = vadd.f32 %v1040, %v1041
      %v1043 = vsel %vm1019, %v659, 0.0
      %v1044 = vadd.f32 %v1042, %v1043
      %v1045 = vsel %vm1019, %v663, 0.0
      %v1046 = vadd.f32 %v1044, %v1045
      %v1047 = vsel %vm1019, %v669, 0.0
      %v1048 = vadd.f32 %v1046, %v1047
      %v1049 = vsel %vm1019, %v673, 0.0
      %v1050 = vadd.f32 %v1048, %v1049
      %v1051 = vsel %vm1019, %v679, 0.0
      %v1052 = vadd.f32 %v1050, %v1051
      %v1053 = vsel %vm1019, %v683, 0.0
      %v1054 = vadd.f32 %v1052, %v1053
      %v1055 = vsel %vm1019, %v689, 0.0
      %v1056 = vadd.f32 %v1054, %v1055
      %v1057 = vsel %vm1019, %v693, 0.0
      %v1058 = vadd.f32 %v1056, %v1057
      %v1059 = vsel %vm1019, %v699, 0.0
      %v1060 = vadd.f32 %v1058, %v1059
      %v1061 = vsel %vm1019, %v703, 0.0
      %v1062 = vadd.f32 %v1060, %v1061
      %v1063 = vsel %vm1019, %v709, 0.0
      %v1064 = vadd.f32 %v1062, %v1063
      %v1065 = vsel %vm1019, %v713, 0.0
      %v1066 = vadd.f32 %v1064, %v1065
      %v1067 = vsel %vm1019, %v719, 0.0
      %v1068 = vadd.f32 %v1066, %v1067
      %v1069 = vsel %vm1019, %v723, 0.0
      %v1070 = vadd.f32 %v1068, %v1069
      %v1071 = vsel %vm1019, %v729, 0.0
      %v1072 = vadd.f32 %v1070, %v1071
      %v1073 = vsel %vm1019, %v733, 0.0
      %v1074 = vadd.f32 %v1072, %v1073
      %v1075 = vsel %vm1019, %v739, 0.0
      %v1076 = vadd.f32 %v1074, %v1075
      %v1077 = vsel %vm1019, %v743, 0.0
      %v1078 = vadd.f32 %v1076, %v1077
      %v1079 = vsel %vm1019, %v749, 0.0
      %v1080 = vadd.f32 %v1078, %v1079
      %v1081 = vsel %vm1019, %v753, 0.0
      %v1082 = vadd.f32 %v1080, %v1081
      %v1083 = vrot.slane %v1082, 4
      %v1084 = vadd.f32 %v1082, %v1083
      %v1085 = vrot.slane %v1084, 2
      %v1086 = vadd.f32 %v1084, %v1085
      %v1087 = vrot.slane %v1086, 1
      %v1088 = vadd.f32 %v1086, %v1087
      %v1089 = vmul.f32 %v597, %v597
      %v1090 = vmul.f32 %v599, %v599
      %v1091 = vmul.f32 %v601, %v601
      %v1092 = vmul.f32 %v603, %v603
      %v1093 = vmul.f32 %v607, %v607
      %v1094 = vmul.f32 %v609, %v609
      %v1095 = vmul.f32 %v611, %v611
      %v1096 = vmul.f32 %v613, %v613
      %v1097 = vmul.f32 %v617, %v617
      %v1098 = vmul.f32 %v619, %v619
      %v1099 = vmul.f32 %v621, %v621
      %v1100 = vmul.f32 %v623, %v623
      %v1101 = vmul.f32 %v627, %v627
      %v1102 = vmul.f32 %v629, %v629
      %v1103 = vmul.f32 %v631, %v631
      %v1104 = vmul.f32 %v633, %v633
      %v1105 = vmul.f32 %v637, %v637
      %v1106 = vmul.f32 %v639, %v639
      %v1107 = vmul.f32 %v641, %v641
      %v1108 = vmul.f32 %v643, %v643
      %v1109 = vmul.f32 %v647, %v647
      %v1110 = vmul.f32 %v649, %v649
      %v1111 = vmul.f32 %v651, %v651
      %v1112 = vmul.f32 %v653, %v653
      %v1113 = vmul.f32 %v657, %v657
      %v1114 = vmul.f32 %v659, %v659
      %v1115 = vmul.f32 %v661, %v661
      %v1116 = vmul.f32 %v663, %v663
      %v1117 = vmul.f32 %v667, %v667
      %v1118 = vmul.f32 %v669, %v669
      %v1119 = vmul.f32 %v671, %v671
      %v1120 = vmul.f32 %v673, %v673
      %v1121 = vmul.f32 %v677, %v677
      %v1122 = vmul.f32 %v679, %v679
      %v1123 = vmul.f32 %v681, %v681
      %v1124 = vmul.f32 %v683, %v683
      %v1125 = vmul.f32 %v687, %v687
      %v1126 = vmul.f32 %v689, %v689
      %v1127 = vmul.f32 %v691, %v691
      %v1128 = vmul.f32 %v693, %v693
      %v1129 = vmul.f32 %v697, %v697
      %v1130 = vmul.f32 %v699, %v699
      %v1131 = vmul.f32 %v701, %v701
      %v1132 = vmul.f32 %v703, %v703
      %v1133 = vmul.f32 %v707, %v707
      %v1134 = vmul.f32 %v709, %v709
      %v1135 = vmul.f32 %v711, %v711
      %v1136 = vmul.f32 %v713, %v713
      %v1137 = vmul.f32 %v717, %v717
      %v1138 = vmul.f32 %v719, %v719
      %v1139 = vmul.f32 %v721, %v721
      %v1140 = vmul.f32 %v723, %v723
      %v1141 = vmul.f32 %v727, %v727
      %v1142 = vmul.f32 %v729, %v729
      %v1143 = vmul.f32 %v731, %v731
      %v1144 = vmul.f32 %v733, %v733
      %v1145 = vmul.f32 %v737, %v737
      %v1146 = vmul.f32 %v739, %v739
      %v1147 = vmul.f32 %v741, %v741
      %v1148 = vmul.f32 %v743, %v743
      %v1149 = vmul.f32 %v747, %v747
      %v1150 = vmul.f32 %v749, %v749
      %v1151 = vmul.f32 %v751, %v751
      %v1152 = vmul.f32 %v753, %v753
      %v1153 = vadd.f32 %v1089, %v1091
      %v1154 = vadd.f32 %v1153, %v1093
      %v1155 = vadd.f32 %v1154, %v1095
      %v1156 = vadd.f32 %v1155, %v1097
      %v1157 = vadd.f32 %v1156, %v1099
      %v1158 = vadd.f32 %v1157, %v1101
      %v1159 = vadd.f32 %v1158, %v1103
      %v1160 = vadd.f32 %v1159, %v1105
      %v1161 = vadd.f32 %v1160, %v1107
      %v1162 = vadd.f32 %v1161, %v1109
      %v1163 = vadd.f32 %v1162, %v1111
      %v1164 = vadd.f32 %v1163, %v1113
      %v1165 = vadd.f32 %v1164, %v1115
      %v1166 = vadd.f32 %v1165, %v1117
      %v1167 = vadd.f32 %v1166, %v1119
      %v1168 = vadd.f32 %v1167, %v1121
      %v1169 = vadd.f32 %v1168, %v1123
      %v1170 = vadd.f32 %v1169, %v1125
      %v1171 = vadd.f32 %v1170, %v1127
      %v1172 = vadd.f32 %v1171, %v1129
      %v1173 = vadd.f32 %v1172, %v1131
      %v1174 = vadd.f32 %v1173, %v1133
      %v1175 = vadd.f32 %v1174, %v1135
      %v1176 = vadd.f32 %v1175, %v1137
      %v1177 = vadd.f32 %v1176, %v1139
      %v1178 = vadd.f32 %v1177, %v1141
      %v1179 = vadd.f32 %v1178, %v1143
      %v1180 = vadd.f32 %v1179, %v1145
      %v1181 = vadd.f32 %v1180, %v1147
      %v1182 = vadd.f32 %v1181, %v1149
      %v1183 = vadd.f32 %v1182, %v1151
      %v1184 = vrot.slane %v1183, 4
      %v1185 = vadd.f32 %v1183, %v1184
      %v1186 = vrot.slane %v1185, 2
      %v1187 = vadd.f32 %v1185, %v1186
      %v1188 = vrot.slane %v1187, 1
      %v1189 = vadd.f32 %v1187, %v1188
      %v1190 = vsel %vm1019, %v1090, 0.0
      %v1191 = vsel %vm1019, %v1092, 0.0
      %v1192 = vadd.f32 %v1190, %v1191
      %v1193 = vsel %vm1019, %v1094, 0.0
      %v1194 = vadd.f32 %v1192, %v1193
      %v1195 = vsel %vm1019, %v1096, 0.0
      %v1196 = vadd.f32 %v1194, %v1195
      %v1197 = vsel %vm1019, %v1098, 0.0
      %v1198 = vadd.f32 %v1196, %v1197
      %v1199 = vsel %vm1019, %v1100, 0.0
      %v1200 = vadd.f32 %v1198, %v1199
      %v1201 = vsel %vm1019, %v1102, 0.0
      %v1202 = vadd.f32 %v1200, %v1201
      %v1203 = vsel %vm1019, %v1104, 0.0
      %v1204 = vadd.f32 %v1202, %v1203
      %v1205 = vsel %vm1019, %v1106, 0.0
      %v1206 = vadd.f32 %v1204, %v1205
      %v1207 = vsel %vm1019, %v1108, 0.0
      %v1208 = vadd.f32 %v1206, %v1207
      %v1209 = vsel %vm1019, %v1110, 0.0
      %v1210 = vadd.f32 %v1208, %v1209
      %v1211 = vsel %vm1019, %v1112, 0.0
      %v1212 = vadd.f32 %v1210, %v1211
      %v1213 = vsel %vm1019, %v1114, 0.0
      %v1214 = vadd.f32 %v1212, %v1213
      %v1215 = vsel %vm1019, %v1116, 0.0
      %v1216 = vadd.f32 %v1214, %v1215
      %v1217 = vsel %vm1019, %v1118, 0.0
      %v1218 = vadd.f32 %v1216, %v1217
      %v1219 = vsel %vm1019, %v1120, 0.0
      %v1220 = vadd.f32 %v1218, %v1219
      %v1221 = vsel %vm1019, %v1122, 0.0
      %v1222 = vadd.f32 %v1220, %v1221
      %v1223 = vsel %vm1019, %v1124, 0.0
      %v1224 = vadd.f32 %v1222, %v1223
      %v1225 = vsel %vm1019, %v1126, 0.0
      %v1226 = vadd.f32 %v1224, %v1225
      %v1227 = vsel %vm1019, %v1128, 0.0
      %v1228 = vadd.f32 %v1226, %v1227
      %v1229 = vsel %vm1019, %v1130, 0.0
      %v1230 = vadd.f32 %v1228, %v1229
      %v1231 = vsel %vm1019, %v1132, 0.0
      %v1232 = vadd.f32 %v1230, %v1231
      %v1233 = vsel %vm1019, %v1134, 0.0
      %v1234 = vadd.f32 %v1232, %v1233
      %v1235 = vsel %vm1019, %v1136, 0.0
      %v1236 = vadd.f32 %v1234, %v1235
      %v1237 = vsel %vm1019, %v1138, 0.0
      %v1238 = vadd.f32 %v1236, %v1237
      %v1239 = vsel %vm1019, %v1140, 0.0
      %v1240 = vadd.f32 %v1238, %v1239
      %v1241 = vsel %vm1019, %v1142, 0.0
      %v1242 = vadd.f32 %v1240, %v1241
      %v1243 = vsel %vm1019, %v1144, 0.0
      %v1244 = vadd.f32 %v1242, %v1243
      %v1245 = vsel %vm1019, %v1146, 0.0
      %v1246 = vadd.f32 %v1244, %v1245
      %v1247 = vsel %vm1019, %v1148, 0.0
      %v1248 = vadd.f32 %v1246, %v1247
      %v1249 = vsel %vm1019, %v1150, 0.0
      %v1250 = vadd.f32 %v1248, %v1249
      %v1251 = vsel %vm1019, %v1152, 0.0
      %v1252 = vadd.f32 %v1250, %v1251
      %v1253 = vrot.slane %v1252, 4
      %v1254 = vadd.f32 %v1252, %v1253
      %v1255 = vrot.slane %v1254, 2
      %v1256 = vadd.f32 %v1254, %v1255
      %v1257 = vrot.slane %v1256, 1
      %v1258 = vadd.f32 %v1256, %v1257
      %vm1259 = vcmask 1040384
      %v1260 = vsel %vm1259, %v1018, %v1189
      %v1261 = vsel %vm1259, %v1088, %v1258
      %v1264 = vcombine.low %v1260, %v1261
      %v1266 = vunpack.c.l.s4 1983009808
      %v1267 = vunpack.c.0.s8 %v1266
      %v1268 = vlaneseq
      %v1269 = vshrl.u32 %v1268, 7
      %v1270 = vsub.s32 %v1267, %v1269
      %v1271 = vrot.slane %v1264, %v1270
      %vm1273 = vcmask 1041408
      %vm1274 = vcmask 388098
      %vm1275 = vmor %vm1274, %vm1273
      %1276 = vst.msk [vmem:[%s191] sm:$0xf] %vm1275, %v1271
      %s1277 = smul.u32 32, %s15
      %p1278 = scmp.lt.s32.totalorder %s1277, 63
      %s1279 = scalar_select %p1278, %s1277, 63
      %s1280 = smul.addr %s1279, 2
      %s1281 = smul.addr %s1280, 4
      %s1282 = scalar_lea.vmem %s2, %s1281
      %p1283 = scmp.lt.s32.totalorder %s15, 1
      %s1284 = scalar_select %p1283, %s15, 1
      %s1285 = smul.addr %s1284, 2
      %s1286 = smul.addr %s1285, 2
      %s1287 = scalar_lea.vmem %s3, %s1286
      // Predicated region
      $region29: #{mixed_3b.6} parent=27 // pred_check
        %p1288 = pneg %p80
      $region30: #{mixed_3b.6} parent=27 // pred_check_branch
        %1290 = sbr.rel (%p1288) target = $region32
      $region31: #{mixed_3b.6} parent=27 // pred_region
        %s1291 = smul.u32 32, %s15
      $region32: #{mixed_3b.6} parent=27 // pred_fallthru
        _
      // Predicated region
      $region33: #{mixed_3b.6} parent=27 // pred_check
        %p1292 = pneg %p106
      $region34: #{mixed_3b.6} parent=27 // pred_check_branch
        %1294 = sbr.rel (%p1292) target = $region36
      $region35: #{mixed_3b.6} parent=27 // pred_region
        _
      $region36: #{mixed_3b.6} parent=27 // pred_fallthru
        _
    $region28: #{mixed_3b.6} parent=5 // pred_fallthru
      _
    %p1295 = scmp.le.s32.totalorder 2, %s10
    // Predicated region
    $region37: #{mixed_3b.6} parent=5 // pred_check
      %p1296 = pneg %p1295
    $region38: #{mixed_3b.6} parent=5 // pred_check_branch
      %1298 = sbr.rel (%p1296) target = $region40
    $region39: #{mixed_3b.6} parent=5 // pred_region
      %s1299 = ssub.s32 %s10, 2
      // Predicated region
      $region41: #{mixed_3b.6} parent=39 // pred_check
        %p1300 = pneg %p86
      $region42: #{mixed_3b.6} parent=39 // pred_check_branch
        %1302 = sbr.rel (%p1300) target = $region44
      $region43: #{mixed_3b.6} parent=39 // pred_region
        %s1303 = smul.u32 32, %s16
        %p1304 = scmp.lt.s32.totalorder %s1303, 63
        %s1305 = scalar_select %p1304, %s1303, 63
        %s1306 = smul.addr %s1305, 2
        %s1307 = smul.addr %s1306, 4
        %s1308 = scalar_lea.vmem %s2, %s1307
      $region44: #{mixed_3b.6} parent=39 // pred_fallthru
        _
      // Predicated region
      $region45: #{mixed_3b.6} parent=39 // pred_check
        %p1309 = pneg %p112
      $region46: #{mixed_3b.6} parent=39 // pred_check_branch
        %1311 = sbr.rel (%p1309) target = $region48
      $region47: #{mixed_3b.6} parent=39 // pred_region
        %p1312 = scmp.lt.s32.totalorder %s16, 1
        %s1313 = scalar_select %p1312, %s16, 1
        %s1314 = smul.addr %s1313, 2
        %s1315 = smul.addr %s1314, 2
        %s1316 = scalar_lea.vmem %s3, %s1315
      $region48: #{mixed_3b.6} parent=39 // pred_fallthru
        _
    $region40: #{mixed_3b.6} parent=5 // pred_fallthru
      _
  $region6: #{mixed_3b.6} parent=0 // loop_footer
    %s14 = sadd.s32 1, %s10
  $region7: #{mixed_3b.6} parent=0 // loop_footer_branch
    %9 = sbr.rel target = $region3
  $region8: #{mixed_3b.6} parent=0 // loop_exit
    _

// kernel: mixed_3b.7
$region0: #{mixed_3b.7}
  #allocation0 [shape = 'u32[]', space=smem, size = 0x4, offset = 0x4, fixed_abs, tag = 'smem constant byte address 0x4 - core index']
  #allocation1 [shape = 'u32[144,128]{1,0:T(1,128)}', space=vmem, size = 0x12000, scoped, tag = 'internal scratch']
  %s0 = inlined_call_operand.vmem [shape: bf16[512,176], index: 0, kind: input, shape index: {}]
  %s1 = inlined_call_operand.vmem [shape: f32[1,176], index: 1, kind: input, shape index: {}]
  %s2 = inlined_call_operand.vmem [shape: f32[1,176], index: 2, kind: input, shape index: {}]
  %s3 = inlined_call_operand.vmem [shape: bf16[512,64], index: 3, kind: output, shape index: {0}]
  %s4 = inlined_call_operand.vmem [shape: bf16[512,112], index: 4, kind: output, shape index: {1}]
  %5 = xla_tuple %s3, %s4
  %s6 = sld [smem:[#allocation0]]
  $region53: #{mixed_3b.7} parent=0
    _
  %s8 = ssub.s32 1, %s6
  %s9 = scalar_select 0, %s8, %s6
  loop: start=0, step=1, limit=4
  $region2: #{mixed_3b.7} parent=0 // loop_pre_header
    _
  $region3: #{mixed_3b.7} parent=0 // loop_header
    %s11 = sphi 0, %s15
    %p12 = scmp.ge.s32.totalorder %s11, 4
    %s21 = sphi 0, %s23
    %s24 = sphi 0, %s21
    %s25 = sphi 0, %s24
    %s41 = sphi 0, %s25
    %s45 = sphi 0, %s45
    %s47 = sphi 0, %s45
    %s48 = sphi 0, %s47
    %s62 = sphi 0, %s48
    %s66 = sphi 0, %s66
    %s68 = sphi 0, %s66
    %s69 = sphi 0, %s68
    %s83 = sphi 0, %s69
    %s89 = sphi 0, %s91
    %s92 = sphi 0, %s89
    %s93 = sphi 0, %s92
    %s109 = sphi 0, %s93
    %s115 = sphi 0, %s117
    %s118 = sphi 0, %s115
    %s119 = sphi 0, %s118
    %s135 = sphi 0, %s119
  $region4: #{mixed_3b.7} parent=0 // loop_header_branch
    %14 = sbr.rel (%p12) target = $region8
  $region5: #{mixed_3b.7} parent=0 // loop_body
    %s16 = ssub.s32 %s11, 1
    %s17 = ssub.s32 %s11, 2
    %s18 = sadd.s32 %s11, 1
    %s19 = ssub.s32 %s11, %s18
    %p20 = scmp.eq.s32.totalorder %s19, 0
    %s22 = sadd.s32 %s21, 1
    %s23 = scalar_select %p20, %s21, %s22
    %p26 = pneg %p20
    %p27 = scmp.eq.s32.totalorder %s11, 1
    %p28 = por %p26, %p27
    %p29 = scmp.ne.s32.totalorder %s21, %s24
    %p30 = scmp.eq.s32.totalorder %s11, 0
    %p31 = por %p29, %p30
    %p32 = scmp.ne.s32.totalorder %s21, %s24
    %p33 = scmp.eq.s32.totalorder %s16, 1
    %p34 = por %p32, %p33
    %p35 = scmp.ne.s32.totalorder %s24, %s25
    %p36 = scmp.eq.s32.totalorder %s16, 0
    %p37 = por %p35, %p36
    %p38 = scmp.ne.s32.totalorder %s24, %s25
    %p39 = scmp.eq.s32.totalorder %s17, 1
    %p40 = por %p38, %p39
    %p42 = scmp.ne.s32.totalorder %s25, %s41
    %p43 = scmp.eq.s32.totalorder %s17, 0
    %p44 = por %p42, %p43
    %s46 = sadd.s32 %s45, 1
    %p49 = scmp.eq.s32.totalorder %s11, 1
    %p50 = scmp.ne.s32.totalorder %s45, %s47
    %p51 = scmp.eq.s32.totalorder %s11, 0
    %p52 = por %p50, %p51
    %p53 = scmp.ne.s32.totalorder %s45, %s47
    %p54 = scmp.eq.s32.totalorder %s16, 1
    %p55 = por %p53, %p54
    %p56 = scmp.ne.s32.totalorder %s47, %s48
    %p57 = scmp.eq.s32.totalorder %s16, 0
    %p58 = por %p56, %p57
    %p59 = scmp.ne.s32.totalorder %s47, %s48
    %p60 = scmp.eq.s32.totalorder %s17, 1
    %p61 = por %p59, %p60
    %p63 = scmp.ne.s32.totalorder %s48, %s62
    %p64 = scmp.eq.s32.totalorder %s17, 0
    %p65 = por %p63, %p64
    %s67 = sadd.s32 %s66, 1
    %p70 = scmp.eq.s32.totalorder %s11, 1
    %p71 = scmp.ne.s32.totalorder %s66, %s68
    %p72 = scmp.eq.s32.totalorder %s11, 0
    %p73 = por %p71, %p72
    %p74 = scmp.ne.s32.totalorder %s66, %s68
    %p75 = scmp.eq.s32.totalorder %s16, 1
    %p76 = por %p74, %p75
    %p77 = scmp.ne.s32.totalorder %s68, %s69
    %p78 = scmp.eq.s32.totalorder %s16, 0
    %p79 = por %p77, %p78
    %p80 = scmp.ne.s32.totalorder %s68, %s69
    %p81 = scmp.eq.s32.totalorder %s17, 1
    %p82 = por %p80, %p81
    %p84 = scmp.ne.s32.totalorder %s69, %s83
    %p85 = scmp.eq.s32.totalorder %s17, 0
    %p86 = por %p84, %p85
    %s87 = ssub.s32 %s11, %s18
    %p88 = scmp.eq.s32.totalorder %s87, 0
    %s90 = sadd.s32 %s89, 1
    %s91 = scalar_select %p88, %s89, %s90
    %p94 = pneg %p88
    %p95 = scmp.eq.s32.totalorder %s11, 1
    %p96 = por %p94, %p95
    %p97 = scmp.ne.s32.totalorder %s89, %s92
    %p98 = scmp.eq.s32.totalorder %s11, 0
    %p99 = por %p97, %p98
    %p100 = scmp.ne.s32.totalorder %s89, %s92
    %p101 = scmp.eq.s32.totalorder %s16, 1
    %p102 = por %p100, %p101
    %p103 = scmp.ne.s32.totalorder %s92, %s93
    %p104 = scmp.eq.s32.totalorder %s16, 0
    %p105 = por %p103, %p104
    %p106 = scmp.ne.s32.totalorder %s92, %s93
    %p107 = scmp.eq.s32.totalorder %s17, 1
    %p108 = por %p106, %p107
    %p110 = scmp.ne.s32.totalorder %s93, %s109
    %p111 = scmp.eq.s32.totalorder %s17, 0
    %p112 = por %p110, %p111
    %s113 = ssub.s32 %s11, %s18
    %p114 = scmp.eq.s32.totalorder %s113, 0
    %s116 = sadd.s32 %s115, 1
    %s117 = scalar_select %p114, %s115, %s116
    %p120 = pneg %p114
    %p121 = scmp.eq.s32.totalorder %s11, 1
    %p122 = por %p120, %p121
    %p123 = scmp.ne.s32.totalorder %s115, %s118
    %p124 = scmp.eq.s32.totalorder %s11, 0
    %p125 = por %p123, %p124
    %p126 = scmp.ne.s32.totalorder %s115, %s118
    %p127 = scmp.eq.s32.totalorder %s16, 1
    %p128 = por %p126, %p127
    %p129 = scmp.ne.s32.totalorder %s118, %s119
    %p130 = scmp.eq.s32.totalorder %s16, 0
    %p131 = por %p129, %p130
    %p132 = scmp.ne.s32.totalorder %s118, %s119
    %p133 = scmp.eq.s32.totalorder %s17, 1
    %p134 = por %p132, %p133
    %p136 = scmp.ne.s32.totalorder %s119, %s135
    %p137 = scmp.eq.s32.totalorder %s17, 0
    %p138 = por %p136, %p137
    %p139 = scmp.le.s32.totalorder 1, %s11
    %p140 = scmp.lt.s32.totalorder %s11, 3
    %p141 = pnand %p139, %p140
    %p142 = pneg %p141
    // Predicated region
    $region9: #{mixed_3b.7} parent=5 // pred_check
      _
    $region10: #{mixed_3b.7} parent=5 // pred_check_branch
      %144 = sbr.rel (%p141) target = $region12
    $region11: #{mixed_3b.7} parent=5 // pred_region
      %s145 = ssub.s32 %s11, 1
      // Predicated region
      $region13: #{mixed_3b.7} parent=11 // pred_check
        %p146 = pneg %p58
      $region14: #{mixed_3b.7} parent=11 // pred_check_branch
        %148 = sbr.rel (%p146) target = $region16
      $region15: #{mixed_3b.7} parent=11 // pred_region
        _
      $region16: #{mixed_3b.7} parent=11 // pred_fallthru
        _
      // Predicated region
      $region17: #{mixed_3b.7} parent=11 // pred_check
        %p149 = pneg %p79
      $region18: #{mixed_3b.7} parent=11 // pred_check_branch
        %151 = sbr.rel (%p149) target = $region20
      $region19: #{mixed_3b.7} parent=11 // pred_region
        _
      $region20: #{mixed_3b.7} parent=11 // pred_fallthru
        _
    $region12: #{mixed_3b.7} parent=5 // pred_fallthru
      _
    %p152 = scmp.lt.s32.totalorder %s11, 2
    // Predicated region
    $region21: #{mixed_3b.7} parent=5 // pred_check
      %p153 = pneg %p152
    $region22: #{mixed_3b.7} parent=5 // pred_check_branch
      %155 = sbr.rel (%p153) target = $region24
    $region23: #{mixed_3b.7} parent=5 // pred_region
      // Predicated region
      $region25: #{mixed_3b.7} parent=23 // pred_check
        %p156 = pneg %p31
      $region26: #{mixed_3b.7} parent=23 // pred_check_branch
        %158 = sbr.rel (%p156) target = $region28
      $region27: #{mixed_3b.7} parent=23 // pred_region
        %s159 = smul.u32 32, %s11
        %p160 = scmp.lt.s32.totalorder %s159, 63
        %s161 = scalar_select %p160, %s159, 63
        %s162 = smul.addr %s161, 2
        %s163 = smul.addr %s162, 4
        %s164 = scalar_lea.vmem %s0, %s163
        %s165 = smul.u32 32, %s11
      $region28: #{mixed_3b.7} parent=23 // pred_fallthru
        _
    $region24: #{mixed_3b.7} parent=5 // pred_fallthru
      _
    %p166 = scmp.le.s32.totalorder 1, %s11
    %p167 = scmp.lt.s32.totalorder %s11, 3
    %p168 = pnand %p166, %p167
    %p169 = pneg %p168
    // Predicated region
    $region29: #{mixed_3b.7} parent=5 // pred_check
      _
    $region30: #{mixed_3b.7} parent=5 // pred_check_branch
      %171 = sbr.rel (%p168) target = $region32
    $region31: #{mixed_3b.7} parent=5 // pred_region
      %s172 = ssub.s32 %s11, 1
      %s173 = smul.u32 32, %s16
      %p174 = scmp.lt.s32.totalorder %s173, 63
      %s175 = scalar_select %p174, %s173, 63
      %s176 = smul.addr %s175, 2
      %s177 = smul.addr %s176, 4
      %s178 = scalar_lea.vmem %s0, %s177
      %p179 = pneg %p37
      %p180 = pneg %p34
      %p181 = pneg %p58
      %p182 = pneg %p55
      %p183 = pneg %p79
      %p184 = pneg %p76
      %p185 = pneg %p105
      %p186 = pneg %p102
      %s187 = smul.u32 32, %s16
      %p188 = scmp.lt.s32.totalorder %s187, 63
      %s189 = scalar_select %p188, %s187, 63
      %s190 = smul.addr %s189, 4
      %s191 = scalar_lea.vmem %s3, %s190
      %p192 = pneg %p131
      %p193 = pneg %p128
      %s194 = smul.u32 32, %s16
      %p195 = scmp.lt.s32.totalorder %s194, 63
      %s196 = scalar_select %p195, %s194, 63
      %s197 = smul.addr %s196, 4
      %s198 = scalar_lea.vmem %s4, %s197
      %s199 = smul.u32 32, %s16
      %p200 = scmp.lt.s32.totalorder %s199, 63
      %s201 = scalar_select %p200, %s199, 63
      %s202 = smul.addr %s201, 2
      %s203 = smul.addr %s202, 4
      %s204 = scalar_lea.vmem %s0, %s203
      %s205 = smul.u32 32, %s16
      %s206 = smul.u32 32, %s16
      %p207 = scmp.lt.s32.totalorder %s206, 63
      %s208 = scalar_select %p207, %s206, 63
      %s209 = smul.addr %s208, 4
      %s210 = scalar_lea.vmem %s3, %s209
      %s211 = smul.u32 32, %s16
      %s212 = smul.u32 32, %s16
      %p213 = scmp.lt.s32.totalorder %s212, 63
      %s214 = scalar_select %p213, %s212, 63
      %s215 = smul.addr %s214, 4
      %s216 = scalar_lea.vmem %s4, %s215
      %s217 = smul.u32 32, %s16
      %v218 = vld [vmem:[%s204] sm:$0xff]
      %v219 = vld [vmem:[%s204 + $0x8] sm:$0xff]
      %v220 = vld [vmem:[%s204 + $0x10] sm:$0xff]
      %v221 = vld [vmem:[%s204 + $0x18] sm:$0xff]
      %v222 = vld [vmem:[%s204 + $0x20] sm:$0xff]
      %v223 = vld [vmem:[%s204 + $0x28] sm:$0xff]
      %v224 = vld [vmem:[%s204 + $0x30] sm:$0xff]
      %v225 = vld [vmem:[%s204 + $0x38] sm:$0xff]
      %v226 = vld [vmem:[%s204 + $0x40] sm:$0xff]
      %v227 = vld [vmem:[%s204 + $0x48] sm:$0xff]
      %v228 = vld [vmem:[%s204 + $0x50] sm:$0xff]
      %v229 = vld [vmem:[%s204 + $0x58] sm:$0xff]
      %v230 = vld [vmem:[%s204 + $0x60] sm:$0xff]
      %v231 = vld [vmem:[%s204 + $0x68] sm:$0xff]
      %v232 = vld [vmem:[%s204 + $0x70] sm:$0xff]
      %v233 = vld [vmem:[%s204 + $0x78] sm:$0xff]
      %v234 = vld [vmem:[%s204 + $0x80] sm:$0xff]
      %v235 = vld [vmem:[%s204 + $0x88] sm:$0xff]
      %v236 = vld [vmem:[%s204 + $0x90] sm:$0xff]
      %v237 = vld [vmem:[%s204 + $0x98] sm:$0xff]
      %v238 = vld [vmem:[%s204 + $0xa0] sm:$0xff]
      %v239 = vld [vmem:[%s204 + $0xa8] sm:$0xff]
      %v240 = vld [vmem:[%s204 + $0xb0] sm:$0xff]
      %v241 = vld [vmem:[%s204 + $0xb8] sm:$0xff]
      %v242 = vld [vmem:[%s204 + $0xc0] sm:$0xff]
      %v243 = vld [vmem:[%s204 + $0xc8] sm:$0xff]
      %v244 = vld [vmem:[%s204 + $0xd0] sm:$0xff]
      %v245 = vld [vmem:[%s204 + $0xd8] sm:$0xff]
      %v246 = vld [vmem:[%s204 + $0xe0] sm:$0xff]
      %v247 = vld [vmem:[%s204 + $0xe8] sm:$0xff]
      %v248 = vld [vmem:[%s204 + $0xf0] sm:$0xff]
      %v249 = vld [vmem:[%s204 + $0xf8] sm:$0xff]
      %v250 = vunpack.c.l.bf16 %v218
      %v251 = vunpack.c.h.bf16 %v218
      %v252 = vunpack.c.l.bf16 %v219
      %v253 = vunpack.c.h.bf16 %v219
      %v254 = vunpack.c.l.bf16 %v220
      %v255 = vunpack.c.h.bf16 %v220
      %v256 = vunpack.c.l.bf16 %v221
      %v257 = vunpack.c.h.bf16 %v221
      %v258 = vunpack.c.l.bf16 %v222
      %v259 = vunpack.c.h.bf16 %v222
      %v260 = vunpack.c.l.bf16 %v223
      %v261 = vunpack.c.h.bf16 %v223
      %v262 = vunpack.c.l.bf16 %v224
      %v263 = vunpack.c.h.bf16 %v224
      %v264 = vunpack.c.l.bf16 %v225
      %v265 = vunpack.c.h.bf16 %v225
      %v266 = vunpack.c.l.bf16 %v226
      %v267 = vunpack.c.h.bf16 %v226
      %v268 = vunpack.c.l.bf16 %v227
      %v269 = vunpack.c.h.bf16 %v227
      %v270 = vunpack.c.l.bf16 %v228
      %v271 = vunpack.c.h.bf16 %v228
      %v272 = vunpack.c.l.bf16 %v229
      %v273 = vunpack.c.h.bf16 %v229
      %v274 = vunpack.c.l.bf16 %v230
      %v275 = vunpack.c.h.bf16 %v230
      %v276 = vunpack.c.l.bf16 %v231
      %v277 = vunpack.c.h.bf16 %v231
      %v278 = vunpack.c.l.bf16 %v232
      %v279 = vunpack.c.h.bf16 %v232
      %v280 = vunpack.c.l.bf16 %v233
      %v281 = vunpack.c.h.bf16 %v233
      %v282 = vunpack.c.l.bf16 %v234
      %v283 = vunpack.c.h.bf16 %v234
      %v284 = vunpack.c.l.bf16 %v235
      %v285 = vunpack.c.h.bf16 %v235
      %v286 = vunpack.c.l.bf16 %v236
      %v287 = vunpack.c.h.bf16 %v236
      %v288 = vunpack.c.l.bf16 %v237
      %v289 = vunpack.c.h.bf16 %v237
      %v290 = vunpack.c.l.bf16 %v238
      %v291 = vunpack.c.h.bf16 %v238
      %v292 = vunpack.c.l.bf16 %v239
      %v293 = vunpack.c.h.bf16 %v239
      %v294 = vunpack.c.l.bf16 %v240
      %v295 = vunpack.c.h.bf16 %v240
      %v296 = vunpack.c.l.bf16 %v241
      %v297 = vunpack.c.h.bf16 %v241
      %v298 = vunpack.c.l.bf16 %v242
      %v299 = vunpack.c.h.bf16 %v242
      %v300 = vunpack.c.l.bf16 %v243
      %v301 = vunpack.c.h.bf16 %v243
      %v302 = vunpack.c.l.bf16 %v244
      %v303 = vunpack.c.h.bf16 %v244
      %v304 = vunpack.c.l.bf16 %v245
      %v305 = vunpack.c.h.bf16 %v245
      %v306 = vunpack.c.l.bf16 %v246
      %v307 = vunpack.c.h.bf16 %v246
      %v308 = vunpack.c.l.bf16 %v247
      %v309 = vunpack.c.h.bf16 %v247
      %v310 = vunpack.c.l.bf16 %v248
      %v311 = vunpack.c.h.bf16 %v248
      %v312 = vunpack.c.l.bf16 %v249
      %v313 = vunpack.c.h.bf16 %v249
      %v314 = vld [vmem:[%s1] sm:$0x3]
      %v316 = vlaneseq
      %v317 = vshrl.u32 %v316, 7
      %v318 = vsub.s32 0, %v317
      %v319 = vrot.slane %v314, %v318
      %v320 = vlaneseq
      %v321 = vshrl.u32 %v320, 7
      %v322 = vsub.s32 1, %v321
      %v323 = vrot.slane %v314, %v322
      %v326 = vmul.f32 %v250, %v319
      %v327 = vmul.f32 %v251, %v323
      %v328 = vmul.f32 %v252, %v319
      %v329 = vmul.f32 %v253, %v323
      %v330 = vmul.f32 %v254, %v319
      %v331 = vmul.f32 %v255, %v323
      %v332 = vmul.f32 %v256, %v319
      %v333 = vmul.f32 %v257, %v323
      %v334 = vmul.f32 %v258, %v319
      %v335 = vmul.f32 %v259, %v323
      %v336 = vmul.f32 %v260, %v319
      %v337 = vmul.f32 %v261, %v323
      %v338 = vmul.f32 %v262, %v319
      %v339 = vmul.f32 %v263, %v323
      %v340 = vmul.f32 %v264, %v319
      %v341 = vmul.f32 %v265, %v323
      %v342 = vmul.f32 %v266, %v319
      %v343 = vmul.f32 %v267, %v323
      %v344 = vmul.f32 %v268, %v319
      %v345 = vmul.f32 %v269, %v323
      %v346 = vmul.f32 %v270, %v319
      %v347 = vmul.f32 %v271, %v323
      %v348 = vmul.f32 %v272, %v319
      %v349 = vmul.f32 %v273, %v323
      %v350 = vmul.f32 %v274, %v319
      %v351 = vmul.f32 %v275, %v323
      %v352 = vmul.f32 %v276, %v319
      %v353 = vmul.f32 %v277, %v323
      %v354 = vmul.f32 %v278, %v319
      %v355 = vmul.f32 %v279, %v323
      %v356 = vmul.f32 %v280, %v319
      %v357 = vmul.f32 %v281, %v323
      %v358 = vmul.f32 %v282, %v319
      %v359 = vmul.f32 %v283, %v323
      %v360 = vmul.f32 %v284, %v319
      %v361 = vmul.f32 %v285, %v323
      %v362 = vmul.f32 %v286, %v319
      %v363 = vmul.f32 %v287, %v323
      %v364 = vmul.f32 %v288, %v319
      %v365 = vmul.f32 %v289, %v323
      %v366 = vmul.f32 %v290, %v319
      %v367 = vmul.f32 %v291, %v323
      %v368 = vmul.f32 %v292, %v319
      %v369 = vmul.f32 %v293, %v323
      %v370 = vmul.f32 %v294, %v319
      %v371 = vmul.f32 %v295, %v323
      %v372 = vmul.f32 %v296, %v319
      %v373 = vmul.f32 %v297, %v323
      %v374 = vmul.f32 %v298, %v319
      %v375 = vmul.f32 %v299, %v323
      %v376 = vmul.f32 %v300, %v319
      %v377 = vmul.f32 %v301, %v323
      %v378 = vmul.f32 %v302, %v319
      %v379 = vmul.f32 %v303, %v323
      %v380 = vmul.f32 %v304, %v319
      %v381 = vmul.f32 %v305, %v323
      %v382 = vmul.f32 %v306, %v319
      %v383 = vmul.f32 %v307, %v323
      %v384 = vmul.f32 %v308, %v319
      %v385 = vmul.f32 %v309, %v323
      %v386 = vmul.f32 %v310, %v319
      %v387 = vmul.f32 %v311, %v323
      %v388 = vmul.f32 %v312, %v319
      %v389 = vmul.f32 %v313, %v323
      %v390 = vld [vmem:[%s2] sm:$0x3]
      %v392 = vlaneseq
      %v393 = vshrl.u32 %v392, 7
      %v394 = vsub.s32 0, %v393
      %v395 = vrot.slane %v390, %v394
      %v396 = vlaneseq
      %v397 = vshrl.u32 %v396, 7
      %v398 = vsub.s32 1, %v397
      %v399 = vrot.slane %v390, %v398
      %v402 = vadd.f32 %v326, %v395
      %v403 = vadd.f32 %v327, %v399
      %v404 = vadd.f32 %v328, %v395
      %v405 = vadd.f32 %v329, %v399
      %v406 = vadd.f32 %v330, %v395
      %v407 = vadd.f32 %v331, %v399
      %v408 = vadd.f32 %v332, %v395
      %v409 = vadd.f32 %v333, %v399
      %v410 = vadd.f32 %v334, %v395
      %v411 = vadd.f32 %v335, %v399
      %v412 = vadd.f32 %v336, %v395
      %v413 = vadd.f32 %v337, %v399
      %v414 = vadd.f32 %v338, %v395
      %v415 = vadd.f32 %v339, %v399
      %v416 = vadd.f32 %v340, %v395
      %v417 = vadd.f32 %v341, %v399
      %v418 = vadd.f32 %v342, %v395
      %v419 = vadd.f32 %v343, %v399
      %v420 = vadd.f32 %v344, %v395
      %v421 = vadd.f32 %v345, %v399
      %v422 = vadd.f32 %v346, %v395
      %v423 = vadd.f32 %v347, %v399
      %v424 = vadd.f32 %v348, %v395
      %v425 = vadd.f32 %v349, %v399
      %v426 = vadd.f32 %v350, %v395
      %v427 = vadd.f32 %v351, %v399
      %v428 = vadd.f32 %v352, %v395
      %v429 = vadd.f32 %v353, %v399
      %v430 = vadd.f32 %v354, %v395
      %v431 = vadd.f32 %v355, %v399
      %v432 = vadd.f32 %v356, %v395
      %v433 = vadd.f32 %v357, %v399
      %v434 = vadd.f32 %v358, %v395
      %v435 = vadd.f32 %v359, %v399
      %v436 = vadd.f32 %v360, %v395
      %v437 = vadd.f32 %v361, %v399
      %v438 = vadd.f32 %v362, %v395
      %v439 = vadd.f32 %v363, %v399
      %v440 = vadd.f32 %v364, %v395
      %v441 = vadd.f32 %v365, %v399
      %v442 = vadd.f32 %v366, %v395
      %v443 = vadd.f32 %v367, %v399
      %v444 = vadd.f32 %v368, %v395
      %v445 = vadd.f32 %v369, %v399
      %v446 = vadd.f32 %v370, %v395
      %v447 = vadd.f32 %v371, %v399
      %v448 = vadd.f32 %v372, %v395
      %v449 = vadd.f32 %v373, %v399
      %v450 = vadd.f32 %v374, %v395
      %v451 = vadd.f32 %v375, %v399
      %v452 = vadd.f32 %v376, %v395
      %v453 = vadd.f32 %v377, %v399
      %v454 = vadd.f32 %v378, %v395
      %v455 = vadd.f32 %v379, %v399
      %v456 = vadd.f32 %v380, %v395
      %v457 = vadd.f32 %v381, %v399
      %v458 = vadd.f32 %v382, %v395
      %v459 = vadd.f32 %v383, %v399
      %v460 = vadd.f32 %v384, %v395
      %v461 = vadd.f32 %v385, %v399
      %v462 = vadd.f32 %v386, %v395
      %v463 = vadd.f32 %v387, %v399
      %v464 = vadd.f32 %v388, %v395
      %v465 = vadd.f32 %v389, %v399
      %v466 = vmax.f32 %v402, 0.0
      %v467 = vmax.f32 %v403, 0.0
      %v468 = vmax.f32 %v404, 0.0
      %v469 = vmax.f32 %v405, 0.0
      %v470 = vmax.f32 %v406, 0.0
      %v471 = vmax.f32 %v407, 0.0
      %v472 = vmax.f32 %v408, 0.0
      %v473 = vmax.f32 %v409, 0.0
      %v474 = vmax.f32 %v410, 0.0
      %v475 = vmax.f32 %v411, 0.0
      %v476 = vmax.f32 %v412, 0.0
      %v477 = vmax.f32 %v413, 0.0
      %v478 = vmax.f32 %v414, 0.0
      %v479 = vmax.f32 %v415, 0.0
      %v480 = vmax.f32 %v416, 0.0
      %v481 = vmax.f32 %v417, 0.0
      %v482 = vmax.f32 %v418, 0.0
      %v483 = vmax.f32 %v419, 0.0
      %v484 = vmax.f32 %v420, 0.0
      %v485 = vmax.f32 %v421, 0.0
      %v486 = vmax.f32 %v422, 0.0
      %v487 = vmax.f32 %v423, 0.0
      %v488 = vmax.f32 %v424, 0.0
      %v489 = vmax.f32 %v425, 0.0
      %v490 = vmax.f32 %v426, 0.0
      %v491 = vmax.f32 %v427, 0.0
      %v492 = vmax.f32 %v428, 0.0
      %v493 = vmax.f32 %v429, 0.0
      %v494 = vmax.f32 %v430, 0.0
      %v495 = vmax.f32 %v431, 0.0
      %v496 = vmax.f32 %v432, 0.0
      %v497 = vmax.f32 %v433, 0.0
      %v498 = vmax.f32 %v434, 0.0
      %v499 = vmax.f32 %v435, 0.0
      %v500 = vmax.f32 %v436, 0.0
      %v501 = vmax.f32 %v437, 0.0
      %v502 = vmax.f32 %v438, 0.0
      %v503 = vmax.f32 %v439, 0.0
      %v504 = vmax.f32 %v440, 0.0
      %v505 = vmax.f32 %v441, 0.0
      %v506 = vmax.f32 %v442, 0.0
      %v507 = vmax.f32 %v443, 0.0
      %v508 = vmax.f32 %v444, 0.0
      %v509 = vmax.f32 %v445, 0.0
      %v510 = vmax.f32 %v446, 0.0
      %v511 = vmax.f32 %v447, 0.0
      %v512 = vmax.f32 %v448, 0.0
      %v513 = vmax.f32 %v449, 0.0
      %v514 = vmax.f32 %v450, 0.0
      %v515 = vmax.f32 %v451, 0.0
      %v516 = vmax.f32 %v452, 0.0
      %v517 = vmax.f32 %v453, 0.0
      %v518 = vmax.f32 %v454, 0.0
      %v519 = vmax.f32 %v455, 0.0
      %v520 = vmax.f32 %v456, 0.0
      %v521 = vmax.f32 %v457, 0.0
      %v522 = vmax.f32 %v458, 0.0
      %v523 = vmax.f32 %v459, 0.0
      %v524 = vmax.f32 %v460, 0.0
      %v525 = vmax.f32 %v461, 0.0
      %v526 = vmax.f32 %v462, 0.0
      %v527 = vmax.f32 %v463, 0.0
      %v528 = vmax.f32 %v464, 0.0
      %v529 = vmax.f32 %v465, 0.0
      %v530 = vpack.c.bf16 %v468, %v466
      %v531 = vpack.c.bf16 %v472, %v470
      %v532 = vpack.c.bf16 %v476, %v474
      %v533 = vpack.c.bf16 %v480, %v478
      %v534 = vpack.c.bf16 %v484, %v482
      %v535 = vpack.c.bf16 %v488, %v486
      %v536 = vpack.c.bf16 %v492, %v490
      %v537 = vpack.c.bf16 %v496, %v494
      %v538 = vpack.c.bf16 %v500, %v498
      %v539 = vpack.c.bf16 %v504, %v502
      %v540 = vpack.c.bf16 %v508, %v506
      %v541 = vpack.c.bf16 %v512, %v510
      %v542 = vpack.c.bf16 %v516, %v514
      %v543 = vpack.c.bf16 %v520, %v518
      %v544 = vpack.c.bf16 %v524, %v522
      %v545 = vpack.c.bf16 %v528, %v526
      %v562 = vunpack.c.l.b16 %v530
      %v563 = vunpack.c.h.b16 %v530
      %v564 = vunpack.c.l.b16 %v531
      %v565 = vunpack.c.h.b16 %v531
      %v566 = vunpack.c.l.b16 %v532
      %v567 = vunpack.c.h.b16 %v532
      %v568 = vunpack.c.l.b16 %v533
      %v569 = vunpack.c.h.b16 %v533
      %v570 = vunpack.c.l.b16 %v534
      %v571 = vunpack.c.h.b16 %v534
      %v572 = vunpack.c.l.b16 %v535
      %v573 = vunpack.c.h.b16 %v535
      %v574 = vunpack.c.l.b16 %v536
      %v575 = vunpack.c.h.b16 %v536
      %v576 = vunpack.c.l.b16 %v537
      %v577 = vunpack.c.h.b16 %v537
      %v578 = vunpack.c.l.b16 %v538
      %v579 = vunpack.c.h.b16 %v538
      %v580 = vunpack.c.l.b16 %v539
      %v581 = vunpack.c.h.b16 %v539
      %v582 = vunpack.c.l.b16 %v540
      %v583 = vunpack.c.h.b16 %v540
      %v584 = vunpack.c.l.b16 %v541
      %v585 = vunpack.c.h.b16 %v541
      %v586 = vunpack.c.l.b16 %v542
      %v587 = vunpack.c.h.b16 %v542
      %v588 = vunpack.c.l.b16 %v543
      %v589 = vunpack.c.h.b16 %v543
      %v590 = vunpack.c.l.b16 %v544
      %v591 = vunpack.c.h.b16 %v544
      %v592 = vunpack.c.l.b16 %v545
      %v593 = vunpack.c.h.b16 %v545
      %v594 = vpack.c.b16 %v562, %v562
      %v595 = vpack.c.b16 %v563, %v563
      %v596 = vpack.c.b16 %v564, %v564
      %v597 = vpack.c.b16 %v565, %v565
      %v598 = vpack.c.b16 %v566, %v566
      %v599 = vpack.c.b16 %v567, %v567
      %v600 = vpack.c.b16 %v568, %v568
      %v601 = vpack.c.b16 %v569, %v569
      %v602 = vpack.c.b16 %v570, %v570
      %v603 = vpack.c.b16 %v571, %v571
      %v604 = vpack.c.b16 %v572, %v572
      %v605 = vpack.c.b16 %v573, %v573
      %v606 = vpack.c.b16 %v574, %v574
      %v607 = vpack.c.b16 %v575, %v575
      %v608 = vpack.c.b16 %v576, %v576
      %v609 = vpack.c.b16 %v577, %v577
      %v610 = vpack.c.b16 %v578, %v578
      %v611 = vpack.c.b16 %v579, %v579
      %v612 = vpack.c.b16 %v580, %v580
      %v613 = vpack.c.b16 %v581, %v581
      %v614 = vpack.c.b16 %v582, %v582
      %v615 = vpack.c.b16 %v583, %v583
      %v616 = vpack.c.b16 %v584, %v584
      %v617 = vpack.c.b16 %v585, %v585
      %v618 = vpack.c.b16 %v586, %v586
      %v619 = vpack.c.b16 %v587, %v587
      %v620 = vpack.c.b16 %v588, %v588
      %v621 = vpack.c.b16 %v589, %v589
      %v622 = vpack.c.b16 %v590, %v590
      %v623 = vpack.c.b16 %v591, %v591
      %v624 = vpack.c.b16 %v592, %v592
      %v625 = vpack.c.b16 %v593, %v593
      %vm658 = vcmask 519168
      %659 = vst.msk [vmem:[%s210] sm:$0xf] %vm658, %v594
      %660 = vst.msk [vmem:[%s210 + $0x4] sm:$0xf] %vm658, %v595
      %661 = vst.msk [vmem:[%s210 + $0x8] sm:$0xf] %vm658, %v596
      %662 = vst.msk [vmem:[%s210 + $0xc] sm:$0xf] %vm658, %v597
      %663 = vst.msk [vmem:[%s210 + $0x10] sm:$0xf] %vm658, %v598
      %664 = vst.msk [vmem:[%s210 + $0x14] sm:$0xf] %vm658, %v599
      %665 = vst.msk [vmem:[%s210 + $0x18] sm:$0xf] %vm658, %v600
      %666 = vst.msk [vmem:[%s210 + $0x1c] sm:$0xf] %vm658, %v601
      %667 = vst.msk [vmem:[%s210 + $0x20] sm:$0xf] %vm658, %v602
      %668 = vst.msk [vmem:[%s210 + $0x24] sm:$0xf] %vm658, %v603
      %669 = vst.msk [vmem:[%s210 + $0x28] sm:$0xf] %vm658, %v604
      %670 = vst.msk [vmem:[%s210 + $0x2c] sm:$0xf] %vm658, %v605
      %671 = vst.msk [vmem:[%s210 + $0x30] sm:$0xf] %vm658, %v606
      %672 = vst.msk [vmem:[%s210 + $0x34] sm:$0xf] %vm658, %v607
      %673 = vst.msk [vmem:[%s210 + $0x38] sm:$0xf] %vm658, %v608
      %674 = vst.msk [vmem:[%s210 + $0x3c] sm:$0xf] %vm658, %v609
      %675 = vst.msk [vmem:[%s210 + $0x40] sm:$0xf] %vm658, %v610
      %676 = vst.msk [vmem:[%s210 + $0x44] sm:$0xf] %vm658, %v611
      %677 = vst.msk [vmem:[%s210 + $0x48] sm:$0xf] %vm658, %v612
      %678 = vst.msk [vmem:[%s210 + $0x4c] sm:$0xf] %vm658, %v613
      %679 = vst.msk [vmem:[%s210 + $0x50] sm:$0xf] %vm658, %v614
      %680 = vst.msk [vmem:[%s210 + $0x54] sm:$0xf] %vm658, %v615
      %681 = vst.msk [vmem:[%s210 + $0x58] sm:$0xf] %vm658, %v616
      %682 = vst.msk [vmem:[%s210 + $0x5c] sm:$0xf] %vm658, %v617
      %683 = vst.msk [vmem:[%s210 + $0x60] sm:$0xf] %vm658, %v618
      %684 = vst.msk [vmem:[%s210 + $0x64] sm:$0xf] %vm658, %v619
      %685 = vst.msk [vmem:[%s210 + $0x68] sm:$0xf] %vm658, %v620
      %686 = vst.msk [vmem:[%s210 + $0x6c] sm:$0xf] %vm658, %v621
      %687 = vst.msk [vmem:[%s210 + $0x70] sm:$0xf] %vm658, %v622
      %688 = vst.msk [vmem:[%s210 + $0x74] sm:$0xf] %vm658, %v623
      %689 = vst.msk [vmem:[%s210 + $0x78] sm:$0xf] %vm658, %v624
      %690 = vst.msk [vmem:[%s210 + $0x7c] sm:$0xf] %vm658, %v625
      %v691 = vpack.c.bf16 %v469, %v467
      %v692 = vpack.c.bf16 %v473, %v471
      %v693 = vpack.c.bf16 %v477, %v475
      %v694 = vpack.c.bf16 %v481, %v479
      %v695 = vpack.c.bf16 %v485, %v483
      %v696 = vpack.c.bf16 %v489, %v487
      %v697 = vpack.c.bf16 %v493, %v491
      %v698 = vpack.c.bf16 %v497, %v495
      %v699 = vpack.c.bf16 %v501, %v499
      %v700 = vpack.c.bf16 %v505, %v503
      %v701 = vpack.c.bf16 %v509, %v507
      %v702 = vpack.c.bf16 %v513, %v511
      %v703 = vpack.c.bf16 %v517, %v515
      %v704 = vpack.c.bf16 %v521, %v519
      %v705 = vpack.c.bf16 %v525, %v523
      %v706 = vpack.c.bf16 %v529, %v527
      %v723 = vunpack.c.l.b16 %v691
      %v724 = vunpack.c.h.b16 %v691
      %v725 = vunpack.c.l.b16 %v692
      %v726 = vunpack.c.h.b16 %v692
      %v727 = vunpack.c.l.b16 %v693
      %v728 = vunpack.c.h.b16 %v693
      %v729 = vunpack.c.l.b16 %v694
      %v730 = vunpack.c.h.b16 %v694
      %v731 = vunpack.c.l.b16 %v695
      %v732 = vunpack.c.h.b16 %v695
      %v733 = vunpack.c.l.b16 %v696
      %v734 = vunpack.c.h.b16 %v696
      %v735 = vunpack.c.l.b16 %v697
      %v736 = vunpack.c.h.b16 %v697
      %v737 = vunpack.c.l.b16 %v698
      %v738 = vunpack.c.h.b16 %v698
      %v739 = vunpack.c.l.b16 %v699
      %v740 = vunpack.c.h.b16 %v699
      %v741 = vunpack.c.l.b16 %v700
      %v742 = vunpack.c.h.b16 %v700
      %v743 = vunpack.c.l.b16 %v701
      %v744 = vunpack.c.h.b16 %v701
      %v745 = vunpack.c.l.b16 %v702
      %v746 = vunpack.c.h.b16 %v702
      %v747 = vunpack.c.l.b16 %v703
      %v748 = vunpack.c.h.b16 %v703
      %v749 = vunpack.c.l.b16 %v704
      %v750 = vunpack.c.h.b16 %v704
      %v751 = vunpack.c.l.b16 %v705
      %v752 = vunpack.c.h.b16 %v705
      %v753 = vunpack.c.l.b16 %v706
      %v754 = vunpack.c.h.b16 %v706
      %v755 = vpack.c.b16 %v723, %v562
      %v756 = vpack.c.b16 %v724, %v563
      %v757 = vpack.c.b16 %v725, %v564
      %v758 = vpack.c.b16 %v726, %v565
      %v759 = vpack.c.b16 %v727, %v566
      %v760 = vpack.c.b16 %v728, %v567
      %v761 = vpack.c.b16 %v729, %v568
      %v762 = vpack.c.b16 %v730, %v569
      %v763 = vpack.c.b16 %v731, %v570
      %v764 = vpack.c.b16 %v732, %v571
      %v765 = vpack.c.b16 %v733, %v572
      %v766 = vpack.c.b16 %v734, %v573
      %v767 = vpack.c.b16 %v735, %v574
      %v768 = vpack.c.b16 %v736, %v575
      %v769 = vpack.c.b16 %v737, %v576
      %v770 = vpack.c.b16 %v738, %v577
      %v771 = vpack.c.b16 %v739, %v578
      %v772 = vpack.c.b16 %v740, %v579
      %v773 = vpack.c.b16 %v741, %v580
      %v774 = vpack.c.b16 %v742, %v581
      %v775 = vpack.c.b16 %v743, %v582
      %v776 = vpack.c.b16 %v744, %v583
      %v777 = vpack.c.b16 %v745, %v584
      %v778 = vpack.c.b16 %v746, %v585
      %v779 = vpack.c.b16 %v747, %v586
      %v780 = vpack.c.b16 %v748, %v587
      %v781 = vpack.c.b16 %v749, %v588
      %v782 = vpack.c.b16 %v750, %v589
      %v783 = vpack.c.b16 %v751, %v590
      %v784 = vpack.c.b16 %v752, %v591
      %v785 = vpack.c.b16 %v753, %v592
      %v786 = vpack.c.b16 %v754, %v593
      %787 = vrot.lane.b32.xlu0 %v755, 64
      %v788 = vpop.permute.xlu0 %787
      %789 = vrot.lane.b32.xlu0 %v756, 64
      %v790 = vpop.permute.xlu0 %789
      %791 = vrot.lane.b32.xlu0 %v757, 64
      %v792 = vpop.permute.xlu0 %791
      %793 = vrot.lane.b32.xlu0 %v758, 64
      %v794 = vpop.permute.xlu0 %793
      %795 = vrot.lane.b32.xlu0 %v759, 64
      %v796 = vpop.permute.xlu0 %795
      %797 = vrot.lane.b32.xlu0 %v760, 64
      %v798 = vpop.permute.xlu0 %797
      %799 = vrot.lane.b32.xlu0 %v761, 64
      %v800 = vpop.permute.xlu0 %799
      %801 = vrot.lane.b32.xlu0 %v762, 64
      %v802 = vpop.permute.xlu0 %801
      %803 = vrot.lane.b32.xlu0 %v763, 64
      %v804 = vpop.permute.xlu0 %803
      %805 = vrot.lane.b32.xlu0 %v764, 64
      %v806 = vpop.permute.xlu0 %805
      %807 = vrot.lane.b32.xlu0 %v765, 64
      %v808 = vpop.permute.xlu0 %807
      %809 = vrot.lane.b32.xlu0 %v766, 64
      %v810 = vpop.permute.xlu0 %809
      %811 = vrot.lane.b32.xlu0 %v767, 64
      %v812 = vpop.permute.xlu0 %811
      %813 = vrot.lane.b32.xlu0 %v768, 64
      %v814 = vpop.permute.xlu0 %813
      %815 = vrot.lane.b32.xlu0 %v769, 64
      %v816 = vpop.permute.xlu0 %815
      %817 = vrot.lane.b32.xlu0 %v770, 64
      %v818 = vpop.permute.xlu0 %817
      %819 = vrot.lane.b32.xlu0 %v771, 64
      %v820 = vpop.permute.xlu0 %819
      %821 = vrot.lane.b32.xlu0 %v772, 64
      %v822 = vpop.permute.xlu0 %821
      %823 = vrot.lane.b32.xlu0 %v773, 64
      %v824 = vpop.permute.xlu0 %823
      %825 = vrot.lane.b32.xlu0 %v774, 64
      %v826 = vpop.permute.xlu0 %825
      %827 = vrot.lane.b32.xlu0 %v775, 64
      %v828 = vpop.permute.xlu0 %827
      %829 = vrot.lane.b32.xlu0 %v776, 64
      %v830 = vpop.permute.xlu0 %829
      %831 = vrot.lane.b32.xlu0 %v777, 64
      %v832 = vpop.permute.xlu0 %831
      %833 = vrot.lane.b32.xlu0 %v778, 64
      %v834 = vpop.permute.xlu0 %833
      %835 = vrot.lane.b32.xlu0 %v779, 64
      %v836 = vpop.permute.xlu0 %835
      %837 = vrot.lane.b32.xlu0 %v780, 64
      %v838 = vpop.permute.xlu0 %837
      %839 = vrot.lane.b32.xlu0 %v781, 64
      %v840 = vpop.permute.xlu0 %839
      %841 = vrot.lane.b32.xlu0 %v782, 64
      %v842 = vpop.permute.xlu0 %841
      %843 = vrot.lane.b32.xlu0 %v783, 64
      %v844 = vpop.permute.xlu0 %843
      %845 = vrot.lane.b32.xlu0 %v784, 64
      %v846 = vpop.permute.xlu0 %845
      %847 = vrot.lane.b32.xlu0 %v785, 64
      %v848 = vpop.permute.xlu0 %847
      %849 = vrot.lane.b32.xlu0 %v786, 64
      %v850 = vpop.permute.xlu0 %849
      %v851 = vrot.slane %v788, 4
      %v852 = vrot.slane %v790, 4
      %v853 = vrot.slane %v792, 4
      %v854 = vrot.slane %v794, 4
      %v855 = vrot.slane %v796, 4
      %v856 = vrot.slane %v798, 4
      %v857 = vrot.slane %v800, 4
      %v858 = vrot.slane %v802, 4
      %v859 = vrot.slane %v804, 4
      %v860 = vrot.slane %v806, 4
      %v861 = vrot.slane %v808, 4
      %v862 = vrot.slane %v810, 4
      %v863 = vrot.slane %v812, 4
      %v864 = vrot.slane %v814, 4
      %v865 = vrot.slane %v816, 4
      %v866 = vrot.slane %v818, 4
      %v867 = vrot.slane %v820, 4
      %v868 = vrot.slane %v822, 4
      %v869 = vrot.slane %v824, 4
      %v870 = vrot.slane %v826, 4
      %v871 = vrot.slane %v828, 4
      %v872 = vrot.slane %v830, 4
      %v873 = vrot.slane %v832, 4
      %v874 = vrot.slane %v834, 4
      %v875 = vrot.slane %v836, 4
      %v876 = vrot.slane %v838, 4
      %v877 = vrot.slane %v840, 4
      %v878 = vrot.slane %v842, 4
      %v879 = vrot.slane %v844, 4
      %v880 = vrot.slane %v846, 4
      %v881 = vrot.slane %v848, 4
      %v882 = vrot.slane %v850, 4
      %vm883 = vcmask 523264
      %v884 = vsel %vm883, %v788, %v851
      %v885 = vsel %vm883, %v790, %v852
      %v886 = vsel %vm883, %v792, %v853
      %v887 = vsel %vm883, %v794, %v854
      %v888 = vsel %vm883, %v796, %v855
      %v889 = vsel %vm883, %v798, %v856
      %v890 = vsel %vm883, %v800, %v857
      %v891 = vsel %vm883, %v802, %v858
      %v892 = vsel %vm883, %v804, %v859
      %v893 = vsel %vm883, %v806, %v860
      %v894 = vsel %vm883, %v808, %v861
      %v895 = vsel %vm883, %v810, %v862
      %v896 = vsel %vm883, %v812, %v863
      %v897 = vsel %vm883, %v814, %v864
      %v898 = vsel %vm883, %v816, %v865
      %v899 = vsel %vm883, %v818, %v866
      %v900 = vsel %vm883, %v820, %v867
      %v901 = vsel %vm883, %v822, %v868
      %v902 = vsel %vm883, %v824, %v869
      %v903 = vsel %vm883, %v826, %v870
      %v904 = vsel %vm883, %v828, %v871
      %v905 = vsel %vm883, %v830, %v872
      %v906 = vsel %vm883, %v832, %v873
      %v907 = vsel %vm883, %v834, %v874
      %v908 = vsel %vm883, %v836, %v875
      %v909 = vsel %vm883, %v838, %v876
      %v910 = vsel %vm883, %v840, %v877
      %v911 = vsel %vm883, %v842, %v878
      %v912 = vsel %vm883, %v844, %v879
      %v913 = vsel %vm883, %v846, %v880
      %v914 = vsel %vm883, %v848, %v881
      %v915 = vsel %vm883, %v850, %v882
      %vm948 = vcmask 912384
      %949 = vst.msk [vmem:[%s216] sm:$0xf] %vm948, %v884
      %950 = vst.msk [vmem:[%s216 + $0x4] sm:$0xf] %vm948, %v885
      %951 = vst.msk [vmem:[%s216 + $0x8] sm:$0xf] %vm948, %v886
      %952 = vst.msk [vmem:[%s216 + $0xc] sm:$0xf] %vm948, %v887
      %953 = vst.msk [vmem:[%s216 + $0x10] sm:$0xf] %vm948, %v888
      %954 = vst.msk [vmem:[%s216 + $0x14] sm:$0xf] %vm948, %v889
      %955 = vst.msk [vmem:[%s216 + $0x18] sm:$0xf] %vm948, %v890
      %956 = vst.msk [vmem:[%s216 + $0x1c] sm:$0xf] %vm948, %v891
      %957 = vst.msk [vmem:[%s216 + $0x20] sm:$0xf] %vm948, %v892
      %958 = vst.msk [vmem:[%s216 + $0x24] sm:$0xf] %vm948, %v893
      %959 = vst.msk [vmem:[%s216 + $0x28] sm:$0xf] %vm948, %v894
      %960 = vst.msk [vmem:[%s216 + $0x2c] sm:$0xf] %vm948, %v895
      %961 = vst.msk [vmem:[%s216 + $0x30] sm:$0xf] %vm948, %v896
      %962 = vst.msk [vmem:[%s216 + $0x34] sm:$0xf] %vm948, %v897
      %963 = vst.msk [vmem:[%s216 + $0x38] sm:$0xf] %vm948, %v898
      %964 = vst.msk [vmem:[%s216 + $0x3c] sm:$0xf] %vm948, %v899
      %965 = vst.msk [vmem:[%s216 + $0x40] sm:$0xf] %vm948, %v900
      %966 = vst.msk [vmem:[%s216 + $0x44] sm:$0xf] %vm948, %v901
      %967 = vst.msk [vmem:[%s216 + $0x48] sm:$0xf] %vm948, %v902
      %968 = vst.msk [vmem:[%s216 + $0x4c] sm:$0xf] %vm948, %v903
      %969 = vst.msk [vmem:[%s216 + $0x50] sm:$0xf] %vm948, %v904
      %970 = vst.msk [vmem:[%s216 + $0x54] sm:$0xf] %vm948, %v905
      %971 = vst.msk [vmem:[%s216 + $0x58] sm:$0xf] %vm948, %v906
      %972 = vst.msk [vmem:[%s216 + $0x5c] sm:$0xf] %vm948, %v907
      %973 = vst.msk [vmem:[%s216 + $0x60] sm:$0xf] %vm948, %v908
      %974 = vst.msk [vmem:[%s216 + $0x64] sm:$0xf] %vm948, %v909
      %975 = vst.msk [vmem:[%s216 + $0x68] sm:$0xf] %vm948, %v910
      %976 = vst.msk [vmem:[%s216 + $0x6c] sm:$0xf] %vm948, %v911
      %977 = vst.msk [vmem:[%s216 + $0x70] sm:$0xf] %vm948, %v912
      %978 = vst.msk [vmem:[%s216 + $0x74] sm:$0xf] %vm948, %v913
      %979 = vst.msk [vmem:[%s216 + $0x78] sm:$0xf] %vm948, %v914
      %980 = vst.msk [vmem:[%s216 + $0x7c] sm:$0xf] %vm948, %v915
      %s981 = smul.u32 32, %s16
      %p982 = scmp.lt.s32.totalorder %s981, 63
      %s983 = scalar_select %p982, %s981, 63
      %s984 = smul.addr %s983, 4
      %s985 = scalar_lea.vmem %s3, %s984
      %s986 = smul.u32 32, %s16
      %p987 = scmp.lt.s32.totalorder %s986, 63
      %s988 = scalar_select %p987, %s986, 63
      %s989 = smul.addr %s988, 4
      %s990 = scalar_lea.vmem %s4, %s989
      // Predicated region
      $region33: #{mixed_3b.7} parent=31 // pred_check
        %p991 = pneg %p102
      $region34: #{mixed_3b.7} parent=31 // pred_check_branch
        %993 = sbr.rel (%p991) target = $region36
      $region35: #{mixed_3b.7} parent=31 // pred_region
        %s994 = smul.u32 32, %s16
      $region36: #{mixed_3b.7} parent=31 // pred_fallthru
        _
      // Predicated region
      $region37: #{mixed_3b.7} parent=31 // pred_check
        %p995 = pneg %p128
      $region38: #{mixed_3b.7} parent=31 // pred_check_branch
        %997 = sbr.rel (%p995) target = $region40
      $region39: #{mixed_3b.7} parent=31 // pred_region
        %s998 = smul.u32 32, %s16
      $region40: #{mixed_3b.7} parent=31 // pred_fallthru
        _
    $region32: #{mixed_3b.7} parent=5 // pred_fallthru
      _
    %p999 = scmp.le.s32.totalorder 2, %s11
    // Predicated region
    $region41: #{mixed_3b.7} parent=5 // pred_check
      %p1000 = pneg %p999
    $region42: #{mixed_3b.7} parent=5 // pred_check_branch
      %1002 = sbr.rel (%p1000) target = $region44
    $region43: #{mixed_3b.7} parent=5 // pred_region
      %s1003 = ssub.s32 %s11, 2
      // Predicated region
      $region45: #{mixed_3b.7} parent=43 // pred_check
        %p1004 = pneg %p108
      $region46: #{mixed_3b.7} parent=43 // pred_check_branch
        %1006 = sbr.rel (%p1004) target = $region48
      $region47: #{mixed_3b.7} parent=43 // pred_region
        %s1007 = smul.u32 32, %s17
        %p1008 = scmp.lt.s32.totalorder %s1007, 63
        %s1009 = scalar_select %p1008, %s1007, 63
        %s1010 = smul.addr %s1009, 4
        %s1011 = scalar_lea.vmem %s3, %s1010
      $region48: #{mixed_3b.7} parent=43 // pred_fallthru
        _
      // Predicated region
      $region49: #{mixed_3b.7} parent=43 // pred_check
        %p1012 = pneg %p134
      $region50: #{mixed_3b.7} parent=43 // pred_check_branch
        %1014 = sbr.rel (%p1012) target = $region52
      $region51: #{mixed_3b.7} parent=43 // pred_region
        %s1015 = smul.u32 32, %s17
        %p1016 = scmp.lt.s32.totalorder %s1015, 63
        %s1017 = scalar_select %p1016, %s1015, 63
        %s1018 = smul.addr %s1017, 4
        %s1019 = scalar_lea.vmem %s4, %s1018
      $region52: #{mixed_3b.7} parent=43 // pred_fallthru
        _
    $region44: #{mixed_3b.7} parent=5 // pred_fallthru
      _
  $region6: #{mixed_3b.7} parent=0 // loop_footer
    %s15 = sadd.s32 1, %s11
  $region7: #{mixed_3b.7} parent=0 // loop_footer_branch
    %10 = sbr.rel target = $region3
  $region8: #{mixed_3b.7} parent=0 // loop_exit
    _

// kernel: mixed_3b.9
$region0: #{mixed_3b.9}
  #allocation0 [shape = 'u32[]', space=smem, size = 0x4, offset = 0x4, fixed_abs, tag = 'smem constant byte address 0x4 - core index']
  #allocation1 [shape = 'u32[144,128]{1,0:T(1,128)}', space=vmem, size = 0x12000, scoped, tag = 'internal scratch']
  #allocation2 [shape = 'f32[64,160]{1,0:T(8,128)}', space=vmem, size = 0x10000, scoped, tag = 'scratch operand']
  %s0 = inlined_call_operand.vmem [shape: bf16[2,6,64,160], index: 0, kind: input, shape index: {}]
  %s1 = inlined_call_operand.vmem [shape: f32[1,160], index: 1, kind: input, shape index: {}]
  %s2 = inlined_call_operand.vmem [shape: f32[1,160], index: 2, kind: input, shape index: {}]
  %s3 = inlined_call_operand.vmem [shape: bf16[3,160,160], index: 3, kind: input, shape index: {}]
  %s4 = inlined_call_operand.vmem [shape: bf16[2,4,64,160], index: 4, kind: output, shape index: {0}]
  %s5 = inlined_call_operand.vmem [shape: f32[2,4,2,160], index: 5, kind: output, shape index: {1}]
  %6 = xla_tuple %s4, %s5
  %s7 = sld [smem:[#allocation0]]
  $region69: #{mixed_3b.9} parent=0
    _
  %s9 = ssub.s32 1, %s7
  %s10 = scalar_select 0, %s9, %s7
  loop: start=0, step=1, limit=26
  $region2: #{mixed_3b.9} parent=0 // loop_pre_header
    _
  $region3: #{mixed_3b.9} parent=0 // loop_header
    %s12 = sphi 0, %s16
    %p13 = scmp.ge.s32.totalorder %s12, 26
    %s19 = sphi 0, %s38
    %s20 = sphi 0, %s34
    %s21 = sphi 0, %s30
    %s22 = sphi 0, %s19
    %s23 = sphi 0, %s20
    %s24 = sphi 0, %s21
    %s25 = sphi 0, %s22
    %s26 = sphi 0, %s23
    %s27 = sphi 0, %s24
    %s45 = sphi 0, %s47
    %s48 = sphi 0, %s45
    %s49 = sphi 0, %s48
    %s65 = sphi 0, %s49
    %s69 = sphi 0, %s69
    %s71 = sphi 0, %s69
    %s72 = sphi 0, %s71
    %s86 = sphi 0, %s72
    %s90 = sphi 0, %s90
    %s92 = sphi 0, %s90
    %s93 = sphi 0, %s92
    %s107 = sphi 0, %s93
    %s113 = sphi 0, %s115
    %s116 = sphi 0, %s113
    %s117 = sphi 0, %s116
    %s133 = sphi 0, %s117
    %s141 = sphi 0, %s143
    %s144 = sphi 0, %s141
    %s145 = sphi 0, %s144
    %s161 = sphi 0, %s145
    %s169 = sphi 0, %s171
    %s172 = sphi 0, %s169
    %s173 = sphi 0, %s172
    %s189 = sphi 0, %s173
  $region4: #{mixed_3b.9} parent=0 // loop_header_branch
    %15 = sbr.rel (%p13) target = $region8
  $region5: #{mixed_3b.9} parent=0 // loop_body
    %s17 = ssub.s32 %s12, 1
    %s18 = ssub.s32 %s12, 2
    %s28 = sadd.s32 1, %s21
    %p29 = scmp.ge.s32.totalorder %s28, 3
    %s30 = scalar_select %p29, 0, %s28
    %s31 = sadd.s32 1, %s20
    %s32 = scalar_select %p29, %s31, %s20
    %p33 = scmp.ge.s32.totalorder %s32, 4
    %s34 = scalar_select %p33, 0, %s32
    %s35 = sadd.s32 1, %s19
    %s36 = scalar_select %p33, %s35, %s19
    %p37 = scmp.ge.s32.totalorder %s36, 2
    %s38 = scalar_select %p37, 0, %s36
    %s39 = sadd.s32 %s20, %s21
    %s40 = sadd.s32 %s34, %s30
    %s41 = ssub.s32 %s19, %s38
    %s42 = ssub.s32 %s39, %s40
    %s43 = sor.u32 %s41, %s42
    %p44 = scmp.eq.s32.totalorder %s43, 0
    %s46 = sadd.s32 %s45, 1
    %s47 = scalar_select %p44, %s45, %s46
    %p50 = pneg %p44
    %p51 = scmp.eq.s32.totalorder %s12, 23
    %p52 = por %p50, %p51
    %p53 = scmp.ne.s32.totalorder %s45, %s48
    %p54 = scmp.eq.s32.totalorder %s12, 0
    %p55 = por %p53, %p54
    %p56 = scmp.ne.s32.totalorder %s45, %s48
    %p57 = scmp.eq.s32.totalorder %s17, 23
    %p58 = por %p56, %p57
    %p59 = scmp.ne.s32.totalorder %s48, %s49
    %p60 = scmp.eq.s32.totalorder %s17, 0
    %p61 = por %p59, %p60
    %p62 = scmp.ne.s32.totalorder %s48, %s49
    %p63 = scmp.eq.s32.totalorder %s18, 23
    %p64 = por %p62, %p63
    %p66 = scmp.ne.s32.totalorder %s49, %s65
    %p67 = scmp.eq.s32.totalorder %s18, 0
    %p68 = por %p66, %p67
    %s70 = sadd.s32 %s69, 1
    %p73 = scmp.eq.s32.totalorder %s12, 23
    %p74 = scmp.ne.s32.totalorder %s69, %s71
    %p75 = scmp.eq.s32.totalorder %s12, 0
    %p76 = por %p74, %p75
    %p77 = scmp.ne.s32.totalorder %s69, %s71
    %p78 = scmp.eq.s32.totalorder %s17, 23
    %p79 = por %p77, %p78
    %p80 = scmp.ne.s32.totalorder %s71, %s72
    %p81 = scmp.eq.s32.totalorder %s17, 0
    %p82 = por %p80, %p81
    %p83 = scmp.ne.s32.totalorder %s71, %s72
    %p84 = scmp.eq.s32.totalorder %s18, 23
    %p85 = por %p83, %p84
    %p87 = scmp.ne.s32.totalorder %s72, %s86
    %p88 = scmp.eq.s32.totalorder %s18, 0
    %p89 = por %p87, %p88
    %s91 = sadd.s32 %s90, 1
    %p94 = scmp.eq.s32.totalorder %s12, 23
    %p95 = scmp.ne.s32.totalorder %s90, %s92
    %p96 = scmp.eq.s32.totalorder %s12, 0
    %p97 = por %p95, %p96
    %p98 = scmp.ne.s32.totalorder %s90, %s92
    %p99 = scmp.eq.s32.totalorder %s17, 23
    %p100 = por %p98, %p99
    %p101 = scmp.ne.s32.totalorder %s92, %s93
    %p102 = scmp.eq.s32.totalorder %s17, 0
    %p103 = por %p101, %p102
    %p104 = scmp.ne.s32.totalorder %s92, %s93
    %p105 = scmp.eq.s32.totalorder %s18, 23
    %p106 = por %p104, %p105
    %p108 = scmp.ne.s32.totalorder %s93, %s107
    %p109 = scmp.eq.s32.totalorder %s18, 0
    %p110 = por %p108, %p109
    %s111 = ssub.s32 %s21, %s30
    %p112 = scmp.eq.s32.totalorder %s111, 0
    %s114 = sadd.s32 %s113, 1
    %s115 = scalar_select %p112, %s113, %s114
    %p118 = pneg %p112
    %p119 = scmp.eq.s32.totalorder %s12, 23
    %p120 = por %p118, %p119
    %p121 = scmp.ne.s32.totalorder %s113, %s116
    %p122 = scmp.eq.s32.totalorder %s12, 0
    %p123 = por %p121, %p122
    %p124 = scmp.ne.s32.totalorder %s113, %s116
    %p125 = scmp.eq.s32.totalorder %s17, 23
    %p126 = por %p124, %p125
    %p127 = scmp.ne.s32.totalorder %s116, %s117
    %p128 = scmp.eq.s32.totalorder %s17, 0
    %p129 = por %p127, %p128
    %p130 = scmp.ne.s32.totalorder %s116, %s117
    %p131 = scmp.eq.s32.totalorder %s18, 23
    %p132 = por %p130, %p131
    %p134 = scmp.ne.s32.totalorder %s117, %s133
    %p135 = scmp.eq.s32.totalorder %s18, 0
    %p136 = por %p134, %p135
    %s137 = ssub.s32 %s19, %s38
    %s138 = ssub.s32 %s20, %s34
    %s139 = sor.u32 %s137, %s138
    %p140 = scmp.eq.s32.totalorder %s139, 0
    %s142 = sadd.s32 %s141, 1
    %s143 = scalar_select %p140, %s141, %s142
    %p146 = pneg %p140
    %p147 = scmp.eq.s32.totalorder %s12, 23
    %p148 = por %p146, %p147
    %p149 = scmp.ne.s32.totalorder %s141, %s144
    %p150 = scmp.eq.s32.totalorder %s12, 0
    %p151 = por %p149, %p150
    %p152 = scmp.ne.s32.totalorder %s141, %s144
    %p153 = scmp.eq.s32.totalorder %s17, 23
    %p154 = por %p152, %p153
    %p155 = scmp.ne.s32.totalorder %s144, %s145
    %p156 = scmp.eq.s32.totalorder %s17, 0
    %p157 = por %p155, %p156
    %p158 = scmp.ne.s32.totalorder %s144, %s145
    %p159 = scmp.eq.s32.totalorder %s18, 23
    %p160 = por %p158, %p159
    %p162 = scmp.ne.s32.totalorder %s145, %s161
    %p163 = scmp.eq.s32.totalorder %s18, 0
    %p164 = por %p162, %p163
    %s165 = ssub.s32 %s19, %s38
    %s166 = ssub.s32 %s20, %s34
    %s167 = sor.u32 %s165, %s166
    %p168 = scmp.eq.s32.totalorder %s167, 0
    %s170 = sadd.s32 %s169, 1
    %s171 = scalar_select %p168, %s169, %s170
    %p174 = pneg %p168
    %p175 = scmp.eq.s32.totalorder %s12, 23
    %p176 = por %p174, %p175
    %p177 = scmp.ne.s32.totalorder %s169, %s172
    %p178 = scmp.eq.s32.totalorder %s12, 0
    %p179 = por %p177, %p178
    %p180 = scmp.ne.s32.totalorder %s169, %s172
    %p181 = scmp.eq.s32.totalorder %s17, 23
    %p182 = por %p180, %p181
    %p183 = scmp.ne.s32.totalorder %s172, %s173
    %p184 = scmp.eq.s32.totalorder %s17, 0
    %p185 = por %p183, %p184
    %p186 = scmp.ne.s32.totalorder %s172, %s173
    %p187 = scmp.eq.s32.totalorder %s18, 23
    %p188 = por %p186, %p187
    %p190 = scmp.ne.s32.totalorder %s173, %s189
    %p191 = scmp.eq.s32.totalorder %s18, 0
    %p192 = por %p190, %p191
    %p193 = scmp.le.s32.totalorder 1, %s12
    %p194 = scmp.lt.s32.totalorder %s12, 25
    %p195 = pnand %p193, %p194
    %p196 = pneg %p195
    // Predicated region
    $region9: #{mixed_3b.9} parent=5 // pred_check
      _
    $region10: #{mixed_3b.9} parent=5 // pred_check_branch
      %198 = sbr.rel (%p195) target = $region12
    $region11: #{mixed_3b.9} parent=5 // pred_region
      %s199 = ssub.s32 %s12, 1
      // Predicated region
      $region13: #{mixed_3b.9} parent=11 // pred_check
        %p200 = pneg %p82
      $region14: #{mixed_3b.9} parent=11 // pred_check_branch
        %202 = sbr.rel (%p200) target = $region16
      $region15: #{mixed_3b.9} parent=11 // pred_region
        _
      $region16: #{mixed_3b.9} parent=11 // pred_fallthru
        _
      // Predicated region
      $region17: #{mixed_3b.9} parent=11 // pred_check
        %p203 = pneg %p103
      $region18: #{mixed_3b.9} parent=11 // pred_check_branch
        %205 = sbr.rel (%p203) target = $region20
      $region19: #{mixed_3b.9} parent=11 // pred_region
        _
      $region20: #{mixed_3b.9} parent=11 // pred_fallthru
        _
    $region12: #{mixed_3b.9} parent=5 // pred_fallthru
      _
    %p206 = scmp.lt.s32.totalorder %s12, 24
    // Predicated region
    $region21: #{mixed_3b.9} parent=5 // pred_check
      %p207 = pneg %p206
    $region22: #{mixed_3b.9} parent=5 // pred_check_branch
      %209 = sbr.rel (%p207) target = $region24
    $region23: #{mixed_3b.9} parent=5 // pred_region
      // Predicated region
      $region25: #{mixed_3b.9} parent=23 // pred_check
        %p210 = pneg %p55
      $region26: #{mixed_3b.9} parent=23 // pred_check_branch
        %212 = sbr.rel (%p210) target = $region28
      $region27: #{mixed_3b.9} parent=23 // pred_region
        %s213 = sadd.s32 %s20, %s21
        %p214 = scmp.lt.s32.totalorder %s19, 1
        %s215 = scalar_select %p214, %s19, 1
        %p216 = scmp.lt.s32.totalorder %s213, 5
        %s217 = scalar_select %p216, %s213, 5
        %s218 = smul.addr %s217, 16
        %s219 = smul.addr %s215, 96
        %s220 = sadd.s32 %s218, %s219
        %s221 = smul.addr %s220, 4
        %s222 = scalar_lea.vmem %s0, %s221
        %s223 = sadd.s32 %s20, %s21
      $region28: #{mixed_3b.9} parent=23 // pred_fallthru
        _
      // Predicated region
      $region29: #{mixed_3b.9} parent=23 // pred_check
        %p224 = pneg %p123
      $region30: #{mixed_3b.9} parent=23 // pred_check_branch
        %226 = sbr.rel (%p224) target = $region32
      $region31: #{mixed_3b.9} parent=23 // pred_region
        %p227 = scmp.lt.s32.totalorder %s21, 2
        %s228 = scalar_select %p227, %s21, 2
        %s229 = smul.addr %s228, 40
        %s230 = smul.addr %s229, 4
        %s231 = scalar_lea.vmem %s3, %s230
      $region32: #{mixed_3b.9} parent=23 // pred_fallthru
        _
    $region24: #{mixed_3b.9} parent=5 // pred_fallthru
      _
    %p232 = scmp.le.s32.totalorder 1, %s12
    %p233 = scmp.lt.s32.totalorder %s12, 25
    %p234 = pnand %p232, %p233
    %p235 = pneg %p234
    // Predicated region
    $region33: #{mixed_3b.9} parent=5 // pred_check
      _
    $region34: #{mixed_3b.9} parent=5 // pred_check_branch
      %237 = sbr.rel (%p234) target = $region36
    $region35: #{mixed_3b.9} parent=5 // pred_region
      %s238 = ssub.s32 %s12, 1
      %s239 = sadd.s32 %s23, %s24
      %p240 = scmp.lt.s32.totalorder %s22, 1
      %s241 = scalar_select %p240, %s22, 1
      %p242 = scmp.lt.s32.totalorder %s239, 5
      %s243 = scalar_select %p242, %s239, 5
      %s244 = smul.addr %s243, 16
      %s245 = smul.addr %s241, 96
      %s246 = sadd.s32 %s244, %s245
      %s247 = smul.addr %s246, 4
      %s248 = scalar_lea.vmem %s0, %s247
      %p249 = pneg %p61
      %p250 = pneg %p58
      %p251 = pneg %p82
      %p252 = pneg %p79
      %p253 = pneg %p103
      %p254 = pneg %p100
      %p255 = scmp.lt.s32.totalorder %s24, 2
      %s256 = scalar_select %p255, %s24, 2
      %s257 = smul.addr %s256, 40
      %s258 = smul.addr %s257, 4
      %s259 = scalar_lea.vmem %s3, %s258
      %p260 = pneg %p129
      %p261 = pneg %p126
      %p262 = pneg %p157
      %p263 = pneg %p154
      %p264 = scmp.lt.s32.totalorder %s22, 1
      %s265 = scalar_select %p264, %s22, 1
      %p266 = scmp.lt.s32.totalorder %s23, 3
      %s267 = scalar_select %p266, %s23, 3
      %s268 = smul.addr %s267, 16
      %s269 = smul.addr %s265, 64
      %s270 = sadd.s32 %s268, %s269
      %s271 = smul.addr %s270, 4
      %s272 = scalar_lea.vmem %s4, %s271
      %p273 = pneg %p185
      %p274 = pneg %p182
      %p275 = scmp.lt.s32.totalorder %s22, 1
      %s276 = scalar_select %p275, %s22, 1
      %p277 = scmp.lt.s32.totalorder %s23, 3
      %s278 = scalar_select %p277, %s23, 3
      %s279 = smul.addr %s278, 2
      %s280 = smul.addr %s276, 8
      %s281 = sadd.s32 %s279, %s280
      %s282 = smul.addr %s281, 2
      %s283 = scalar_lea.vmem %s5, %s282
      %s284 = sadd.s32 %s23, %s24
      %p285 = scmp.lt.s32.totalorder %s22, 1
      %s286 = scalar_select %p285, %s22, 1
      %p287 = scmp.lt.s32.totalorder %s284, 5
      %s288 = scalar_select %p287, %s284, 5
      %s289 = smul.addr %s288, 16
      %s290 = smul.addr %s286, 96
      %s291 = sadd.s32 %s289, %s290
      %s292 = smul.addr %s291, 4
      %s293 = scalar_lea.vmem %s0, %s292
      %s294 = sadd.s32 %s23, %s24
      %p295 = scmp.lt.s32.totalorder %s24, 2
      %s296 = scalar_select %p295, %s24, 2
      %s297 = smul.addr %s296, 40
      %s298 = smul.addr %s297, 4
      %s299 = scalar_lea.vmem %s3, %s298
      %p300 = scmp.lt.s32.totalorder %s22, 1
      %s301 = scalar_select %p300, %s22, 1
      %p302 = scmp.lt.s32.totalorder %s23, 3
      %s303 = scalar_select %p302, %s23, 3
      %s304 = smul.addr %s303, 16
      %s305 = smul.addr %s301, 64
      %s306 = sadd.s32 %s304, %s305
      %s307 = smul.addr %s306, 4
      %s308 = scalar_lea.vmem %s4, %s307
      %p309 = scmp.lt.s32.totalorder %s22, 1
      %s310 = scalar_select %p309, %s22, 1
      %p311 = scmp.lt.s32.totalorder %s23, 3
      %s312 = scalar_select %p311, %s23, 3
      %s313 = smul.addr %s312, 2
      %s314 = smul.addr %s310, 8
      %s315 = sadd.s32 %s313, %s314
      %s316 = smul.addr %s315, 2
      %s317 = scalar_lea.vmem %s5, %s316
      %p319 = scmp.eq.s32.totalorder %s24, 0
      // Predicated region
      $region37: #{mixed_3b.9} parent=35 // pred_check
        %p320 = pneg %p319
      $region38: #{mixed_3b.9} parent=35 // pred_check_branch
        %322 = sbr.rel (%p320) target = $region40
      $region39: #{mixed_3b.9} parent=35 // pred_region
        %323 = vst [vmem:[#allocation2] sm:$0xff] 0.0
        %vm324 = vcmask 261120
        %325 = vst.msk [vmem:[#allocation2 + $0x8] sm:$0xff] %vm324, 0.0
        %326 = vst [vmem:[#allocation2 + $0x10] sm:$0xff] 0.0
        %327 = vst.msk [vmem:[#allocation2 + $0x18] sm:$0xff] %vm324, 0.0
        %328 = vst [vmem:[#allocation2 + $0x20] sm:$0xff] 0.0
        %329 = vst.msk [vmem:[#allocation2 + $0x28] sm:$0xff] %vm324, 0.0
        %330 = vst [vmem:[#allocation2 + $0x30] sm:$0xff] 0.0
        %331 = vst.msk [vmem:[#allocation2 + $0x38] sm:$0xff] %vm324, 0.0
        %332 = vst [vmem:[#allocation2 + $0x40] sm:$0xff] 0.0
        %333 = vst.msk [vmem:[#allocation2 + $0x48] sm:$0xff] %vm324, 0.0
        %334 = vst [vmem:[#allocation2 + $0x50] sm:$0xff] 0.0
        %335 = vst.msk [vmem:[#allocation2 + $0x58] sm:$0xff] %vm324, 0.0
        %336 = vst [vmem:[#allocation2 + $0x60] sm:$0xff] 0.0
        %337 = vst.msk [vmem:[#allocation2 + $0x68] sm:$0xff] %vm324, 0.0
        %338 = vst [vmem:[#allocation2 + $0x70] sm:$0xff] 0.0
        %339 = vst.msk [vmem:[#allocation2 + $0x78] sm:$0xff] %vm324, 0.0
      $region40: #{mixed_3b.9} parent=35 // pred_fallthru
        _
      %s340 = sadd.s32 %s23, %s24
      %p341 = scmp.ge.s32.totalorder %s340, 1
      %p342 = scmp.le.s32.totalorder %s340, 4
      %p343 = pnand %p341, %p342
      %p344 = pneg %p343
      // Predicated region
      $region41: #{mixed_3b.9} parent=35 // pred_check
        _
      $region42: #{mixed_3b.9} parent=35 // pred_check_branch
        %346 = sbr.rel (%p343) target = $region44
      $region43: #{mixed_3b.9} parent=35 // pred_region
        %v347 = vld [vmem:[%s293] sm:$0xff]
        %v348 = vld [vmem:[%s293 + $0x8] sm:$0xff]
        %v349 = vld [vmem:[%s293 + $0x10] sm:$0xff]
        %v350 = vld [vmem:[%s293 + $0x18] sm:$0xff]
        %v351 = vld [vmem:[%s293 + $0x20] sm:$0xff]
        %v352 = vld [vmem:[%s293 + $0x28] sm:$0xff]
        %v353 = vld [vmem:[%s293 + $0x30] sm:$0xff]
        %v354 = vld [vmem:[%s293 + $0x38] sm:$0xff]
        %v355 = vunpack.c.l.bf16 %v347
        %v356 = vunpack.c.h.bf16 %v347
        %v357 = vunpack.c.l.bf16 %v348
        %v358 = vunpack.c.h.bf16 %v348
        %v359 = vunpack.c.l.bf16 %v349
        %v360 = vunpack.c.h.bf16 %v349
        %v361 = vunpack.c.l.bf16 %v350
        %v362 = vunpack.c.h.bf16 %v350
        %v363 = vunpack.c.l.bf16 %v351
        %v364 = vunpack.c.h.bf16 %v351
        %v365 = vunpack.c.l.bf16 %v352
        %v366 = vunpack.c.h.bf16 %v352
        %v367 = vunpack.c.l.bf16 %v353
        %v368 = vunpack.c.h.bf16 %v353
        %v369 = vunpack.c.l.bf16 %v354
        %v370 = vunpack.c.h.bf16 %v354
        %v371 = vld [vmem:[%s1] sm:$0x3]
        %v373 = vlaneseq
        %v374 = vshrl.u32 %v373, 7
        %v375 = vsub.s32 0, %v374
        %v376 = vrot.slane %v371, %v375
        %v377 = vlaneseq
        %v378 = vshrl.u32 %v377, 7
        %v379 = vsub.s32 1, %v378
        %v380 = vrot.slane %v371, %v379
        %v383 = vmul.f32 %v355, %v376
        %v384 = vmul.f32 %v356, %v380
        %v385 = vmul.f32 %v357, %v376
        %v386 = vmul.f32 %v358, %v380
        %v387 = vmul.f32 %v359, %v376
        %v388 = vmul.f32 %v360, %v380
        %v389 = vmul.f32 %v361, %v376
        %v390 = vmul.f32 %v362, %v380
        %v391 = vmul.f32 %v363, %v376
        %v392 = vmul.f32 %v364, %v380
        %v393 = vmul.f32 %v365, %v376
        %v394 = vmul.f32 %v366, %v380
        %v395 = vmul.f32 %v367, %v376
        %v396 = vmul.f32 %v368, %v380
        %v397 = vmul.f32 %v369, %v376
        %v398 = vmul.f32 %v370, %v380
        %v399 = vld [vmem:[%s2] sm:$0x3]
        %v401 = vlaneseq
        %v402 = vshrl.u32 %v401, 7
        %v403 = vsub.s32 0, %v402
        %v404 = vrot.slane %v399, %v403
        %v405 = vlaneseq
        %v406 = vshrl.u32 %v405, 7
        %v407 = vsub.s32 1, %v406
        %v408 = vrot.slane %v399, %v407
        %v411 = vadd.f32 %v383, %v404
        %v412 = vadd.f32 %v384, %v408
        %v413 = vadd.f32 %v385, %v404
        %v414 = vadd.f32 %v386, %v408
        %v415 = vadd.f32 %v387, %v404
        %v416 = vadd.f32 %v388, %v408
        %v417 = vadd.f32 %v389, %v404
        %v418 = vadd.f32 %v390, %v408
        %v419 = vadd.f32 %v391, %v404
        %v420 = vadd.f32 %v392, %v408
        %v421 = vadd.f32 %v393, %v404
        %v422 = vadd.f32 %v394, %v408
        %v423 = vadd.f32 %v395, %v404
        %v424 = vadd.f32 %v396, %v408
        %v425 = vadd.f32 %v397, %v404
        %v426 = vadd.f32 %v398, %v408
        %v427 = vmax.f32 %v411, 0.0
        %v428 = vmax.f32 %v412, 0.0
        %v429 = vmax.f32 %v413, 0.0
        %v430 = vmax.f32 %v414, 0.0
        %v431 = vmax.f32 %v415, 0.0
        %v432 = vmax.f32 %v416, 0.0
        %v433 = vmax.f32 %v417, 0.0
        %v434 = vmax.f32 %v418, 0.0
        %v435 = vmax.f32 %v419, 0.0
        %v436 = vmax.f32 %v420, 0.0
        %v437 = vmax.f32 %v421, 0.0
        %v438 = vmax.f32 %v422, 0.0
        %v439 = vmax.f32 %v423, 0.0
        %v440 = vmax.f32 %v424, 0.0
        %v441 = vmax.f32 %v425, 0.0
        %v442 = vmax.f32 %v426, 0.0
        %v443 = vld [vmem:[#allocation2] sm:$0xff]
        %v444 = vld [vmem:[#allocation2 + $0x8] sm:$0xff]
        %v445 = vld [vmem:[#allocation2 + $0x10] sm:$0xff]
        %v446 = vld [vmem:[#allocation2 + $0x18] sm:$0xff]
        %v447 = vld [vmem:[#allocation2 + $0x20] sm:$0xff]
        %v448 = vld [vmem:[#allocation2 + $0x28] sm:$0xff]
        %v449 = vld [vmem:[#allocation2 + $0x30] sm:$0xff]
        %v450 = vld [vmem:[#allocation2 + $0x38] sm:$0xff]
        %v451 = vld [vmem:[#allocation2 + $0x40] sm:$0xff]
        %v452 = vld [vmem:[#allocation2 + $0x48] sm:$0xff]
        %v453 = vld [vmem:[#allocation2 + $0x50] sm:$0xff]
        %v454 = vld [vmem:[#allocation2 + $0x58] sm:$0xff]
        %v455 = vld [vmem:[#allocation2 + $0x60] sm:$0xff]
        %v456 = vld [vmem:[#allocation2 + $0x68] sm:$0xff]
        %v457 = vld [vmem:[#allocation2 + $0x70] sm:$0xff]
        %v458 = vld [vmem:[#allocation2 + $0x78] sm:$0xff]
        %v459 = vpack.c.bf16 %v429, %v427
        %v460 = vpack.c.bf16 %v430, %v428
        %v461 = vpack.c.bf16 %v433, %v431
        %v462 = vpack.c.bf16 %v434, %v432
        %v463 = vpack.c.bf16 %v437, %v435
        %v464 = vpack.c.bf16 %v438, %v436
        %v465 = vpack.c.bf16 %v441, %v439
        %v466 = vpack.c.bf16 %v442, %v440
        %v467 = vld [vmem:[%s299] sm:$0xff]
        %v468 = vld [vmem:[%s299 + $0x8] sm:$0xff]
        %v469 = vld [vmem:[%s299 + $0x10] sm:$0xff]
        %v470 = vld [vmem:[%s299 + $0x18] sm:$0xff]
        %v471 = vld [vmem:[%s299 + $0x20] sm:$0xff]
        %v472 = vld [vmem:[%s299 + $0x28] sm:$0xff]
        %v473 = vld [vmem:[%s299 + $0x30] sm:$0xff]
        %v474 = vld [vmem:[%s299 + $0x38] sm:$0xff]
        %v475 = vld [vmem:[%s299 + $0x40] sm:$0xff]
        %v476 = vld [vmem:[%s299 + $0x48] sm:$0xff]
        %v477 = vld [vmem:[%s299 + $0x50] sm:$0xff]
        %v478 = vld [vmem:[%s299 + $0x58] sm:$0xff]
        %v479 = vld [vmem:[%s299 + $0x60] sm:$0xff]
        %v480 = vld [vmem:[%s299 + $0x68] sm:$0xff]
        %v481 = vld [vmem:[%s299 + $0x70] sm:$0xff]
        %v482 = vld [vmem:[%s299 + $0x78] sm:$0xff]
        %v483 = vld [vmem:[%s299 + $0x80] sm:$0xff]
        %v484 = vld [vmem:[%s299 + $0x88] sm:$0xff]
        %v485 = vld [vmem:[%s299 + $0x90] sm:$0xff]
        %v486 = vld [vmem:[%s299 + $0x98] sm:$0xff]
        %v507 = vunpack.c.l.b16 %v467
        %v508 = vunpack.c.h.b16 %v467
        %v509 = vunpack.c.l.b16 %v468
        %v510 = vunpack.c.h.b16 %v468
        %v511 = vunpack.c.l.b16 %v469
        %v512 = vunpack.c.h.b16 %v469
        %v513 = vunpack.c.l.b16 %v470
        %v514 = vunpack.c.h.b16 %v470
        %v515 = vunpack.c.l.b16 %v471
        %v516 = vunpack.c.h.b16 %v471
        %v517 = vunpack.c.l.b16 %v472
        %v518 = vunpack.c.h.b16 %v472
        %v519 = vunpack.c.l.b16 %v473
        %v520 = vunpack.c.h.b16 %v473
        %v521 = vunpack.c.l.b16 %v474
        %v522 = vunpack.c.h.b16 %v474
        %v523 = vunpack.c.l.b16 %v475
        %v524 = vunpack.c.h.b16 %v475
        %v525 = vunpack.c.l.b16 %v476
        %v526 = vunpack.c.h.b16 %v476
        %v527 = vunpack.c.l.b16 %v477
        %v528 = vunpack.c.h.b16 %v477
        %v529 = vunpack.c.l.b16 %v478
        %v530 = vunpack.c.h.b16 %v478
        %v531 = vunpack.c.l.b16 %v479
        %v532 = vunpack.c.h.b16 %v479
        %v533 = vunpack.c.l.b16 %v480
        %v534 = vunpack.c.h.b16 %v480
        %v535 = vunpack.c.l.b16 %v481
        %v536 = vunpack.c.h.b16 %v481
        %v537 = vunpack.c.l.b16 %v482
        %v538 = vunpack.c.h.b16 %v482
        %v539 = vunpack.c.l.b16 %v483
        %v540 = vunpack.c.h.b16 %v483
        %v541 = vunpack.c.l.b16 %v484
        %v542 = vunpack.c.h.b16 %v484
        %v543 = vunpack.c.l.b16 %v485
        %v544 = vunpack.c.h.b16 %v485
        %v545 = vunpack.c.l.b16 %v486
        %v546 = vunpack.c.h.b16 %v486
        %v547 = vpack.c.b16 %v509, %v507
        %v548 = vpack.c.b16 %v510, %v508
        %v549 = vpack.c.b16 %v513, %v511
        %v550 = vpack.c.b16 %v514, %v512
        %v551 = vpack.c.b16 %v517, %v515
        %v552 = vpack.c.b16 %v518, %v516
        %v553 = vpack.c.b16 %v521, %v519
        %v554 = vpack.c.b16 %v522, %v520
        %v555 = vpack.c.b16 %v525, %v523
        %v556 = vpack.c.b16 %v526, %v524
        %v557 = vpack.c.b16 %v529, %v527
        %v558 = vpack.c.b16 %v530, %v528
        %v559 = vpack.c.b16 %v533, %v531
        %v560 = vpack.c.b16 %v534, %v532
        %v561 = vpack.c.b16 %v537, %v535
        %v562 = vpack.c.b16 %v538, %v536
        %v563 = vpack.c.b16 %v541, %v539
        %v564 = vpack.c.b16 %v542, %v540
        %v565 = vpack.c.b16 %v545, %v543
        %v566 = vpack.c.b16 %v546, %v544
        %vm587 = vcmask 261120
        %v589 = vsel %vm587, %v460, 0
        %v592 = vsel %vm587, %v462, 0
        %v595 = vsel %vm587, %v464, 0
        %v598 = vsel %vm587, %v466, 0
        %600 = vmatprep.subr.bf16.mxu0 %v548
        %601 = vmatpush1.bf16.msra.mxu0 %v547
        %602 = vmatprep.subr.bf16.mxu0 %v550
        %603 = vmatpush1.bf16.msra.mxu0 %v549
        %604 = vmatprep.subr.bf16.mxu0 %v552
        %605 = vmatpush1.bf16.msra.mxu0 %v551
        %606 = vmatprep.subr.bf16.mxu0 %v554
        %607 = vmatpush1.bf16.msra.mxu0 %v553
        %608 = vmatprep.subr.bf16.mxu0 %v556
        %609 = vmatpush1.bf16.msra.mxu0 %v555
        %610 = vmatprep.subr.bf16.mxu0 %v558
        %611 = vmatpush1.bf16.msra.mxu0 %v557
        %612 = vmatprep.subr.bf16.mxu0 %v560
        %613 = vmatpush1.bf16.msra.mxu0 %v559
        %614 = vmatprep.subr.bf16.mxu0 %v562
        %615 = vmatpush1.bf16.msra.mxu0 %v561
        %616 = vmatprep.subr.bf16.mxu0 %v564
        %617 = vmatpush1.bf16.msra.mxu0 %v563
        %618 = vmatprep.subr.bf16.mxu0 %v566
        %619 = vmatpush1.bf16.msra.mxu0 %v565
        %620 = vmatprep.subr.bf16.mxu0 0
        %621 = vmatpush1.bf16.msra.mxu0 0
        %622 = vmatprep.subr.bf16.mxu0 0
        %623 = vmatpush1.bf16.msra.mxu0 0
        %624 = vmatprep.subr.bf16.mxu0 0
        %625 = vmatpush1.bf16.msra.mxu0 0
        %626 = vmatprep.subr.bf16.mxu0 0
        %627 = vmatpush1.bf16.msra.mxu0 0
        %628 = vmatprep.subr.bf16.mxu0 0
        %629 = vmatpush1.bf16.msra.mxu0 0
        %630 = vmatprep.subr.bf16.mxu0 0
        %631 = vmatpush1.bf16.msra.mxu0 0
        %632 = vmatprep.mubr.bf16.mxu0 %v589
        %633 = vmatmul.mubr.bf16.gmra.mrb[0].mxu0 %v459
        %v634 = vpop.f32.mrb[0].mxu0
        %v635 = vadd.f32 0.0, %v634
        %v636 = vpop.f32.mrb[0].mxu0
        %v637 = vadd.f32 0.0, %v636
        %v638 = vpop.f32.mrb[0].mxu0
        %v639 = vadd.f32 0.0, %v638
        %v640 = vpop.f32.mrb[0].mxu0
        %v641 = vadd.f32 0.0, %v640
        %642 = vmatprep.mubr.bf16.mxu0 %v592
        %643 = vmatmul.mubr.bf16.gmra.mrb[0].mxu0 %v461
        %v644 = vpop.f32.mrb[0].mxu0
        %v645 = vadd.f32 0.0, %v644
        %v646 = vpop.f32.mrb[0].mxu0
        %v647 = vadd.f32 0.0, %v646
        %v648 = vpop.f32.mrb[0].mxu0
        %v649 = vadd.f32 0.0, %v648
        %v650 = vpop.f32.mrb[0].mxu0
        %v651 = vadd.f32 0.0, %v650
        %652 = vmatprep.mubr.bf16.mxu0 %v595
        %653 = vmatmul.mubr.bf16.gmra.mrb[0].mxu0 %v463
        %v654 = vpop.f32.mrb[0].mxu0
        %v655 = vadd.f32 0.0, %v654
        %v656 = vpop.f32.mrb[0].mxu0
        %v657 = vadd.f32 0.0, %v656
        %v658 = vpop.f32.mrb[0].mxu0
        %v659 = vadd.f32 0.0, %v658
        %v660 = vpop.f32.mrb[0].mxu0
        %v661 = vadd.f32 0.0, %v660
        %662 = vmatprep.mubr.bf16.mxu0 %v598
        %663 = vmatmul.mubr.bf16.gmra.mrb[0].mxu0 %v465
        %v664 = vpop.f32.mrb[0].mxu0
        %v665 = vadd.f32 0.0, %v664
        %v666 = vpop.f32.mrb[0].mxu0
        %v667 = vadd.f32 0.0, %v666
        %v668 = vpop.f32.mrb[0].mxu0
        %v669 = vadd.f32 0.0, %v668
        %v670 = vpop.f32.mrb[0].mxu0
        %v671 = vadd.f32 0.0, %v670
        %672 = vdwg.mxu0
        %v673 = vadd.f32 %v443, %v635
        %v674 = vadd.f32 %v444, %v637
        %v675 = vadd.f32 %v445, %v639
        %v676 = vadd.f32 %v446, %v641
        %v677 = vadd.f32 %v447, %v645
        %v678 = vadd.f32 %v448, %v647
        %v679 = vadd.f32 %v449, %v649
        %v680 = vadd.f32 %v450, %v651
        %v681 = vadd.f32 %v451, %v655
        %v682 = vadd.f32 %v452, %v657
        %v683 = vadd.f32 %v453, %v659
        %v684 = vadd.f32 %v454, %v661
        %v685 = vadd.f32 %v455, %v665
        %v686 = vadd.f32 %v456, %v667
        %v687 = vadd.f32 %v457, %v669
        %v688 = vadd.f32 %v458, %v671
        %689 = vst [vmem:[#allocation2] sm:$0xff] %v673
        %690 = vst.msk [vmem:[#allocation2 + $0x8] sm:$0xff] %vm587, %v674
        %691 = vst [vmem:[#allocation2 + $0x10] sm:$0xff] %v675
        %692 = vst.msk [vmem:[#allocation2 + $0x18] sm:$0xff] %vm587, %v676
        %693 = vst [vmem:[#allocation2 + $0x20] sm:$0xff] %v677
        %694 = vst.msk [vmem:[#allocation2 + $0x28] sm:$0xff] %vm587, %v678
        %695 = vst [vmem:[#allocation2 + $0x30] sm:$0xff] %v679
        %696 = vst.msk [vmem:[#allocation2 + $0x38] sm:$0xff] %vm587, %v680
        %697 = vst [vmem:[#allocation2 + $0x40] sm:$0xff] %v681
        %698 = vst.msk [vmem:[#allocation2 + $0x48] sm:$0xff] %vm587, %v682
        %699 = vst [vmem:[#allocation2 + $0x50] sm:$0xff] %v683
        %700 = vst.msk [vmem:[#allocation2 + $0x58] sm:$0xff] %vm587, %v684
        %701 = vst [vmem:[#allocation2 + $0x60] sm:$0xff] %v685
        %702 = vst.msk [vmem:[#allocation2 + $0x68] sm:$0xff] %vm587, %v686
        %703 = vst [vmem:[#allocation2 + $0x70] sm:$0xff] %v687
        %704 = vst.msk [vmem:[#allocation2 + $0x78] sm:$0xff] %vm587, %v688
      $region44: #{mixed_3b.9} parent=35 // pred_fallthru
        _
      %p705 = scmp.eq.s32.totalorder %s24, 2
      // Predicated region
      $region45: #{mixed_3b.9} parent=35 // pred_check
        %p706 = pneg %p705
      $region46: #{mixed_3b.9} parent=35 // pred_check_branch
        %708 = sbr.rel (%p706) target = $region48
      $region47: #{mixed_3b.9} parent=35 // pred_region
        %v709 = vld [vmem:[#allocation2] sm:$0xff]
        %v710 = vld [vmem:[#allocation2 + $0x8] sm:$0xff]
        %v711 = vld [vmem:[#allocation2 + $0x10] sm:$0xff]
        %v712 = vld [vmem:[#allocation2 + $0x18] sm:$0xff]
        %v713 = vld [vmem:[#allocation2 + $0x20] sm:$0xff]
        %v714 = vld [vmem:[#allocation2 + $0x28] sm:$0xff]
        %v715 = vld [vmem:[#allocation2 + $0x30] sm:$0xff]
        %v716 = vld [vmem:[#allocation2 + $0x38] sm:$0xff]
        %v717 = vld [vmem:[#allocation2 + $0x40] sm:$0xff]
        %v718 = vld [vmem:[#allocation2 + $0x48] sm:$0xff]
        %v719 = vld [vmem:[#allocation2 + $0x50] sm:$0xff]
        %v720 = vld [vmem:[#allocation2 + $0x58] sm:$0xff]
        %v721 = vld [vmem:[#allocation2 + $0x60] sm:$0xff]
        %v722 = vld [vmem:[#allocation2 + $0x68] sm:$0xff]
        %v723 = vld [vmem:[#allocation2 + $0x70] sm:$0xff]
        %v724 = vld [vmem:[#allocation2 + $0x78] sm:$0xff]
        %v725 = vpack.c.bf16 %v711, %v709
        %v726 = vpack.c.bf16 %v712, %v710
        %v727 = vpack.c.bf16 %v715, %v713
        %v728 = vpack.c.bf16 %v716, %v714
        %v729 = vpack.c.bf16 %v719, %v717
        %v730 = vpack.c.bf16 %v720, %v718
        %v731 = vpack.c.bf16 %v723, %v721
        %v732 = vpack.c.bf16 %v724, %v722
        %v741 = vunpack.c.l.b16 %v725
        %v742 = vunpack.c.l.b16 %v726
        %v743 = vunpack.c.h.b16 %v725
        %v744 = vunpack.c.h.b16 %v726
        %v745 = vunpack.c.l.b16 %v727
        %v746 = vunpack.c.l.b16 %v728
        %v747 = vunpack.c.h.b16 %v727
        %v748 = vunpack.c.h.b16 %v728
        %v749 = vunpack.c.l.b16 %v729
        %v750 = vunpack.c.l.b16 %v730
        %v751 = vunpack.c.h.b16 %v729
        %v752 = vunpack.c.h.b16 %v730
        %v753 = vunpack.c.l.b16 %v731
        %v754 = vunpack.c.l.b16 %v732
        %v755 = vunpack.c.h.b16 %v731
        %v756 = vunpack.c.h.b16 %v732
        %v757 = vpack.c.b16 %v742, %v741
        %v758 = vpack.c.b16 %v744, %v743
        %v759 = vpack.c.b16 %v746, %v745
        %v760 = vpack.c.b16 %v748, %v747
        %v761 = vpack.c.b16 %v750, %v749
        %v762 = vpack.c.b16 %v752, %v751
        %v763 = vpack.c.b16 %v754, %v753
        %v764 = vpack.c.b16 %v756, %v755
        %vm773 = vcmask 1043456
        %vm774 = vcmask 261124
        %vm775 = vmor %vm774, %vm773
        %776 = vst.msk [vmem:[%s308] sm:$0xff] %vm775, %v757
        %777 = vst.msk [vmem:[%s308 + $0x8] sm:$0xff] %vm775, %v758
        %778 = vst.msk [vmem:[%s308 + $0x10] sm:$0xff] %vm775, %v759
        %779 = vst.msk [vmem:[%s308 + $0x18] sm:$0xff] %vm775, %v760
        %780 = vst.msk [vmem:[%s308 + $0x20] sm:$0xff] %vm775, %v761
        %781 = vst.msk [vmem:[%s308 + $0x28] sm:$0xff] %vm775, %v762
        %782 = vst.msk [vmem:[%s308 + $0x30] sm:$0xff] %vm775, %v763
        %783 = vst.msk [vmem:[%s308 + $0x38] sm:$0xff] %vm775, %v764
        %v784 = vadd.f32 %v709, %v711
        %v785 = vadd.f32 %v784, %v713
        %v786 = vadd.f32 %v785, %v715
        %v787 = vadd.f32 %v786, %v717
        %v788 = vadd.f32 %v787, %v719
        %v789 = vadd.f32 %v788, %v721
        %v790 = vadd.f32 %v789, %v723
        %v791 = vrot.slane %v790, 4
        %v792 = vadd.f32 %v790, %v791
        %v793 = vrot.slane %v792, 2
        %v794 = vadd.f32 %v792, %v793
        %v795 = vrot.slane %v794, 1
        %v796 = vadd.f32 %v794, %v795
        %vm797 = vcmask 261120
        %v798 = vsel %vm797, %v710, 0.0
        %v799 = vsel %vm797, %v712, 0.0
        %v800 = vadd.f32 %v798, %v799
        %v801 = vsel %vm797, %v714, 0.0
        %v802 = vadd.f32 %v800, %v801
        %v803 = vsel %vm797, %v716, 0.0
        %v804 = vadd.f32 %v802, %v803
        %v805 = vsel %vm797, %v718, 0.0
        %v806 = vadd.f32 %v804, %v805
        %v807 = vsel %vm797, %v720, 0.0
        %v808 = vadd.f32 %v806, %v807
        %v809 = vsel %vm797, %v722, 0.0
        %v810 = vadd.f32 %v808, %v809
        %v811 = vsel %vm797, %v724, 0.0
        %v812 = vadd.f32 %v810, %v811
        %v813 = vrot.slane %v812, 4
        %v814 = vadd.f32 %v812, %v813
        %v815 = vrot.slane %v814, 2
        %v816 = vadd.f32 %v814, %v815
        %v817 = vrot.slane %v816, 1
        %v818 = vadd.f32 %v816, %v817
        %v819 = vmul.f32 %v709, %v709
        %v820 = vmul.f32 %v710, %v710
        %v821 = vmul.f32 %v711, %v711
        %v822 = vmul.f32 %v712, %v712
        %v823 = vmul.f32 %v713, %v713
        %v824 = vmul.f32 %v714, %v714
        %v825 = vmul.f32 %v715, %v715
        %v826 = vmul.f32 %v716, %v716
        %v827 = vmul.f32 %v717, %v717
        %v828 = vmul.f32 %v718, %v718
        %v829 = vmul.f32 %v719, %v719
        %v830 = vmul.f32 %v720, %v720
        %v831 = vmul.f32 %v721, %v721
        %v832 = vmul.f32 %v722, %v722
        %v833 = vmul.f32 %v723, %v723
        %v834 = vmul.f32 %v724, %v724
        %v835 = vadd.f32 %v819, %v821
        %v836 = vadd.f32 %v835, %v823
        %v837 = vadd.f32 %v836, %v825
        %v838 = vadd.f32 %v837, %v827
        %v839 = vadd.f32 %v838, %v829
        %v840 = vadd.f32 %v839, %v831
        %v841 = vadd.f32 %v840, %v833
        %v842 = vrot.slane %v841, 4
        %v843 = vadd.f32 %v841, %v842
        %v844 = vrot.slane %v843, 2
        %v845 = vadd.f32 %v843, %v844
        %v846 = vrot.slane %v845, 1
        %v847 = vadd.f32 %v845, %v846
        %v848 = vsel %vm797, %v820, 0.0
        %v849 = vsel %vm797, %v822, 0.0
        %v850 = vadd.f32 %v848, %v849
        %v851 = vsel %vm797, %v824, 0.0
        %v852 = vadd.f32 %v850, %v851
        %v853 = vsel %vm797, %v826, 0.0
        %v854 = vadd.f32 %v852, %v853
        %v855 = vsel %vm797, %v828, 0.0
        %v856 = vadd.f32 %v854, %v855
        %v857 = vsel %vm797, %v830, 0.0
        %v858 = vadd.f32 %v856, %v857
        %v859 = vsel %vm797, %v832, 0.0
        %v860 = vadd.f32 %v858, %v859
        %v861 = vsel %vm797, %v834, 0.0
        %v862 = vadd.f32 %v860, %v861
        %v863 = vrot.slane %v862, 4
        %v864 = vadd.f32 %v862, %v863
        %v865 = vrot.slane %v864, 2
        %v866 = vadd.f32 %v864, %v865
        %v867 = vrot.slane %v866, 1
        %v868 = vadd.f32 %v866, %v867
        %vm869 = vcmask 1040384
        %v870 = vsel %vm869, %v796, %v847
        %v871 = vsel %vm869, %v818, %v868
        %v874 = vcombine.low %v870, %v871
        %v876 = vunpack.c.l.s4 1983009808
        %v877 = vunpack.c.0.s8 %v876
        %v878 = vlaneseq
        %v879 = vshrl.u32 %v878, 7
        %v880 = vsub.s32 %v877, %v879
        %v881 = vrot.slane %v874, %v880
        %vm883 = vcmask 1041408
        %vm884 = vcmask 257026
        %vm885 = vmor %vm884, %vm883
        %886 = vst.msk [vmem:[%s317] sm:$0xf] %vm885, %v881
      $region48: #{mixed_3b.9} parent=35 // pred_fallthru
        _
      %p887 = scmp.lt.s32.totalorder %s22, 1
      %s888 = scalar_select %p887, %s22, 1
      %p889 = scmp.lt.s32.totalorder %s23, 3
      %s890 = scalar_select %p889, %s23, 3
      %s891 = smul.addr %s890, 16
      %s892 = smul.addr %s888, 64
      %s893 = sadd.s32 %s891, %s892
      %s894 = smul.addr %s893, 4
      %s895 = scalar_lea.vmem %s4, %s894
      %p896 = scmp.lt.s32.totalorder %s22, 1
      %s897 = scalar_select %p896, %s22, 1
      %p898 = scmp.lt.s32.totalorder %s23, 3
      %s899 = scalar_select %p898, %s23, 3
      %s900 = smul.addr %s899, 2
      %s901 = smul.addr %s897, 8
      %s902 = sadd.s32 %s900, %s901
      %s903 = smul.addr %s902, 2
      %s904 = scalar_lea.vmem %s5, %s903
      // Predicated region
      $region49: #{mixed_3b.9} parent=35 // pred_check
        %p905 = pneg %p154
      $region50: #{mixed_3b.9} parent=35 // pred_check_branch
        %907 = sbr.rel (%p905) target = $region52
      $region51: #{mixed_3b.9} parent=35 // pred_region
        _
      $region52: #{mixed_3b.9} parent=35 // pred_fallthru
        _
      // Predicated region
      $region53: #{mixed_3b.9} parent=35 // pred_check
        %p908 = pneg %p182
      $region54: #{mixed_3b.9} parent=35 // pred_check_branch
        %910 = sbr.rel (%p908) target = $region56
      $region55: #{mixed_3b.9} parent=35 // pred_region
        _
      $region56: #{mixed_3b.9} parent=35 // pred_fallthru
        _
    $region36: #{mixed_3b.9} parent=5 // pred_fallthru
      _
    %p911 = scmp.le.s32.totalorder 2, %s12
    // Predicated region
    $region57: #{mixed_3b.9} parent=5 // pred_check
      %p912 = pneg %p911
    $region58: #{mixed_3b.9} parent=5 // pred_check_branch
      %914 = sbr.rel (%p912) target = $region60
    $region59: #{mixed_3b.9} parent=5 // pred_region
      %s915 = ssub.s32 %s12, 2
      // Predicated region
      $region61: #{mixed_3b.9} parent=59 // pred_check
        %p916 = pneg %p160
      $region62: #{mixed_3b.9} parent=59 // pred_check_branch
        %918 = sbr.rel (%p916) target = $region64
      $region63: #{mixed_3b.9} parent=59 // pred_region
        %p919 = scmp.lt.s32.totalorder %s25, 1
        %s920 = scalar_select %p919, %s25, 1
        %p921 = scmp.lt.s32.totalorder %s26, 3
        %s922 = scalar_select %p921, %s26, 3
        %s923 = smul.addr %s922, 16
        %s924 = smul.addr %s920, 64
        %s925 = sadd.s32 %s923, %s924
        %s926 = smul.addr %s925, 4
        %s927 = scalar_lea.vmem %s4, %s926
      $region64: #{mixed_3b.9} parent=59 // pred_fallthru
        _
      // Predicated region
      $region65: #{mixed_3b.9} parent=59 // pred_check
        %p928 = pneg %p188
      $region66: #{mixed_3b.9} parent=59 // pred_check_branch
        %930 = sbr.rel (%p928) target = $region68
      $region67: #{mixed_3b.9} parent=59 // pred_region
        %p931 = scmp.lt.s32.totalorder %s25, 1
        %s932 = scalar_select %p931, %s25, 1
        %p933 = scmp.lt.s32.totalorder %s26, 3
        %s934 = scalar_select %p933, %s26, 3
        %s935 = smul.addr %s934, 2
        %s936 = smul.addr %s932, 8
        %s937 = sadd.s32 %s935, %s936
        %s938 = smul.addr %s937, 2
        %s939 = scalar_lea.vmem %s5, %s938
      $region68: #{mixed_3b.9} parent=59 // pred_fallthru
        _
    $region60: #{mixed_3b.9} parent=5 // pred_fallthru
      _
  $region6: #{mixed_3b.9} parent=0 // loop_footer
    %s16 = sadd.s32 1, %s12
  $region7: #{mixed_3b.9} parent=0 // loop_footer_branch
    %11 = sbr.rel target = $region3
  $region8: #{mixed_3b.9} parent=0 // loop_exit
    _

// kernel: mixed_3b.8
$region0: #{mixed_3b.8}
  #allocation0 [shape = 'u32[]', space=smem, size = 0x4, offset = 0x4, fixed_abs, tag = 'smem constant byte address 0x4 - core index']
  #allocation1 [shape = 'u32[144,128]{1,0:T(1,128)}', space=vmem, size = 0x12000, scoped, tag = 'internal scratch']
  %s0 = inlined_call_operand.vmem [shape: bf16[2,4,80,336], index: 0, kind: input, shape index: {}]
  %s1 = inlined_call_operand.vmem [shape: bf16[3,336,160], index: 1, kind: input, shape index: {}]
  %s2 = inlined_call_operand.vmem [shape: bf16[2,4,64,160], index: 2, kind: output, shape index: {0}]
  %s3 = inlined_call_operand.vmem [shape: f32[2,4,2,160], index: 3, kind: output, shape index: {1}]
  %4 = xla_tuple %s2, %s3
  %s5 = sld [smem:[#allocation0]]
  $region49: #{mixed_3b.8} parent=0
    _
  %s7 = ssub.s32 1, %s5
  %s8 = scalar_select 0, %s7, %s5
  loop: start=0, step=1, limit=10
  $region2: #{mixed_3b.8} parent=0 // loop_pre_header
    _
  $region3: #{mixed_3b.8} parent=0 // loop_header
    %s10 = sphi 0, %s14
    %p11 = scmp.ge.s32.totalorder %s10, 10
    %s17 = sphi 0, %s29
    %s18 = sphi 0, %s25
    %s19 = sphi 0, %s17
    %s20 = sphi 0, %s18
    %s21 = sphi 0, %s19
    %s22 = sphi 0, %s20
    %s34 = sphi 0, %s36
    %s37 = sphi 0, %s34
    %s38 = sphi 0, %s37
    %s54 = sphi 0, %s38
    %s58 = sphi 0, %s58
    %s60 = sphi 0, %s58
    %s61 = sphi 0, %s60
    %s75 = sphi 0, %s61
    %s83 = sphi 0, %s85
    %s86 = sphi 0, %s83
    %s87 = sphi 0, %s86
    %s103 = sphi 0, %s87
    %s111 = sphi 0, %s113
    %s114 = sphi 0, %s111
    %s115 = sphi 0, %s114
    %s131 = sphi 0, %s115
  $region4: #{mixed_3b.8} parent=0 // loop_header_branch
    %13 = sbr.rel (%p11) target = $region8
  $region5: #{mixed_3b.8} parent=0 // loop_body
    %s15 = ssub.s32 %s10, 1
    %s16 = ssub.s32 %s10, 2
    %s23 = sadd.s32 1, %s18
    %p24 = scmp.ge.s32.totalorder %s23, 4
    %s25 = scalar_select %p24, 0, %s23
    %s26 = sadd.s32 1, %s17
    %s27 = scalar_select %p24, %s26, %s17
    %p28 = scmp.ge.s32.totalorder %s27, 2
    %s29 = scalar_select %p28, 0, %s27
    %s30 = ssub.s32 %s17, %s29
    %s31 = ssub.s32 %s18, %s25
    %s32 = sor.u32 %s30, %s31
    %p33 = scmp.eq.s32.totalorder %s32, 0
    %s35 = sadd.s32 %s34, 1
    %s36 = scalar_select %p33, %s34, %s35
    %p39 = pneg %p33
    %p40 = scmp.eq.s32.totalorder %s10, 7
    %p41 = por %p39, %p40
    %p42 = scmp.ne.s32.totalorder %s34, %s37
    %p43 = scmp.eq.s32.totalorder %s10, 0
    %p44 = por %p42, %p43
    %p45 = scmp.ne.s32.totalorder %s34, %s37
    %p46 = scmp.eq.s32.totalorder %s15, 7
    %p47 = por %p45, %p46
    %p48 = scmp.ne.s32.totalorder %s37, %s38
    %p49 = scmp.eq.s32.totalorder %s15, 0
    %p50 = por %p48, %p49
    %p51 = scmp.ne.s32.totalorder %s37, %s38
    %p52 = scmp.eq.s32.totalorder %s16, 7
    %p53 = por %p51, %p52
    %p55 = scmp.ne.s32.totalorder %s38, %s54
    %p56 = scmp.eq.s32.totalorder %s16, 0
    %p57 = por %p55, %p56
    %s59 = sadd.s32 %s58, 1
    %p62 = scmp.eq.s32.totalorder %s10, 7
    %p63 = scmp.ne.s32.totalorder %s58, %s60
    %p64 = scmp.eq.s32.totalorder %s10, 0
    %p65 = por %p63, %p64
    %p66 = scmp.ne.s32.totalorder %s58, %s60
    %p67 = scmp.eq.s32.totalorder %s15, 7
    %p68 = por %p66, %p67
    %p69 = scmp.ne.s32.totalorder %s60, %s61
    %p70 = scmp.eq.s32.totalorder %s15, 0
    %p71 = por %p69, %p70
    %p72 = scmp.ne.s32.totalorder %s60, %s61
    %p73 = scmp.eq.s32.totalorder %s16, 7
    %p74 = por %p72, %p73
    %p76 = scmp.ne.s32.totalorder %s61, %s75
    %p77 = scmp.eq.s32.totalorder %s16, 0
    %p78 = por %p76, %p77
    %s79 = ssub.s32 %s17, %s29
    %s80 = ssub.s32 %s18, %s25
    %s81 = sor.u32 %s79, %s80
    %p82 = scmp.eq.s32.totalorder %s81, 0
    %s84 = sadd.s32 %s83, 1
    %s85 = scalar_select %p82, %s83, %s84
    %p88 = pneg %p82
    %p89 = scmp.eq.s32.totalorder %s10, 7
    %p90 = por %p88, %p89
    %p91 = scmp.ne.s32.totalorder %s83, %s86
    %p92 = scmp.eq.s32.totalorder %s10, 0
    %p93 = por %p91, %p92
    %p94 = scmp.ne.s32.totalorder %s83, %s86
    %p95 = scmp.eq.s32.totalorder %s15, 7
    %p96 = por %p94, %p95
    %p97 = scmp.ne.s32.totalorder %s86, %s87
    %p98 = scmp.eq.s32.totalorder %s15, 0
    %p99 = por %p97, %p98
    %p100 = scmp.ne.s32.totalorder %s86, %s87
    %p101 = scmp.eq.s32.totalorder %s16, 7
    %p102 = por %p100, %p101
    %p104 = scmp.ne.s32.totalorder %s87, %s103
    %p105 = scmp.eq.s32.totalorder %s16, 0
    %p106 = por %p104, %p105
    %s107 = ssub.s32 %s17, %s29
    %s108 = ssub.s32 %s18, %s25
    %s109 = sor.u32 %s107, %s108
    %p110 = scmp.eq.s32.totalorder %s109, 0
    %s112 = sadd.s32 %s111, 1
    %s113 = scalar_select %p110, %s111, %s112
    %p116 = pneg %p110
    %p117 = scmp.eq.s32.totalorder %s10, 7
    %p118 = por %p116, %p117
    %p119 = scmp.ne.s32.totalorder %s111, %s114
    %p120 = scmp.eq.s32.totalorder %s10, 0
    %p121 = por %p119, %p120
    %p122 = scmp.ne.s32.totalorder %s111, %s114
    %p123 = scmp.eq.s32.totalorder %s15, 7
    %p124 = por %p122, %p123
    %p125 = scmp.ne.s32.totalorder %s114, %s115
    %p126 = scmp.eq.s32.totalorder %s15, 0
    %p127 = por %p125, %p126
    %p128 = scmp.ne.s32.totalorder %s114, %s115
    %p129 = scmp.eq.s32.totalorder %s16, 7
    %p130 = por %p128, %p129
    %p132 = scmp.ne.s32.totalorder %s115, %s131
    %p133 = scmp.eq.s32.totalorder %s16, 0
    %p134 = por %p132, %p133
    %p135 = scmp.le.s32.totalorder 1, %s10
    %p136 = scmp.lt.s32.totalorder %s10, 9
    %p137 = pnand %p135, %p136
    %p138 = pneg %p137
    // Predicated region
    $region9: #{mixed_3b.8} parent=5 // pred_check
      _
    $region10: #{mixed_3b.8} parent=5 // pred_check_branch
      %140 = sbr.rel (%p137) target = $region12
    $region11: #{mixed_3b.8} parent=5 // pred_region
      %s141 = ssub.s32 %s10, 1
      // Predicated region
      $region13: #{mixed_3b.8} parent=11 // pred_check
        %p142 = pneg %p71
      $region14: #{mixed_3b.8} parent=11 // pred_check_branch
        %144 = sbr.rel (%p142) target = $region16
      $region15: #{mixed_3b.8} parent=11 // pred_region
        _
      $region16: #{mixed_3b.8} parent=11 // pred_fallthru
        _
    $region12: #{mixed_3b.8} parent=5 // pred_fallthru
      _
    %p145 = scmp.lt.s32.totalorder %s10, 8
    // Predicated region
    $region17: #{mixed_3b.8} parent=5 // pred_check
      %p146 = pneg %p145
    $region18: #{mixed_3b.8} parent=5 // pred_check_branch
      %148 = sbr.rel (%p146) target = $region20
    $region19: #{mixed_3b.8} parent=5 // pred_region
      // Predicated region
      $region21: #{mixed_3b.8} parent=19 // pred_check
        %p149 = pneg %p44
      $region22: #{mixed_3b.8} parent=19 // pred_check_branch
        %151 = sbr.rel (%p149) target = $region24
      $region23: #{mixed_3b.8} parent=19 // pred_region
        %p152 = scmp.lt.s32.totalorder %s17, 1
        %s153 = scalar_select %p152, %s17, 1
        %p154 = scmp.lt.s32.totalorder %s18, 3
        %s155 = scalar_select %p154, %s18, 3
        %s156 = smul.addr %s155, 30
        %s157 = smul.addr %s153, 120
        %s158 = sadd.s32 %s156, %s157
        %s159 = smul.addr %s158, 4
        %s160 = scalar_lea.vmem %s0, %s159
      $region24: #{mixed_3b.8} parent=19 // pred_fallthru
        _
    $region20: #{mixed_3b.8} parent=5 // pred_fallthru
      _
    %p161 = scmp.le.s32.totalorder 1, %s10
    %p162 = scmp.lt.s32.totalorder %s10, 9
    %p163 = pnand %p161, %p162
    %p164 = pneg %p163
    // Predicated region
    $region25: #{mixed_3b.8} parent=5 // pred_check
      _
    $region26: #{mixed_3b.8} parent=5 // pred_check_branch
      %166 = sbr.rel (%p163) target = $region28
    $region27: #{mixed_3b.8} parent=5 // pred_region
      %s167 = ssub.s32 %s10, 1
      %p168 = scmp.lt.s32.totalorder %s19, 1
      %s169 = scalar_select %p168, %s19, 1
      %p170 = scmp.lt.s32.totalorder %s20, 3
      %s171 = scalar_select %p170, %s20, 3
      %s172 = smul.addr %s171, 30
      %s173 = smul.addr %s169, 120
      %s174 = sadd.s32 %s172, %s173
      %s175 = smul.addr %s174, 4
      %s176 = scalar_lea.vmem %s0, %s175
      %p177 = pneg %p50
      %p178 = pneg %p47
      %p179 = pneg %p71
      %p180 = pneg %p68
      %p181 = pneg %p99
      %p182 = pneg %p96
      %p183 = scmp.lt.s32.totalorder %s19, 1
      %s184 = scalar_select %p183, %s19, 1
      %p185 = scmp.lt.s32.totalorder %s20, 3
      %s186 = scalar_select %p185, %s20, 3
      %s187 = smul.addr %s186, 16
      %s188 = smul.addr %s184, 64
      %s189 = sadd.s32 %s187, %s188
      %s190 = smul.addr %s189, 4
      %s191 = scalar_lea.vmem %s2, %s190
      %p192 = pneg %p127
      %p193 = pneg %p124
      %p194 = scmp.lt.s32.totalorder %s19, 1
      %s195 = scalar_select %p194, %s19, 1
      %p196 = scmp.lt.s32.totalorder %s20, 3
      %s197 = scalar_select %p196, %s20, 3
      %s198 = smul.addr %s197, 2
      %s199 = smul.addr %s195, 8
      %s200 = sadd.s32 %s198, %s199
      %s201 = smul.addr %s200, 2
      %s202 = scalar_lea.vmem %s3, %s201
      %p203 = scmp.lt.s32.totalorder %s19, 1
      %s204 = scalar_select %p203, %s19, 1
      %p205 = scmp.lt.s32.totalorder %s20, 3
      %s206 = scalar_select %p205, %s20, 3
      %s207 = smul.addr %s206, 30
      %s208 = smul.addr %s204, 120
      %s209 = sadd.s32 %s207, %s208
      %s210 = smul.addr %s209, 4
      %s211 = scalar_lea.vmem %s0, %s210
      %p212 = scmp.lt.s32.totalorder %s19, 1
      %s213 = scalar_select %p212, %s19, 1
      %p214 = scmp.lt.s32.totalorder %s20, 3
      %s215 = scalar_select %p214, %s20, 3
      %s216 = smul.addr %s215, 16
      %s217 = smul.addr %s213, 64
      %s218 = sadd.s32 %s216, %s217
      %s219 = smul.addr %s218, 4
      %s220 = scalar_lea.vmem %s2, %s219
      %p221 = scmp.lt.s32.totalorder %s19, 1
      %s222 = scalar_select %p221, %s19, 1
      %p223 = scmp.lt.s32.totalorder %s20, 3
      %s224 = scalar_select %p223, %s20, 3
      %s225 = smul.addr %s224, 2
      %s226 = smul.addr %s222, 8
      %s227 = sadd.s32 %s225, %s226
      %s228 = smul.addr %s227, 2
      %s229 = scalar_lea.vmem %s3, %s228
      %v231 = vld [vmem:[%s211] sm:$0xff]
      %v232 = vld [vmem:[%s211 + $0x8] sm:$0xf]
      %v233 = vld [vmem:[%s211 + $0xc] sm:$0xff]
      %v234 = vld [vmem:[%s211 + $0x14] sm:$0xf]
      %v235 = vld [vmem:[%s211 + $0x18] sm:$0xff]
      %v236 = vld [vmem:[%s211 + $0x20] sm:$0xf]
      %v237 = vld [vmem:[%s211 + $0x24] sm:$0xff]
      %v238 = vld [vmem:[%s211 + $0x2c] sm:$0xf]
      %v239 = vld [vmem:[%s211 + $0x30] sm:$0xff]
      %v240 = vld [vmem:[%s211 + $0x38] sm:$0xf]
      %v241 = vld [vmem:[%s211 + $0x3c] sm:$0xff]
      %v242 = vld [vmem:[%s211 + $0x44] sm:$0xf]
      %v243 = vld [vmem:[%s211 + $0x48] sm:$0xff]
      %v244 = vld [vmem:[%s211 + $0x50] sm:$0xf]
      %v245 = vld [vmem:[%s211 + $0x54] sm:$0xff]
      %v246 = vld [vmem:[%s211 + $0x5c] sm:$0xf]
      %v247 = vld [vmem:[%s1] sm:$0xff]
      %v248 = vld [vmem:[%s1 + $0x8] sm:$0xff]
      %v249 = vld [vmem:[%s1 + $0x10] sm:$0xff]
      %v250 = vld [vmem:[%s1 + $0x18] sm:$0xff]
      %v251 = vld [vmem:[%s1 + $0x20] sm:$0xff]
      %v252 = vld [vmem:[%s1 + $0x28] sm:$0xff]
      %v253 = vld [vmem:[%s1 + $0x30] sm:$0xff]
      %v254 = vld [vmem:[%s1 + $0x38] sm:$0xff]
      %v255 = vld [vmem:[%s1 + $0x40] sm:$0xff]
      %v256 = vld [vmem:[%s1 + $0x48] sm:$0xff]
      %v257 = vld [vmem:[%s1 + $0x50] sm:$0xff]
      %v258 = vld [vmem:[%s1 + $0x58] sm:$0xff]
      %v259 = vld [vmem:[%s1 + $0x60] sm:$0xff]
      %v260 = vld [vmem:[%s1 + $0x68] sm:$0xff]
      %v261 = vld [vmem:[%s1 + $0x70] sm:$0xff]
      %v262 = vld [vmem:[%s1 + $0x78] sm:$0xff]
      %v263 = vld [vmem:[%s1 + $0x80] sm:$0xff]
      %v264 = vld [vmem:[%s1 + $0x88] sm:$0xff]
      %v265 = vld [vmem:[%s1 + $0x90] sm:$0xff]
      %v266 = vld [vmem:[%s1 + $0x98] sm:$0xff]
      %v267 = vld [vmem:[%s1 + $0xa0] sm:$0xff]
      %v268 = vld [vmem:[%s1 + $0xa8] sm:$0xff]
      %v269 = vld [vmem:[%s1 + $0xb0] sm:$0xff]
      %v270 = vld [vmem:[%s1 + $0xb8] sm:$0xff]
      %v271 = vld [vmem:[%s1 + $0xc0] sm:$0xff]
      %v272 = vld [vmem:[%s1 + $0xc8] sm:$0xff]
      %v273 = vld [vmem:[%s1 + $0xd0] sm:$0xff]
      %v274 = vld [vmem:[%s1 + $0xd8] sm:$0xff]
      %v275 = vld [vmem:[%s1 + $0xe0] sm:$0xff]
      %v276 = vld [vmem:[%s1 + $0xe8] sm:$0xff]
      %v277 = vld [vmem:[%s1 + $0xf0] sm:$0xff]
      %v278 = vld [vmem:[%s1 + $0xf8] sm:$0xff]
      %v279 = vld [vmem:[%s1 + $0x100] sm:$0xff]
      %v280 = vld [vmem:[%s1 + $0x108] sm:$0xff]
      %v281 = vld [vmem:[%s1 + $0x110] sm:$0xff]
      %v282 = vld [vmem:[%s1 + $0x118] sm:$0xff]
      %v283 = vld [vmem:[%s1 + $0x120] sm:$0xff]
      %v284 = vld [vmem:[%s1 + $0x128] sm:$0xff]
      %v285 = vld [vmem:[%s1 + $0x130] sm:$0xff]
      %v286 = vld [vmem:[%s1 + $0x138] sm:$0xff]
      %v287 = vld [vmem:[%s1 + $0x140] sm:$0xff]
      %v288 = vld [vmem:[%s1 + $0x148] sm:$0xff]
      %v289 = vld [vmem:[%s211 + $0x60] sm:$0xff]
      %v290 = vld [vmem:[%s211 + $0x68] sm:$0xf]
      %s291 = scalar_lea.vmem %s1, 336
      %v292 = vld [vmem:[%s291] sm:$0xff]
      %v293 = vld [vmem:[%s291 + $0x8] sm:$0xff]
      %v294 = vld [vmem:[%s291 + $0x10] sm:$0xff]
      %v295 = vld [vmem:[%s291 + $0x18] sm:$0xff]
      %v296 = vld [vmem:[%s291 + $0x20] sm:$0xff]
      %v297 = vld [vmem:[%s291 + $0x28] sm:$0xff]
      %v298 = vld [vmem:[%s291 + $0x30] sm:$0xff]
      %v299 = vld [vmem:[%s291 + $0x38] sm:$0xff]
      %v300 = vld [vmem:[%s291 + $0x40] sm:$0xff]
      %v301 = vld [vmem:[%s291 + $0x48] sm:$0xff]
      %v302 = vld [vmem:[%s291 + $0x50] sm:$0xff]
      %v303 = vld [vmem:[%s291 + $0x58] sm:$0xff]
      %v304 = vld [vmem:[%s291 + $0x60] sm:$0xff]
      %v305 = vld [vmem:[%s291 + $0x68] sm:$0xff]
      %v306 = vld [vmem:[%s291 + $0x70] sm:$0xff]
      %v307 = vld [vmem:[%s291 + $0x78] sm:$0xff]
      %v308 = vld [vmem:[%s291 + $0x80] sm:$0xff]
      %v309 = vld [vmem:[%s291 + $0x88] sm:$0xff]
      %v310 = vld [vmem:[%s291 + $0x90] sm:$0xff]
      %v311 = vld [vmem:[%s291 + $0x98] sm:$0xff]
      %v312 = vld [vmem:[%s291 + $0xa0] sm:$0xff]
      %v313 = vld [vmem:[%s291 + $0xa8] sm:$0xff]
      %v314 = vld [vmem:[%s291 + $0xb0] sm:$0xff]
      %v315 = vld [vmem:[%s291 + $0xb8] sm:$0xff]
      %v316 = vld [vmem:[%s291 + $0xc0] sm:$0xff]
      %v317 = vld [vmem:[%s291 + $0xc8] sm:$0xff]
      %v318 = vld [vmem:[%s291 + $0xd0] sm:$0xff]
      %v319 = vld [vmem:[%s291 + $0xd8] sm:$0xff]
      %v320 = vld [vmem:[%s291 + $0xe0] sm:$0xff]
      %v321 = vld [vmem:[%s291 + $0xe8] sm:$0xff]
      %v322 = vld [vmem:[%s291 + $0xf0] sm:$0xff]
      %v323 = vld [vmem:[%s291 + $0xf8] sm:$0xff]
      %v324 = vld [vmem:[%s291 + $0x100] sm:$0xff]
      %v325 = vld [vmem:[%s291 + $0x108] sm:$0xff]
      %v326 = vld [vmem:[%s291 + $0x110] sm:$0xff]
      %v327 = vld [vmem:[%s291 + $0x118] sm:$0xff]
      %v328 = vld [vmem:[%s291 + $0x120] sm:$0xff]
      %v329 = vld [vmem:[%s291 + $0x128] sm:$0xff]
      %v330 = vld [vmem:[%s291 + $0x130] sm:$0xff]
      %v331 = vld [vmem:[%s291 + $0x138] sm:$0xff]
      %v332 = vld [vmem:[%s291 + $0x140] sm:$0xff]
      %v333 = vld [vmem:[%s291 + $0x148] sm:$0xff]
      %v350 = vunpack.c.l.b16 %v233
      %v351 = vunpack.c.h.b16 %v233
      %v352 = vunpack.c.l.b16 %v234
      %v353 = vunpack.c.l.b16 %v235
      %v354 = vunpack.c.h.b16 %v235
      %v355 = vunpack.c.l.b16 %v236
      %v356 = vunpack.c.l.b16 %v237
      %v357 = vunpack.c.h.b16 %v237
      %v358 = vunpack.c.l.b16 %v238
      %v359 = vunpack.c.l.b16 %v239
      %v360 = vunpack.c.h.b16 %v239
      %v361 = vunpack.c.l.b16 %v240
      %v362 = vunpack.c.l.b16 %v241
      %v363 = vunpack.c.h.b16 %v241
      %v364 = vunpack.c.l.b16 %v242
      %v365 = vunpack.c.l.b16 %v243
      %v366 = vunpack.c.h.b16 %v243
      %v367 = vunpack.c.l.b16 %v244
      %v368 = vunpack.c.l.b16 %v245
      %v369 = vunpack.c.h.b16 %v245
      %v370 = vunpack.c.l.b16 %v246
      %v371 = vunpack.c.l.b16 %v289
      %v372 = vunpack.c.h.b16 %v289
      %v373 = vunpack.c.l.b16 %v290
      %v374 = vpack.c.b16 %v353, %v350
      %v375 = vpack.c.b16 %v354, %v351
      %v376 = vpack.c.b16 %v355, %v352
      %v377 = vpack.c.b16 %v359, %v356
      %v378 = vpack.c.b16 %v360, %v357
      %v379 = vpack.c.b16 %v361, %v358
      %v380 = vpack.c.b16 %v365, %v362
      %v381 = vpack.c.b16 %v366, %v363
      %v382 = vpack.c.b16 %v367, %v364
      %v383 = vpack.c.b16 %v371, %v368
      %v384 = vpack.c.b16 %v372, %v369
      %v385 = vpack.c.b16 %v373, %v370
      %v436 = vunpack.c.l.b16 %v292
      %v437 = vunpack.c.h.b16 %v292
      %v438 = vunpack.c.l.b16 %v293
      %v439 = vunpack.c.h.b16 %v293
      %v440 = vunpack.c.l.b16 %v294
      %v441 = vunpack.c.h.b16 %v294
      %v442 = vunpack.c.l.b16 %v295
      %v443 = vunpack.c.h.b16 %v295
      %v444 = vunpack.c.l.b16 %v296
      %v445 = vunpack.c.h.b16 %v296
      %v446 = vunpack.c.l.b16 %v297
      %v447 = vunpack.c.h.b16 %v297
      %v448 = vunpack.c.l.b16 %v298
      %v449 = vunpack.c.h.b16 %v298
      %v450 = vunpack.c.l.b16 %v299
      %v451 = vunpack.c.h.b16 %v299
      %v452 = vunpack.c.l.b16 %v300
      %v453 = vunpack.c.h.b16 %v300
      %v454 = vunpack.c.l.b16 %v301
      %v455 = vunpack.c.h.b16 %v301
      %v456 = vunpack.c.l.b16 %v302
      %v457 = vunpack.c.h.b16 %v302
      %v458 = vunpack.c.l.b16 %v303
      %v459 = vunpack.c.h.b16 %v303
      %v460 = vunpack.c.l.b16 %v304
      %v461 = vunpack.c.h.b16 %v304
      %v462 = vunpack.c.l.b16 %v305
      %v463 = vunpack.c.h.b16 %v305
      %v464 = vunpack.c.l.b16 %v306
      %v465 = vunpack.c.h.b16 %v306
      %v466 = vunpack.c.l.b16 %v307
      %v467 = vunpack.c.h.b16 %v307
      %v468 = vunpack.c.l.b16 %v308
      %v469 = vunpack.c.h.b16 %v308
      %v470 = vunpack.c.l.b16 %v309
      %v471 = vunpack.c.h.b16 %v309
      %v472 = vunpack.c.l.b16 %v310
      %v473 = vunpack.c.h.b16 %v310
      %v474 = vunpack.c.l.b16 %v311
      %v475 = vunpack.c.h.b16 %v311
      %v476 = vunpack.c.l.b16 %v312
      %v477 = vunpack.c.h.b16 %v312
      %v478 = vunpack.c.l.b16 %v313
      %v479 = vunpack.c.h.b16 %v313
      %v480 = vunpack.c.l.b16 %v314
      %v481 = vunpack.c.h.b16 %v314
      %v482 = vunpack.c.l.b16 %v315
      %v483 = vunpack.c.h.b16 %v315
      %v484 = vunpack.c.l.b16 %v316
      %v485 = vunpack.c.h.b16 %v316
      %v486 = vunpack.c.l.b16 %v317
      %v487 = vunpack.c.h.b16 %v317
      %v488 = vunpack.c.l.b16 %v318
      %v489 = vunpack.c.h.b16 %v318
      %v490 = vunpack.c.l.b16 %v319
      %v491 = vunpack.c.h.b16 %v319
      %v492 = vunpack.c.l.b16 %v320
      %v493 = vunpack.c.h.b16 %v320
      %v494 = vunpack.c.l.b16 %v321
      %v495 = vunpack.c.h.b16 %v321
      %v496 = vunpack.c.l.b16 %v322
      %v497 = vunpack.c.h.b16 %v322
      %v498 = vunpack.c.l.b16 %v323
      %v499 = vunpack.c.h.b16 %v323
      %v500 = vunpack.c.l.b16 %v324
      %v501 = vunpack.c.h.b16 %v324
      %v502 = vunpack.c.l.b16 %v325
      %v503 = vunpack.c.h.b16 %v325
      %v504 = vunpack.c.l.b16 %v326
      %v505 = vunpack.c.h.b16 %v326
      %v506 = vunpack.c.l.b16 %v327
      %v507 = vunpack.c.h.b16 %v327
      %v508 = vunpack.c.l.b16 %v328
      %v509 = vunpack.c.h.b16 %v328
      %v510 = vunpack.c.l.b16 %v329
      %v511 = vunpack.c.h.b16 %v329
      %v512 = vunpack.c.l.b16 %v330
      %v513 = vunpack.c.h.b16 %v330
      %v514 = vunpack.c.l.b16 %v331
      %v515 = vunpack.c.h.b16 %v331
      %v516 = vunpack.c.l.b16 %v332
      %v517 = vunpack.c.h.b16 %v332
      %v518 = vunpack.c.l.b16 %v333
      %v519 = vunpack.c.h.b16 %v333
      %v520 = vpack.c.b16 %v438, %v436
      %v521 = vpack.c.b16 %v439, %v437
      %v522 = vpack.c.b16 %v442, %v440
      %v523 = vpack.c.b16 %v443, %v441
      %v524 = vpack.c.b16 %v446, %v444
      %v525 = vpack.c.b16 %v447, %v445
      %v526 = vpack.c.b16 %v450, %v448
      %v527 = vpack.c.b16 %v451, %v449
      %v528 = vpack.c.b16 %v454, %v452
      %v529 = vpack.c.b16 %v455, %v453
      %v530 = vpack.c.b16 %v458, %v456
      %v531 = vpack.c.b16 %v459, %v457
      %v532 = vpack.c.b16 %v462, %v460
      %v533 = vpack.c.b16 %v463, %v461
      %v534 = vpack.c.b16 %v466, %v464
      %v535 = vpack.c.b16 %v467, %v465
      %v536 = vpack.c.b16 %v470, %v468
      %v537 = vpack.c.b16 %v471, %v469
      %v538 = vpack.c.b16 %v474, %v472
      %v539 = vpack.c.b16 %v475, %v473
      %v540 = vpack.c.b16 %v478, %v476
      %v541 = vpack.c.b16 %v479, %v477
      %v542 = vpack.c.b16 %v482, %v480
      %v543 = vpack.c.b16 %v483, %v481
      %v544 = vpack.c.b16 %v486, %v484
      %v545 = vpack.c.b16 %v487, %v485
      %v546 = vpack.c.b16 %v490, %v488
      %v547 = vpack.c.b16 %v491, %v489
      %v548 = vpack.c.b16 %v494, %v492
      %v549 = vpack.c.b16 %v495, %v493
      %v550 = vpack.c.b16 %v498, %v496
      %v551 = vpack.c.b16 %v499, %v497
      %v552 = vpack.c.b16 %v502, %v500
      %v553 = vpack.c.b16 %v503, %v501
      %v554 = vpack.c.b16 %v506, %v504
      %v555 = vpack.c.b16 %v507, %v505
      %v556 = vpack.c.b16 %v510, %v508
      %v557 = vpack.c.b16 %v511, %v509
      %v558 = vpack.c.b16 %v514, %v512
      %v559 = vpack.c.b16 %v515, %v513
      %v560 = vpack.c.b16 %v518, %v516
      %v561 = vpack.c.b16 %v519, %v517
      %vm604 = vcmask 654336
      %v606 = vsel %vm604, %v376, 0
      %v609 = vsel %vm604, %v379, 0
      %v612 = vsel %vm604, %v382, 0
      %v615 = vsel %vm604, %v385, 0
      %617 = vmatprep.subr.bf16.mxu0 %v521
      %618 = vmatpush1.bf16.msra.mxu0 %v520
      %619 = vmatprep.subr.bf16.mxu0 %v523
      %620 = vmatpush1.bf16.msra.mxu0 %v522
      %621 = vmatprep.subr.bf16.mxu0 %v525
      %622 = vmatpush1.bf16.msra.mxu0 %v524
      %623 = vmatprep.subr.bf16.mxu0 %v527
      %624 = vmatpush1.bf16.msra.mxu0 %v526
      %625 = vmatprep.subr.bf16.mxu0 %v529
      %626 = vmatpush1.bf16.msra.mxu0 %v528
      %627 = vmatprep.subr.bf16.mxu0 %v531
      %628 = vmatpush1.bf16.msra.mxu0 %v530
      %629 = vmatprep.subr.bf16.mxu0 %v533
      %630 = vmatpush1.bf16.msra.mxu0 %v532
      %631 = vmatprep.subr.bf16.mxu0 %v535
      %632 = vmatpush1.bf16.msra.mxu0 %v534
      %633 = vmatprep.subr.bf16.mxu0 %v537
      %634 = vmatpush1.bf16.msra.mxu0 %v536
      %635 = vmatprep.subr.bf16.mxu0 %v539
      %636 = vmatpush1.bf16.msra.mxu0 %v538
      %637 = vmatprep.subr.bf16.mxu0 %v541
      %638 = vmatpush1.bf16.msra.mxu0 %v540
      %639 = vmatprep.subr.bf16.mxu0 %v543
      %640 = vmatpush1.bf16.msra.mxu0 %v542
      %641 = vmatprep.subr.bf16.mxu0 %v545
      %642 = vmatpush1.bf16.msra.mxu0 %v544
      %643 = vmatprep.subr.bf16.mxu0 %v547
      %644 = vmatpush1.bf16.msra.mxu0 %v546
      %645 = vmatprep.subr.bf16.mxu0 %v549
      %646 = vmatpush1.bf16.msra.mxu0 %v548
      %647 = vmatprep.subr.bf16.mxu0 %v551
      %648 = vmatpush1.bf16.msra.mxu0 %v550
      %649 = vmatprep.mubr.bf16.mxu0 %v375
      %650 = vmatmul.mubr.bf16.gmra.mrb[0].mxu0 %v374
      %v651 = vpop.f32.mrb[0].mxu0
      %v652 = vadd.f32 0.0, %v651
      %v653 = vpop.f32.mrb[0].mxu0
      %v654 = vadd.f32 0.0, %v653
      %v655 = vpop.f32.mrb[0].mxu0
      %v656 = vadd.f32 0.0, %v655
      %v657 = vpop.f32.mrb[0].mxu0
      %v658 = vadd.f32 0.0, %v657
      %659 = vmatprep.mubr.bf16.mxu0 %v378
      %660 = vmatmul.mubr.bf16.gmra.mrb[0].mxu0 %v377
      %v661 = vpop.f32.mrb[0].mxu0
      %v662 = vadd.f32 0.0, %v661
      %v663 = vpop.f32.mrb[0].mxu0
      %v664 = vadd.f32 0.0, %v663
      %v665 = vpop.f32.mrb[0].mxu0
      %v666 = vadd.f32 0.0, %v665
      %v667 = vpop.f32.mrb[0].mxu0
      %v668 = vadd.f32 0.0, %v667
      %669 = vmatprep.mubr.bf16.mxu0 %v381
      %670 = vmatmul.mubr.bf16.gmra.mrb[0].mxu0 %v380
      %v671 = vpop.f32.mrb[0].mxu0
      %v672 = vadd.f32 0.0, %v671
      %v673 = vpop.f32.mrb[0].mxu0
      %v674 = vadd.f32 0.0, %v673
      %v675 = vpop.f32.mrb[0].mxu0
      %v676 = vadd.f32 0.0, %v675
      %v677 = vpop.f32.mrb[0].mxu0
      %v678 = vadd.f32 0.0, %v677
      %679 = vmatprep.mubr.bf16.mxu0 %v384
      %680 = vmatmul.mubr.bf16.gmra.mrb[0].mxu0 %v383
      %v681 = vpop.f32.mrb[0].mxu0
      %v682 = vadd.f32 0.0, %v681
      %v683 = vpop.f32.mrb[0].mxu0
      %v684 = vadd.f32 0.0, %v683
      %v685 = vpop.f32.mrb[0].mxu0
      %v686 = vadd.f32 0.0, %v685
      %v687 = vpop.f32.mrb[0].mxu0
      %v688 = vadd.f32 0.0, %v687
      %689 = vdwg.mxu0
      %690 = vmatprep.subr.bf16.mxu0 %v553
      %691 = vmatpush1.bf16.msra.mxu0 %v552
      %692 = vmatprep.subr.bf16.mxu0 %v555
      %693 = vmatpush1.bf16.msra.mxu0 %v554
      %694 = vmatprep.subr.bf16.mxu0 %v557
      %695 = vmatpush1.bf16.msra.mxu0 %v556
      %696 = vmatprep.subr.bf16.mxu0 %v559
      %697 = vmatpush1.bf16.msra.mxu0 %v558
      %698 = vmatprep.subr.bf16.mxu0 %v561
      %699 = vmatpush1.bf16.msra.mxu0 %v560
      %700 = vmatprep.subr.bf16.mxu0 0
      %701 = vmatpush1.bf16.msra.mxu0 0
      %702 = vmatprep.subr.bf16.mxu0 0
      %703 = vmatpush1.bf16.msra.mxu0 0
      %704 = vmatprep.subr.bf16.mxu0 0
      %705 = vmatpush1.bf16.msra.mxu0 0
      %706 = vmatprep.subr.bf16.mxu0 0
      %707 = vmatpush1.bf16.msra.mxu0 0
      %708 = vmatprep.subr.bf16.mxu0 0
      %709 = vmatpush1.bf16.msra.mxu0 0
      %710 = vmatprep.subr.bf16.mxu0 0
      %711 = vmatpush1.bf16.msra.mxu0 0
      %712 = vmatprep.subr.bf16.mxu0 0
      %713 = vmatpush1.bf16.msra.mxu0 0
      %714 = vmatprep.subr.bf16.mxu0 0
      %715 = vmatpush1.bf16.msra.mxu0 0
      %716 = vmatprep.subr.bf16.mxu0 0
      %717 = vmatpush1.bf16.msra.mxu0 0
      %718 = vmatprep.subr.bf16.mxu0 0
      %719 = vmatpush1.bf16.msra.mxu0 0
      %720 = vmatprep.subr.bf16.mxu0 0
      %721 = vmatpush1.bf16.msra.mxu0 0
      %722 = vmatprep.mubr.bf16.mxu0 0
      %723 = vmatmul.mubr.bf16.gmra.mrb[0].mxu0 %v606
      %v724 = vpop.f32.mrb[0].mxu0
      %v725 = vadd.f32 %v652, %v724
      %v726 = vpop.f32.mrb[0].mxu0
      %v727 = vadd.f32 %v654, %v726
      %v728 = vpop.f32.mrb[0].mxu0
      %v729 = vadd.f32 %v656, %v728
      %v730 = vpop.f32.mrb[0].mxu0
      %v731 = vadd.f32 %v658, %v730
      %732 = vmatprep.mubr.bf16.mxu0 0
      %733 = vmatmul.mubr.bf16.gmra.mrb[0].mxu0 %v609
      %v734 = vpop.f32.mrb[0].mxu0
      %v735 = vadd.f32 %v662, %v734
      %v736 = vpop.f32.mrb[0].mxu0
      %v737 = vadd.f32 %v664, %v736
      %v738 = vpop.f32.mrb[0].mxu0
      %v739 = vadd.f32 %v666, %v738
      %v740 = vpop.f32.mrb[0].mxu0
      %v741 = vadd.f32 %v668, %v740
      %742 = vmatprep.mubr.bf16.mxu0 0
      %743 = vmatmul.mubr.bf16.gmra.mrb[0].mxu0 %v612
      %v744 = vpop.f32.mrb[0].mxu0
      %v745 = vadd.f32 %v672, %v744
      %v746 = vpop.f32.mrb[0].mxu0
      %v747 = vadd.f32 %v674, %v746
      %v748 = vpop.f32.mrb[0].mxu0
      %v749 = vadd.f32 %v676, %v748
      %v750 = vpop.f32.mrb[0].mxu0
      %v751 = vadd.f32 %v678, %v750
      %752 = vmatprep.mubr.bf16.mxu0 0
      %753 = vmatmul.mubr.bf16.gmra.mrb[0].mxu0 %v615
      %v754 = vpop.f32.mrb[0].mxu0
      %v755 = vadd.f32 %v682, %v754
      %v756 = vpop.f32.mrb[0].mxu0
      %v757 = vadd.f32 %v684, %v756
      %v758 = vpop.f32.mrb[0].mxu0
      %v759 = vadd.f32 %v686, %v758
      %v760 = vpop.f32.mrb[0].mxu0
      %v761 = vadd.f32 %v688, %v760
      %762 = vdwg.mxu0
      %v765 = vunpack.c.l.b16 %v231
      %v766 = vunpack.c.h.b16 %v231
      %v767 = vunpack.c.l.b16 %v232
      %v768 = vpack.c.b16 %v350, %v765
      %v769 = vpack.c.b16 %v351, %v766
      %v770 = vpack.c.b16 %v352, %v767
      %v771 = vpack.c.b16 %v356, %v353
      %v772 = vpack.c.b16 %v357, %v354
      %v773 = vpack.c.b16 %v358, %v355
      %v774 = vpack.c.b16 %v362, %v359
      %v775 = vpack.c.b16 %v363, %v360
      %v776 = vpack.c.b16 %v364, %v361
      %v777 = vpack.c.b16 %v368, %v365
      %v778 = vpack.c.b16 %v369, %v366
      %v779 = vpack.c.b16 %v370, %v367
      %v830 = vunpack.c.l.b16 %v247
      %v831 = vunpack.c.h.b16 %v247
      %v832 = vunpack.c.l.b16 %v248
      %v833 = vunpack.c.h.b16 %v248
      %v834 = vunpack.c.l.b16 %v249
      %v835 = vunpack.c.h.b16 %v249
      %v836 = vunpack.c.l.b16 %v250
      %v837 = vunpack.c.h.b16 %v250
      %v838 = vunpack.c.l.b16 %v251
      %v839 = vunpack.c.h.b16 %v251
      %v840 = vunpack.c.l.b16 %v252
      %v841 = vunpack.c.h.b16 %v252
      %v842 = vunpack.c.l.b16 %v253
      %v843 = vunpack.c.h.b16 %v253
      %v844 = vunpack.c.l.b16 %v254
      %v845 = vunpack.c.h.b16 %v254
      %v846 = vunpack.c.l.b16 %v255
      %v847 = vunpack.c.h.b16 %v255
      %v848 = vunpack.c.l.b16 %v256
      %v849 = vunpack.c.h.b16 %v256
      %v850 = vunpack.c.l.b16 %v257
      %v851 = vunpack.c.h.b16 %v257
      %v852 = vunpack.c.l.b16 %v258
      %v853 = vunpack.c.h.b16 %v258
      %v854 = vunpack.c.l.b16 %v259
      %v855 = vunpack.c.h.b16 %v259
      %v856 = vunpack.c.l.b16 %v260
      %v857 = vunpack.c.h.b16 %v260
      %v858 = vunpack.c.l.b16 %v261
      %v859 = vunpack.c.h.b16 %v261
      %v860 = vunpack.c.l.b16 %v262
      %v861 = vunpack.c.h.b16 %v262
      %v862 = vunpack.c.l.b16 %v263
      %v863 = vunpack.c.h.b16 %v263
      %v864 = vunpack.c.l.b16 %v264
      %v865 = vunpack.c.h.b16 %v264
      %v866 = vunpack.c.l.b16 %v265
      %v867 = vunpack.c.h.b16 %v265
      %v868 = vunpack.c.l.b16 %v266
      %v869 = vunpack.c.h.b16 %v266
      %v870 = vunpack.c.l.b16 %v267
      %v871 = vunpack.c.h.b16 %v267
      %v872 = vunpack.c.l.b16 %v268
      %v873 = vunpack.c.h.b16 %v268
      %v874 = vunpack.c.l.b16 %v269
      %v875 = vunpack.c.h.b16 %v269
      %v876 = vunpack.c.l.b16 %v270
      %v877 = vunpack.c.h.b16 %v270
      %v878 = vunpack.c.l.b16 %v271
      %v879 = vunpack.c.h.b16 %v271
      %v880 = vunpack.c.l.b16 %v272
      %v881 = vunpack.c.h.b16 %v272
      %v882 = vunpack.c.l.b16 %v273
      %v883 = vunpack.c.h.b16 %v273
      %v884 = vunpack.c.l.b16 %v274
      %v885 = vunpack.c.h.b16 %v274
      %v886 = vunpack.c.l.b16 %v275
      %v887 = vunpack.c.h.b16 %v275
      %v888 = vunpack.c.l.b16 %v276
      %v889 = vunpack.c.h.b16 %v276
      %v890 = vunpack.c.l.b16 %v277
      %v891 = vunpack.c.h.b16 %v277
      %v892 = vunpack.c.l.b16 %v278
      %v893 = vunpack.c.h.b16 %v278
      %v894 = vunpack.c.l.b16 %v279
      %v895 = vunpack.c.h.b16 %v279
      %v896 = vunpack.c.l.b16 %v280
      %v897 = vunpack.c.h.b16 %v280
      %v898 = vunpack.c.l.b16 %v281
      %v899 = vunpack.c.h.b16 %v281
      %v900 = vunpack.c.l.b16 %v282
      %v901 = vunpack.c.h.b16 %v282
      %v902 = vunpack.c.l.b16 %v283
      %v903 = vunpack.c.h.b16 %v283
      %v904 = vunpack.c.l.b16 %v284
      %v905 = vunpack.c.h.b16 %v284
      %v906 = vunpack.c.l.b16 %v285
      %v907 = vunpack.c.h.b16 %v285
      %v908 = vunpack.c.l.b16 %v286
      %v909 = vunpack.c.h.b16 %v286
      %v910 = vunpack.c.l.b16 %v287
      %v911 = vunpack.c.h.b16 %v287
      %v912 = vunpack.c.l.b16 %v288
      %v913 = vunpack.c.h.b16 %v288
      %v914 = vpack.c.b16 %v832, %v830
      %v915 = vpack.c.b16 %v833, %v831
      %v916 = vpack.c.b16 %v836, %v834
      %v917 = vpack.c.b16 %v837, %v835
      %v918 = vpack.c.b16 %v840, %v838
      %v919 = vpack.c.b16 %v841, %v839
      %v920 = vpack.c.b16 %v844, %v842
      %v921 = vpack.c.b16 %v845, %v843
      %v922 = vpack.c.b16 %v848, %v846
      %v923 = vpack.c.b16 %v849, %v847
      %v924 = vpack.c.b16 %v852, %v850
      %v925 = vpack.c.b16 %v853, %v851
      %v926 = vpack.c.b16 %v856, %v854
      %v927 = vpack.c.b16 %v857, %v855
      %v928 = vpack.c.b16 %v860, %v858
      %v929 = vpack.c.b16 %v861, %v859
      %v930 = vpack.c.b16 %v864, %v862
      %v931 = vpack.c.b16 %v865, %v863
      %v932 = vpack.c.b16 %v868, %v866
      %v933 = vpack.c.b16 %v869, %v867
      %v934 = vpack.c.b16 %v872, %v870
      %v935 = vpack.c.b16 %v873, %v871
      %v936 = vpack.c.b16 %v876, %v874
      %v937 = vpack.c.b16 %v877, %v875
      %v938 = vpack.c.b16 %v880, %v878
      %v939 = vpack.c.b16 %v881, %v879
      %v940 = vpack.c.b16 %v884, %v882
      %v941 = vpack.c.b16 %v885, %v883
      %v942 = vpack.c.b16 %v888, %v886
      %v943 = vpack.c.b16 %v889, %v887
      %v944 = vpack.c.b16 %v892, %v890
      %v945 = vpack.c.b16 %v893, %v891
      %v946 = vpack.c.b16 %v896, %v894
      %v947 = vpack.c.b16 %v897, %v895
      %v948 = vpack.c.b16 %v900, %v898
      %v949 = vpack.c.b16 %v901, %v899
      %v950 = vpack.c.b16 %v904, %v902
      %v951 = vpack.c.b16 %v905, %v903
      %v952 = vpack.c.b16 %v908, %v906
      %v953 = vpack.c.b16 %v909, %v907
      %v954 = vpack.c.b16 %v912, %v910
      %v955 = vpack.c.b16 %v913, %v911
      %v999 = vsel %vm604, %v770, 0
      %v1002 = vsel %vm604, %v773, 0
      %v1005 = vsel %vm604, %v776, 0
      %v1008 = vsel %vm604, %v779, 0
      %1010 = vmatprep.subr.bf16.mxu0 %v915
      %1011 = vmatpush1.bf16.msra.mxu0 %v914
      %1012 = vmatprep.subr.bf16.mxu0 %v917
      %1013 = vmatpush1.bf16.msra.mxu0 %v916
      %1014 = vmatprep.subr.bf16.mxu0 %v919
      %1015 = vmatpush1.bf16.msra.mxu0 %v918
      %1016 = vmatprep.subr.bf16.mxu0 %v921
      %1017 = vmatpush1.bf16.msra.mxu0 %v920
      %1018 = vmatprep.subr.bf16.mxu0 %v923
      %1019 = vmatpush1.bf16.msra.mxu0 %v922
      %1020 = vmatprep.subr.bf16.mxu0 %v925
      %1021 = vmatpush1.bf16.msra.mxu0 %v924
      %1022 = vmatprep.subr.bf16.mxu0 %v927
      %1023 = vmatpush1.bf16.msra.mxu0 %v926
      %1024 = vmatprep.subr.bf16.mxu0 %v929
      %1025 = vmatpush1.bf16.msra.mxu0 %v928
      %1026 = vmatprep.subr.bf16.mxu0 %v931
      %1027 = vmatpush1.bf16.msra.mxu0 %v930
      %1028 = vmatprep.subr.bf16.mxu0 %v933
      %1029 = vmatpush1.bf16.msra.mxu0 %v932
      %1030 = vmatprep.subr.bf16.mxu0 %v935
      %1031 = vmatpush1.bf16.msra.mxu0 %v934
      %1032 = vmatprep.subr.bf16.mxu0 %v937
      %1033 = vmatpush1.bf16.msra.mxu0 %v936
      %1034 = vmatprep.subr.bf16.mxu0 %v939
      %1035 = vmatpush1.bf16.msra.mxu0 %v938
      %1036 = vmatprep.subr.bf16.mxu0 %v941
      %1037 = vmatpush1.bf16.msra.mxu0 %v940
      %1038 = vmatprep.subr.bf16.mxu0 %v943
      %1039 = vmatpush1.bf16.msra.mxu0 %v942
      %1040 = vmatprep.subr.bf16.mxu0 %v945
      %1041 = vmatpush1.bf16.msra.mxu0 %v944
      %1042 = vmatprep.mubr.bf16.mxu0 %v769
      %1043 = vmatmul.mubr.bf16.gmra.mrb[0].mxu0 %v768
      %v1044 = vpop.f32.mrb[0].mxu0
      %v1045 = vadd.f32 %v725, %v1044
      %v1046 = vpop.f32.mrb[0].mxu0
      %v1047 = vadd.f32 %v727, %v1046
      %v1048 = vpop.f32.mrb[0].mxu0
      %v1049 = vadd.f32 %v729, %v1048
      %v1050 = vpop.f32.mrb[0].mxu0
      %v1051 = vadd.f32 %v731, %v1050
      %1052 = vmatprep.mubr.bf16.mxu0 %v772
      %1053 = vmatmul.mubr.bf16.gmra.mrb[0].mxu0 %v771
      %v1054 = vpop.f32.mrb[0].mxu0
      %v1055 = vadd.f32 %v735, %v1054
      %v1056 = vpop.f32.mrb[0].mxu0
      %v1057 = vadd.f32 %v737, %v1056
      %v1058 = vpop.f32.mrb[0].mxu0
      %v1059 = vadd.f32 %v739, %v1058
      %v1060 = vpop.f32.mrb[0].mxu0
      %v1061 = vadd.f32 %v741, %v1060
      %1062 = vmatprep.mubr.bf16.mxu0 %v775
      %1063 = vmatmul.mubr.bf16.gmra.mrb[0].mxu0 %v774
      %v1064 = vpop.f32.mrb[0].mxu0
      %v1065 = vadd.f32 %v745, %v1064
      %v1066 = vpop.f32.mrb[0].mxu0
      %v1067 = vadd.f32 %v747, %v1066
      %v1068 = vpop.f32.mrb[0].mxu0
      %v1069 = vadd.f32 %v749, %v1068
      %v1070 = vpop.f32.mrb[0].mxu0
      %v1071 = vadd.f32 %v751, %v1070
      %1072 = vmatprep.mubr.bf16.mxu0 %v778
      %1073 = vmatmul.mubr.bf16.gmra.mrb[0].mxu0 %v777
      %v1074 = vpop.f32.mrb[0].mxu0
      %v1075 = vadd.f32 %v755, %v1074
      %v1076 = vpop.f32.mrb[0].mxu0
      %v1077 = vadd.f32 %v757, %v1076
      %v1078 = vpop.f32.mrb[0].mxu0
      %v1079 = vadd.f32 %v759, %v1078
      %v1080 = vpop.f32.mrb[0].mxu0
      %v1081 = vadd.f32 %v761, %v1080
      %1082 = vdwg.mxu0
      %1083 = vmatprep.subr.bf16.mxu0 %v947
      %1084 = vmatpush1.bf16.msra.mxu0 %v946
      %1085 = vmatprep.subr.bf16.mxu0 %v949
      %1086 = vmatpush1.bf16.msra.mxu0 %v948
      %1087 = vmatprep.subr.bf16.mxu0 %v951
      %1088 = vmatpush1.bf16.msra.mxu0 %v950
      %1089 = vmatprep.subr.bf16.mxu0 %v953
      %1090 = vmatpush1.bf16.msra.mxu0 %v952
      %1091 = vmatprep.subr.bf16.mxu0 %v955
      %1092 = vmatpush1.bf16.msra.mxu0 %v954
      %1093 = vmatprep.subr.bf16.mxu0 0
      %1094 = vmatpush1.bf16.msra.mxu0 0
      %1095 = vmatprep.subr.bf16.mxu0 0
      %1096 = vmatpush1.bf16.msra.mxu0 0
      %1097 = vmatprep.subr.bf16.mxu0 0
      %1098 = vmatpush1.bf16.msra.mxu0 0
      %1099 = vmatprep.subr.bf16.mxu0 0
      %1100 = vmatpush1.bf16.msra.mxu0 0
      %1101 = vmatprep.subr.bf16.mxu0 0
      %1102 = vmatpush1.bf16.msra.mxu0 0
      %1103 = vmatprep.subr.bf16.mxu0 0
      %1104 = vmatpush1.bf16.msra.mxu0 0
      %1105 = vmatprep.subr.bf16.mxu0 0
      %1106 = vmatpush1.bf16.msra.mxu0 0
      %1107 = vmatprep.subr.bf16.mxu0 0
      %1108 = vmatpush1.bf16.msra.mxu0 0
      %1109 = vmatprep.subr.bf16.mxu0 0
      %1110 = vmatpush1.bf16.msra.mxu0 0
      %1111 = vmatprep.subr.bf16.mxu0 0
      %1112 = vmatpush1.bf16.msra.mxu0 0
      %1113 = vmatprep.subr.bf16.mxu0 0
      %1114 = vmatpush1.bf16.msra.mxu0 0
      %1115 = vmatprep.mubr.bf16.mxu0 0
      %1116 = vmatmul.mubr.bf16.gmra.mrb[0].mxu0 %v999
      %v1117 = vpop.f32.mrb[0].mxu0
      %v1118 = vadd.f32 %v1045, %v1117
      %v1119 = vpop.f32.mrb[0].mxu0
      %v1120 = vadd.f32 %v1047, %v1119
      %v1121 = vpop.f32.mrb[0].mxu0
      %v1122 = vadd.f32 %v1049, %v1121
      %v1123 = vpop.f32.mrb[0].mxu0
      %v1124 = vadd.f32 %v1051, %v1123
      %1125 = vmatprep.mubr.bf16.mxu0 0
      %1126 = vmatmul.mubr.bf16.gmra.mrb[0].mxu0 %v1002
      %v1127 = vpop.f32.mrb[0].mxu0
      %v1128 = vadd.f32 %v1055, %v1127
      %v1129 = vpop.f32.mrb[0].mxu0
      %v1130 = vadd.f32 %v1057, %v1129
      %v1131 = vpop.f32.mrb[0].mxu0
      %v1132 = vadd.f32 %v1059, %v1131
      %v1133 = vpop.f32.mrb[0].mxu0
      %v1134 = vadd.f32 %v1061, %v1133
      %1135 = vmatprep.mubr.bf16.mxu0 0
      %1136 = vmatmul.mubr.bf16.gmra.mrb[0].mxu0 %v1005
      %v1137 = vpop.f32.mrb[0].mxu0
      %v1138 = vadd.f32 %v1065, %v1137
      %v1139 = vpop.f32.mrb[0].mxu0
      %v1140 = vadd.f32 %v1067, %v1139
      %v1141 = vpop.f32.mrb[0].mxu0
      %v1142 = vadd.f32 %v1069, %v1141
      %v1143 = vpop.f32.mrb[0].mxu0
      %v1144 = vadd.f32 %v1071, %v1143
      %1145 = vmatprep.mubr.bf16.mxu0 0
      %1146 = vmatmul.mubr.bf16.gmra.mrb[0].mxu0 %v1008
      %v1147 = vpop.f32.mrb[0].mxu0
      %v1148 = vadd.f32 %v1075, %v1147
      %v1149 = vpop.f32.mrb[0].mxu0
      %v1150 = vadd.f32 %v1077, %v1149
      %v1151 = vpop.f32.mrb[0].mxu0
      %v1152 = vadd.f32 %v1079, %v1151
      %v1153 = vpop.f32.mrb[0].mxu0
      %v1154 = vadd.f32 %v1081, %v1153
      %1155 = vdwg.mxu0
      %v1156 = vld [vmem:[%s211 + $0x18] sm:$0xff]
      %v1157 = vld [vmem:[%s211 + $0x20] sm:$0xf]
      %v1158 = vld [vmem:[%s211 + $0x24] sm:$0xff]
      %v1159 = vld [vmem:[%s211 + $0x2c] sm:$0xf]
      %v1160 = vld [vmem:[%s211 + $0x30] sm:$0xff]
      %v1161 = vld [vmem:[%s211 + $0x38] sm:$0xf]
      %v1162 = vld [vmem:[%s211 + $0x3c] sm:$0xff]
      %v1163 = vld [vmem:[%s211 + $0x44] sm:$0xf]
      %v1164 = vld [vmem:[%s211 + $0x48] sm:$0xff]
      %v1165 = vld [vmem:[%s211 + $0x50] sm:$0xf]
      %v1166 = vld [vmem:[%s211 + $0x54] sm:$0xff]
      %v1167 = vld [vmem:[%s211 + $0x5c] sm:$0xf]
      %v1168 = vld [vmem:[%s211 + $0x60] sm:$0xff]
      %v1169 = vld [vmem:[%s211 + $0x68] sm:$0xf]
      %v1170 = vld [vmem:[%s211 + $0x6c] sm:$0xff]
      %v1171 = vld [vmem:[%s211 + $0x74] sm:$0xf]
      %s1172 = scalar_lea.vmem %s1, 672
      %v1173 = vld [vmem:[%s1172] sm:$0xff]
      %v1174 = vld [vmem:[%s1172 + $0x8] sm:$0xff]
      %v1175 = vld [vmem:[%s1172 + $0x10] sm:$0xff]
      %v1176 = vld [vmem:[%s1172 + $0x18] sm:$0xff]
      %v1177 = vld [vmem:[%s1172 + $0x20] sm:$0xff]
      %v1178 = vld [vmem:[%s1172 + $0x28] sm:$0xff]
      %v1179 = vld [vmem:[%s1172 + $0x30] sm:$0xff]
      %v1180 = vld [vmem:[%s1172 + $0x38] sm:$0xff]
      %v1181 = vld [vmem:[%s1172 + $0x40] sm:$0xff]
      %v1182 = vld [vmem:[%s1172 + $0x48] sm:$0xff]
      %v1183 = vld [vmem:[%s1172 + $0x50] sm:$0xff]
      %v1184 = vld [vmem:[%s1172 + $0x58] sm:$0xff]
      %v1185 = vld [vmem:[%s1172 + $0x60] sm:$0xff]
      %v1186 = vld [vmem:[%s1172 + $0x68] sm:$0xff]
      %v1187 = vld [vmem:[%s1172 + $0x70] sm:$0xff]
      %v1188 = vld [vmem:[%s1172 + $0x78] sm:$0xff]
      %v1189 = vld [vmem:[%s1172 + $0x80] sm:$0xff]
      %v1190 = vld [vmem:[%s1172 + $0x88] sm:$0xff]
      %v1191 = vld [vmem:[%s1172 + $0x90] sm:$0xff]
      %v1192 = vld [vmem:[%s1172 + $0x98] sm:$0xff]
      %v1193 = vld [vmem:[%s1172 + $0xa0] sm:$0xff]
      %v1194 = vld [vmem:[%s1172 + $0xa8] sm:$0xff]
      %v1195 = vld [vmem:[%s1172 + $0xb0] sm:$0xff]
      %v1196 = vld [vmem:[%s1172 + $0xb8] sm:$0xff]
      %v1197 = vld [vmem:[%s1172 + $0xc0] sm:$0xff]
      %v1198 = vld [vmem:[%s1172 + $0xc8] sm:$0xff]
      %v1199 = vld [vmem:[%s1172 + $0xd0] sm:$0xff]
      %v1200 = vld [vmem:[%s1172 + $0xd8] sm:$0xff]
      %v1201 = vld [vmem:[%s1172 + $0xe0] sm:$0xff]
      %v1202 = vld [vmem:[%s1172 + $0xe8] sm:$0xff]
      %v1203 = vld [vmem:[%s1172 + $0xf0] sm:$0xff]
      %v1204 = vld [vmem:[%s1172 + $0xf8] sm:$0xff]
      %v1205 = vld [vmem:[%s1172 + $0x100] sm:$0xff]
      %v1206 = vld [vmem:[%s1172 + $0x108] sm:$0xff]
      %v1207 = vld [vmem:[%s1172 + $0x110] sm:$0xff]
      %v1208 = vld [vmem:[%s1172 + $0x118] sm:$0xff]
      %v1209 = vld [vmem:[%s1172 + $0x120] sm:$0xff]
      %v1210 = vld [vmem:[%s1172 + $0x128] sm:$0xff]
      %v1211 = vld [vmem:[%s1172 + $0x130] sm:$0xff]
      %v1212 = vld [vmem:[%s1172 + $0x138] sm:$0xff]
      %v1213 = vld [vmem:[%s1172 + $0x140] sm:$0xff]
      %v1214 = vld [vmem:[%s1172 + $0x148] sm:$0xff]
      %v1231 = vunpack.c.l.b16 %v1156
      %v1232 = vunpack.c.h.b16 %v1156
      %v1233 = vunpack.c.l.b16 %v1157
      %v1234 = vunpack.c.l.b16 %v1158
      %v1235 = vunpack.c.h.b16 %v1158
      %v1236 = vunpack.c.l.b16 %v1159
      %v1237 = vunpack.c.l.b16 %v1160
      %v1238 = vunpack.c.h.b16 %v1160
      %v1239 = vunpack.c.l.b16 %v1161
      %v1240 = vunpack.c.l.b16 %v1162
      %v1241 = vunpack.c.h.b16 %v1162
      %v1242 = vunpack.c.l.b16 %v1163
      %v1243 = vunpack.c.l.b16 %v1164
      %v1244 = vunpack.c.h.b16 %v1164
      %v1245 = vunpack.c.l.b16 %v1165
      %v1246 = vunpack.c.l.b16 %v1166
      %v1247 = vunpack.c.h.b16 %v1166
      %v1248 = vunpack.c.l.b16 %v1167
      %v1249 = vunpack.c.l.b16 %v1168
      %v1250 = vunpack.c.h.b16 %v1168
      %v1251 = vunpack.c.l.b16 %v1169
      %v1252 = vunpack.c.l.b16 %v1170
      %v1253 = vunpack.c.h.b16 %v1170
      %v1254 = vunpack.c.l.b16 %v1171
      %v1255 = vpack.c.b16 %v1234, %v1231
      %v1256 = vpack.c.b16 %v1235, %v1232
      %v1257 = vpack.c.b16 %v1236, %v1233
      %v1258 = vpack.c.b16 %v1240, %v1237
      %v1259 = vpack.c.b16 %v1241, %v1238
      %v1260 = vpack.c.b16 %v1242, %v1239
      %v1261 = vpack.c.b16 %v1246, %v1243
      %v1262 = vpack.c.b16 %v1247, %v1244
      %v1263 = vpack.c.b16 %v1248, %v1245
      %v1264 = vpack.c.b16 %v1252, %v1249
      %v1265 = vpack.c.b16 %v1253, %v1250
      %v1266 = vpack.c.b16 %v1254, %v1251
      %v1317 = vunpack.c.l.b16 %v1173
      %v1318 = vunpack.c.h.b16 %v1173
      %v1319 = vunpack.c.l.b16 %v1174
      %v1320 = vunpack.c.h.b16 %v1174
      %v1321 = vunpack.c.l.b16 %v1175
      %v1322 = vunpack.c.h.b16 %v1175
      %v1323 = vunpack.c.l.b16 %v1176
      %v1324 = vunpack.c.h.b16 %v1176
      %v1325 = vunpack.c.l.b16 %v1177
      %v1326 = vunpack.c.h.b16 %v1177
      %v1327 = vunpack.c.l.b16 %v1178
      %v1328 = vunpack.c.h.b16 %v1178
      %v1329 = vunpack.c.l.b16 %v1179
      %v1330 = vunpack.c.h.b16 %v1179
      %v1331 = vunpack.c.l.b16 %v1180
      %v1332 = vunpack.c.h.b16 %v1180
      %v1333 = vunpack.c.l.b16 %v1181
      %v1334 = vunpack.c.h.b16 %v1181
      %v1335 = vunpack.c.l.b16 %v1182
      %v1336 = vunpack.c.h.b16 %v1182
      %v1337 = vunpack.c.l.b16 %v1183
      %v1338 = vunpack.c.h.b16 %v1183
      %v1339 = vunpack.c.l.b16 %v1184
      %v1340 = vunpack.c.h.b16 %v1184
      %v1341 = vunpack.c.l.b16 %v1185
      %v1342 = vunpack.c.h.b16 %v1185
      %v1343 = vunpack.c.l.b16 %v1186
      %v1344 = vunpack.c.h.b16 %v1186
      %v1345 = vunpack.c.l.b16 %v1187
      %v1346 = vunpack.c.h.b16 %v1187
      %v1347 = vunpack.c.l.b16 %v1188
      %v1348 = vunpack.c.h.b16 %v1188
      %v1349 = vunpack.c.l.b16 %v1189
      %v1350 = vunpack.c.h.b16 %v1189
      %v1351 = vunpack.c.l.b16 %v1190
      %v1352 = vunpack.c.h.b16 %v1190
      %v1353 = vunpack.c.l.b16 %v1191
      %v1354 = vunpack.c.h.b16 %v1191
      %v1355 = vunpack.c.l.b16 %v1192
      %v1356 = vunpack.c.h.b16 %v1192
      %v1357 = vunpack.c.l.b16 %v1193
      %v1358 = vunpack.c.h.b16 %v1193
      %v1359 = vunpack.c.l.b16 %v1194
      %v1360 = vunpack.c.h.b16 %v1194
      %v1361 = vunpack.c.l.b16 %v1195
      %v1362 = vunpack.c.h.b16 %v1195
      %v1363 = vunpack.c.l.b16 %v1196
      %v1364 = vunpack.c.h.b16 %v1196
      %v1365 = vunpack.c.l.b16 %v1197
      %v1366 = vunpack.c.h.b16 %v1197
      %v1367 = vunpack.c.l.b16 %v1198
      %v1368 = vunpack.c.h.b16 %v1198
      %v1369 = vunpack.c.l.b16 %v1199
      %v1370 = vunpack.c.h.b16 %v1199
      %v1371 = vunpack.c.l.b16 %v1200
      %v1372 = vunpack.c.h.b16 %v1200
      %v1373 = vunpack.c.l.b16 %v1201
      %v1374 = vunpack.c.h.b16 %v1201
      %v1375 = vunpack.c.l.b16 %v1202
      %v1376 = vunpack.c.h.b16 %v1202
      %v1377 = vunpack.c.l.b16 %v1203
      %v1378 = vunpack.c.h.b16 %v1203
      %v1379 = vunpack.c.l.b16 %v1204
      %v1380 = vunpack.c.h.b16 %v1204
      %v1381 = vunpack.c.l.b16 %v1205
      %v1382 = vunpack.c.h.b16 %v1205
      %v1383 = vunpack.c.l.b16 %v1206
      %v1384 = vunpack.c.h.b16 %v1206
      %v1385 = vunpack.c.l.b16 %v1207
      %v1386 = vunpack.c.h.b16 %v1207
      %v1387 = vunpack.c.l.b16 %v1208
      %v1388 = vunpack.c.h.b16 %v1208
      %v1389 = vunpack.c.l.b16 %v1209
      %v1390 = vunpack.c.h.b16 %v1209
      %v1391 = vunpack.c.l.b16 %v1210
      %v1392 = vunpack.c.h.b16 %v1210
      %v1393 = vunpack.c.l.b16 %v1211
      %v1394 = vunpack.c.h.b16 %v1211
      %v1395 = vunpack.c.l.b16 %v1212
      %v1396 = vunpack.c.h.b16 %v1212
      %v1397 = vunpack.c.l.b16 %v1213
      %v1398 = vunpack.c.h.b16 %v1213
      %v1399 = vunpack.c.l.b16 %v1214
      %v1400 = vunpack.c.h.b16 %v1214
      %v1401 = vpack.c.b16 %v1319, %v1317
      %v1402 = vpack.c.b16 %v1320, %v1318
      %v1403 = vpack.c.b16 %v1323, %v1321
      %v1404 = vpack.c.b16 %v1324, %v1322
      %v1405 = vpack.c.b16 %v1327, %v1325
      %v1406 = vpack.c.b16 %v1328, %v1326
      %v1407 = vpack.c.b16 %v1331, %v1329
      %v1408 = vpack.c.b16 %v1332, %v1330
      %v1409 = vpack.c.b16 %v1335, %v1333
      %v1410 = vpack.c.b16 %v1336, %v1334
      %v1411 = vpack.c.b16 %v1339, %v1337
      %v1412 = vpack.c.b16 %v1340, %v1338
      %v1413 = vpack.c.b16 %v1343, %v1341
      %v1414 = vpack.c.b16 %v1344, %v1342
      %v1415 = vpack.c.b16 %v1347, %v1345
      %v1416 = vpack.c.b16 %v1348, %v1346
      %v1417 = vpack.c.b16 %v1351, %v1349
      %v1418 = vpack.c.b16 %v1352, %v1350
      %v1419 = vpack.c.b16 %v1355, %v1353
      %v1420 = vpack.c.b16 %v1356, %v1354
      %v1421 = vpack.c.b16 %v1359, %v1357
      %v1422 = vpack.c.b16 %v1360, %v1358
      %v1423 = vpack.c.b16 %v1363, %v1361
      %v1424 = vpack.c.b16 %v1364, %v1362
      %v1425 = vpack.c.b16 %v1367, %v1365
      %v1426 = vpack.c.b16 %v1368, %v1366
      %v1427 = vpack.c.b16 %v1371, %v1369
      %v1428 = vpack.c.b16 %v1372, %v1370
      %v1429 = vpack.c.b16 %v1375, %v1373
      %v1430 = vpack.c.b16 %v1376, %v1374
      %v1431 = vpack.c.b16 %v1379, %v1377
      %v1432 = vpack.c.b16 %v1380, %v1378
      %v1433 = vpack.c.b16 %v1383, %v1381
      %v1434 = vpack.c.b16 %v1384, %v1382
      %v1435 = vpack.c.b16 %v1387, %v1385
      %v1436 = vpack.c.b16 %v1388, %v1386
      %v1437 = vpack.c.b16 %v1391, %v1389
      %v1438 = vpack.c.b16 %v1392, %v1390
      %v1439 = vpack.c.b16 %v1395, %v1393
      %v1440 = vpack.c.b16 %v1396, %v1394
      %v1441 = vpack.c.b16 %v1399, %v1397
      %v1442 = vpack.c.b16 %v1400, %v1398
      %v1486 = vsel %vm604, %v1257, 0
      %v1489 = vsel %vm604, %v1260, 0
      %v1492 = vsel %vm604, %v1263, 0
      %v1495 = vsel %vm604, %v1266, 0
      %1497 = vmatprep.subr.bf16.mxu0 %v1402
      %1498 = vmatpush1.bf16.msra.mxu0 %v1401
      %1499 = vmatprep.subr.bf16.mxu0 %v1404
      %1500 = vmatpush1.bf16.msra.mxu0 %v1403
      %1501 = vmatprep.subr.bf16.mxu0 %v1406
      %1502 = vmatpush1.bf16.msra.mxu0 %v1405
      %1503 = vmatprep.subr.bf16.mxu0 %v1408
      %1504 = vmatpush1.bf16.msra.mxu0 %v1407
      %1505 = vmatprep.subr.bf16.mxu0 %v1410
      %1506 = vmatpush1.bf16.msra.mxu0 %v1409
      %1507 = vmatprep.subr.bf16.mxu0 %v1412
      %1508 = vmatpush1.bf16.msra.mxu0 %v1411
      %1509 = vmatprep.subr.bf16.mxu0 %v1414
      %1510 = vmatpush1.bf16.msra.mxu0 %v1413
      %1511 = vmatprep.subr.bf16.mxu0 %v1416
      %1512 = vmatpush1.bf16.msra.mxu0 %v1415
      %1513 = vmatprep.subr.bf16.mxu0 %v1418
      %1514 = vmatpush1.bf16.msra.mxu0 %v1417
      %1515 = vmatprep.subr.bf16.mxu0 %v1420
      %1516 = vmatpush1.bf16.msra.mxu0 %v1419
      %1517 = vmatprep.subr.bf16.mxu0 %v1422
      %1518 = vmatpush1.bf16.msra.mxu0 %v1421
      %1519 = vmatprep.subr.bf16.mxu0 %v1424
      %1520 = vmatpush1.bf16.msra.mxu0 %v1423
      %1521 = vmatprep.subr.bf16.mxu0 %v1426
      %1522 = vmatpush1.bf16.msra.mxu0 %v1425
      %1523 = vmatprep.subr.bf16.mxu0 %v1428
      %1524 = vmatpush1.bf16.msra.mxu0 %v1427
      %1525 = vmatprep.subr.bf16.mxu0 %v1430
      %1526 = vmatpush1.bf16.msra.mxu0 %v1429
      %1527 = vmatprep.subr.bf16.mxu0 %v1432
      %1528 = vmatpush1.bf16.msra.mxu0 %v1431
      %1529 = vmatprep.mubr.bf16.mxu0 %v1256
      %1530 = vmatmul.mubr.bf16.gmra.mrb[0].mxu0 %v1255
      %v1531 = vpop.f32.mrb[0].mxu0
      %v1532 = vadd.f32 0.0, %v1531
      %v1533 = vpop.f32.mrb[0].mxu0
      %v1534 = vadd.f32 0.0, %v1533
      %v1535 = vpop.f32.mrb[0].mxu0
      %v1536 = vadd.f32 0.0, %v1535
      %v1537 = vpop.f32.mrb[0].mxu0
      %v1538 = vadd.f32 0.0, %v1537
      %1539 = vmatprep.mubr.bf16.mxu0 %v1259
      %1540 = vmatmul.mubr.bf16.gmra.mrb[0].mxu0 %v1258
      %v1541 = vpop.f32.mrb[0].mxu0
      %v1542 = vadd.f32 0.0, %v1541
      %v1543 = vpop.f32.mrb[0].mxu0
      %v1544 = vadd.f32 0.0, %v1543
      %v1545 = vpop.f32.mrb[0].mxu0
      %v1546 = vadd.f32 0.0, %v1545
      %v1547 = vpop.f32.mrb[0].mxu0
      %v1548 = vadd.f32 0.0, %v1547
      %1549 = vmatprep.mubr.bf16.mxu0 %v1262
      %1550 = vmatmul.mubr.bf16.gmra.mrb[0].mxu0 %v1261
      %v1551 = vpop.f32.mrb[0].mxu0
      %v1552 = vadd.f32 0.0, %v1551
      %v1553 = vpop.f32.mrb[0].mxu0
      %v1554 = vadd.f32 0.0, %v1553
      %v1555 = vpop.f32.mrb[0].mxu0
      %v1556 = vadd.f32 0.0, %v1555
      %v1557 = vpop.f32.mrb[0].mxu0
      %v1558 = vadd.f32 0.0, %v1557
      %1559 = vmatprep.mubr.bf16.mxu0 %v1265
      %1560 = vmatmul.mubr.bf16.gmra.mrb[0].mxu0 %v1264
      %v1561 = vpop.f32.mrb[0].mxu0
      %v1562 = vadd.f32 0.0, %v1561
      %v1563 = vpop.f32.mrb[0].mxu0
      %v1564 = vadd.f32 0.0, %v1563
      %v1565 = vpop.f32.mrb[0].mxu0
      %v1566 = vadd.f32 0.0, %v1565
      %v1567 = vpop.f32.mrb[0].mxu0
      %v1568 = vadd.f32 0.0, %v1567
      %1569 = vdwg.mxu0
      %1570 = vmatprep.subr.bf16.mxu0 %v1434
      %1571 = vmatpush1.bf16.msra.mxu0 %v1433
      %1572 = vmatprep.subr.bf16.mxu0 %v1436
      %1573 = vmatpush1.bf16.msra.mxu0 %v1435
      %1574 = vmatprep.subr.bf16.mxu0 %v1438
      %1575 = vmatpush1.bf16.msra.mxu0 %v1437
      %1576 = vmatprep.subr.bf16.mxu0 %v1440
      %1577 = vmatpush1.bf16.msra.mxu0 %v1439
      %1578 = vmatprep.subr.bf16.mxu0 %v1442
      %1579 = vmatpush1.bf16.msra.mxu0 %v1441
      %1580 = vmatprep.subr.bf16.mxu0 0
      %1581 = vmatpush1.bf16.msra.mxu0 0
      %1582 = vmatprep.subr.bf16.mxu0 0
      %1583 = vmatpush1.bf16.msra.mxu0 0
      %1584 = vmatprep.subr.bf16.mxu0 0
      %1585 = vmatpush1.bf16.msra.mxu0 0
      %1586 = vmatprep.subr.bf16.mxu0 0
      %1587 = vmatpush1.bf16.msra.mxu0 0
      %1588 = vmatprep.subr.bf16.mxu0 0
      %1589 = vmatpush1.bf16.msra.mxu0 0
      %1590 = vmatprep.subr.bf16.mxu0 0
      %1591 = vmatpush1.bf16.msra.mxu0 0
      %1592 = vmatprep.subr.bf16.mxu0 0
      %1593 = vmatpush1.bf16.msra.mxu0 0
      %1594 = vmatprep.subr.bf16.mxu0 0
      %1595 = vmatpush1.bf16.msra.mxu0 0
      %1596 = vmatprep.subr.bf16.mxu0 0
      %1597 = vmatpush1.bf16.msra.mxu0 0
      %1598 = vmatprep.subr.bf16.mxu0 0
      %1599 = vmatpush1.bf16.msra.mxu0 0
      %1600 = vmatprep.subr.bf16.mxu0 0
      %1601 = vmatpush1.bf16.msra.mxu0 0
      %1602 = vmatprep.mubr.bf16.mxu0 0
      %1603 = vmatmul.mubr.bf16.gmra.mrb[0].mxu0 %v1486
      %v1604 = vpop.f32.mrb[0].mxu0
      %v1605 = vadd.f32 %v1532, %v1604
      %v1606 = vpop.f32.mrb[0].mxu0
      %v1607 = vadd.f32 %v1534, %v1606
      %v1608 = vpop.f32.mrb[0].mxu0
      %v1609 = vadd.f32 %v1536, %v1608
      %v1610 = vpop.f32.mrb[0].mxu0
      %v1611 = vadd.f32 %v1538, %v1610
      %1612 = vmatprep.mubr.bf16.mxu0 0
      %1613 = vmatmul.mubr.bf16.gmra.mrb[0].mxu0 %v1489
      %v1614 = vpop.f32.mrb[0].mxu0
      %v1615 = vadd.f32 %v1542, %v1614
      %v1616 = vpop.f32.mrb[0].mxu0
      %v1617 = vadd.f32 %v1544, %v1616
      %v1618 = vpop.f32.mrb[0].mxu0
      %v1619 = vadd.f32 %v1546, %v1618
      %v1620 = vpop.f32.mrb[0].mxu0
      %v1621 = vadd.f32 %v1548, %v1620
      %1622 = vmatprep.mubr.bf16.mxu0 0
      %1623 = vmatmul.mubr.bf16.gmra.mrb[0].mxu0 %v1492
      %v1624 = vpop.f32.mrb[0].mxu0
      %v1625 = vadd.f32 %v1552, %v1624
      %v1626 = vpop.f32.mrb[0].mxu0
      %v1627 = vadd.f32 %v1554, %v1626
      %v1628 = vpop.f32.mrb[0].mxu0
      %v1629 = vadd.f32 %v1556, %v1628
      %v1630 = vpop.f32.mrb[0].mxu0
      %v1631 = vadd.f32 %v1558, %v1630
      %1632 = vmatprep.mubr.bf16.mxu0 0
      %1633 = vmatmul.mubr.bf16.gmra.mrb[0].mxu0 %v1495
      %v1634 = vpop.f32.mrb[0].mxu0
      %v1635 = vadd.f32 %v1562, %v1634
      %v1636 = vpop.f32.mrb[0].mxu0
      %v1637 = vadd.f32 %v1564, %v1636
      %v1638 = vpop.f32.mrb[0].mxu0
      %v1639 = vadd.f32 %v1566, %v1638
      %v1640 = vpop.f32.mrb[0].mxu0
      %v1641 = vadd.f32 %v1568, %v1640
      %1642 = vdwg.mxu0
      %v1643 = vadd.f32 %v1118, %v1605
      %v1644 = vadd.f32 %v1120, %v1607
      %v1645 = vadd.f32 %v1122, %v1609
      %v1646 = vadd.f32 %v1124, %v1611
      %v1647 = vadd.f32 %v1128, %v1615
      %v1648 = vadd.f32 %v1130, %v1617
      %v1649 = vadd.f32 %v1132, %v1619
      %v1650 = vadd.f32 %v1134, %v1621
      %v1651 = vadd.f32 %v1138, %v1625
      %v1652 = vadd.f32 %v1140, %v1627
      %v1653 = vadd.f32 %v1142, %v1629
      %v1654 = vadd.f32 %v1144, %v1631
      %v1655 = vadd.f32 %v1148, %v1635
      %v1656 = vadd.f32 %v1150, %v1637
      %v1657 = vadd.f32 %v1152, %v1639
      %v1658 = vadd.f32 %v1154, %v1641
      %v1659 = vpack.c.bf16 %v1645, %v1643
      %v1660 = vpack.c.bf16 %v1646, %v1644
      %v1661 = vpack.c.bf16 %v1649, %v1647
      %v1662 = vpack.c.bf16 %v1650, %v1648
      %v1663 = vpack.c.bf16 %v1653, %v1651
      %v1664 = vpack.c.bf16 %v1654, %v1652
      %v1665 = vpack.c.bf16 %v1657, %v1655
      %v1666 = vpack.c.bf16 %v1658, %v1656
      %v1675 = vunpack.c.l.b16 %v1659
      %v1676 = vunpack.c.l.b16 %v1660
      %v1677 = vunpack.c.h.b16 %v1659
      %v1678 = vunpack.c.h.b16 %v1660
      %v1679 = vunpack.c.l.b16 %v1661
      %v1680 = vunpack.c.l.b16 %v1662
      %v1681 = vunpack.c.h.b16 %v1661
      %v1682 = vunpack.c.h.b16 %v1662
      %v1683 = vunpack.c.l.b16 %v1663
      %v1684 = vunpack.c.l.b16 %v1664
      %v1685 = vunpack.c.h.b16 %v1663
      %v1686 = vunpack.c.h.b16 %v1664
      %v1687 = vunpack.c.l.b16 %v1665
      %v1688 = vunpack.c.l.b16 %v1666
      %v1689 = vunpack.c.h.b16 %v1665
      %v1690 = vunpack.c.h.b16 %v1666
      %v1691 = vpack.c.b16 %v1676, %v1675
      %v1692 = vpack.c.b16 %v1678, %v1677
      %v1693 = vpack.c.b16 %v1680, %v1679
      %v1694 = vpack.c.b16 %v1682, %v1681
      %v1695 = vpack.c.b16 %v1684, %v1683
      %v1696 = vpack.c.b16 %v1686, %v1685
      %v1697 = vpack.c.b16 %v1688, %v1687
      %v1698 = vpack.c.b16 %v1690, %v1689
      %vm1707 = vcmask 1043456
      %vm1708 = vcmask 261124
      %vm1709 = vmor %vm1708, %vm1707
      %1710 = vst.msk [vmem:[%s220] sm:$0xff] %vm1709, %v1691
      %1711 = vst.msk [vmem:[%s220 + $0x8] sm:$0xff] %vm1709, %v1692
      %1712 = vst.msk [vmem:[%s220 + $0x10] sm:$0xff] %vm1709, %v1693
      %1713 = vst.msk [vmem:[%s220 + $0x18] sm:$0xff] %vm1709, %v1694
      %1714 = vst.msk [vmem:[%s220 + $0x20] sm:$0xff] %vm1709, %v1695
      %1715 = vst.msk [vmem:[%s220 + $0x28] sm:$0xff] %vm1709, %v1696
      %1716 = vst.msk [vmem:[%s220 + $0x30] sm:$0xff] %vm1709, %v1697
      %1717 = vst.msk [vmem:[%s220 + $0x38] sm:$0xff] %vm1709, %v1698
      %v1718 = vadd.f32 %v1643, %v1645
      %v1719 = vadd.f32 %v1718, %v1647
      %v1720 = vadd.f32 %v1719, %v1649
      %v1721 = vadd.f32 %v1720, %v1651
      %v1722 = vadd.f32 %v1721, %v1653
      %v1723 = vadd.f32 %v1722, %v1655
      %v1724 = vadd.f32 %v1723, %v1657
      %v1725 = vrot.slane %v1724, 4
      %v1726 = vadd.f32 %v1724, %v1725
      %v1727 = vrot.slane %v1726, 2
      %v1728 = vadd.f32 %v1726, %v1727
      %v1729 = vrot.slane %v1728, 1
      %v1730 = vadd.f32 %v1728, %v1729
      %vm1731 = vcmask 261120
      %v1732 = vsel %vm1731, %v1644, 0.0
      %v1733 = vsel %vm1731, %v1646, 0.0
      %v1734 = vadd.f32 %v1732, %v1733
      %v1735 = vsel %vm1731, %v1648, 0.0
      %v1736 = vadd.f32 %v1734, %v1735
      %v1737 = vsel %vm1731, %v1650, 0.0
      %v1738 = vadd.f32 %v1736, %v1737
      %v1739 = vsel %vm1731, %v1652, 0.0
      %v1740 = vadd.f32 %v1738, %v1739
      %v1741 = vsel %vm1731, %v1654, 0.0
      %v1742 = vadd.f32 %v1740, %v1741
      %v1743 = vsel %vm1731, %v1656, 0.0
      %v1744 = vadd.f32 %v1742, %v1743
      %v1745 = vsel %vm1731, %v1658, 0.0
      %v1746 = vadd.f32 %v1744, %v1745
      %v1747 = vrot.slane %v1746, 4
      %v1748 = vadd.f32 %v1746, %v1747
      %v1749 = vrot.slane %v1748, 2
      %v1750 = vadd.f32 %v1748, %v1749
      %v1751 = vrot.slane %v1750, 1
      %v1752 = vadd.f32 %v1750, %v1751
      %v1753 = vmul.f32 %v1643, %v1643
      %v1754 = vmul.f32 %v1644, %v1644
      %v1755 = vmul.f32 %v1645, %v1645
      %v1756 = vmul.f32 %v1646, %v1646
      %v1757 = vmul.f32 %v1647, %v1647
      %v1758 = vmul.f32 %v1648, %v1648
      %v1759 = vmul.f32 %v1649, %v1649
      %v1760 = vmul.f32 %v1650, %v1650
      %v1761 = vmul.f32 %v1651, %v1651
      %v1762 = vmul.f32 %v1652, %v1652
      %v1763 = vmul.f32 %v1653, %v1653
      %v1764 = vmul.f32 %v1654, %v1654
      %v1765 = vmul.f32 %v1655, %v1655
      %v1766 = vmul.f32 %v1656, %v1656
      %v1767 = vmul.f32 %v1657, %v1657
      %v1768 = vmul.f32 %v1658, %v1658
      %v1769 = vadd.f32 %v1753, %v1755
      %v1770 = vadd.f32 %v1769, %v1757
      %v1771 = vadd.f32 %v1770, %v1759
      %v1772 = vadd.f32 %v1771, %v1761
      %v1773 = vadd.f32 %v1772, %v1763
      %v1774 = vadd.f32 %v1773, %v1765
      %v1775 = vadd.f32 %v1774, %v1767
      %v1776 = vrot.slane %v1775, 4
      %v1777 = vadd.f32 %v1775, %v1776
      %v1778 = vrot.slane %v1777, 2
      %v1779 = vadd.f32 %v1777, %v1778
      %v1780 = vrot.slane %v1779, 1
      %v1781 = vadd.f32 %v1779, %v1780
      %v1782 = vsel %vm1731, %v1754, 0.0
      %v1783 = vsel %vm1731, %v1756, 0.0
      %v1784 = vadd.f32 %v1782, %v1783
      %v1785 = vsel %vm1731, %v1758, 0.0
      %v1786 = vadd.f32 %v1784, %v1785
      %v1787 = vsel %vm1731, %v1760, 0.0
      %v1788 = vadd.f32 %v1786, %v1787
      %v1789 = vsel %vm1731, %v1762, 0.0
      %v1790 = vadd.f32 %v1788, %v1789
      %v1791 = vsel %vm1731, %v1764, 0.0
      %v1792 = vadd.f32 %v1790, %v1791
      %v1793 = vsel %vm1731, %v1766, 0.0
      %v1794 = vadd.f32 %v1792, %v1793
      %v1795 = vsel %vm1731, %v1768, 0.0
      %v1796 = vadd.f32 %v1794, %v1795
      %v1797 = vrot.slane %v1796, 4
      %v1798 = vadd.f32 %v1796, %v1797
      %v1799 = vrot.slane %v1798, 2
      %v1800 = vadd.f32 %v1798, %v1799
      %v1801 = vrot.slane %v1800, 1
      %v1802 = vadd.f32 %v1800, %v1801
      %vm1803 = vcmask 1040384
      %v1804 = vsel %vm1803, %v1730, %v1781
      %v1805 = vsel %vm1803, %v1752, %v1802
      %v1808 = vcombine.low %v1804, %v1805
      %v1810 = vunpack.c.l.s4 1983009808
      %v1811 = vunpack.c.0.s8 %v1810
      %v1812 = vlaneseq
      %v1813 = vshrl.u32 %v1812, 7
      %v1814 = vsub.s32 %v1811, %v1813
      %v1815 = vrot.slane %v1808, %v1814
      %vm1817 = vcmask 1041408
      %vm1818 = vcmask 257026
      %vm1819 = vmor %vm1818, %vm1817
      %1820 = vst.msk [vmem:[%s229] sm:$0xf] %vm1819, %v1815
      %p1821 = scmp.lt.s32.totalorder %s19, 1
      %s1822 = scalar_select %p1821, %s19, 1
      %p1823 = scmp.lt.s32.totalorder %s20, 3
      %s1824 = scalar_select %p1823, %s20, 3
      %s1825 = smul.addr %s1824, 16
      %s1826 = smul.addr %s1822, 64
      %s1827 = sadd.s32 %s1825, %s1826
      %s1828 = smul.addr %s1827, 4
      %s1829 = scalar_lea.vmem %s2, %s1828
      %p1830 = scmp.lt.s32.totalorder %s19, 1
      %s1831 = scalar_select %p1830, %s19, 1
      %p1832 = scmp.lt.s32.totalorder %s20, 3
      %s1833 = scalar_select %p1832, %s20, 3
      %s1834 = smul.addr %s1833, 2
      %s1835 = smul.addr %s1831, 8
      %s1836 = sadd.s32 %s1834, %s1835
      %s1837 = smul.addr %s1836, 2
      %s1838 = scalar_lea.vmem %s3, %s1837
      // Predicated region
      $region29: #{mixed_3b.8} parent=27 // pred_check
        %p1839 = pneg %p96
      $region30: #{mixed_3b.8} parent=27 // pred_check_branch
        %1841 = sbr.rel (%p1839) target = $region32
      $region31: #{mixed_3b.8} parent=27 // pred_region
        _
      $region32: #{mixed_3b.8} parent=27 // pred_fallthru
        _
      // Predicated region
      $region33: #{mixed_3b.8} parent=27 // pred_check
        %p1842 = pneg %p124
      $region34: #{mixed_3b.8} parent=27 // pred_check_branch
        %1844 = sbr.rel (%p1842) target = $region36
      $region35: #{mixed_3b.8} parent=27 // pred_region
        _
      $region36: #{mixed_3b.8} parent=27 // pred_fallthru
        _
    $region28: #{mixed_3b.8} parent=5 // pred_fallthru
      _
    %p1845 = scmp.le.s32.totalorder 2, %s10
    // Predicated region
    $region37: #{mixed_3b.8} parent=5 // pred_check
      %p1846 = pneg %p1845
    $region38: #{mixed_3b.8} parent=5 // pred_check_branch
      %1848 = sbr.rel (%p1846) target = $region40
    $region39: #{mixed_3b.8} parent=5 // pred_region
      %s1849 = ssub.s32 %s10, 2
      // Predicated region
      $region41: #{mixed_3b.8} parent=39 // pred_check
        %p1850 = pneg %p102
      $region42: #{mixed_3b.8} parent=39 // pred_check_branch
        %1852 = sbr.rel (%p1850) target = $region44
      $region43: #{mixed_3b.8} parent=39 // pred_region
        %p1853 = scmp.lt.s32.totalorder %s21, 1
        %s1854 = scalar_select %p1853, %s21, 1
        %p1855 = scmp.lt.s32.totalorder %s22, 3
        %s1856 = scalar_select %p1855, %s22, 3
        %s1857 = smul.addr %s1856, 16
        %s1858 = smul.addr %s1854, 64
        %s1859 = sadd.s32 %s1857, %s1858
        %s1860 = smul.addr %s1859, 4
        %s1861 = scalar_lea.vmem %s2, %s1860
      $region44: #{mixed_3b.8} parent=39 // pred_fallthru
        _
      // Predicated region
      $region45: #{mixed_3b.8} parent=39 // pred_check
        %p1862 = pneg %p130
      $region46: #{mixed_3b.8} parent=39 // pred_check_branch
        %1864 = sbr.rel (%p1862) target = $region48
      $region47: #{mixed_3b.8} parent=39 // pred_region
        %p1865 = scmp.lt.s32.totalorder %s21, 1
        %s1866 = scalar_select %p1865, %s21, 1
        %p1867 = scmp.lt.s32.totalorder %s22, 3
        %s1868 = scalar_select %p1867, %s22, 3
        %s1869 = smul.addr %s1868, 2
        %s1870 = smul.addr %s1866, 8
        %s1871 = sadd.s32 %s1869, %s1870
        %s1872 = smul.addr %s1871, 2
        %s1873 = scalar_lea.vmem %s3, %s1872
      $region48: #{mixed_3b.8} parent=39 // pred_fallthru
        _
    $region40: #{mixed_3b.8} parent=5 // pred_fallthru
      _
  $region6: #{mixed_3b.8} parent=0 // loop_footer
    %s14 = sadd.s32 1, %s10
  $region7: #{mixed_3b.8} parent=0 // loop_footer_branch
    %9 = sbr.rel target = $region3
  $region8: #{mixed_3b.8} parent=0 // loop_exit
    _

// kernel: mixed_3b.10
$region0: #{mixed_3b.10}
  #allocation0 [shape = 'u32[]', space=smem, size = 0x4, offset = 0x4, fixed_abs, tag = 'smem constant byte address 0x4 - core index']
  #allocation1 [shape = 'u32[144,128]{1,0:T(1,128)}', space=vmem, size = 0x12000, scoped, tag = 'internal scratch']
  %s0 = inlined_call_operand.vmem [shape: bf16[512,192], index: 0, kind: input, shape index: {}]
  %s1 = inlined_call_operand.vmem [shape: bf16[192,32], index: 1, kind: input, shape index: {}]
  %s2 = inlined_call_operand.vmem [shape: bf16[512,32], index: 2, kind: output, shape index: {0}]
  %s3 = inlined_call_operand.vmem [shape: f32[2,2,32], index: 3, kind: output, shape index: {1}]
  %4 = xla_tuple %s2, %s3
  %s5 = sld [smem:[#allocation0]]
  $region49: #{mixed_3b.10} parent=0
    _
  %s7 = ssub.s32 1, %s5
  %s8 = scalar_select 0, %s7, %s5
  loop: start=0, step=1, limit=4
  $region2: #{mixed_3b.10} parent=0 // loop_pre_header
    _
  $region3: #{mixed_3b.10} parent=0 // loop_header
    %s10 = sphi 0, %s14
    %p11 = scmp.ge.s32.totalorder %s10, 4
    %s20 = sphi 0, %s22
    %s23 = sphi 0, %s20
    %s24 = sphi 0, %s23
    %s40 = sphi 0, %s24
    %s44 = sphi 0, %s44
    %s46 = sphi 0, %s44
    %s47 = sphi 0, %s46
    %s61 = sphi 0, %s47
    %s67 = sphi 0, %s69
    %s70 = sphi 0, %s67
    %s71 = sphi 0, %s70
    %s87 = sphi 0, %s71
    %s93 = sphi 0, %s95
    %s96 = sphi 0, %s93
    %s97 = sphi 0, %s96
    %s113 = sphi 0, %s97
  $region4: #{mixed_3b.10} parent=0 // loop_header_branch
    %13 = sbr.rel (%p11) target = $region8
  $region5: #{mixed_3b.10} parent=0 // loop_body
    %s15 = ssub.s32 %s10, 1
    %s16 = ssub.s32 %s10, 2
    %s17 = sadd.s32 %s10, 1
    %s18 = ssub.s32 %s10, %s17
    %p19 = scmp.eq.s32.totalorder %s18, 0
    %s21 = sadd.s32 %s20, 1
    %s22 = scalar_select %p19, %s20, %s21
    %p25 = pneg %p19
    %p26 = scmp.eq.s32.totalorder %s10, 1
    %p27 = por %p25, %p26
    %p28 = scmp.ne.s32.totalorder %s20, %s23
    %p29 = scmp.eq.s32.totalorder %s10, 0
    %p30 = por %p28, %p29
    %p31 = scmp.ne.s32.totalorder %s20, %s23
    %p32 = scmp.eq.s32.totalorder %s15, 1
    %p33 = por %p31, %p32
    %p34 = scmp.ne.s32.totalorder %s23, %s24
    %p35 = scmp.eq.s32.totalorder %s15, 0
    %p36 = por %p34, %p35
    %p37 = scmp.ne.s32.totalorder %s23, %s24
    %p38 = scmp.eq.s32.totalorder %s16, 1
    %p39 = por %p37, %p38
    %p41 = scmp.ne.s32.totalorder %s24, %s40
    %p42 = scmp.eq.s32.totalorder %s16, 0
    %p43 = por %p41, %p42
    %s45 = sadd.s32 %s44, 1
    %p48 = scmp.eq.s32.totalorder %s10, 1
    %p49 = scmp.ne.s32.totalorder %s44, %s46
    %p50 = scmp.eq.s32.totalorder %s10, 0
    %p51 = por %p49, %p50
    %p52 = scmp.ne.s32.totalorder %s44, %s46
    %p53 = scmp.eq.s32.totalorder %s15, 1
    %p54 = por %p52, %p53
    %p55 = scmp.ne.s32.totalorder %s46, %s47
    %p56 = scmp.eq.s32.totalorder %s15, 0
    %p57 = por %p55, %p56
    %p58 = scmp.ne.s32.totalorder %s46, %s47
    %p59 = scmp.eq.s32.totalorder %s16, 1
    %p60 = por %p58, %p59
    %p62 = scmp.ne.s32.totalorder %s47, %s61
    %p63 = scmp.eq.s32.totalorder %s16, 0
    %p64 = por %p62, %p63
    %s65 = ssub.s32 %s10, %s17
    %p66 = scmp.eq.s32.totalorder %s65, 0
    %s68 = sadd.s32 %s67, 1
    %s69 = scalar_select %p66, %s67, %s68
    %p72 = pneg %p66
    %p73 = scmp.eq.s32.totalorder %s10, 1
    %p74 = por %p72, %p73
    %p75 = scmp.ne.s32.totalorder %s67, %s70
    %p76 = scmp.eq.s32.totalorder %s10, 0
    %p77 = por %p75, %p76
    %p78 = scmp.ne.s32.totalorder %s67, %s70
    %p79 = scmp.eq.s32.totalorder %s15, 1
    %p80 = por %p78, %p79
    %p81 = scmp.ne.s32.totalorder %s70, %s71
    %p82 = scmp.eq.s32.totalorder %s15, 0
    %p83 = por %p81, %p82
    %p84 = scmp.ne.s32.totalorder %s70, %s71
    %p85 = scmp.eq.s32.totalorder %s16, 1
    %p86 = por %p84, %p85
    %p88 = scmp.ne.s32.totalorder %s71, %s87
    %p89 = scmp.eq.s32.totalorder %s16, 0
    %p90 = por %p88, %p89
    %s91 = ssub.s32 %s10, %s17
    %p92 = scmp.eq.s32.totalorder %s91, 0
    %s94 = sadd.s32 %s93, 1
    %s95 = scalar_select %p92, %s93, %s94
    %p98 = pneg %p92
    %p99 = scmp.eq.s32.totalorder %s10, 1
    %p100 = por %p98, %p99
    %p101 = scmp.ne.s32.totalorder %s93, %s96
    %p102 = scmp.eq.s32.totalorder %s10, 0
    %p103 = por %p101, %p102
    %p104 = scmp.ne.s32.totalorder %s93, %s96
    %p105 = scmp.eq.s32.totalorder %s15, 1
    %p106 = por %p104, %p105
    %p107 = scmp.ne.s32.totalorder %s96, %s97
    %p108 = scmp.eq.s32.totalorder %s15, 0
    %p109 = por %p107, %p108
    %p110 = scmp.ne.s32.totalorder %s96, %s97
    %p111 = scmp.eq.s32.totalorder %s16, 1
    %p112 = por %p110, %p111
    %p114 = scmp.ne.s32.totalorder %s97, %s113
    %p115 = scmp.eq.s32.totalorder %s16, 0
    %p116 = por %p114, %p115
    %p117 = scmp.le.s32.totalorder 1, %s10
    %p118 = scmp.lt.s32.totalorder %s10, 3
    %p119 = pnand %p117, %p118
    %p120 = pneg %p119
    // Predicated region
    $region9: #{mixed_3b.10} parent=5 // pred_check
      _
    $region10: #{mixed_3b.10} parent=5 // pred_check_branch
      %122 = sbr.rel (%p119) target = $region12
    $region11: #{mixed_3b.10} parent=5 // pred_region
      %s123 = ssub.s32 %s10, 1
      // Predicated region
      $region13: #{mixed_3b.10} parent=11 // pred_check
        %p124 = pneg %p57
      $region14: #{mixed_3b.10} parent=11 // pred_check_branch
        %126 = sbr.rel (%p124) target = $region16
      $region15: #{mixed_3b.10} parent=11 // pred_region
        _
      $region16: #{mixed_3b.10} parent=11 // pred_fallthru
        _
    $region12: #{mixed_3b.10} parent=5 // pred_fallthru
      _
    %p127 = scmp.lt.s32.totalorder %s10, 2
    // Predicated region
    $region17: #{mixed_3b.10} parent=5 // pred_check
      %p128 = pneg %p127
    $region18: #{mixed_3b.10} parent=5 // pred_check_branch
      %130 = sbr.rel (%p128) target = $region20
    $region19: #{mixed_3b.10} parent=5 // pred_region
      // Predicated region
      $region21: #{mixed_3b.10} parent=19 // pred_check
        %p131 = pneg %p30
      $region22: #{mixed_3b.10} parent=19 // pred_check_branch
        %133 = sbr.rel (%p131) target = $region24
      $region23: #{mixed_3b.10} parent=19 // pred_region
        %s134 = smul.u32 32, %s10
        %p135 = scmp.lt.s32.totalorder %s134, 63
        %s136 = scalar_select %p135, %s134, 63
        %s137 = smul.addr %s136, 2
        %s138 = smul.addr %s137, 4
        %s139 = scalar_lea.vmem %s0, %s138
        %s140 = smul.u32 32, %s10
      $region24: #{mixed_3b.10} parent=19 // pred_fallthru
        _
    $region20: #{mixed_3b.10} parent=5 // pred_fallthru
      _
    %p141 = scmp.le.s32.totalorder 1, %s10
    %p142 = scmp.lt.s32.totalorder %s10, 3
    %p143 = pnand %p141, %p142
    %p144 = pneg %p143
    // Predicated region
    $region25: #{mixed_3b.10} parent=5 // pred_check
      _
    $region26: #{mixed_3b.10} parent=5 // pred_check_branch
      %146 = sbr.rel (%p143) target = $region28
    $region27: #{mixed_3b.10} parent=5 // pred_region
      %s147 = ssub.s32 %s10, 1
      %s148 = smul.u32 32, %s15
      %p149 = scmp.lt.s32.totalorder %s148, 63
      %s150 = scalar_select %p149, %s148, 63
      %s151 = smul.addr %s150, 2
      %s152 = smul.addr %s151, 4
      %s153 = scalar_lea.vmem %s0, %s152
      %p154 = pneg %p36
      %p155 = pneg %p33
      %p156 = pneg %p57
      %p157 = pneg %p54
      %p158 = pneg %p83
      %p159 = pneg %p80
      %s160 = smul.u32 32, %s15
      %p161 = scmp.lt.s32.totalorder %s160, 63
      %s162 = scalar_select %p161, %s160, 63
      %s163 = smul.addr %s162, 4
      %s164 = scalar_lea.vmem %s2, %s163
      %p165 = pneg %p109
      %p166 = pneg %p106
      %p167 = scmp.lt.s32.totalorder %s15, 1
      %s168 = scalar_select %p167, %s15, 1
      %s169 = smul.addr %s168, 2
      %s170 = scalar_lea.vmem %s3, %s169
      %s171 = smul.u32 32, %s15
      %p172 = scmp.lt.s32.totalorder %s171, 63
      %s173 = scalar_select %p172, %s171, 63
      %s174 = smul.addr %s173, 2
      %s175 = smul.addr %s174, 4
      %s176 = scalar_lea.vmem %s0, %s175
      %s177 = smul.u32 32, %s15
      %s178 = smul.u32 32, %s15
      %p179 = scmp.lt.s32.totalorder %s178, 63
      %s180 = scalar_select %p179, %s178, 63
      %s181 = smul.addr %s180, 4
      %s182 = scalar_lea.vmem %s2, %s181
      %s183 = smul.u32 32, %s15
      %p184 = scmp.lt.s32.totalorder %s15, 1
      %s185 = scalar_select %p184, %s15, 1
      %s186 = smul.addr %s185, 2
      %s187 = scalar_lea.vmem %s3, %s186
      %v189 = vld [vmem:[%s176] sm:$0xff]
      %v190 = vld [vmem:[%s176 + $0x8] sm:$0xff]
      %v191 = vld [vmem:[%s176 + $0x10] sm:$0xff]
      %v192 = vld [vmem:[%s176 + $0x18] sm:$0xff]
      %v193 = vld [vmem:[%s176 + $0x20] sm:$0xff]
      %v194 = vld [vmem:[%s176 + $0x28] sm:$0xff]
      %v195 = vld [vmem:[%s176 + $0x30] sm:$0xff]
      %v196 = vld [vmem:[%s176 + $0x38] sm:$0xff]
      %v197 = vld [vmem:[%s176 + $0x40] sm:$0xff]
      %v198 = vld [vmem:[%s176 + $0x48] sm:$0xff]
      %v199 = vld [vmem:[%s176 + $0x50] sm:$0xff]
      %v200 = vld [vmem:[%s176 + $0x58] sm:$0xff]
      %v201 = vld [vmem:[%s176 + $0x60] sm:$0xff]
      %v202 = vld [vmem:[%s176 + $0x68] sm:$0xff]
      %v203 = vld [vmem:[%s176 + $0x70] sm:$0xff]
      %v204 = vld [vmem:[%s176 + $0x78] sm:$0xff]
      %v205 = vld [vmem:[%s176 + $0x80] sm:$0xff]
      %v206 = vld [vmem:[%s176 + $0x88] sm:$0xff]
      %v207 = vld [vmem:[%s176 + $0x90] sm:$0xff]
      %v208 = vld [vmem:[%s176 + $0x98] sm:$0xff]
      %v209 = vld [vmem:[%s176 + $0xa0] sm:$0xff]
      %v210 = vld [vmem:[%s176 + $0xa8] sm:$0xff]
      %v211 = vld [vmem:[%s176 + $0xb0] sm:$0xff]
      %v212 = vld [vmem:[%s176 + $0xb8] sm:$0xff]
      %v213 = vld [vmem:[%s176 + $0xc0] sm:$0xff]
      %v214 = vld [vmem:[%s176 + $0xc8] sm:$0xff]
      %v215 = vld [vmem:[%s176 + $0xd0] sm:$0xff]
      %v216 = vld [vmem:[%s176 + $0xd8] sm:$0xff]
      %v217 = vld [vmem:[%s176 + $0xe0] sm:$0xff]
      %v218 = vld [vmem:[%s176 + $0xe8] sm:$0xff]
      %v219 = vld [vmem:[%s176 + $0xf0] sm:$0xff]
      %v220 = vld [vmem:[%s176 + $0xf8] sm:$0xff]
      %v221 = vld [vmem:[%s1] sm:$0xf]
      %v222 = vld [vmem:[%s1 + $0x4] sm:$0xf]
      %v223 = vld [vmem:[%s1 + $0x8] sm:$0xf]
      %v224 = vld [vmem:[%s1 + $0xc] sm:$0xf]
      %v225 = vld [vmem:[%s1 + $0x10] sm:$0xf]
      %v226 = vld [vmem:[%s1 + $0x14] sm:$0xf]
      %v227 = vld [vmem:[%s1 + $0x18] sm:$0xf]
      %v228 = vld [vmem:[%s1 + $0x1c] sm:$0xf]
      %v229 = vld [vmem:[%s1 + $0x20] sm:$0xf]
      %v230 = vld [vmem:[%s1 + $0x24] sm:$0xf]
      %v231 = vld [vmem:[%s1 + $0x28] sm:$0xf]
      %v232 = vld [vmem:[%s1 + $0x2c] sm:$0xf]
      %v233 = vld [vmem:[%s1 + $0x30] sm:$0xf]
      %v234 = vld [vmem:[%s1 + $0x34] sm:$0xf]
      %v235 = vld [vmem:[%s1 + $0x38] sm:$0xf]
      %v236 = vld [vmem:[%s1 + $0x3c] sm:$0xf]
      %v237 = vld [vmem:[%s1 + $0x40] sm:$0xf]
      %v238 = vld [vmem:[%s1 + $0x44] sm:$0xf]
      %v239 = vld [vmem:[%s1 + $0x48] sm:$0xf]
      %v240 = vld [vmem:[%s1 + $0x4c] sm:$0xf]
      %v241 = vld [vmem:[%s1 + $0x50] sm:$0xf]
      %v242 = vld [vmem:[%s1 + $0x54] sm:$0xf]
      %v243 = vld [vmem:[%s1 + $0x58] sm:$0xf]
      %v244 = vld [vmem:[%s1 + $0x5c] sm:$0xf]
      %v277 = vunpack.c.l.b16 %v189
      %v278 = vunpack.c.h.b16 %v189
      %v279 = vunpack.c.l.b16 %v190
      %v280 = vunpack.c.h.b16 %v190
      %v281 = vunpack.c.l.b16 %v191
      %v282 = vunpack.c.h.b16 %v191
      %v283 = vunpack.c.l.b16 %v192
      %v284 = vunpack.c.h.b16 %v192
      %v285 = vunpack.c.l.b16 %v193
      %v286 = vunpack.c.h.b16 %v193
      %v287 = vunpack.c.l.b16 %v194
      %v288 = vunpack.c.h.b16 %v194
      %v289 = vunpack.c.l.b16 %v195
      %v290 = vunpack.c.h.b16 %v195
      %v291 = vunpack.c.l.b16 %v196
      %v292 = vunpack.c.h.b16 %v196
      %v293 = vunpack.c.l.b16 %v197
      %v294 = vunpack.c.h.b16 %v197
      %v295 = vunpack.c.l.b16 %v198
      %v296 = vunpack.c.h.b16 %v198
      %v297 = vunpack.c.l.b16 %v199
      %v298 = vunpack.c.h.b16 %v199
      %v299 = vunpack.c.l.b16 %v200
      %v300 = vunpack.c.h.b16 %v200
      %v301 = vunpack.c.l.b16 %v201
      %v302 = vunpack.c.h.b16 %v201
      %v303 = vunpack.c.l.b16 %v202
      %v304 = vunpack.c.h.b16 %v202
      %v305 = vunpack.c.l.b16 %v203
      %v306 = vunpack.c.h.b16 %v203
      %v307 = vunpack.c.l.b16 %v204
      %v308 = vunpack.c.h.b16 %v204
      %v309 = vunpack.c.l.b16 %v205
      %v310 = vunpack.c.h.b16 %v205
      %v311 = vunpack.c.l.b16 %v206
      %v312 = vunpack.c.h.b16 %v206
      %v313 = vunpack.c.l.b16 %v207
      %v314 = vunpack.c.h.b16 %v207
      %v315 = vunpack.c.l.b16 %v208
      %v316 = vunpack.c.h.b16 %v208
      %v317 = vunpack.c.l.b16 %v209
      %v318 = vunpack.c.h.b16 %v209
      %v319 = vunpack.c.l.b16 %v210
      %v320 = vunpack.c.h.b16 %v210
      %v321 = vunpack.c.l.b16 %v211
      %v322 = vunpack.c.h.b16 %v211
      %v323 = vunpack.c.l.b16 %v212
      %v324 = vunpack.c.h.b16 %v212
      %v325 = vunpack.c.l.b16 %v213
      %v326 = vunpack.c.h.b16 %v213
      %v327 = vunpack.c.l.b16 %v214
      %v328 = vunpack.c.h.b16 %v214
      %v329 = vunpack.c.l.b16 %v215
      %v330 = vunpack.c.h.b16 %v215
      %v331 = vunpack.c.l.b16 %v216
      %v332 = vunpack.c.h.b16 %v216
      %v333 = vunpack.c.l.b16 %v217
      %v334 = vunpack.c.h.b16 %v217
      %v335 = vunpack.c.l.b16 %v218
      %v336 = vunpack.c.h.b16 %v218
      %v337 = vunpack.c.l.b16 %v219
      %v338 = vunpack.c.h.b16 %v219
      %v339 = vunpack.c.l.b16 %v220
      %v340 = vunpack.c.h.b16 %v220
      %v341 = vpack.c.b16 %v279, %v277
      %v342 = vpack.c.b16 %v280, %v278
      %v343 = vpack.c.b16 %v283, %v281
      %v344 = vpack.c.b16 %v284, %v282
      %v345 = vpack.c.b16 %v287, %v285
      %v346 = vpack.c.b16 %v288, %v286
      %v347 = vpack.c.b16 %v291, %v289
      %v348 = vpack.c.b16 %v292, %v290
      %v349 = vpack.c.b16 %v295, %v293
      %v350 = vpack.c.b16 %v296, %v294
      %v351 = vpack.c.b16 %v299, %v297
      %v352 = vpack.c.b16 %v300, %v298
      %v353 = vpack.c.b16 %v303, %v301
      %v354 = vpack.c.b16 %v304, %v302
      %v355 = vpack.c.b16 %v307, %v305
      %v356 = vpack.c.b16 %v308, %v306
      %v357 = vpack.c.b16 %v311, %v309
      %v358 = vpack.c.b16 %v312, %v310
      %v359 = vpack.c.b16 %v315, %v313
      %v360 = vpack.c.b16 %v316, %v314
      %v361 = vpack.c.b16 %v319, %v317
      %v362 = vpack.c.b16 %v320, %v318
      %v363 = vpack.c.b16 %v323, %v321
      %v364 = vpack.c.b16 %v324, %v322
      %v365 = vpack.c.b16 %v327, %v325
      %v366 = vpack.c.b16 %v328, %v326
      %v367 = vpack.c.b16 %v331, %v329
      %v368 = vpack.c.b16 %v332, %v330
      %v369 = vpack.c.b16 %v335, %v333
      %v370 = vpack.c.b16 %v336, %v334
      %v371 = vpack.c.b16 %v339, %v337
      %v372 = vpack.c.b16 %v340, %v338
      %v413 = vunpack.c.l.b16 %v221
      %v414 = vunpack.c.l.b16 %v222
      %v415 = vunpack.c.l.b16 %v223
      %v416 = vunpack.c.l.b16 %v224
      %v417 = vunpack.c.l.b16 %v225
      %v418 = vunpack.c.l.b16 %v226
      %v419 = vunpack.c.l.b16 %v227
      %v420 = vunpack.c.l.b16 %v228
      %v421 = vunpack.c.l.b16 %v229
      %v422 = vunpack.c.l.b16 %v230
      %v423 = vunpack.c.l.b16 %v231
      %v424 = vunpack.c.l.b16 %v232
      %v425 = vunpack.c.l.b16 %v233
      %v426 = vunpack.c.l.b16 %v234
      %v427 = vunpack.c.l.b16 %v235
      %v428 = vunpack.c.l.b16 %v236
      %v429 = vunpack.c.l.b16 %v237
      %v430 = vunpack.c.l.b16 %v238
      %v431 = vunpack.c.l.b16 %v239
      %v432 = vunpack.c.l.b16 %v240
      %v433 = vunpack.c.l.b16 %v241
      %v434 = vunpack.c.l.b16 %v242
      %v435 = vunpack.c.l.b16 %v243
      %v436 = vunpack.c.l.b16 %v244
      %v437 = vpack.c.b16 %v414, %v413
      %v438 = vpack.c.b16 %v416, %v415
      %v439 = vpack.c.b16 %v418, %v417
      %v440 = vpack.c.b16 %v420, %v419
      %v441 = vpack.c.b16 %v422, %v421
      %v442 = vpack.c.b16 %v424, %v423
      %v443 = vpack.c.b16 %v426, %v425
      %v444 = vpack.c.b16 %v428, %v427
      %v445 = vpack.c.b16 %v430, %v429
      %v446 = vpack.c.b16 %v432, %v431
      %v447 = vpack.c.b16 %v434, %v433
      %v448 = vpack.c.b16 %v436, %v435
      %vm461 = vcmask 523264
      %v463 = vsel %vm461, %v342, 0
      %v466 = vsel %vm461, %v344, 0
      %v469 = vsel %vm461, %v346, 0
      %v472 = vsel %vm461, %v348, 0
      %v475 = vsel %vm461, %v350, 0
      %v478 = vsel %vm461, %v352, 0
      %v481 = vsel %vm461, %v354, 0
      %v484 = vsel %vm461, %v356, 0
      %v487 = vsel %vm461, %v358, 0
      %v490 = vsel %vm461, %v360, 0
      %v493 = vsel %vm461, %v362, 0
      %v496 = vsel %vm461, %v364, 0
      %v499 = vsel %vm461, %v366, 0
      %v502 = vsel %vm461, %v368, 0
      %v505 = vsel %vm461, %v370, 0
      %v508 = vsel %vm461, %v372, 0
      %510 = vmatprep.subr.bf16.mxu0 0
      %511 = vmatpush1.bf16.msra.mxu0 %v437
      %512 = vmatprep.subr.bf16.mxu0 0
      %513 = vmatpush1.bf16.msra.mxu0 %v438
      %514 = vmatprep.subr.bf16.mxu0 0
      %515 = vmatpush1.bf16.msra.mxu0 %v439
      %516 = vmatprep.subr.bf16.mxu0 0
      %517 = vmatpush1.bf16.msra.mxu0 %v440
      %518 = vmatprep.subr.bf16.mxu0 0
      %519 = vmatpush1.bf16.msra.mxu0 %v441
      %520 = vmatprep.subr.bf16.mxu0 0
      %521 = vmatpush1.bf16.msra.mxu0 %v442
      %522 = vmatprep.subr.bf16.mxu0 0
      %523 = vmatpush1.bf16.msra.mxu0 %v443
      %524 = vmatprep.subr.bf16.mxu0 0
      %525 = vmatpush1.bf16.msra.mxu0 %v444
      %526 = vmatprep.subr.bf16.mxu0 0
      %527 = vmatpush1.bf16.msra.mxu0 %v445
      %528 = vmatprep.subr.bf16.mxu0 0
      %529 = vmatpush1.bf16.msra.mxu0 %v446
      %530 = vmatprep.subr.bf16.mxu0 0
      %531 = vmatpush1.bf16.msra.mxu0 %v447
      %532 = vmatprep.subr.bf16.mxu0 0
      %533 = vmatpush1.bf16.msra.mxu0 %v448
      %534 = vmatprep.subr.bf16.mxu0 0
      %535 = vmatpush1.bf16.msra.mxu0 0
      %536 = vmatprep.subr.bf16.mxu0 0
      %537 = vmatpush1.bf16.msra.mxu0 0
      %538 = vmatprep.subr.bf16.mxu0 0
      %539 = vmatpush1.bf16.msra.mxu0 0
      %540 = vmatprep.subr.bf16.mxu0 0
      %541 = vmatpush1.bf16.msra.mxu0 0
      %542 = vmatprep.mubr.bf16.mxu0 %v463
      %543 = vmatmul.mubr.bf16.gmra.mrb[0].mxu0 %v341
      %v544 = vpop.f32.mrb[0].mxu0
      %v545 = vadd.f32 0.0, %v544
      %v546 = vpop.f32.mrb[0].mxu0
      %v547 = vpop.f32.mrb[0].mxu0
      %v548 = vadd.f32 0.0, %v547
      %v549 = vpop.f32.mrb[0].mxu0
      %550 = vmatprep.mubr.bf16.mxu0 %v466
      %551 = vmatmul.mubr.bf16.gmra.mrb[0].mxu0 %v343
      %v552 = vpop.f32.mrb[0].mxu0
      %v553 = vadd.f32 0.0, %v552
      %v554 = vpop.f32.mrb[0].mxu0
      %v555 = vpop.f32.mrb[0].mxu0
      %v556 = vadd.f32 0.0, %v555
      %v557 = vpop.f32.mrb[0].mxu0
      %558 = vmatprep.mubr.bf16.mxu0 %v469
      %559 = vmatmul.mubr.bf16.gmra.mrb[0].mxu0 %v345
      %v560 = vpop.f32.mrb[0].mxu0
      %v561 = vadd.f32 0.0, %v560
      %v562 = vpop.f32.mrb[0].mxu0
      %v563 = vpop.f32.mrb[0].mxu0
      %v564 = vadd.f32 0.0, %v563
      %v565 = vpop.f32.mrb[0].mxu0
      %566 = vmatprep.mubr.bf16.mxu0 %v472
      %567 = vmatmul.mubr.bf16.gmra.mrb[0].mxu0 %v347
      %v568 = vpop.f32.mrb[0].mxu0
      %v569 = vadd.f32 0.0, %v568
      %v570 = vpop.f32.mrb[0].mxu0
      %v571 = vpop.f32.mrb[0].mxu0
      %v572 = vadd.f32 0.0, %v571
      %v573 = vpop.f32.mrb[0].mxu0
      %574 = vmatprep.mubr.bf16.mxu0 %v475
      %575 = vmatmul.mubr.bf16.gmra.mrb[0].mxu0 %v349
      %v576 = vpop.f32.mrb[0].mxu0
      %v577 = vadd.f32 0.0, %v576
      %v578 = vpop.f32.mrb[0].mxu0
      %v579 = vpop.f32.mrb[0].mxu0
      %v580 = vadd.f32 0.0, %v579
      %v581 = vpop.f32.mrb[0].mxu0
      %582 = vmatprep.mubr.bf16.mxu0 %v478
      %583 = vmatmul.mubr.bf16.gmra.mrb[0].mxu0 %v351
      %v584 = vpop.f32.mrb[0].mxu0
      %v585 = vadd.f32 0.0, %v584
      %v586 = vpop.f32.mrb[0].mxu0
      %v587 = vpop.f32.mrb[0].mxu0
      %v588 = vadd.f32 0.0, %v587
      %v589 = vpop.f32.mrb[0].mxu0
      %590 = vmatprep.mubr.bf16.mxu0 %v481
      %591 = vmatmul.mubr.bf16.gmra.mrb[0].mxu0 %v353
      %v592 = vpop.f32.mrb[0].mxu0
      %v593 = vadd.f32 0.0, %v592
      %v594 = vpop.f32.mrb[0].mxu0
      %v595 = vpop.f32.mrb[0].mxu0
      %v596 = vadd.f32 0.0, %v595
      %v597 = vpop.f32.mrb[0].mxu0
      %598 = vmatprep.mubr.bf16.mxu0 %v484
      %599 = vmatmul.mubr.bf16.gmra.mrb[0].mxu0 %v355
      %v600 = vpop.f32.mrb[0].mxu0
      %v601 = vadd.f32 0.0, %v600
      %v602 = vpop.f32.mrb[0].mxu0
      %v603 = vpop.f32.mrb[0].mxu0
      %v604 = vadd.f32 0.0, %v603
      %v605 = vpop.f32.mrb[0].mxu0
      %606 = vmatprep.mubr.bf16.mxu0 %v487
      %607 = vmatmul.mubr.bf16.gmra.mrb[0].mxu0 %v357
      %v608 = vpop.f32.mrb[0].mxu0
      %v609 = vadd.f32 0.0, %v608
      %v610 = vpop.f32.mrb[0].mxu0
      %v611 = vpop.f32.mrb[0].mxu0
      %v612 = vadd.f32 0.0, %v611
      %v613 = vpop.f32.mrb[0].mxu0
      %614 = vmatprep.mubr.bf16.mxu0 %v490
      %615 = vmatmul.mubr.bf16.gmra.mrb[0].mxu0 %v359
      %v616 = vpop.f32.mrb[0].mxu0
      %v617 = vadd.f32 0.0, %v616
      %v618 = vpop.f32.mrb[0].mxu0
      %v619 = vpop.f32.mrb[0].mxu0
      %v620 = vadd.f32 0.0, %v619
      %v621 = vpop.f32.mrb[0].mxu0
      %622 = vmatprep.mubr.bf16.mxu0 %v493
      %623 = vmatmul.mubr.bf16.gmra.mrb[0].mxu0 %v361
      %v624 = vpop.f32.mrb[0].mxu0
      %v625 = vadd.f32 0.0, %v624
      %v626 = vpop.f32.mrb[0].mxu0
      %v627 = vpop.f32.mrb[0].mxu0
      %v628 = vadd.f32 0.0, %v627
      %v629 = vpop.f32.mrb[0].mxu0
      %630 = vmatprep.mubr.bf16.mxu0 %v496
      %631 = vmatmul.mubr.bf16.gmra.mrb[0].mxu0 %v363
      %v632 = vpop.f32.mrb[0].mxu0
      %v633 = vadd.f32 0.0, %v632
      %v634 = vpop.f32.mrb[0].mxu0
      %v635 = vpop.f32.mrb[0].mxu0
      %v636 = vadd.f32 0.0, %v635
      %v637 = vpop.f32.mrb[0].mxu0
      %638 = vmatprep.mubr.bf16.mxu0 %v499
      %639 = vmatmul.mubr.bf16.gmra.mrb[0].mxu0 %v365
      %v640 = vpop.f32.mrb[0].mxu0
      %v641 = vadd.f32 0.0, %v640
      %v642 = vpop.f32.mrb[0].mxu0
      %v643 = vpop.f32.mrb[0].mxu0
      %v644 = vadd.f32 0.0, %v643
      %v645 = vpop.f32.mrb[0].mxu0
      %646 = vmatprep.mubr.bf16.mxu0 %v502
      %647 = vmatmul.mubr.bf16.gmra.mrb[0].mxu0 %v367
      %v648 = vpop.f32.mrb[0].mxu0
      %v649 = vadd.f32 0.0, %v648
      %v650 = vpop.f32.mrb[0].mxu0
      %v651 = vpop.f32.mrb[0].mxu0
      %v652 = vadd.f32 0.0, %v651
      %v653 = vpop.f32.mrb[0].mxu0
      %654 = vmatprep.mubr.bf16.mxu0 %v505
      %655 = vmatmul.mubr.bf16.gmra.mrb[0].mxu0 %v369
      %v656 = vpop.f32.mrb[0].mxu0
      %v657 = vadd.f32 0.0, %v656
      %v658 = vpop.f32.mrb[0].mxu0
      %v659 = vpop.f32.mrb[0].mxu0
      %v660 = vadd.f32 0.0, %v659
      %v661 = vpop.f32.mrb[0].mxu0
      %662 = vmatprep.mubr.bf16.mxu0 %v508
      %663 = vmatmul.mubr.bf16.gmra.mrb[0].mxu0 %v371
      %v664 = vpop.f32.mrb[0].mxu0
      %v665 = vadd.f32 0.0, %v664
      %v666 = vpop.f32.mrb[0].mxu0
      %v667 = vpop.f32.mrb[0].mxu0
      %v668 = vadd.f32 0.0, %v667
      %v669 = vpop.f32.mrb[0].mxu0
      %670 = vdwg.mxu0
      %v671 = vpack.c.bf16 %v548, %v545
      %v672 = vpack.c.bf16 %v556, %v553
      %v673 = vpack.c.bf16 %v564, %v561
      %v674 = vpack.c.bf16 %v572, %v569
      %v675 = vpack.c.bf16 %v580, %v577
      %v676 = vpack.c.bf16 %v588, %v585
      %v677 = vpack.c.bf16 %v596, %v593
      %v678 = vpack.c.bf16 %v604, %v601
      %v679 = vpack.c.bf16 %v612, %v609
      %v680 = vpack.c.bf16 %v620, %v617
      %v681 = vpack.c.bf16 %v628, %v625
      %v682 = vpack.c.bf16 %v636, %v633
      %v683 = vpack.c.bf16 %v644, %v641
      %v684 = vpack.c.bf16 %v652, %v649
      %v685 = vpack.c.bf16 %v660, %v657
      %v686 = vpack.c.bf16 %v668, %v665
      %v703 = vunpack.c.l.b16 %v671
      %v704 = vunpack.c.h.b16 %v671
      %v705 = vunpack.c.l.b16 %v672
      %v706 = vunpack.c.h.b16 %v672
      %v707 = vunpack.c.l.b16 %v673
      %v708 = vunpack.c.h.b16 %v673
      %v709 = vunpack.c.l.b16 %v674
      %v710 = vunpack.c.h.b16 %v674
      %v711 = vunpack.c.l.b16 %v675
      %v712 = vunpack.c.h.b16 %v675
      %v713 = vunpack.c.l.b16 %v676
      %v714 = vunpack.c.h.b16 %v676
      %v715 = vunpack.c.l.b16 %v677
      %v716 = vunpack.c.h.b16 %v677
      %v717 = vunpack.c.l.b16 %v678
      %v718 = vunpack.c.h.b16 %v678
      %v719 = vunpack.c.l.b16 %v679
      %v720 = vunpack.c.h.b16 %v679
      %v721 = vunpack.c.l.b16 %v680
      %v722 = vunpack.c.h.b16 %v680
      %v723 = vunpack.c.l.b16 %v681
      %v724 = vunpack.c.h.b16 %v681
      %v725 = vunpack.c.l.b16 %v682
      %v726 = vunpack.c.h.b16 %v682
      %v727 = vunpack.c.l.b16 %v683
      %v728 = vunpack.c.h.b16 %v683
      %v729 = vunpack.c.l.b16 %v684
      %v730 = vunpack.c.h.b16 %v684
      %v731 = vunpack.c.l.b16 %v685
      %v732 = vunpack.c.h.b16 %v685
      %v733 = vunpack.c.l.b16 %v686
      %v734 = vunpack.c.h.b16 %v686
      %v735 = vpack.c.b16 %v703, %v703
      %v736 = vpack.c.b16 %v704, %v704
      %v737 = vpack.c.b16 %v705, %v705
      %v738 = vpack.c.b16 %v706, %v706
      %v739 = vpack.c.b16 %v707, %v707
      %v740 = vpack.c.b16 %v708, %v708
      %v741 = vpack.c.b16 %v709, %v709
      %v742 = vpack.c.b16 %v710, %v710
      %v743 = vpack.c.b16 %v711, %v711
      %v744 = vpack.c.b16 %v712, %v712
      %v745 = vpack.c.b16 %v713, %v713
      %v746 = vpack.c.b16 %v714, %v714
      %v747 = vpack.c.b16 %v715, %v715
      %v748 = vpack.c.b16 %v716, %v716
      %v749 = vpack.c.b16 %v717, %v717
      %v750 = vpack.c.b16 %v718, %v718
      %v751 = vpack.c.b16 %v719, %v719
      %v752 = vpack.c.b16 %v720, %v720
      %v753 = vpack.c.b16 %v721, %v721
      %v754 = vpack.c.b16 %v722, %v722
      %v755 = vpack.c.b16 %v723, %v723
      %v756 = vpack.c.b16 %v724, %v724
      %v757 = vpack.c.b16 %v725, %v725
      %v758 = vpack.c.b16 %v726, %v726
      %v759 = vpack.c.b16 %v727, %v727
      %v760 = vpack.c.b16 %v728, %v728
      %v761 = vpack.c.b16 %v729, %v729
      %v762 = vpack.c.b16 %v730, %v730
      %v763 = vpack.c.b16 %v731, %v731
      %v764 = vpack.c.b16 %v732, %v732
      %v765 = vpack.c.b16 %v733, %v733
      %v766 = vpack.c.b16 %v734, %v734
      %vm799 = vcmask 257024
      %800 = vst.msk [vmem:[%s182] sm:$0xf] %vm799, %v735
      %801 = vst.msk [vmem:[%s182 + $0x4] sm:$0xf] %vm799, %v736
      %802 = vst.msk [vmem:[%s182 + $0x8] sm:$0xf] %vm799, %v737
      %803 = vst.msk [vmem:[%s182 + $0xc] sm:$0xf] %vm799, %v738
      %804 = vst.msk [vmem:[%s182 + $0x10] sm:$0xf] %vm799, %v739
      %805 = vst.msk [vmem:[%s182 + $0x14] sm:$0xf] %vm799, %v740
      %806 = vst.msk [vmem:[%s182 + $0x18] sm:$0xf] %vm799, %v741
      %807 = vst.msk [vmem:[%s182 + $0x1c] sm:$0xf] %vm799, %v742
      %808 = vst.msk [vmem:[%s182 + $0x20] sm:$0xf] %vm799, %v743
      %809 = vst.msk [vmem:[%s182 + $0x24] sm:$0xf] %vm799, %v744
      %810 = vst.msk [vmem:[%s182 + $0x28] sm:$0xf] %vm799, %v745
      %811 = vst.msk [vmem:[%s182 + $0x2c] sm:$0xf] %vm799, %v746
      %812 = vst.msk [vmem:[%s182 + $0x30] sm:$0xf] %vm799, %v747
      %813 = vst.msk [vmem:[%s182 + $0x34] sm:$0xf] %vm799, %v748
      %814 = vst.msk [vmem:[%s182 + $0x38] sm:$0xf] %vm799, %v749
      %815 = vst.msk [vmem:[%s182 + $0x3c] sm:$0xf] %vm799, %v750
      %816 = vst.msk [vmem:[%s182 + $0x40] sm:$0xf] %vm799, %v751
      %817 = vst.msk [vmem:[%s182 + $0x44] sm:$0xf] %vm799, %v752
      %818 = vst.msk [vmem:[%s182 + $0x48] sm:$0xf] %vm799, %v753
      %819 = vst.msk [vmem:[%s182 + $0x4c] sm:$0xf] %vm799, %v754
      %820 = vst.msk [vmem:[%s182 + $0x50] sm:$0xf] %vm799, %v755
      %821 = vst.msk [vmem:[%s182 + $0x54] sm:$0xf] %vm799, %v756
      %822 = vst.msk [vmem:[%s182 + $0x58] sm:$0xf] %vm799, %v757
      %823 = vst.msk [vmem:[%s182 + $0x5c] sm:$0xf] %vm799, %v758
      %824 = vst.msk [vmem:[%s182 + $0x60] sm:$0xf] %vm799, %v759
      %825 = vst.msk [vmem:[%s182 + $0x64] sm:$0xf] %vm799, %v760
      %826 = vst.msk [vmem:[%s182 + $0x68] sm:$0xf] %vm799, %v761
      %827 = vst.msk [vmem:[%s182 + $0x6c] sm:$0xf] %vm799, %v762
      %828 = vst.msk [vmem:[%s182 + $0x70] sm:$0xf] %vm799, %v763
      %829 = vst.msk [vmem:[%s182 + $0x74] sm:$0xf] %vm799, %v764
      %830 = vst.msk [vmem:[%s182 + $0x78] sm:$0xf] %vm799, %v765
      %831 = vst.msk [vmem:[%s182 + $0x7c] sm:$0xf] %vm799, %v766
      %vm832 = vcmask 261120
      %v833 = vsel %vm832, %v545, 0.0
      %v834 = vsel %vm832, %v548, 0.0
      %v835 = vadd.f32 %v833, %v834
      %v836 = vsel %vm832, %v553, 0.0
      %v837 = vadd.f32 %v835, %v836
      %v838 = vsel %vm832, %v556, 0.0
      %v839 = vadd.f32 %v837, %v838
      %v840 = vsel %vm832, %v561, 0.0
      %v841 = vadd.f32 %v839, %v840
      %v842 = vsel %vm832, %v564, 0.0
      %v843 = vadd.f32 %v841, %v842
      %v844 = vsel %vm832, %v569, 0.0
      %v845 = vadd.f32 %v843, %v844
      %v846 = vsel %vm832, %v572, 0.0
      %v847 = vadd.f32 %v845, %v846
      %v848 = vsel %vm832, %v577, 0.0
      %v849 = vadd.f32 %v847, %v848
      %v850 = vsel %vm832, %v580, 0.0
      %v851 = vadd.f32 %v849, %v850
      %v852 = vsel %vm832, %v585, 0.0
      %v853 = vadd.f32 %v851, %v852
      %v854 = vsel %vm832, %v588, 0.0
      %v855 = vadd.f32 %v853, %v854
      %v856 = vsel %vm832, %v593, 0.0
      %v857 = vadd.f32 %v855, %v856
      %v858 = vsel %vm832, %v596, 0.0
      %v859 = vadd.f32 %v857, %v858
      %v860 = vsel %vm832, %v601, 0.0
      %v861 = vadd.f32 %v859, %v860
      %v862 = vsel %vm832, %v604, 0.0
      %v863 = vadd.f32 %v861, %v862
      %v864 = vsel %vm832, %v609, 0.0
      %v865 = vadd.f32 %v863, %v864
      %v866 = vsel %vm832, %v612, 0.0
      %v867 = vadd.f32 %v865, %v866
      %v868 = vsel %vm832, %v617, 0.0
      %v869 = vadd.f32 %v867, %v868
      %v870 = vsel %vm832, %v620, 0.0
      %v871 = vadd.f32 %v869, %v870
      %v872 = vsel %vm832, %v625, 0.0
      %v873 = vadd.f32 %v871, %v872
      %v874 = vsel %vm832, %v628, 0.0
      %v875 = vadd.f32 %v873, %v874
      %v876 = vsel %vm832, %v633, 0.0
      %v877 = vadd.f32 %v875, %v876
      %v878 = vsel %vm832, %v636, 0.0
      %v879 = vadd.f32 %v877, %v878
      %v880 = vsel %vm832, %v641, 0.0
      %v881 = vadd.f32 %v879, %v880
      %v882 = vsel %vm832, %v644, 0.0
      %v883 = vadd.f32 %v881, %v882
      %v884 = vsel %vm832, %v649, 0.0
      %v885 = vadd.f32 %v883, %v884
      %v886 = vsel %vm832, %v652, 0.0
      %v887 = vadd.f32 %v885, %v886
      %v888 = vsel %vm832, %v657, 0.0
      %v889 = vadd.f32 %v887, %v888
      %v890 = vsel %vm832, %v660, 0.0
      %v891 = vadd.f32 %v889, %v890
      %v892 = vsel %vm832, %v665, 0.0
      %v893 = vadd.f32 %v891, %v892
      %v894 = vsel %vm832, %v668, 0.0
      %v895 = vadd.f32 %v893, %v894
      %v896 = vrot.slane %v895, 4
      %v897 = vadd.f32 %v895, %v896
      %v898 = vrot.slane %v897, 2
      %v899 = vadd.f32 %v897, %v898
      %v900 = vrot.slane %v899, 1
      %v901 = vadd.f32 %v899, %v900
      %v902 = vmul.f32 %v545, %v545
      %v903 = vmul.f32 %v548, %v548
      %v904 = vmul.f32 %v553, %v553
      %v905 = vmul.f32 %v556, %v556
      %v906 = vmul.f32 %v561, %v561
      %v907 = vmul.f32 %v564, %v564
      %v908 = vmul.f32 %v569, %v569
      %v909 = vmul.f32 %v572, %v572
      %v910 = vmul.f32 %v577, %v577
      %v911 = vmul.f32 %v580, %v580
      %v912 = vmul.f32 %v585, %v585
      %v913 = vmul.f32 %v588, %v588
      %v914 = vmul.f32 %v593, %v593
      %v915 = vmul.f32 %v596, %v596
      %v916 = vmul.f32 %v601, %v601
      %v917 = vmul.f32 %v604, %v604
      %v918 = vmul.f32 %v609, %v609
      %v919 = vmul.f32 %v612, %v612
      %v920 = vmul.f32 %v617, %v617
      %v921 = vmul.f32 %v620, %v620
      %v922 = vmul.f32 %v625, %v625
      %v923 = vmul.f32 %v628, %v628
      %v924 = vmul.f32 %v633, %v633
      %v925 = vmul.f32 %v636, %v636
      %v926 = vmul.f32 %v641, %v641
      %v927 = vmul.f32 %v644, %v644
      %v928 = vmul.f32 %v649, %v649
      %v929 = vmul.f32 %v652, %v652
      %v930 = vmul.f32 %v657, %v657
      %v931 = vmul.f32 %v660, %v660
      %v932 = vmul.f32 %v665, %v665
      %v933 = vmul.f32 %v668, %v668
      %v934 = vsel %vm832, %v902, 0.0
      %v935 = vsel %vm832, %v903, 0.0
      %v936 = vadd.f32 %v934, %v935
      %v937 = vsel %vm832, %v904, 0.0
      %v938 = vadd.f32 %v936, %v937
      %v939 = vsel %vm832, %v905, 0.0
      %v940 = vadd.f32 %v938, %v939
      %v941 = vsel %vm832, %v906, 0.0
      %v942 = vadd.f32 %v940, %v941
      %v943 = vsel %vm832, %v907, 0.0
      %v944 = vadd.f32 %v942, %v943
      %v945 = vsel %vm832, %v908, 0.0
      %v946 = vadd.f32 %v944, %v945
      %v947 = vsel %vm832, %v909, 0.0
      %v948 = vadd.f32 %v946, %v947
      %v949 = vsel %vm832, %v910, 0.0
      %v950 = vadd.f32 %v948, %v949
      %v951 = vsel %vm832, %v911, 0.0
      %v952 = vadd.f32 %v950, %v951
      %v953 = vsel %vm832, %v912, 0.0
      %v954 = vadd.f32 %v952, %v953
      %v955 = vsel %vm832, %v913, 0.0
      %v956 = vadd.f32 %v954, %v955
      %v957 = vsel %vm832, %v914, 0.0
      %v958 = vadd.f32 %v956, %v957
      %v959 = vsel %vm832, %v915, 0.0
      %v960 = vadd.f32 %v958, %v959
      %v961 = vsel %vm832, %v916, 0.0
      %v962 = vadd.f32 %v960, %v961
      %v963 = vsel %vm832, %v917, 0.0
      %v964 = vadd.f32 %v962, %v963
      %v965 = vsel %vm832, %v918, 0.0
      %v966 = vadd.f32 %v964, %v965
      %v967 = vsel %vm832, %v919, 0.0
      %v968 = vadd.f32 %v966, %v967
      %v969 = vsel %vm832, %v920, 0.0
      %v970 = vadd.f32 %v968, %v969
      %v971 = vsel %vm832, %v921, 0.0
      %v972 = vadd.f32 %v970, %v971
      %v973 = vsel %vm832, %v922, 0.0
      %v974 = vadd.f32 %v972, %v973
      %v975 = vsel %vm832, %v923, 0.0
      %v976 = vadd.f32 %v974, %v975
      %v977 = vsel %vm832, %v924, 0.0
      %v978 = vadd.f32 %v976, %v977
      %v979 = vsel %vm832, %v925, 0.0
      %v980 = vadd.f32 %v978, %v979
      %v981 = vsel %vm832, %v926, 0.0
      %v982 = vadd.f32 %v980, %v981
      %v983 = vsel %vm832, %v927, 0.0
      %v984 = vadd.f32 %v982, %v983
      %v985 = vsel %vm832, %v928, 0.0
      %v986 = vadd.f32 %v984, %v985
      %v987 = vsel %vm832, %v929, 0.0
      %v988 = vadd.f32 %v986, %v987
      %v989 = vsel %vm832, %v930, 0.0
      %v990 = vadd.f32 %v988, %v989
      %v991 = vsel %vm832, %v931, 0.0
      %v992 = vadd.f32 %v990, %v991
      %v993 = vsel %vm832, %v932, 0.0
      %v994 = vadd.f32 %v992, %v993
      %v995 = vsel %vm832, %v933, 0.0
      %v996 = vadd.f32 %v994, %v995
      %v997 = vrot.slane %v996, 4
      %v998 = vadd.f32 %v996, %v997
      %v999 = vrot.slane %v998, 2
      %v1000 = vadd.f32 %v998, %v999
      %v1001 = vrot.slane %v1000, 1
      %v1002 = vadd.f32 %v1000, %v1001
      %vm1003 = vcmask 1040384
      %v1004 = vsel %vm1003, %v901, %v1002
      %vm1005 = vcmask 254976
      %1006 = vst.msk [vmem:[%s187] sm:$0x3] %vm1005, %v1004
      %s1007 = smul.u32 32, %s15
      %p1008 = scmp.lt.s32.totalorder %s1007, 63
      %s1009 = scalar_select %p1008, %s1007, 63
      %s1010 = smul.addr %s1009, 4
      %s1011 = scalar_lea.vmem %s2, %s1010
      %p1012 = scmp.lt.s32.totalorder %s15, 1
      %s1013 = scalar_select %p1012, %s15, 1
      %s1014 = smul.addr %s1013, 2
      %s1015 = scalar_lea.vmem %s3, %s1014
      // Predicated region
      $region29: #{mixed_3b.10} parent=27 // pred_check
        %p1016 = pneg %p80
      $region30: #{mixed_3b.10} parent=27 // pred_check_branch
        %1018 = sbr.rel (%p1016) target = $region32
      $region31: #{mixed_3b.10} parent=27 // pred_region
        %s1019 = smul.u32 32, %s15
      $region32: #{mixed_3b.10} parent=27 // pred_fallthru
        _
      // Predicated region
      $region33: #{mixed_3b.10} parent=27 // pred_check
        %p1020 = pneg %p106
      $region34: #{mixed_3b.10} parent=27 // pred_check_branch
        %1022 = sbr.rel (%p1020) target = $region36
      $region35: #{mixed_3b.10} parent=27 // pred_region
        _
      $region36: #{mixed_3b.10} parent=27 // pred_fallthru
        _
    $region28: #{mixed_3b.10} parent=5 // pred_fallthru
      _
    %p1023 = scmp.le.s32.totalorder 2, %s10
    // Predicated region
    $region37: #{mixed_3b.10} parent=5 // pred_check
      %p1024 = pneg %p1023
    $region38: #{mixed_3b.10} parent=5 // pred_check_branch
      %1026 = sbr.rel (%p1024) target = $region40
    $region39: #{mixed_3b.10} parent=5 // pred_region
      %s1027 = ssub.s32 %s10, 2
      // Predicated region
      $region41: #{mixed_3b.10} parent=39 // pred_check
        %p1028 = pneg %p86
      $region42: #{mixed_3b.10} parent=39 // pred_check_branch
        %1030 = sbr.rel (%p1028) target = $region44
      $region43: #{mixed_3b.10} parent=39 // pred_region
        %s1031 = smul.u32 32, %s16
        %p1032 = scmp.lt.s32.totalorder %s1031, 63
        %s1033 = scalar_select %p1032, %s1031, 63
        %s1034 = smul.addr %s1033, 4
        %s1035 = scalar_lea.vmem %s2, %s1034
      $region44: #{mixed_3b.10} parent=39 // pred_fallthru
        _
      // Predicated region
      $region45: #{mixed_3b.10} parent=39 // pred_check
        %p1036 = pneg %p112
      $region46: #{mixed_3b.10} parent=39 // pred_check_branch
        %1038 = sbr.rel (%p1036) target = $region48
      $region47: #{mixed_3b.10} parent=39 // pred_region
        %p1039 = scmp.lt.s32.totalorder %s16, 1
        %s1040 = scalar_select %p1039, %s16, 1
        %s1041 = smul.addr %s1040, 2
        %s1042 = scalar_lea.vmem %s3, %s1041
      $region48: #{mixed_3b.10} parent=39 // pred_fallthru
        _
    $region40: #{mixed_3b.10} parent=5 // pred_fallthru
      _
  $region6: #{mixed_3b.10} parent=0 // loop_footer
    %s14 = sadd.s32 1, %s10
  $region7: #{mixed_3b.10} parent=0 // loop_footer_branch
    %9 = sbr.rel target = $region3
  $region8: #{mixed_3b.10} parent=0 // loop_exit
    _

// kernel: mixed_3b.11
$region0: #{mixed_3b.11}
  #allocation0 [shape = 'u32[]', space=smem, size = 0x4, offset = 0x4, fixed_abs, tag = 'smem constant byte address 0x4 - core index']
  #allocation1 [shape = 'u32[144,128]{1,0:T(1,128)}', space=vmem, size = 0x12000, scoped, tag = 'internal scratch']
  %s0 = inlined_call_operand.vmem [shape: bf16[512,64], index: 0, kind: input, shape index: {}]
  %s1 = inlined_call_operand.vmem [shape: bf16[512,160], index: 1, kind: input, shape index: {}]
  %s2 = inlined_call_operand.vmem [shape: bf16[512,32], index: 2, kind: input, shape index: {}]
  %s3 = inlined_call_operand.vmem [shape: f32[1,160], index: 3, kind: input, shape index: {}]
  %s4 = inlined_call_operand.vmem [shape: f32[1,160], index: 4, kind: input, shape index: {}]
  %s5 = inlined_call_operand.vmem [shape: f32[1,32], index: 5, kind: input, shape index: {}]
  %s6 = inlined_call_operand.vmem [shape: f32[1,32], index: 6, kind: input, shape index: {}]
  %s7 = inlined_call_operand.hbm [shape: f32[512,256], index: 7, kind: output, shape index: {}]
  %s8 = sld [smem:[#allocation0]]
  $region61: #{mixed_3b.11} parent=0
    _
  %s10 = ssub.s32 1, %s8
  %s11 = scalar_select 0, %s10, %s8
  $region1: #{mixed_3b.11} parent=0
    #allocation2 [shape = 'u8[524288]{0}', space=vmem, size = 0x80000, scoped, tag = 'output window, operand 0']
    #allocation3 [shape = 's32[2]{0}', space=sflag, size = 0x8, scoped, tag = 'scoped memory for mixed_3b.11']
    %12 = vsyncpa [#allocation3], 0
    %s13 = scalar_lea.sflag [#allocation3], 1
    %14 = vsyncpa %s13, 0
    loop: start=0, step=1, limit=4
    $region2: #{mixed_3b.11} parent=1 // loop_pre_header
      _
    $region3: #{mixed_3b.11} parent=1 // loop_header
      %s16 = sphi 0, %s20
      %p17 = scmp.ge.s32.totalorder %s16, 4
      %s26 = sphi 0, %s28
      %s29 = sphi 0, %s26
      %s30 = sphi 0, %s29
      %s46 = sphi 0, %s30
      %s52 = sphi 0, %s54
      %s55 = sphi 0, %s52
      %s56 = sphi 0, %s55
      %s72 = sphi 0, %s56
      %s78 = sphi 0, %s80
      %s81 = sphi 0, %s78
      %s82 = sphi 0, %s81
      %s98 = sphi 0, %s82
      %s102 = sphi 0, %s102
      %s104 = sphi 0, %s102
      %s105 = sphi 0, %s104
      %s119 = sphi 0, %s105
      %s123 = sphi 0, %s123
      %s125 = sphi 0, %s123
      %s126 = sphi 0, %s125
      %s140 = sphi 0, %s126
      %s144 = sphi 0, %s144
      %s146 = sphi 0, %s144
      %s147 = sphi 0, %s146
      %s161 = sphi 0, %s147
      %s165 = sphi 0, %s165
      %s167 = sphi 0, %s165
      %s168 = sphi 0, %s167
      %s182 = sphi 0, %s168
      %s188 = sphi 0, %s190
      %s191 = sphi 0, %s188
      %s192 = sphi 0, %s191
      %s208 = sphi 0, %s192
    $region4: #{mixed_3b.11} parent=1 // loop_header_branch
      %19 = sbr.rel (%p17) target = $region8
    $region5: #{mixed_3b.11} parent=1 // loop_body
      %s21 = ssub.s32 %s16, 1
      %s22 = ssub.s32 %s16, 2
      %s23 = sadd.s32 %s16, 1
      %s24 = ssub.s32 %s16, %s23
      %p25 = scmp.eq.s32.totalorder %s24, 0
      %s27 = sadd.s32 %s26, 1
      %s28 = scalar_select %p25, %s26, %s27
      %p31 = pneg %p25
      %p32 = scmp.eq.s32.totalorder %s16, 1
      %p33 = por %p31, %p32
      %p34 = scmp.ne.s32.totalorder %s26, %s29
      %p35 = scmp.eq.s32.totalorder %s16, 0
      %p36 = por %p34, %p35
      %p37 = scmp.ne.s32.totalorder %s26, %s29
      %p38 = scmp.eq.s32.totalorder %s21, 1
      %p39 = por %p37, %p38
      %p40 = scmp.ne.s32.totalorder %s29, %s30
      %p41 = scmp.eq.s32.totalorder %s21, 0
      %p42 = por %p40, %p41
      %p43 = scmp.ne.s32.totalorder %s29, %s30
      %p44 = scmp.eq.s32.totalorder %s22, 1
      %p45 = por %p43, %p44
      %p47 = scmp.ne.s32.totalorder %s30, %s46
      %p48 = scmp.eq.s32.totalorder %s22, 0
      %p49 = por %p47, %p48
      %s50 = ssub.s32 %s16, %s23
      %p51 = scmp.eq.s32.totalorder %s50, 0
      %s53 = sadd.s32 %s52, 1
      %s54 = scalar_select %p51, %s52, %s53
      %p57 = pneg %p51
      %p58 = scmp.eq.s32.totalorder %s16, 1
      %p59 = por %p57, %p58
      %p60 = scmp.ne.s32.totalorder %s52, %s55
      %p61 = scmp.eq.s32.totalorder %s16, 0
      %p62 = por %p60, %p61
      %p63 = scmp.ne.s32.totalorder %s52, %s55
      %p64 = scmp.eq.s32.totalorder %s21, 1
      %p65 = por %p63, %p64
      %p66 = scmp.ne.s32.totalorder %s55, %s56
      %p67 = scmp.eq.s32.totalorder %s21, 0
      %p68 = por %p66, %p67
      %p69 = scmp.ne.s32.totalorder %s55, %s56
      %p70 = scmp.eq.s32.totalorder %s22, 1
      %p71 = por %p69, %p70
      %p73 = scmp.ne.s32.totalorder %s56, %s72
      %p74 = scmp.eq.s32.totalorder %s22, 0
      %p75 = por %p73, %p74
      %s76 = ssub.s32 %s16, %s23
      %p77 = scmp.eq.s32.totalorder %s76, 0
      %s79 = sadd.s32 %s78, 1
      %s80 = scalar_select %p77, %s78, %s79
      %p83 = pneg %p77
      %p84 = scmp.eq.s32.totalorder %s16, 1
      %p85 = por %p83, %p84
      %p86 = scmp.ne.s32.totalorder %s78, %s81
      %p87 = scmp.eq.s32.totalorder %s16, 0
      %p88 = por %p86, %p87
      %p89 = scmp.ne.s32.totalorder %s78, %s81
      %p90 = scmp.eq.s32.totalorder %s21, 1
      %p91 = por %p89, %p90
      %p92 = scmp.ne.s32.totalorder %s81, %s82
      %p93 = scmp.eq.s32.totalorder %s21, 0
      %p94 = por %p92, %p93
      %p95 = scmp.ne.s32.totalorder %s81, %s82
      %p96 = scmp.eq.s32.totalorder %s22, 1
      %p97 = por %p95, %p96
      %p99 = scmp.ne.s32.totalorder %s82, %s98
      %p100 = scmp.eq.s32.totalorder %s22, 0
      %p101 = por %p99, %p100
      %s103 = sadd.s32 %s102, 1
      %p106 = scmp.eq.s32.totalorder %s16, 1
      %p107 = scmp.ne.s32.totalorder %s102, %s104
      %p108 = scmp.eq.s32.totalorder %s16, 0
      %p109 = por %p107, %p108
      %p110 = scmp.ne.s32.totalorder %s102, %s104
      %p111 = scmp.eq.s32.totalorder %s21, 1
      %p112 = por %p110, %p111
      %p113 = scmp.ne.s32.totalorder %s104, %s105
      %p114 = scmp.eq.s32.totalorder %s21, 0
      %p115 = por %p113, %p114
      %p116 = scmp.ne.s32.totalorder %s104, %s105
      %p117 = scmp.eq.s32.totalorder %s22, 1
      %p118 = por %p116, %p117
      %p120 = scmp.ne.s32.totalorder %s105, %s119
      %p121 = scmp.eq.s32.totalorder %s22, 0
      %p122 = por %p120, %p121
      %s124 = sadd.s32 %s123, 1
      %p127 = scmp.eq.s32.totalorder %s16, 1
      %p128 = scmp.ne.s32.totalorder %s123, %s125
      %p129 = scmp.eq.s32.totalorder %s16, 0
      %p130 = por %p128, %p129
      %p131 = scmp.ne.s32.totalorder %s123, %s125
      %p132 = scmp.eq.s32.totalorder %s21, 1
      %p133 = por %p131, %p132
      %p134 = scmp.ne.s32.totalorder %s125, %s126
      %p135 = scmp.eq.s32.totalorder %s21, 0
      %p136 = por %p134, %p135
      %p137 = scmp.ne.s32.totalorder %s125, %s126
      %p138 = scmp.eq.s32.totalorder %s22, 1
      %p139 = por %p137, %p138
      %p141 = scmp.ne.s32.totalorder %s126, %s140
      %p142 = scmp.eq.s32.totalorder %s22, 0
      %p143 = por %p141, %p142
      %s145 = sadd.s32 %s144, 1
      %p148 = scmp.eq.s32.totalorder %s16, 1
      %p149 = scmp.ne.s32.totalorder %s144, %s146
      %p150 = scmp.eq.s32.totalorder %s16, 0
      %p151 = por %p149, %p150
      %p152 = scmp.ne.s32.totalorder %s144, %s146
      %p153 = scmp.eq.s32.totalorder %s21, 1
      %p154 = por %p152, %p153
      %p155 = scmp.ne.s32.totalorder %s146, %s147
      %p156 = scmp.eq.s32.totalorder %s21, 0
      %p157 = por %p155, %p156
      %p158 = scmp.ne.s32.totalorder %s146, %s147
      %p159 = scmp.eq.s32.totalorder %s22, 1
      %p160 = por %p158, %p159
      %p162 = scmp.ne.s32.totalorder %s147, %s161
      %p163 = scmp.eq.s32.totalorder %s22, 0
      %p164 = por %p162, %p163
      %s166 = sadd.s32 %s165, 1
      %p169 = scmp.eq.s32.totalorder %s16, 1
      %p170 = scmp.ne.s32.totalorder %s165, %s167
      %p171 = scmp.eq.s32.totalorder %s16, 0
      %p172 = por %p170, %p171
      %p173 = scmp.ne.s32.totalorder %s165, %s167
      %p174 = scmp.eq.s32.totalorder %s21, 1
      %p175 = por %p173, %p174
      %p176 = scmp.ne.s32.totalorder %s167, %s168
      %p177 = scmp.eq.s32.totalorder %s21, 0
      %p178 = por %p176, %p177
      %p179 = scmp.ne.s32.totalorder %s167, %s168
      %p180 = scmp.eq.s32.totalorder %s22, 1
      %p181 = por %p179, %p180
      %p183 = scmp.ne.s32.totalorder %s168, %s182
      %p184 = scmp.eq.s32.totalorder %s22, 0
      %p185 = por %p183, %p184
      %s186 = ssub.s32 %s16, %s23
      %p187 = scmp.eq.s32.totalorder %s186, 0
      %s189 = sadd.s32 %s188, 1
      %s190 = scalar_select %p187, %s188, %s189
      %p193 = pneg %p187
      %p194 = scmp.eq.s32.totalorder %s16, 1
      %p195 = por %p193, %p194
      %p196 = scmp.ne.s32.totalorder %s188, %s191
      %p197 = scmp.eq.s32.totalorder %s16, 0
      %p198 = por %p196, %p197
      %p199 = scmp.ne.s32.totalorder %s188, %s191
      %p200 = scmp.eq.s32.totalorder %s21, 1
      %p201 = por %p199, %p200
      %p202 = scmp.ne.s32.totalorder %s191, %s192
      %p203 = scmp.eq.s32.totalorder %s21, 0
      %p204 = por %p202, %p203
      %p205 = scmp.ne.s32.totalorder %s191, %s192
      %p206 = scmp.eq.s32.totalorder %s22, 1
      %p207 = por %p205, %p206
      %p209 = scmp.ne.s32.totalorder %s192, %s208
      %p210 = scmp.eq.s32.totalorder %s22, 0
      %p211 = por %p209, %p210
      %p212 = scmp.le.s32.totalorder 1, %s16
      %p213 = scmp.lt.s32.totalorder %s16, 3
      %p214 = pnand %p212, %p213
      %p215 = pneg %p214
      // Predicated region
      $region9: #{mixed_3b.11} parent=5 // pred_check
        _
      $region10: #{mixed_3b.11} parent=5 // pred_check_branch
        %217 = sbr.rel (%p214) target = $region12
      $region11: #{mixed_3b.11} parent=5 // pred_region
        %s218 = ssub.s32 %s16, 1
        // Predicated region
        $region13: #{mixed_3b.11} parent=11 // pred_check
          %p219 = pneg %p115
        $region14: #{mixed_3b.11} parent=11 // pred_check_branch
          %221 = sbr.rel (%p219) target = $region16
        $region15: #{mixed_3b.11} parent=11 // pred_region
          _
        $region16: #{mixed_3b.11} parent=11 // pred_fallthru
          _
        // Predicated region
        $region17: #{mixed_3b.11} parent=11 // pred_check
          %p222 = pneg %p136
        $region18: #{mixed_3b.11} parent=11 // pred_check_branch
          %224 = sbr.rel (%p222) target = $region20
        $region19: #{mixed_3b.11} parent=11 // pred_region
          _
        $region20: #{mixed_3b.11} parent=11 // pred_fallthru
          _
        // Predicated region
        $region21: #{mixed_3b.11} parent=11 // pred_check
          %p225 = pneg %p157
        $region22: #{mixed_3b.11} parent=11 // pred_check_branch
          %227 = sbr.rel (%p225) target = $region24
        $region23: #{mixed_3b.11} parent=11 // pred_region
          _
        $region24: #{mixed_3b.11} parent=11 // pred_fallthru
          _
        // Predicated region
        $region25: #{mixed_3b.11} parent=11 // pred_check
          %p228 = pneg %p178
        $region26: #{mixed_3b.11} parent=11 // pred_check_branch
          %230 = sbr.rel (%p228) target = $region28
        $region27: #{mixed_3b.11} parent=11 // pred_region
          _
        $region28: #{mixed_3b.11} parent=11 // pred_fallthru
          _
      $region12: #{mixed_3b.11} parent=5 // pred_fallthru
        _
      %p231 = scmp.lt.s32.totalorder %s16, 2
      // Predicated region
      $region29: #{mixed_3b.11} parent=5 // pred_check
        %p232 = pneg %p231
      $region30: #{mixed_3b.11} parent=5 // pred_check_branch
        %234 = sbr.rel (%p232) target = $region32
      $region31: #{mixed_3b.11} parent=5 // pred_region
        // Predicated region
        $region33: #{mixed_3b.11} parent=31 // pred_check
          %p235 = pneg %p36
        $region34: #{mixed_3b.11} parent=31 // pred_check_branch
          %237 = sbr.rel (%p235) target = $region36
        $region35: #{mixed_3b.11} parent=31 // pred_region
          %s238 = smul.u32 32, %s16
          %p239 = scmp.lt.s32.totalorder %s238, 63
          %s240 = scalar_select %p239, %s238, 63
          %s241 = smul.addr %s240, 4
          %s242 = scalar_lea.vmem %s0, %s241
          %s243 = smul.u32 32, %s16
        $region36: #{mixed_3b.11} parent=31 // pred_fallthru
          _
        // Predicated region
        $region37: #{mixed_3b.11} parent=31 // pred_check
          %p244 = pneg %p62
        $region38: #{mixed_3b.11} parent=31 // pred_check_branch
          %246 = sbr.rel (%p244) target = $region40
        $region39: #{mixed_3b.11} parent=31 // pred_region
          %s247 = smul.u32 32, %s16
          %p248 = scmp.lt.s32.totalorder %s247, 63
          %s249 = scalar_select %p248, %s247, 63
          %s250 = smul.addr %s249, 2
          %s251 = smul.addr %s250, 4
          %s252 = scalar_lea.vmem %s1, %s251
          %s253 = smul.u32 32, %s16
        $region40: #{mixed_3b.11} parent=31 // pred_fallthru
          _
        // Predicated region
        $region41: #{mixed_3b.11} parent=31 // pred_check
          %p254 = pneg %p88
        $region42: #{mixed_3b.11} parent=31 // pred_check_branch
          %256 = sbr.rel (%p254) target = $region44
        $region43: #{mixed_3b.11} parent=31 // pred_region
          %s257 = smul.u32 32, %s16
          %p258 = scmp.lt.s32.totalorder %s257, 63
          %s259 = scalar_select %p258, %s257, 63
          %s260 = smul.addr %s259, 4
          %s261 = scalar_lea.vmem %s2, %s260
          %s262 = smul.u32 32, %s16
        $region44: #{mixed_3b.11} parent=31 // pred_fallthru
          _
      $region32: #{mixed_3b.11} parent=5 // pred_fallthru
        _
      %p263 = scmp.le.s32.totalorder 1, %s16
      %p264 = scmp.lt.s32.totalorder %s16, 3
      %p265 = pnand %p263, %p264
      %p266 = pneg %p265
      // Predicated region
      $region45: #{mixed_3b.11} parent=5 // pred_check
        _
      $region46: #{mixed_3b.11} parent=5 // pred_check_branch
        %268 = sbr.rel (%p265) target = $region48
      $region47: #{mixed_3b.11} parent=5 // pred_region
        %s269 = ssub.s32 %s16, 1
        %s270 = smul.u32 32, %s21
        %p271 = scmp.lt.s32.totalorder %s270, 63
        %s272 = scalar_select %p271, %s270, 63
        %s273 = smul.addr %s272, 4
        %s274 = scalar_lea.vmem %s0, %s273
        %p275 = pneg %p42
        %p276 = pneg %p39
        %s277 = smul.u32 32, %s21
        %p278 = scmp.lt.s32.totalorder %s277, 63
        %s279 = scalar_select %p278, %s277, 63
        %s280 = smul.addr %s279, 2
        %s281 = smul.addr %s280, 4
        %s282 = scalar_lea.vmem %s1, %s281
        %p283 = pneg %p68
        %p284 = pneg %p65
        %s285 = smul.u32 32, %s21
        %p286 = scmp.lt.s32.totalorder %s285, 63
        %s287 = scalar_select %p286, %s285, 63
        %s288 = smul.addr %s287, 4
        %s289 = scalar_lea.vmem %s2, %s288
        %p290 = pneg %p94
        %p291 = pneg %p91
        %p292 = pneg %p115
        %p293 = pneg %p112
        %p294 = pneg %p136
        %p295 = pneg %p133
        %p296 = pneg %p157
        %p297 = pneg %p154
        %p298 = pneg %p178
        %p299 = pneg %p175
        %p300 = pneg %p204
        %p301 = pneg %p201
        %s302 = sand.u32 %s191, 1
        %s303 = scalar_lea.sflag [#allocation3], %s302
        %s304 = sand.u32 %s191, 1
        %s305 = smul.addr %s304, 512
        %s306 = scalar_lea.vmem [#allocation2], %s305
        %s307 = smul.u32 32, %s21
        %p308 = scmp.lt.s32.totalorder %s307, 63
        %s309 = scalar_select %p308, %s307, 63
        %s310 = smul.addr %s309, 4
        %s311 = scalar_lea.vmem %s0, %s310
        %s312 = smul.u32 32, %s21
        %s313 = smul.u32 32, %s21
        %p314 = scmp.lt.s32.totalorder %s313, 63
        %s315 = scalar_select %p314, %s313, 63
        %s316 = smul.addr %s315, 2
        %s317 = smul.addr %s316, 4
        %s318 = scalar_lea.vmem %s1, %s317
        %s319 = smul.u32 32, %s21
        %s320 = smul.u32 32, %s21
        %p321 = scmp.lt.s32.totalorder %s320, 63
        %s322 = scalar_select %p321, %s320, 63
        %s323 = smul.addr %s322, 4
        %s324 = scalar_lea.vmem %s2, %s323
        %s325 = smul.u32 32, %s21
        %s326 = smul.u32 32, %s21
        %v327 = vld [vmem:[%s318] sm:$0xff]
        %v328 = vld [vmem:[%s318 + $0x8] sm:$0xff]
        %v329 = vld [vmem:[%s318 + $0x10] sm:$0xff]
        %v330 = vld [vmem:[%s318 + $0x18] sm:$0xff]
        %v331 = vld [vmem:[%s318 + $0x20] sm:$0xff]
        %v332 = vld [vmem:[%s318 + $0x28] sm:$0xff]
        %v333 = vld [vmem:[%s318 + $0x30] sm:$0xff]
        %v334 = vld [vmem:[%s318 + $0x38] sm:$0xff]
        %v335 = vld [vmem:[%s318 + $0x40] sm:$0xff]
        %v336 = vld [vmem:[%s318 + $0x48] sm:$0xff]
        %v337 = vld [vmem:[%s318 + $0x50] sm:$0xff]
        %v338 = vld [vmem:[%s318 + $0x58] sm:$0xff]
        %v339 = vld [vmem:[%s318 + $0x60] sm:$0xff]
        %v340 = vld [vmem:[%s318 + $0x68] sm:$0xff]
        %v341 = vld [vmem:[%s318 + $0x70] sm:$0xff]
        %v342 = vld [vmem:[%s318 + $0x78] sm:$0xff]
        %v343 = vld [vmem:[%s318 + $0x80] sm:$0xff]
        %v344 = vld [vmem:[%s318 + $0x88] sm:$0xff]
        %v345 = vld [vmem:[%s318 + $0x90] sm:$0xff]
        %v346 = vld [vmem:[%s318 + $0x98] sm:$0xff]
        %v347 = vld [vmem:[%s318 + $0xa0] sm:$0xff]
        %v348 = vld [vmem:[%s318 + $0xa8] sm:$0xff]
        %v349 = vld [vmem:[%s318 + $0xb0] sm:$0xff]
        %v350 = vld [vmem:[%s318 + $0xb8] sm:$0xff]
        %v351 = vld [vmem:[%s318 + $0xc0] sm:$0xff]
        %v352 = vld [vmem:[%s318 + $0xc8] sm:$0xff]
        %v353 = vld [vmem:[%s318 + $0xd0] sm:$0xff]
        %v354 = vld [vmem:[%s318 + $0xd8] sm:$0xff]
        %v355 = vld [vmem:[%s318 + $0xe0] sm:$0xff]
        %v356 = vld [vmem:[%s318 + $0xe8] sm:$0xff]
        %v357 = vld [vmem:[%s318 + $0xf0] sm:$0xff]
        %v358 = vld [vmem:[%s318 + $0xf8] sm:$0xff]
        %v359 = vunpack.c.l.bf16 %v327
        %v360 = vunpack.c.h.bf16 %v327
        %v361 = vunpack.c.l.bf16 %v328
        %v362 = vunpack.c.h.bf16 %v328
        %v363 = vunpack.c.l.bf16 %v329
        %v364 = vunpack.c.h.bf16 %v329
        %v365 = vunpack.c.l.bf16 %v330
        %v366 = vunpack.c.h.bf16 %v330
        %v367 = vunpack.c.l.bf16 %v331
        %v368 = vunpack.c.h.bf16 %v331
        %v369 = vunpack.c.l.bf16 %v332
        %v370 = vunpack.c.h.bf16 %v332
        %v371 = vunpack.c.l.bf16 %v333
        %v372 = vunpack.c.h.bf16 %v333
        %v373 = vunpack.c.l.bf16 %v334
        %v374 = vunpack.c.h.bf16 %v334
        %v375 = vunpack.c.l.bf16 %v335
        %v376 = vunpack.c.h.bf16 %v335
        %v377 = vunpack.c.l.bf16 %v336
        %v378 = vunpack.c.h.bf16 %v336
        %v379 = vunpack.c.l.bf16 %v337
        %v380 = vunpack.c.h.bf16 %v337
        %v381 = vunpack.c.l.bf16 %v338
        %v382 = vunpack.c.h.bf16 %v338
        %v383 = vunpack.c.l.bf16 %v339
        %v384 = vunpack.c.h.bf16 %v339
        %v385 = vunpack.c.l.bf16 %v340
        %v386 = vunpack.c.h.bf16 %v340
        %v387 = vunpack.c.l.bf16 %v341
        %v388 = vunpack.c.h.bf16 %v341
        %v389 = vunpack.c.l.bf16 %v342
        %v390 = vunpack.c.h.bf16 %v342
        %v391 = vunpack.c.l.bf16 %v343
        %v392 = vunpack.c.h.bf16 %v343
        %v393 = vunpack.c.l.bf16 %v344
        %v394 = vunpack.c.h.bf16 %v344
        %v395 = vunpack.c.l.bf16 %v345
        %v396 = vunpack.c.h.bf16 %v345
        %v397 = vunpack.c.l.bf16 %v346
        %v398 = vunpack.c.h.bf16 %v346
        %v399 = vunpack.c.l.bf16 %v347
        %v400 = vunpack.c.h.bf16 %v347
        %v401 = vunpack.c.l.bf16 %v348
        %v402 = vunpack.c.h.bf16 %v348
        %v403 = vunpack.c.l.bf16 %v349
        %v404 = vunpack.c.h.bf16 %v349
        %v405 = vunpack.c.l.bf16 %v350
        %v406 = vunpack.c.h.bf16 %v350
        %v407 = vunpack.c.l.bf16 %v351
        %v408 = vunpack.c.h.bf16 %v351
        %v409 = vunpack.c.l.bf16 %v352
        %v410 = vunpack.c.h.bf16 %v352
        %v411 = vunpack.c.l.bf16 %v353
        %v412 = vunpack.c.h.bf16 %v353
        %v413 = vunpack.c.l.bf16 %v354
        %v414 = vunpack.c.h.bf16 %v354
        %v415 = vunpack.c.l.bf16 %v355
        %v416 = vunpack.c.h.bf16 %v355
        %v417 = vunpack.c.l.bf16 %v356
        %v418 = vunpack.c.h.bf16 %v356
        %v419 = vunpack.c.l.bf16 %v357
        %v420 = vunpack.c.h.bf16 %v357
        %v421 = vunpack.c.l.bf16 %v358
        %v422 = vunpack.c.h.bf16 %v358
        %v423 = vld [vmem:[%s3] sm:$0x3]
        %v425 = vlaneseq
        %v426 = vshrl.u32 %v425, 7
        %v427 = vsub.s32 0, %v426
        %v428 = vrot.slane %v423, %v427
        %v429 = vlaneseq
        %v430 = vshrl.u32 %v429, 7
        %v431 = vsub.s32 1, %v430
        %v432 = vrot.slane %v423, %v431
        %v435 = vmul.f32 %v359, %v428
        %v436 = vmul.f32 %v360, %v432
        %v437 = vmul.f32 %v361, %v428
        %v438 = vmul.f32 %v362, %v432
        %v439 = vmul.f32 %v363, %v428
        %v440 = vmul.f32 %v364, %v432
        %v441 = vmul.f32 %v365, %v428
        %v442 = vmul.f32 %v366, %v432
        %v443 = vmul.f32 %v367, %v428
        %v444 = vmul.f32 %v368, %v432
        %v445 = vmul.f32 %v369, %v428
        %v446 = vmul.f32 %v370, %v432
        %v447 = vmul.f32 %v371, %v428
        %v448 = vmul.f32 %v372, %v432
        %v449 = vmul.f32 %v373, %v428
        %v450 = vmul.f32 %v374, %v432
        %v451 = vmul.f32 %v375, %v428
        %v452 = vmul.f32 %v376, %v432
        %v453 = vmul.f32 %v377, %v428
        %v454 = vmul.f32 %v378, %v432
        %v455 = vmul.f32 %v379, %v428
        %v456 = vmul.f32 %v380, %v432
        %v457 = vmul.f32 %v381, %v428
        %v458 = vmul.f32 %v382, %v432
        %v459 = vmul.f32 %v383, %v428
        %v460 = vmul.f32 %v384, %v432
        %v461 = vmul.f32 %v385, %v428
        %v462 = vmul.f32 %v386, %v432
        %v463 = vmul.f32 %v387, %v428
        %v464 = vmul.f32 %v388, %v432
        %v465 = vmul.f32 %v389, %v428
        %v466 = vmul.f32 %v390, %v432
        %v467 = vmul.f32 %v391, %v428
        %v468 = vmul.f32 %v392, %v432
        %v469 = vmul.f32 %v393, %v428
        %v470 = vmul.f32 %v394, %v432
        %v471 = vmul.f32 %v395, %v428
        %v472 = vmul.f32 %v396, %v432
        %v473 = vmul.f32 %v397, %v428
        %v474 = vmul.f32 %v398, %v432
        %v475 = vmul.f32 %v399, %v428
        %v476 = vmul.f32 %v400, %v432
        %v477 = vmul.f32 %v401, %v428
        %v478 = vmul.f32 %v402, %v432
        %v479 = vmul.f32 %v403, %v428
        %v480 = vmul.f32 %v404, %v432
        %v481 = vmul.f32 %v405, %v428
        %v482 = vmul.f32 %v406, %v432
        %v483 = vmul.f32 %v407, %v428
        %v484 = vmul.f32 %v408, %v432
        %v485 = vmul.f32 %v409, %v428
        %v486 = vmul.f32 %v410, %v432
        %v487 = vmul.f32 %v411, %v428
        %v488 = vmul.f32 %v412, %v432
        %v489 = vmul.f32 %v413, %v428
        %v490 = vmul.f32 %v414, %v432
        %v491 = vmul.f32 %v415, %v428
        %v492 = vmul.f32 %v416, %v432
        %v493 = vmul.f32 %v417, %v428
        %v494 = vmul.f32 %v418, %v432
        %v495 = vmul.f32 %v419, %v428
        %v496 = vmul.f32 %v420, %v432
        %v497 = vmul.f32 %v421, %v428
        %v498 = vmul.f32 %v422, %v432
        %v499 = vld [vmem:[%s4] sm:$0x3]
        %v501 = vlaneseq
        %v502 = vshrl.u32 %v501, 7
        %v503 = vsub.s32 0, %v502
        %v504 = vrot.slane %v499, %v503
        %v505 = vlaneseq
        %v506 = vshrl.u32 %v505, 7
        %v507 = vsub.s32 1, %v506
        %v508 = vrot.slane %v499, %v507
        %v511 = vadd.f32 %v435, %v504
        %v512 = vadd.f32 %v436, %v508
        %v513 = vadd.f32 %v437, %v504
        %v514 = vadd.f32 %v438, %v508
        %v515 = vadd.f32 %v439, %v504
        %v516 = vadd.f32 %v440, %v508
        %v517 = vadd.f32 %v441, %v504
        %v518 = vadd.f32 %v442, %v508
        %v519 = vadd.f32 %v443, %v504
        %v520 = vadd.f32 %v444, %v508
        %v521 = vadd.f32 %v445, %v504
        %v522 = vadd.f32 %v446, %v508
        %v523 = vadd.f32 %v447, %v504
        %v524 = vadd.f32 %v448, %v508
        %v525 = vadd.f32 %v449, %v504
        %v526 = vadd.f32 %v450, %v508
        %v527 = vadd.f32 %v451, %v504
        %v528 = vadd.f32 %v452, %v508
        %v529 = vadd.f32 %v453, %v504
        %v530 = vadd.f32 %v454, %v508
        %v531 = vadd.f32 %v455, %v504
        %v532 = vadd.f32 %v456, %v508
        %v533 = vadd.f32 %v457, %v504
        %v534 = vadd.f32 %v458, %v508
        %v535 = vadd.f32 %v459, %v504
        %v536 = vadd.f32 %v460, %v508
        %v537 = vadd.f32 %v461, %v504
        %v538 = vadd.f32 %v462, %v508
        %v539 = vadd.f32 %v463, %v504
        %v540 = vadd.f32 %v464, %v508
        %v541 = vadd.f32 %v465, %v504
        %v542 = vadd.f32 %v466, %v508
        %v543 = vadd.f32 %v467, %v504
        %v544 = vadd.f32 %v468, %v508
        %v545 = vadd.f32 %v469, %v504
        %v546 = vadd.f32 %v470, %v508
        %v547 = vadd.f32 %v471, %v504
        %v548 = vadd.f32 %v472, %v508
        %v549 = vadd.f32 %v473, %v504
        %v550 = vadd.f32 %v474, %v508
        %v551 = vadd.f32 %v475, %v504
        %v552 = vadd.f32 %v476, %v508
        %v553 = vadd.f32 %v477, %v504
        %v554 = vadd.f32 %v478, %v508
        %v555 = vadd.f32 %v479, %v504
        %v556 = vadd.f32 %v480, %v508
        %v557 = vadd.f32 %v481, %v504
        %v558 = vadd.f32 %v482, %v508
        %v559 = vadd.f32 %v483, %v504
        %v560 = vadd.f32 %v484, %v508
        %v561 = vadd.f32 %v485, %v504
        %v562 = vadd.f32 %v486, %v508
        %v563 = vadd.f32 %v487, %v504
        %v564 = vadd.f32 %v488, %v508
        %v565 = vadd.f32 %v489, %v504
        %v566 = vadd.f32 %v490, %v508
        %v567 = vadd.f32 %v491, %v504
        %v568 = vadd.f32 %v492, %v508
        %v569 = vadd.f32 %v493, %v504
        %v570 = vadd.f32 %v494, %v508
        %v571 = vadd.f32 %v495, %v504
        %v572 = vadd.f32 %v496, %v508
        %v573 = vadd.f32 %v497, %v504
        %v574 = vadd.f32 %v498, %v508
        %v575 = vmax.f32 %v511, 0.0
        %v576 = vmax.f32 %v512, 0.0
        %v577 = vmax.f32 %v513, 0.0
        %v578 = vmax.f32 %v514, 0.0
        %v579 = vmax.f32 %v515, 0.0
        %v580 = vmax.f32 %v516, 0.0
        %v581 = vmax.f32 %v517, 0.0
        %v582 = vmax.f32 %v518, 0.0
        %v583 = vmax.f32 %v519, 0.0
        %v584 = vmax.f32 %v520, 0.0
        %v585 = vmax.f32 %v521, 0.0
        %v586 = vmax.f32 %v522, 0.0
        %v587 = vmax.f32 %v523, 0.0
        %v588 = vmax.f32 %v524, 0.0
        %v589 = vmax.f32 %v525, 0.0
        %v590 = vmax.f32 %v526, 0.0
        %v591 = vmax.f32 %v527, 0.0
        %v592 = vmax.f32 %v528, 0.0
        %v593 = vmax.f32 %v529, 0.0
        %v594 = vmax.f32 %v530, 0.0
        %v595 = vmax.f32 %v531, 0.0
        %v596 = vmax.f32 %v532, 0.0
        %v597 = vmax.f32 %v533, 0.0
        %v598 = vmax.f32 %v534, 0.0
        %v599 = vmax.f32 %v535, 0.0
        %v600 = vmax.f32 %v536, 0.0
        %v601 = vmax.f32 %v537, 0.0
        %v602 = vmax.f32 %v538, 0.0
        %v603 = vmax.f32 %v539, 0.0
        %v604 = vmax.f32 %v540, 0.0
        %v605 = vmax.f32 %v541, 0.0
        %v606 = vmax.f32 %v542, 0.0
        %v607 = vmax.f32 %v543, 0.0
        %v608 = vmax.f32 %v544, 0.0
        %v609 = vmax.f32 %v545, 0.0
        %v610 = vmax.f32 %v546, 0.0
        %v611 = vmax.f32 %v547, 0.0
        %v612 = vmax.f32 %v548, 0.0
        %v613 = vmax.f32 %v549, 0.0
        %v614 = vmax.f32 %v550, 0.0
        %v615 = vmax.f32 %v551, 0.0
        %v616 = vmax.f32 %v552, 0.0
        %v617 = vmax.f32 %v553, 0.0
        %v618 = vmax.f32 %v554, 0.0
        %v619 = vmax.f32 %v555, 0.0
        %v620 = vmax.f32 %v556, 0.0
        %v621 = vmax.f32 %v557, 0.0
        %v622 = vmax.f32 %v558, 0.0
        %v623 = vmax.f32 %v559, 0.0
        %v624 = vmax.f32 %v560, 0.0
        %v625 = vmax.f32 %v561, 0.0
        %v626 = vmax.f32 %v562, 0.0
        %v627 = vmax.f32 %v563, 0.0
        %v628 = vmax.f32 %v564, 0.0
        %v629 = vmax.f32 %v565, 0.0
        %v630 = vmax.f32 %v566, 0.0
        %v631 = vmax.f32 %v567, 0.0
        %v632 = vmax.f32 %v568, 0.0
        %v633 = vmax.f32 %v569, 0.0
        %v634 = vmax.f32 %v570, 0.0
        %v635 = vmax.f32 %v571, 0.0
        %v636 = vmax.f32 %v572, 0.0
        %v637 = vmax.f32 %v573, 0.0
        %v638 = vmax.f32 %v574, 0.0
        %v639 = vld [vmem:[%s324] sm:$0xf]
        %v640 = vld [vmem:[%s324 + $0x4] sm:$0xf]
        %v641 = vld [vmem:[%s324 + $0x8] sm:$0xf]
        %v642 = vld [vmem:[%s324 + $0xc] sm:$0xf]
        %v643 = vld [vmem:[%s324 + $0x10] sm:$0xf]
        %v644 = vld [vmem:[%s324 + $0x14] sm:$0xf]
        %v645 = vld [vmem:[%s324 + $0x18] sm:$0xf]
        %v646 = vld [vmem:[%s324 + $0x1c] sm:$0xf]
        %v647 = vld [vmem:[%s324 + $0x20] sm:$0xf]
        %v648 = vld [vmem:[%s324 + $0x24] sm:$0xf]
        %v649 = vld [vmem:[%s324 + $0x28] sm:$0xf]
        %v650 = vld [vmem:[%s324 + $0x2c] sm:$0xf]
        %v651 = vld [vmem:[%s324 + $0x30] sm:$0xf]
        %v652 = vld [vmem:[%s324 + $0x34] sm:$0xf]
        %v653 = vld [vmem:[%s324 + $0x38] sm:$0xf]
        %v654 = vld [vmem:[%s324 + $0x3c] sm:$0xf]
        %v655 = vld [vmem:[%s324 + $0x40] sm:$0xf]
        %v656 = vld [vmem:[%s324 + $0x44] sm:$0xf]
        %v657 = vld [vmem:[%s324 + $0x48] sm:$0xf]
        %v658 = vld [vmem:[%s324 + $0x4c] sm:$0xf]
        %v659 = vld [vmem:[%s324 + $0x50] sm:$0xf]
        %v660 = vld [vmem:[%s324 + $0x54] sm:$0xf]
        %v661 = vld [vmem:[%s324 + $0x58] sm:$0xf]
        %v662 = vld [vmem:[%s324 + $0x5c] sm:$0xf]
        %v663 = vld [vmem:[%s324 + $0x60] sm:$0xf]
        %v664 = vld [vmem:[%s324 + $0x64] sm:$0xf]
        %v665 = vld [vmem:[%s324 + $0x68] sm:$0xf]
        %v666 = vld [vmem:[%s324 + $0x6c] sm:$0xf]
        %v667 = vld [vmem:[%s324 + $0x70] sm:$0xf]
        %v668 = vld [vmem:[%s324 + $0x74] sm:$0xf]
        %v669 = vld [vmem:[%s324 + $0x78] sm:$0xf]
        %v670 = vld [vmem:[%s324 + $0x7c] sm:$0xf]
        %v671 = vunpack.c.l.bf16 %v639
        %v672 = vunpack.c.l.bf16 %v640
        %v673 = vunpack.c.l.bf16 %v641
        %v674 = vunpack.c.l.bf16 %v642
        %v675 = vunpack.c.l.bf16 %v643
        %v676 = vunpack.c.l.bf16 %v644
        %v677 = vunpack.c.l.bf16 %v645
        %v678 = vunpack.c.l.bf16 %v646
        %v679 = vunpack.c.l.bf16 %v647
        %v680 = vunpack.c.l.bf16 %v648
        %v681 = vunpack.c.l.bf16 %v649
        %v682 = vunpack.c.l.bf16 %v650
        %v683 = vunpack.c.l.bf16 %v651
        %v684 = vunpack.c.l.bf16 %v652
        %v685 = vunpack.c.l.bf16 %v653
        %v686 = vunpack.c.l.bf16 %v654
        %v687 = vunpack.c.l.bf16 %v655
        %v688 = vunpack.c.l.bf16 %v656
        %v689 = vunpack.c.l.bf16 %v657
        %v690 = vunpack.c.l.bf16 %v658
        %v691 = vunpack.c.l.bf16 %v659
        %v692 = vunpack.c.l.bf16 %v660
        %v693 = vunpack.c.l.bf16 %v661
        %v694 = vunpack.c.l.bf16 %v662
        %v695 = vunpack.c.l.bf16 %v663
        %v696 = vunpack.c.l.bf16 %v664
        %v697 = vunpack.c.l.bf16 %v665
        %v698 = vunpack.c.l.bf16 %v666
        %v699 = vunpack.c.l.bf16 %v667
        %v700 = vunpack.c.l.bf16 %v668
        %v701 = vunpack.c.l.bf16 %v669
        %v702 = vunpack.c.l.bf16 %v670
        %v703 = vld [vmem:[%s5] sm:$0x1]
        %v705 = vlaneseq
        %v706 = vshrl.u32 %v705, 7
        %v707 = vsub.s32 0, %v706
        %v708 = vrot.slane %v703, %v707
        %v710 = vmul.f32 %v671, %v708
        %v711 = vmul.f32 %v672, %v708
        %v712 = vmul.f32 %v673, %v708
        %v713 = vmul.f32 %v674, %v708
        %v714 = vmul.f32 %v675, %v708
        %v715 = vmul.f32 %v676, %v708
        %v716 = vmul.f32 %v677, %v708
        %v717 = vmul.f32 %v678, %v708
        %v718 = vmul.f32 %v679, %v708
        %v719 = vmul.f32 %v680, %v708
        %v720 = vmul.f32 %v681, %v708
        %v721 = vmul.f32 %v682, %v708
        %v722 = vmul.f32 %v683, %v708
        %v723 = vmul.f32 %v684, %v708
        %v724 = vmul.f32 %v685, %v708
        %v725 = vmul.f32 %v686, %v708
        %v726 = vmul.f32 %v687, %v708
        %v727 = vmul.f32 %v688, %v708
        %v728 = vmul.f32 %v689, %v708
        %v729 = vmul.f32 %v690, %v708
        %v730 = vmul.f32 %v691, %v708
        %v731 = vmul.f32 %v692, %v708
        %v732 = vmul.f32 %v693, %v708
        %v733 = vmul.f32 %v694, %v708
        %v734 = vmul.f32 %v695, %v708
        %v735 = vmul.f32 %v696, %v708
        %v736 = vmul.f32 %v697, %v708
        %v737 = vmul.f32 %v698, %v708
        %v738 = vmul.f32 %v699, %v708
        %v739 = vmul.f32 %v700, %v708
        %v740 = vmul.f32 %v701, %v708
        %v741 = vmul.f32 %v702, %v708
        %v742 = vld [vmem:[%s6] sm:$0x1]
        %v744 = vlaneseq
        %v745 = vshrl.u32 %v744, 7
        %v746 = vsub.s32 0, %v745
        %v747 = vrot.slane %v742, %v746
        %v749 = vadd.f32 %v710, %v747
        %v750 = vadd.f32 %v711, %v747
        %v751 = vadd.f32 %v712, %v747
        %v752 = vadd.f32 %v713, %v747
        %v753 = vadd.f32 %v714, %v747
        %v754 = vadd.f32 %v715, %v747
        %v755 = vadd.f32 %v716, %v747
        %v756 = vadd.f32 %v717, %v747
        %v757 = vadd.f32 %v718, %v747
        %v758 = vadd.f32 %v719, %v747
        %v759 = vadd.f32 %v720, %v747
        %v760 = vadd.f32 %v721, %v747
        %v761 = vadd.f32 %v722, %v747
        %v762 = vadd.f32 %v723, %v747
        %v763 = vadd.f32 %v724, %v747
        %v764 = vadd.f32 %v725, %v747
        %v765 = vadd.f32 %v726, %v747
        %v766 = vadd.f32 %v727, %v747
        %v767 = vadd.f32 %v728, %v747
        %v768 = vadd.f32 %v729, %v747
        %v769 = vadd.f32 %v730, %v747
        %v770 = vadd.f32 %v731, %v747
        %v771 = vadd.f32 %v732, %v747
        %v772 = vadd.f32 %v733, %v747
        %v773 = vadd.f32 %v734, %v747
        %v774 = vadd.f32 %v735, %v747
        %v775 = vadd.f32 %v736, %v747
        %v776 = vadd.f32 %v737, %v747
        %v777 = vadd.f32 %v738, %v747
        %v778 = vadd.f32 %v739, %v747
        %v779 = vadd.f32 %v740, %v747
        %v780 = vadd.f32 %v741, %v747
        %v781 = vmax.f32 %v749, 0.0
        %v782 = vmax.f32 %v750, 0.0
        %v783 = vmax.f32 %v751, 0.0
        %v784 = vmax.f32 %v752, 0.0
        %v785 = vmax.f32 %v753, 0.0
        %v786 = vmax.f32 %v754, 0.0
        %v787 = vmax.f32 %v755, 0.0
        %v788 = vmax.f32 %v756, 0.0
        %v789 = vmax.f32 %v757, 0.0
        %v790 = vmax.f32 %v758, 0.0
        %v791 = vmax.f32 %v759, 0.0
        %v792 = vmax.f32 %v760, 0.0
        %v793 = vmax.f32 %v761, 0.0
        %v794 = vmax.f32 %v762, 0.0
        %v795 = vmax.f32 %v763, 0.0
        %v796 = vmax.f32 %v764, 0.0
        %v797 = vmax.f32 %v765, 0.0
        %v798 = vmax.f32 %v766, 0.0
        %v799 = vmax.f32 %v767, 0.0
        %v800 = vmax.f32 %v768, 0.0
        %v801 = vmax.f32 %v769, 0.0
        %v802 = vmax.f32 %v770, 0.0
        %v803 = vmax.f32 %v771, 0.0
        %v804 = vmax.f32 %v772, 0.0
        %v805 = vmax.f32 %v773, 0.0
        %v806 = vmax.f32 %v774, 0.0
        %v807 = vmax.f32 %v775, 0.0
        %v808 = vmax.f32 %v776, 0.0
        %v809 = vmax.f32 %v777, 0.0
        %v810 = vmax.f32 %v778, 0.0
        %v811 = vmax.f32 %v779, 0.0
        %v812 = vmax.f32 %v780, 0.0
        %v813 = vld [vmem:[%s311] sm:$0xf]
        %v814 = vld [vmem:[%s311 + $0x4] sm:$0xf]
        %v815 = vld [vmem:[%s311 + $0x8] sm:$0xf]
        %v816 = vld [vmem:[%s311 + $0xc] sm:$0xf]
        %v817 = vld [vmem:[%s311 + $0x10] sm:$0xf]
        %v818 = vld [vmem:[%s311 + $0x14] sm:$0xf]
        %v819 = vld [vmem:[%s311 + $0x18] sm:$0xf]
        %v820 = vld [vmem:[%s311 + $0x1c] sm:$0xf]
        %v821 = vld [vmem:[%s311 + $0x20] sm:$0xf]
        %v822 = vld [vmem:[%s311 + $0x24] sm:$0xf]
        %v823 = vld [vmem:[%s311 + $0x28] sm:$0xf]
        %v824 = vld [vmem:[%s311 + $0x2c] sm:$0xf]
        %v825 = vld [vmem:[%s311 + $0x30] sm:$0xf]
        %v826 = vld [vmem:[%s311 + $0x34] sm:$0xf]
        %v827 = vld [vmem:[%s311 + $0x38] sm:$0xf]
        %v828 = vld [vmem:[%s311 + $0x3c] sm:$0xf]
        %v829 = vld [vmem:[%s311 + $0x40] sm:$0xf]
        %v830 = vld [vmem:[%s311 + $0x44] sm:$0xf]
        %v831 = vld [vmem:[%s311 + $0x48] sm:$0xf]
        %v832 = vld [vmem:[%s311 + $0x4c] sm:$0xf]
        %v833 = vld [vmem:[%s311 + $0x50] sm:$0xf]
        %v834 = vld [vmem:[%s311 + $0x54] sm:$0xf]
        %v835 = vld [vmem:[%s311 + $0x58] sm:$0xf]
        %v836 = vld [vmem:[%s311 + $0x5c] sm:$0xf]
        %v837 = vld [vmem:[%s311 + $0x60] sm:$0xf]
        %v838 = vld [vmem:[%s311 + $0x64] sm:$0xf]
        %v839 = vld [vmem:[%s311 + $0x68] sm:$0xf]
        %v840 = vld [vmem:[%s311 + $0x6c] sm:$0xf]
        %v841 = vld [vmem:[%s311 + $0x70] sm:$0xf]
        %v842 = vld [vmem:[%s311 + $0x74] sm:$0xf]
        %v843 = vld [vmem:[%s311 + $0x78] sm:$0xf]
        %v844 = vld [vmem:[%s311 + $0x7c] sm:$0xf]
        %v845 = vunpack.c.l.bf16 %v813
        %v846 = vunpack.c.l.bf16 %v814
        %v847 = vunpack.c.l.bf16 %v815
        %v848 = vunpack.c.l.bf16 %v816
        %v849 = vunpack.c.l.bf16 %v817
        %v850 = vunpack.c.l.bf16 %v818
        %v851 = vunpack.c.l.bf16 %v819
        %v852 = vunpack.c.l.bf16 %v820
        %v853 = vunpack.c.l.bf16 %v821
        %v854 = vunpack.c.l.bf16 %v822
        %v855 = vunpack.c.l.bf16 %v823
        %v856 = vunpack.c.l.bf16 %v824
        %v857 = vunpack.c.l.bf16 %v825
        %v858 = vunpack.c.l.bf16 %v826
        %v859 = vunpack.c.l.bf16 %v827
        %v860 = vunpack.c.l.bf16 %v828
        %v861 = vunpack.c.l.bf16 %v829
        %v862 = vunpack.c.l.bf16 %v830
        %v863 = vunpack.c.l.bf16 %v831
        %v864 = vunpack.c.l.bf16 %v832
        %v865 = vunpack.c.l.bf16 %v833
        %v866 = vunpack.c.l.bf16 %v834
        %v867 = vunpack.c.l.bf16 %v835
        %v868 = vunpack.c.l.bf16 %v836
        %v869 = vunpack.c.l.bf16 %v837
        %v870 = vunpack.c.l.bf16 %v838
        %v871 = vunpack.c.l.bf16 %v839
        %v872 = vunpack.c.l.bf16 %v840
        %v873 = vunpack.c.l.bf16 %v841
        %v874 = vunpack.c.l.bf16 %v842
        %v875 = vunpack.c.l.bf16 %v843
        %v876 = vunpack.c.l.bf16 %v844
        %941 = vrot.lane.b32.xlu0 %v575, 64
        %v942 = vpop.permute.xlu0 %941
        %943 = vrot.lane.b32.xlu0 %v576, 64
        %v944 = vpop.permute.xlu0 %943
        %945 = vrot.lane.b32.xlu0 %v577, 64
        %v946 = vpop.permute.xlu0 %945
        %947 = vrot.lane.b32.xlu0 %v578, 64
        %v948 = vpop.permute.xlu0 %947
        %949 = vrot.lane.b32.xlu0 %v579, 64
        %v950 = vpop.permute.xlu0 %949
        %951 = vrot.lane.b32.xlu0 %v580, 64
        %v952 = vpop.permute.xlu0 %951
        %953 = vrot.lane.b32.xlu0 %v581, 64
        %v954 = vpop.permute.xlu0 %953
        %955 = vrot.lane.b32.xlu0 %v582, 64
        %v956 = vpop.permute.xlu0 %955
        %957 = vrot.lane.b32.xlu0 %v583, 64
        %v958 = vpop.permute.xlu0 %957
        %959 = vrot.lane.b32.xlu0 %v584, 64
        %v960 = vpop.permute.xlu0 %959
        %961 = vrot.lane.b32.xlu0 %v585, 64
        %v962 = vpop.permute.xlu0 %961
        %963 = vrot.lane.b32.xlu0 %v586, 64
        %v964 = vpop.permute.xlu0 %963
        %965 = vrot.lane.b32.xlu0 %v587, 64
        %v966 = vpop.permute.xlu0 %965
        %967 = vrot.lane.b32.xlu0 %v588, 64
        %v968 = vpop.permute.xlu0 %967
        %969 = vrot.lane.b32.xlu0 %v589, 64
        %v970 = vpop.permute.xlu0 %969
        %971 = vrot.lane.b32.xlu0 %v590, 64
        %v972 = vpop.permute.xlu0 %971
        %973 = vrot.lane.b32.xlu0 %v591, 64
        %v974 = vpop.permute.xlu0 %973
        %975 = vrot.lane.b32.xlu0 %v592, 64
        %v976 = vpop.permute.xlu0 %975
        %977 = vrot.lane.b32.xlu0 %v593, 64
        %v978 = vpop.permute.xlu0 %977
        %979 = vrot.lane.b32.xlu0 %v594, 64
        %v980 = vpop.permute.xlu0 %979
        %981 = vrot.lane.b32.xlu0 %v595, 64
        %v982 = vpop.permute.xlu0 %981
        %983 = vrot.lane.b32.xlu0 %v596, 64
        %v984 = vpop.permute.xlu0 %983
        %985 = vrot.lane.b32.xlu0 %v597, 64
        %v986 = vpop.permute.xlu0 %985
        %987 = vrot.lane.b32.xlu0 %v598, 64
        %v988 = vpop.permute.xlu0 %987
        %989 = vrot.lane.b32.xlu0 %v599, 64
        %v990 = vpop.permute.xlu0 %989
        %991 = vrot.lane.b32.xlu0 %v600, 64
        %v992 = vpop.permute.xlu0 %991
        %993 = vrot.lane.b32.xlu0 %v601, 64
        %v994 = vpop.permute.xlu0 %993
        %995 = vrot.lane.b32.xlu0 %v602, 64
        %v996 = vpop.permute.xlu0 %995
        %997 = vrot.lane.b32.xlu0 %v603, 64
        %v998 = vpop.permute.xlu0 %997
        %999 = vrot.lane.b32.xlu0 %v604, 64
        %v1000 = vpop.permute.xlu0 %999
        %1001 = vrot.lane.b32.xlu0 %v605, 64
        %v1002 = vpop.permute.xlu0 %1001
        %1003 = vrot.lane.b32.xlu0 %v606, 64
        %v1004 = vpop.permute.xlu0 %1003
        %1005 = vrot.lane.b32.xlu0 %v607, 64
        %v1006 = vpop.permute.xlu0 %1005
        %1007 = vrot.lane.b32.xlu0 %v608, 64
        %v1008 = vpop.permute.xlu0 %1007
        %1009 = vrot.lane.b32.xlu0 %v609, 64
        %v1010 = vpop.permute.xlu0 %1009
        %1011 = vrot.lane.b32.xlu0 %v610, 64
        %v1012 = vpop.permute.xlu0 %1011
        %1013 = vrot.lane.b32.xlu0 %v611, 64
        %v1014 = vpop.permute.xlu0 %1013
        %1015 = vrot.lane.b32.xlu0 %v612, 64
        %v1016 = vpop.permute.xlu0 %1015
        %1017 = vrot.lane.b32.xlu0 %v613, 64
        %v1018 = vpop.permute.xlu0 %1017
        %1019 = vrot.lane.b32.xlu0 %v614, 64
        %v1020 = vpop.permute.xlu0 %1019
        %1021 = vrot.lane.b32.xlu0 %v615, 64
        %v1022 = vpop.permute.xlu0 %1021
        %1023 = vrot.lane.b32.xlu0 %v616, 64
        %v1024 = vpop.permute.xlu0 %1023
        %1025 = vrot.lane.b32.xlu0 %v617, 64
        %v1026 = vpop.permute.xlu0 %1025
        %1027 = vrot.lane.b32.xlu0 %v618, 64
        %v1028 = vpop.permute.xlu0 %1027
        %1029 = vrot.lane.b32.xlu0 %v619, 64
        %v1030 = vpop.permute.xlu0 %1029
        %1031 = vrot.lane.b32.xlu0 %v620, 64
        %v1032 = vpop.permute.xlu0 %1031
        %1033 = vrot.lane.b32.xlu0 %v621, 64
        %v1034 = vpop.permute.xlu0 %1033
        %1035 = vrot.lane.b32.xlu0 %v622, 64
        %v1036 = vpop.permute.xlu0 %1035
        %1037 = vrot.lane.b32.xlu0 %v623, 64
        %v1038 = vpop.permute.xlu0 %1037
        %1039 = vrot.lane.b32.xlu0 %v624, 64
        %v1040 = vpop.permute.xlu0 %1039
        %1041 = vrot.lane.b32.xlu0 %v625, 64
        %v1042 = vpop.permute.xlu0 %1041
        %1043 = vrot.lane.b32.xlu0 %v626, 64
        %v1044 = vpop.permute.xlu0 %1043
        %1045 = vrot.lane.b32.xlu0 %v627, 64
        %v1046 = vpop.permute.xlu0 %1045
        %1047 = vrot.lane.b32.xlu0 %v628, 64
        %v1048 = vpop.permute.xlu0 %1047
        %1049 = vrot.lane.b32.xlu0 %v629, 64
        %v1050 = vpop.permute.xlu0 %1049
        %1051 = vrot.lane.b32.xlu0 %v630, 64
        %v1052 = vpop.permute.xlu0 %1051
        %1053 = vrot.lane.b32.xlu0 %v631, 64
        %v1054 = vpop.permute.xlu0 %1053
        %1055 = vrot.lane.b32.xlu0 %v632, 64
        %v1056 = vpop.permute.xlu0 %1055
        %1057 = vrot.lane.b32.xlu0 %v633, 64
        %v1058 = vpop.permute.xlu0 %1057
        %1059 = vrot.lane.b32.xlu0 %v634, 64
        %v1060 = vpop.permute.xlu0 %1059
        %1061 = vrot.lane.b32.xlu0 %v635, 64
        %v1062 = vpop.permute.xlu0 %1061
        %1063 = vrot.lane.b32.xlu0 %v636, 64
        %v1064 = vpop.permute.xlu0 %1063
        %1065 = vrot.lane.b32.xlu0 %v637, 64
        %v1066 = vpop.permute.xlu0 %1065
        %1067 = vrot.lane.b32.xlu0 %v638, 64
        %v1068 = vpop.permute.xlu0 %1067
        %vm1069 = vcmask 523264
        %v1070 = vsel %vm1069, %v942, %v944
        %v1071 = vsel %vm1069, %v946, %v948
        %v1072 = vsel %vm1069, %v950, %v952
        %v1073 = vsel %vm1069, %v954, %v956
        %v1074 = vsel %vm1069, %v958, %v960
        %v1075 = vsel %vm1069, %v962, %v964
        %v1076 = vsel %vm1069, %v966, %v968
        %v1077 = vsel %vm1069, %v970, %v972
        %v1078 = vsel %vm1069, %v974, %v976
        %v1079 = vsel %vm1069, %v978, %v980
        %v1080 = vsel %vm1069, %v982, %v984
        %v1081 = vsel %vm1069, %v986, %v988
        %v1082 = vsel %vm1069, %v990, %v992
        %v1083 = vsel %vm1069, %v994, %v996
        %v1084 = vsel %vm1069, %v998, %v1000
        %v1085 = vsel %vm1069, %v1002, %v1004
        %v1086 = vsel %vm1069, %v1006, %v1008
        %v1087 = vsel %vm1069, %v1010, %v1012
        %v1088 = vsel %vm1069, %v1014, %v1016
        %v1089 = vsel %vm1069, %v1018, %v1020
        %v1090 = vsel %vm1069, %v1022, %v1024
        %v1091 = vsel %vm1069, %v1026, %v1028
        %v1092 = vsel %vm1069, %v1030, %v1032
        %v1093 = vsel %vm1069, %v1034, %v1036
        %v1094 = vsel %vm1069, %v1038, %v1040
        %v1095 = vsel %vm1069, %v1042, %v1044
        %v1096 = vsel %vm1069, %v1046, %v1048
        %v1097 = vsel %vm1069, %v1050, %v1052
        %v1098 = vsel %vm1069, %v1054, %v1056
        %v1099 = vsel %vm1069, %v1058, %v1060
        %v1100 = vsel %vm1069, %v1062, %v1064
        %v1101 = vsel %vm1069, %v1066, %v1068
        %1198 = vrot.lane.b32.xlu0 %v781, 96
        %v1199 = vpop.permute.xlu0 %1198
        %1200 = vrot.lane.b32.xlu0 %v782, 96
        %v1201 = vpop.permute.xlu0 %1200
        %1202 = vrot.lane.b32.xlu0 %v783, 96
        %v1203 = vpop.permute.xlu0 %1202
        %1204 = vrot.lane.b32.xlu0 %v784, 96
        %v1205 = vpop.permute.xlu0 %1204
        %1206 = vrot.lane.b32.xlu0 %v785, 96
        %v1207 = vpop.permute.xlu0 %1206
        %1208 = vrot.lane.b32.xlu0 %v786, 96
        %v1209 = vpop.permute.xlu0 %1208
        %1210 = vrot.lane.b32.xlu0 %v787, 96
        %v1211 = vpop.permute.xlu0 %1210
        %1212 = vrot.lane.b32.xlu0 %v788, 96
        %v1213 = vpop.permute.xlu0 %1212
        %1214 = vrot.lane.b32.xlu0 %v789, 96
        %v1215 = vpop.permute.xlu0 %1214
        %1216 = vrot.lane.b32.xlu0 %v790, 96
        %v1217 = vpop.permute.xlu0 %1216
        %1218 = vrot.lane.b32.xlu0 %v791, 96
        %v1219 = vpop.permute.xlu0 %1218
        %1220 = vrot.lane.b32.xlu0 %v792, 96
        %v1221 = vpop.permute.xlu0 %1220
        %1222 = vrot.lane.b32.xlu0 %v793, 96
        %v1223 = vpop.permute.xlu0 %1222
        %1224 = vrot.lane.b32.xlu0 %v794, 96
        %v1225 = vpop.permute.xlu0 %1224
        %1226 = vrot.lane.b32.xlu0 %v795, 96
        %v1227 = vpop.permute.xlu0 %1226
        %1228 = vrot.lane.b32.xlu0 %v796, 96
        %v1229 = vpop.permute.xlu0 %1228
        %1230 = vrot.lane.b32.xlu0 %v797, 96
        %v1231 = vpop.permute.xlu0 %1230
        %1232 = vrot.lane.b32.xlu0 %v798, 96
        %v1233 = vpop.permute.xlu0 %1232
        %1234 = vrot.lane.b32.xlu0 %v799, 96
        %v1235 = vpop.permute.xlu0 %1234
        %1236 = vrot.lane.b32.xlu0 %v800, 96
        %v1237 = vpop.permute.xlu0 %1236
        %1238 = vrot.lane.b32.xlu0 %v801, 96
        %v1239 = vpop.permute.xlu0 %1238
        %1240 = vrot.lane.b32.xlu0 %v802, 96
        %v1241 = vpop.permute.xlu0 %1240
        %1242 = vrot.lane.b32.xlu0 %v803, 96
        %v1243 = vpop.permute.xlu0 %1242
        %1244 = vrot.lane.b32.xlu0 %v804, 96
        %v1245 = vpop.permute.xlu0 %1244
        %1246 = vrot.lane.b32.xlu0 %v805, 96
        %v1247 = vpop.permute.xlu0 %1246
        %1248 = vrot.lane.b32.xlu0 %v806, 96
        %v1249 = vpop.permute.xlu0 %1248
        %1250 = vrot.lane.b32.xlu0 %v807, 96
        %v1251 = vpop.permute.xlu0 %1250
        %1252 = vrot.lane.b32.xlu0 %v808, 96
        %v1253 = vpop.permute.xlu0 %1252
        %1254 = vrot.lane.b32.xlu0 %v809, 96
        %v1255 = vpop.permute.xlu0 %1254
        %1256 = vrot.lane.b32.xlu0 %v810, 96
        %v1257 = vpop.permute.xlu0 %1256
        %1258 = vrot.lane.b32.xlu0 %v811, 96
        %v1259 = vpop.permute.xlu0 %1258
        %1260 = vrot.lane.b32.xlu0 %v812, 96
        %v1261 = vpop.permute.xlu0 %1260
        %v1294 = vsel %vm1069, %v845, %v942
        %v1295 = vsel %vm1069, %v846, %v946
        %v1296 = vsel %vm1069, %v847, %v950
        %v1297 = vsel %vm1069, %v848, %v954
        %v1298 = vsel %vm1069, %v849, %v958
        %v1299 = vsel %vm1069, %v850, %v962
        %v1300 = vsel %vm1069, %v851, %v966
        %v1301 = vsel %vm1069, %v852, %v970
        %v1302 = vsel %vm1069, %v853, %v974
        %v1303 = vsel %vm1069, %v854, %v978
        %v1304 = vsel %vm1069, %v855, %v982
        %v1305 = vsel %vm1069, %v856, %v986
        %v1306 = vsel %vm1069, %v857, %v990
        %v1307 = vsel %vm1069, %v858, %v994
        %v1308 = vsel %vm1069, %v859, %v998
        %v1309 = vsel %vm1069, %v860, %v1002
        %v1310 = vsel %vm1069, %v861, %v1006
        %v1311 = vsel %vm1069, %v862, %v1010
        %v1312 = vsel %vm1069, %v863, %v1014
        %v1313 = vsel %vm1069, %v864, %v1018
        %v1314 = vsel %vm1069, %v865, %v1022
        %v1315 = vsel %vm1069, %v866, %v1026
        %v1316 = vsel %vm1069, %v867, %v1030
        %v1317 = vsel %vm1069, %v868, %v1034
        %v1318 = vsel %vm1069, %v869, %v1038
        %v1319 = vsel %vm1069, %v870, %v1042
        %v1320 = vsel %vm1069, %v871, %v1046
        %v1321 = vsel %vm1069, %v872, %v1050
        %v1322 = vsel %vm1069, %v873, %v1054
        %v1323 = vsel %vm1069, %v874, %v1058
        %v1324 = vsel %vm1069, %v875, %v1062
        %v1325 = vsel %vm1069, %v876, %v1066
        %vm1326 = vcmask 785408
        %v1327 = vsel %vm1326, %v1070, %v1199
        %v1328 = vsel %vm1326, %v1071, %v1201
        %v1329 = vsel %vm1326, %v1072, %v1203
        %v1330 = vsel %vm1326, %v1073, %v1205
        %v1331 = vsel %vm1326, %v1074, %v1207
        %v1332 = vsel %vm1326, %v1075, %v1209
        %v1333 = vsel %vm1326, %v1076, %v1211
        %v1334 = vsel %vm1326, %v1077, %v1213
        %v1335 = vsel %vm1326, %v1078, %v1215
        %v1336 = vsel %vm1326, %v1079, %v1217
        %v1337 = vsel %vm1326, %v1080, %v1219
        %v1338 = vsel %vm1326, %v1081, %v1221
        %v1339 = vsel %vm1326, %v1082, %v1223
        %v1340 = vsel %vm1326, %v1083, %v1225
        %v1341 = vsel %vm1326, %v1084, %v1227
        %v1342 = vsel %vm1326, %v1085, %v1229
        %v1343 = vsel %vm1326, %v1086, %v1231
        %v1344 = vsel %vm1326, %v1087, %v1233
        %v1345 = vsel %vm1326, %v1088, %v1235
        %v1346 = vsel %vm1326, %v1089, %v1237
        %v1347 = vsel %vm1326, %v1090, %v1239
        %v1348 = vsel %vm1326, %v1091, %v1241
        %v1349 = vsel %vm1326, %v1092, %v1243
        %v1350 = vsel %vm1326, %v1093, %v1245
        %v1351 = vsel %vm1326, %v1094, %v1247
        %v1352 = vsel %vm1326, %v1095, %v1249
        %v1353 = vsel %vm1326, %v1096, %v1251
        %v1354 = vsel %vm1326, %v1097, %v1253
        %v1355 = vsel %vm1326, %v1098, %v1255
        %v1356 = vsel %vm1326, %v1099, %v1257
        %v1357 = vsel %vm1326, %v1100, %v1259
        %v1358 = vsel %vm1326, %v1101, %v1261
        %1359 = vst [vmem:[%s306] sm:$0xff] %v1294
        %1360 = vst [vmem:[%s306 + $0x8] sm:$0xff] %v1327
        %1361 = vst [vmem:[%s306 + $0x10] sm:$0xff] %v1295
        %1362 = vst [vmem:[%s306 + $0x18] sm:$0xff] %v1328
        %1363 = vst [vmem:[%s306 + $0x20] sm:$0xff] %v1296
        %1364 = vst [vmem:[%s306 + $0x28] sm:$0xff] %v1329
        %1365 = vst [vmem:[%s306 + $0x30] sm:$0xff] %v1297
        %1366 = vst [vmem:[%s306 + $0x38] sm:$0xff] %v1330
        %1367 = vst [vmem:[%s306 + $0x40] sm:$0xff] %v1298
        %1368 = vst [vmem:[%s306 + $0x48] sm:$0xff] %v1331
        %1369 = vst [vmem:[%s306 + $0x50] sm:$0xff] %v1299
        %1370 = vst [vmem:[%s306 + $0x58] sm:$0xff] %v1332
        %1371 = vst [vmem:[%s306 + $0x60] sm:$0xff] %v1300
        %1372 = vst [vmem:[%s306 + $0x68] sm:$0xff] %v1333
        %1373 = vst [vmem:[%s306 + $0x70] sm:$0xff] %v1301
        %1374 = vst [vmem:[%s306 + $0x78] sm:$0xff] %v1334
        %1375 = vst [vmem:[%s306 + $0x80] sm:$0xff] %v1302
        %1376 = vst [vmem:[%s306 + $0x88] sm:$0xff] %v1335
        %1377 = vst [vmem:[%s306 + $0x90] sm:$0xff] %v1303
        %1378 = vst [vmem:[%s306 + $0x98] sm:$0xff] %v1336
        %1379 = vst [vmem:[%s306 + $0xa0] sm:$0xff] %v1304
        %1380 = vst [vmem:[%s306 + $0xa8] sm:$0xff] %v1337
        %1381 = vst [vmem:[%s306 + $0xb0] sm:$0xff] %v1305
        %1382 = vst [vmem:[%s306 + $0xb8] sm:$0xff] %v1338
        %1383 = vst [vmem:[%s306 + $0xc0] sm:$0xff] %v1306
        %1384 = vst [vmem:[%s306 + $0xc8] sm:$0xff] %v1339
        %1385 = vst [vmem:[%s306 + $0xd0] sm:$0xff] %v1307
        %1386 = vst [vmem:[%s306 + $0xd8] sm:$0xff] %v1340
        %1387 = vst [vmem:[%s306 + $0xe0] sm:$0xff] %v1308
        %1388 = vst [vmem:[%s306 + $0xe8] sm:$0xff] %v1341
        %1389 = vst [vmem:[%s306 + $0xf0] sm:$0xff] %v1309
        %1390 = vst [vmem:[%s306 + $0xf8] sm:$0xff] %v1342
        %1391 = vst [vmem:[%s306 + $0x100] sm:$0xff] %v1310
        %1392 = vst [vmem:[%s306 + $0x108] sm:$0xff] %v1343
        %1393 = vst [vmem:[%s306 + $0x110] sm:$0xff] %v1311
        %1394 = vst [vmem:[%s306 + $0x118] sm:$0xff] %v1344
        %1395 = vst [vmem:[%s306 + $0x120] sm:$0xff] %v1312
        %1396 = vst [vmem:[%s306 + $0x128] sm:$0xff] %v1345
        %1397 = vst [vmem:[%s306 + $0x130] sm:$0xff] %v1313
        %1398 = vst [vmem:[%s306 + $0x138] sm:$0xff] %v1346
        %1399 = vst [vmem:[%s306 + $0x140] sm:$0xff] %v1314
        %1400 = vst [vmem:[%s306 + $0x148] sm:$0xff] %v1347
        %1401 = vst [vmem:[%s306 + $0x150] sm:$0xff] %v1315
        %1402 = vst [vmem:[%s306 + $0x158] sm:$0xff] %v1348
        %1403 = vst [vmem:[%s306 + $0x160] sm:$0xff] %v1316
        %1404 = vst [vmem:[%s306 + $0x168] sm:$0xff] %v1349
        %1405 = vst [vmem:[%s306 + $0x170] sm:$0xff] %v1317
        %1406 = vst [vmem:[%s306 + $0x178] sm:$0xff] %v1350
        %1407 = vst [vmem:[%s306 + $0x180] sm:$0xff] %v1318
        %1408 = vst [vmem:[%s306 + $0x188] sm:$0xff] %v1351
        %1409 = vst [vmem:[%s306 + $0x190] sm:$0xff] %v1319
        %1410 = vst [vmem:[%s306 + $0x198] sm:$0xff] %v1352
        %1411 = vst [vmem:[%s306 + $0x1a0] sm:$0xff] %v1320
        %1412 = vst [vmem:[%s306 + $0x1a8] sm:$0xff] %v1353
        %1413 = vst [vmem:[%s306 + $0x1b0] sm:$0xff] %v1321
        %1414 = vst [vmem:[%s306 + $0x1b8] sm:$0xff] %v1354
        %1415 = vst [vmem:[%s306 + $0x1c0] sm:$0xff] %v1322
        %1416 = vst [vmem:[%s306 + $0x1c8] sm:$0xff] %v1355
        %1417 = vst [vmem:[%s306 + $0x1d0] sm:$0xff] %v1323
        %1418 = vst [vmem:[%s306 + $0x1d8] sm:$0xff] %v1356
        %1419 = vst [vmem:[%s306 + $0x1e0] sm:$0xff] %v1324
        %1420 = vst [vmem:[%s306 + $0x1e8] sm:$0xff] %v1357
        %1421 = vst [vmem:[%s306 + $0x1f0] sm:$0xff] %v1325
        %1422 = vst [vmem:[%s306 + $0x1f8] sm:$0xff] %v1358
        %s1423 = sand.u32 %s191, 1
        %s1424 = scalar_lea.sflag [#allocation3], %s1423
        %s1425 = sand.u32 %s191, 1
        %s1426 = smul.addr %s1425, 512
        %s1427 = scalar_lea.vmem [#allocation2], %s1426
        // Predicated region
        $region49: #{mixed_3b.11} parent=47 // pred_check
          %p1428 = pneg %p201
        $region50: #{mixed_3b.11} parent=47 // pred_check_branch
          %1430 = sbr.rel (%p1428) target = $region52
        $region51: #{mixed_3b.11} parent=47 // pred_region
          %s1431 = smul.u32 32, %s21
          %s1433 = ssub.s32 8192, 8192
          %1434 = vsyncadd %s1424, %s1433
          %s1435 = smul.addr %s1431, 2
          %s1436 = smul.addr %s1435, 128
          %s1437 = scalar_lea.hbm %s7, %s1436
          %s1438 = sshll.u32 %s1427, 4
          %s1439 = int_to_ptr.vmem [resolvable:$true] %s1438
          %1444 = dma.vmem_to_hbm [thread:$0]  %s1439, 8192, %s1437, %s1424, 256, 256, 16
        $region52: #{mixed_3b.11} parent=47 // pred_fallthru
          _
      $region48: #{mixed_3b.11} parent=5 // pred_fallthru
        _
      %p1445 = scmp.le.s32.totalorder 2, %s16
      // Predicated region
      $region53: #{mixed_3b.11} parent=5 // pred_check
        %p1446 = pneg %p1445
      $region54: #{mixed_3b.11} parent=5 // pred_check_branch
        %1448 = sbr.rel (%p1446) target = $region56
      $region55: #{mixed_3b.11} parent=5 // pred_region
        %s1449 = ssub.s32 %s16, 2
        // Predicated region
        $region57: #{mixed_3b.11} parent=55 // pred_check
          %p1450 = pneg %p207
        $region58: #{mixed_3b.11} parent=55 // pred_check_branch
          %1452 = sbr.rel (%p1450) target = $region60
        $region59: #{mixed_3b.11} parent=55 // pred_region
          %s1453 = sand.u32 %s192, 1
          %s1454 = scalar_lea.sflag [#allocation3], %s1453
          %s1455 = sand.u32 %s192, 1
          %s1456 = smul.addr %s1455, 512
          %s1457 = scalar_lea.vmem [#allocation2], %s1456
          %1458 = dma.done %s1454, 8192
        $region60: #{mixed_3b.11} parent=55 // pred_fallthru
          _
      $region56: #{mixed_3b.11} parent=5 // pred_fallthru
        _
    $region6: #{mixed_3b.11} parent=1 // loop_footer
      %s20 = sadd.s32 1, %s16
    $region7: #{mixed_3b.11} parent=1 // loop_footer_branch
      %15 = sbr.rel target = $region3
    $region8: #{mixed_3b.11} parent=1 // loop_exit
      _
    %1459 = vsyncpa [#allocation3], 1
    %s1460 = scalar_lea.sflag [#allocation3], 1
    %1461 = vsyncpa %s1460, 1

</llo_original>
